<compile_context>
chip_gen: v7x
topology: tpu7x:2x2x1
jax: 0.10.0
libtpu: 0.0.40
codegen_flags: <defaults>
</compile_context>

<pallas_src>
import jax
import jax.numpy as jnp
from jax.experimental import pallas as pl
from jax.experimental.pallas import tpu as pltpu

EPS = 1e-5
_MATMUL_DTYPE = jnp.float32          # set to jnp.bfloat16 on v6e/v7x for perf
_VMEM_LIMIT = 48 * 1024 * 1024       # v7x-safe; raise toward 96-112 MiB on v5e/v6e


# ------------------------------ small helpers --------------------------------
def _round_up(x, m):
    return (x + m - 1) // m * m


def _pick_row_tile(p):
    for tp in (4096, 2048, 1024, 512, 256, 128, 64, 32, 16, 8):
        if p % tp == 0:
            return tp
    return p


def _pick_row_chunk(h, w):
    """~512 output pixels per accumulated chunk, bounded static unroll."""
    rh = max(1, min(h, max(1, 512 // max(w, 1))))
    while (h + rh - 1) // rh > 16:
        rh = min(h, rh * 2)
    return rh


def _pack_conv_weight(w_oihw, cin_total, coutp):
    """(Cout, Cin_w, 3, 3) -> (9, cin_total, coutp), zero-padded, pre-cast."""
    cout, cin_w, kh, kw = w_oihw.shape
    wk = jnp.transpose(w_oihw, (2, 3, 1, 0)).reshape(kh * kw, cin_w, cout)
    wk = jnp.pad(wk, ((0, 0), (0, cin_total - cin_w), (0, coutp - cout)))
    return wk.astype(_MATMUL_DTYPE)


# ----------------------------- Pallas kernels --------------------------------
def _make_conv_stats_kernel(h, w, cin_p, coutp, fused, rh):
    """3x3 conv (+ optional fused input BN+ReLU) + per-channel sum/sumsq.

    Block shapes seen by the kernel:
      x_ref:     (h, w, cin_p)        unpadded activation block (one image)
      w_ref:     (9, cin_p, coutp)    tap-major weights (pre-cast)
      scale/shift (fused only): (1, 1, coutp)
      y_ref:     (h*w, coutp)         raw conv output (pre-BN)
      stats_ref: (8, coutp)           row 0 = sum, row 1 = sumsq, rest zero
      slab_ref:  (h+2, w+2, cin_p)    VMEM scratch with a zero 1-px halo
    """
    hp, wp = h + 2, w + 2

    def body(act, w_ref, y_ref, stats_ref, slab_ref):
        # ---- build the zero-halo padded slab in VMEM (no XLA-side pad) ----
        slab_ref[0:1, :, :] = jnp.zeros((1, wp, cin_p), _MATMUL_DTYPE)
        slab_ref[hp - 1:hp, :, :] = jnp.zeros((1, wp, cin_p), _MATMUL_DTYPE)
        slab_ref[:, 0:1, :] = jnp.zeros((hp, 1, cin_p), _MATMUL_DTYPE)
        slab_ref[:, wp - 1:wp, :] = jnp.zeros((hp, 1, cin_p), _MATMUL_DTYPE)
        slab_ref[1:h + 1, 1:w + 1, :] = act.astype(_MATMUL_DTYPE)

        # ---- hoist the dx shift: 3 width-exact slabs built once per step ----
        cols = [slab_ref[:, dx:dx + w, :].reshape(hp * w, cin_p)
                for dx in range(3)]

        # ---- 9-tap conv: value accumulation, one store per row chunk -------
        sums = jnp.zeros((1, coutp), jnp.float32)
        sumsq = jnp.zeros((1, coutp), jnp.float32)
        for r0 in range(0, h, rh):
            rc = min(rh, h - r0)
            acc = None
            for k in range(9):
                dy, dx = divmod(k, 3)
                patch = cols[dx][(r0 + dy) * w:(r0 + dy + rc) * w, :]
                t = jnp.dot(patch, w_ref[k],
                            preferred_element_type=jnp.float32)
                acc = t if acc is None else acc + t
            y_ref[r0 * w:(r0 + rc) * w, :] = acc
            # stats while the accumulator is hot (no re-read of the y block)
            sums = sums + jnp.sum(acc, axis=0, keepdims=True)
            sumsq = sumsq + jnp.sum(acc * acc, axis=0, keepdims=True)

        # single unmasked store, padding rows explicitly zeroed
        stats_ref[...] = jnp.concatenate(
            [sums, sumsq, jnp.zeros((6, coutp), jnp.float32)], axis=0)

    if fused:
        def kernel(x_ref, w_ref, scale_ref, shift_ref, y_ref, stats_ref,
                   slab_ref):
            # previous stage's BN-apply + ReLU fused onto the DMA'd block
            act = jnp.maximum(
                x_ref[...] * scale_ref[...] + shift_ref[...], 0.0)
            body(act, w_ref, y_ref, stats_ref, slab_ref)
    else:
        def kernel(x_ref, w_ref, y_ref, stats_ref, slab_ref):
            body(x_ref[...], w_ref, y_ref, stats_ref, slab_ref)

    return kernel


def _bn_relu_kernel(y_ref, scale_ref, shift_ref, o_ref):
    """Fused BatchNorm-apply + ReLU: out = max(y*scale + shift, 0)."""
    o_ref[...] = jnp.maximum(y_ref[...] * scale_ref[...] + shift_ref[...], 0.0)


# ------------------------------- wrappers -------------------------------------
def _conv_stats_call(x_nhwc, wk, coutp, scale_shift):
    """One conv pass (optionally with the previous BN+ReLU fused in).

    x_nhwc: (N, H, W, Cin_p)  unpadded activation
    wk:     (9, Cin_p, Coutp) packed weights
    scale_shift: None (stage 1) or (scale, shift) each (Coutp,)
    Returns y_raw (N, H*W, Coutp) and per-image stats (N*8, Coutp).
    """
    n, h, w, cin_p = x_nhwc.shape
    hw = h * w
    fused = scale_shift is not None
    rh = _pick_row_chunk(h, w)
    kernel = _make_conv_stats_kernel(h, w, cin_p, coutp, fused, rh)

    in_specs = [
        pl.BlockSpec((None, h, w, cin_p), lambda i: (i, 0, 0, 0)),
        pl.BlockSpec((9, cin_p, coutp), lambda i: (0, 0, 0)),
    ]
    args = [x_nhwc, wk]
    if fused:
        scale, shift = scale_shift
        in_specs += [pl.BlockSpec((1, 1, coutp), lambda i: (0, 0, 0)),
                     pl.BlockSpec((1, 1, coutp), lambda i: (0, 0, 0))]
        args += [scale.reshape(1, 1, coutp), shift.reshape(1, 1, coutp)]

    y, stats = pl.pallas_call(
        kernel,
        out_shape=(jax.ShapeDtypeStruct((n, hw, coutp), jnp.float32),
                   jax.ShapeDtypeStruct((n * 8, coutp), jnp.float32)),
        grid=(n,),
        in_specs=in_specs,
        out_specs=(pl.BlockSpec((None, hw, coutp), lambda i: (i, 0, 0)),
                   pl.BlockSpec((8, coutp), lambda i: (i, 0))),
        scratch_shapes=[pltpu.VMEM((h + 2, w + 2, cin_p), _MATMUL_DTYPE)],
        compiler_params=pltpu.CompilerParams(
            dimension_semantics=("parallel",),
            vmem_limit_bytes=_VMEM_LIMIT),
        cost_estimate=pl.CostEstimate(
            flops=2 * n * hw * 9 * cin_p * coutp,
            transcendentals=0,
            bytes_accessed=4 * (x_nhwc.size + wk.size
                                + n * hw * coutp + n * 8 * coutp)),
    )(*args)
    return y, stats


def _fold_bn(stats, gamma, beta, count, coutp):
    """Fold train-mode batch statistics into per-channel scale/shift (tiny)."""
    cout = gamma.shape[0]
    sums = jnp.sum(stats[0::8, :], axis=0)
    sumsq = jnp.sum(stats[1::8, :], axis=0)
    cnt = jnp.float32(count)
    mean = sums / cnt
    var = jnp.maximum(sumsq / cnt - mean * mean, 0.0)   # guard cancellation
    gamma_p = jnp.pad(gamma, (0, coutp - cout))
    beta_p = jnp.pad(beta, (0, coutp - cout))
    scale = gamma_p * jax.lax.rsqrt(var + EPS)
    shift = beta_p - mean * scale
    return scale, shift


def _bn_relu_call(y2d, scale, shift):
    """Final normalize + ReLU over lane-dense row tiles."""
    p, coutp = y2d.shape
    tp = _pick_row_tile(p)
    return pl.pallas_call(
        _bn_relu_kernel,
        out_shape=jax.ShapeDtypeStruct((p, coutp), jnp.float32),
        grid=(p // tp,),
        in_specs=[pl.BlockSpec((tp, coutp), lambda i: (i, 0)),
                  pl.BlockSpec((1, coutp), lambda i: (0, 0)),
                  pl.BlockSpec((1, coutp), lambda i: (0, 0))],
        out_specs=pl.BlockSpec((tp, coutp), lambda i: (i, 0)),
        compiler_params=pltpu.CompilerParams(
            dimension_semantics=("parallel",),
            vmem_limit_bytes=_VMEM_LIMIT),
        cost_estimate=pl.CostEstimate(
            flops=3 * p * coutp,
            transcendentals=0,
            bytes_accessed=4 * (2 * p * coutp + 2 * coutp)),
    )(y2d, scale.reshape(1, coutp), shift.reshape(1, coutp))


def init_double_conv_params(key, in_channels, out_channels):
    ks = jax.random.split(key, 8)

    def conv_w(k, ci, co):
        bound = 1.0 / jnp.sqrt(ci * 9.0)
        return jax.random.uniform(k, (co, ci, 3, 3), jnp.float32, -bound, bound)

    return {
        "w1": conv_w(ks[0], in_channels, out_channels),
        "b1": 0.1 * jax.random.normal(ks[1], (out_channels,), jnp.float32),
        "g1": 1.0 + 0.1 * jax.random.normal(ks[2], (out_channels,), jnp.float32),
        "be1": 0.1 * jax.random.normal(ks[3], (out_channels,), jnp.float32),
        "w2": conv_w(ks[4], out_channels, out_channels),
        "b2": 0.1 * jax.random.normal(ks[5], (out_channels,), jnp.float32),
        "g2": 1.0 + 0.1 * jax.random.normal(ks[6], (out_channels,), jnp.float32),
        "be2": 0.1 * jax.random.normal(ks[7], (out_channels,), jnp.float32),
    }


@jax.jit
def double_conv_forward(x_nchw, params):
    """Pallas DoubleConv forward.  Input/output are NCHW like PyTorch.

    Conv biases b1/b2 are intentionally unused — under train-mode BatchNorm
    they cancel exactly in (y - mean), so the output is identical.
    """
    n, cin, h, w = x_nchw.shape
    cout = params["w1"].shape[0]
    coutp = _round_up(cout, 128)                     # lane-dense channel dim
    hw = h * w

    x_nhwc = jnp.transpose(x_nchw, (0, 2, 3, 1))     # NHWC, channels-last

    w1 = _pack_conv_weight(params["w1"], cin, coutp)
    w2 = _pack_conv_weight(params["w2"], coutp, coutp)

    # stage 1: conv1 + batch stats (BN not yet applied)
    y1, stats1 = _conv_stats_call(x_nhwc, w1, coutp, scale_shift=None)
    scale1, shift1 = _fold_bn(stats1, params["g1"], params["be1"], n * hw, coutp)

    # stage 2: BN1-apply + ReLU fused into conv2's input path, + batch stats
    y2, stats2 = _conv_stats_call(y1.reshape(n, h, w, coutp), w2, coutp,
                                  scale_shift=(scale1, shift1))
    scale2, shift2 = _fold_bn(stats2, params["g2"], params["be2"], n * hw, coutp)

    # final BN2-apply + ReLU (streaming)
    out = _bn_relu_call(y2.reshape(n * hw, coutp), scale2, shift2)
    out = out.reshape(n, h, w, coutp)[..., :cout]
    return jnp.transpose(out, (0, 3, 1, 2))          # back to NCHW


# --------------------------- pure-JAX reference -------------------------------
def _reference_forward(x_nchw, params):
    def conv(x, w, b):
        y = jax.lax.conv_general_dilated(
            x, w, window_strides=(1, 1), padding=((1, 1), (1, 1)),
            dimension_numbers=("NCHW", "OIHW", "NCHW"))
        return y + b[None, :, None, None]

    def bn_relu(y, g, be):
        mean = jnp.mean(y, axis=(0, 2, 3), keepdims=True)
        var = jnp.mean((y - mean) ** 2, axis=(0, 2, 3), keepdims=True)
        y = (y - mean) / jnp.sqrt(var + EPS)
        y = y * g[None, :, None, None] + be[None, :, None, None]
        return jnp.maximum(y, 0.0)

    y = bn_relu(conv(x_nchw, params["w1"], params["b1"]), params["g1"], params["be1"])
    y = bn_relu(conv(y, params["w2"], params["b2"]), params["g2"], params["be2"])
    return y


if __name__ == "__main__":
    key = jax.random.PRNGKey(0)
    k_x, k_p = jax.random.split(key)

    N, C_IN, C_OUT, H, W = 2, 4, 8, 16, 16
    x = jax.random.normal(k_x, (N, C_IN, H, W), jnp.float32)
    params = init_double_conv_params(k_p, C_IN, C_OUT)

    out = jax.block_until_ready(double_conv_forward(x, params))
    ref = _reference_forward(x, params)

    assert out.shape == (N, C_OUT, H, W), out.shape
    max_err = float(jnp.max(jnp.abs(out - ref)))
    assert max_err < 1e-3, max_err

    print("KERNEL_OK")
</pallas_src>

<mosaic_0001>
module attributes {stable_mosaic.version = 11 : i64} {
  func.func @kernel(%arg0: i32, %arg1: memref<1x16x16x4xf32, #tpu.memory_space<vmem>>, %arg2: memref<9x4x128xf32, #tpu.memory_space<vmem>>, %arg3: memref<1x256x128xf32, #tpu.memory_space<vmem>>, %arg4: memref<8x128xf32, #tpu.memory_space<vmem>>, %arg5: memref<18x18x4xf32, #tpu.memory_space<vmem>>) attributes {dimension_semantics = [#tpu.dimension_semantics<parallel>], iteration_bounds = array<i64: 2>, scalar_prefetch = 0 : i64, scratch_operands = 1 : i64, tpu.core_type = #tpu.core_type<tc>, window_params = [{transform_indices = @transform_0, window_bounds = array<i64: 1, 16, 16, 4>}, {pipeline_mode = #tpu.pipeline_mode<synchronous>, transform_indices = @transform_1, window_bounds = array<i64: 9, 4, 128>}, {transform_indices = @transform_2, window_bounds = array<i64: 1, 256, 128>}, {transform_indices = @transform_3, window_bounds = array<i64: 8, 128>}]} {
    %c0 = arith.constant 0 : index
    %c0_0 = arith.constant 0 : index
    %c0_1 = arith.constant 0 : index
    %c0_2 = arith.constant 0 : index
    %0 = vector.load %arg1[%c0, %c0_0, %c0_1, %c0_2] : memref<1x16x16x4xf32, #tpu.memory_space<vmem>>, vector<1x16x16x4xf32>
    %1 = vector.shape_cast %0 : vector<1x16x16x4xf32> to vector<16x16x4xf32>
    %cst = arith.constant 0.000000e+00 : f32
    %2 = vector.broadcast %cst : f32 to vector<1x18x4xf32>
    %c0_3 = arith.constant 0 : index
    %c0_4 = arith.constant 0 : index
    %c0_5 = arith.constant 0 : index
    %3 = vector.load %arg5[%c0_3, %c0_4, %c0_5] : memref<18x18x4xf32, #tpu.memory_space<vmem>>, vector<1x18x4xf32>
    tpu.vector_store %arg5[%c0_3, %c0_4, %c0_5], %2 {strides = array<i32>} : memref<18x18x4xf32, #tpu.memory_space<vmem>>, vector<1x18x4xf32>,
    %cst_6 = arith.constant 0.000000e+00 : f32
    %4 = vector.broadcast %cst_6 : f32 to vector<1x18x4xf32>
    %c17 = arith.constant 17 : index
    %c0_7 = arith.constant 0 : index
    %c0_8 = arith.constant 0 : index
    %5 = vector.load %arg5[%c17, %c0_7, %c0_8] : memref<18x18x4xf32, #tpu.memory_space<vmem>>, vector<1x18x4xf32>
    tpu.vector_store %arg5[%c17, %c0_7, %c0_8], %4 {strides = array<i32>} : memref<18x18x4xf32, #tpu.memory_space<vmem>>, vector<1x18x4xf32>,
    %cst_9 = arith.constant 0.000000e+00 : f32
    %6 = vector.broadcast %cst_9 : f32 to vector<18x1x4xf32>
    %c0_10 = arith.constant 0 : index
    %c0_11 = arith.constant 0 : index
    %c0_12 = arith.constant 0 : index
    %7 = vector.load %arg5[%c0_10, %c0_11, %c0_12] : memref<18x18x4xf32, #tpu.memory_space<vmem>>, vector<18x1x4xf32>
    tpu.vector_store %arg5[%c0_10, %c0_11, %c0_12], %6 {strides = array<i32>} : memref<18x18x4xf32, #tpu.memory_space<vmem>>, vector<18x1x4xf32>,
    %cst_13 = arith.constant 0.000000e+00 : f32
    %8 = vector.broadcast %cst_13 : f32 to vector<18x1x4xf32>
    %c0_14 = arith.constant 0 : index
    %c17_15 = arith.constant 17 : index
    %c0_16 = arith.constant 0 : index
    %9 = vector.load %arg5[%c0_14, %c17_15, %c0_16] : memref<18x18x4xf32, #tpu.memory_space<vmem>>, vector<18x1x4xf32>
    tpu.vector_store %arg5[%c0_14, %c17_15, %c0_16], %8 {strides = array<i32>} : memref<18x18x4xf32, #tpu.memory_space<vmem>>, vector<18x1x4xf32>,
    %c1 = arith.constant 1 : index
    %c1_17 = arith.constant 1 : index
    %c0_18 = arith.constant 0 : index
    %10 = vector.load %arg5[%c1, %c1_17, %c0_18] : memref<18x18x4xf32, #tpu.memory_space<vmem>>, vector<16x16x4xf32>
    tpu.vector_store %arg5[%c1, %c1_17, %c0_18], %1 {strides = array<i32>} : memref<18x18x4xf32, #tpu.memory_space<vmem>>, vector<16x16x4xf32>,
    %c0_19 = arith.constant 0 : index
    %c0_20 = arith.constant 0 : index
    %c0_21 = arith.constant 0 : index
    %11 = vector.load %arg5[%c0_19, %c0_20, %c0_21] : memref<18x18x4xf32, #tpu.memory_space<vmem>>, vector<18x16x4xf32>
    %12 = vector.shape_cast %11 : vector<18x16x4xf32> to vector<288x4xf32>
    %c0_22 = arith.constant 0 : index
    %c1_23 = arith.constant 1 : index
    %c0_24 = arith.constant 0 : index
    %13 = vector.load %arg5[%c0_22, %c1_23, %c0_24] : memref<18x18x4xf32, #tpu.memory_space<vmem>>, vector<18x16x4xf32>
    %14 = vector.shape_cast %13 : vector<18x16x4xf32> to vector<288x4xf32>
    %c0_25 = arith.constant 0 : index
    %c2 = arith.constant 2 : index
    %c0_26 = arith.constant 0 : index
    %15 = vector.load %arg5[%c0_25, %c2, %c0_26] : memref<18x18x4xf32, #tpu.memory_space<vmem>>, vector<18x16x4xf32>
    %16 = vector.shape_cast %15 : vector<18x16x4xf32> to vector<288x4xf32>
    %cst_27 = arith.constant 0.000000e+00 : f32
    %17 = vector.broadcast %cst_27 : f32 to vector<1x128xf32>
    %cst_28 = arith.constant 0.000000e+00 : f32
    %18 = vector.broadcast %cst_28 : f32 to vector<1x128xf32>
    %19 = vector.extract_strided_slice %12 {offsets = [0, 0], sizes = [256, 4], strides = [1, 1]} : vector<288x4xf32> to vector<256x4xf32>
    %c0_29 = arith.constant 0 : index
    %c0_30 = arith.constant 0 : index
    %c0_31 = arith.constant 0 : index
    %20 = vector.load %arg2[%c0_29, %c0_30, %c0_31] : memref<9x4x128xf32, #tpu.memory_space<vmem>>, vector<1x4x128xf32>
    %21 = vector.shape_cast %20 : vector<1x4x128xf32> to vector<4x128xf32>
    %cst_32 = arith.constant dense<0.000000e+00> : vector<256x128xf32>
    %22 = tpu.matmul %19, %21, %cst_32 {dimension_numbers = #tpu.dot_dimension_numbers<[1], [0], [0], [1], [0, 0, 1, 1], [], []>} : vector<256x4xf32>, vector<4x128xf32>, vector<256x128xf32> -> vector<256x128xf32>
    %23 = vector.extract_strided_slice %14 {offsets = [0, 0], sizes = [256, 4], strides = [1, 1]} : vector<288x4xf32> to vector<256x4xf32>
    %c1_33 = arith.constant 1 : index
    %c0_34 = arith.constant 0 : index
    %c0_35 = arith.constant 0 : index
    %24 = vector.load %arg2[%c1_33, %c0_34, %c0_35] : memref<9x4x128xf32, #tpu.memory_space<vmem>>, vector<1x4x128xf32>
    %25 = vector.shape_cast %24 : vector<1x4x128xf32> to vector<4x128xf32>
    %cst_36 = arith.constant dense<0.000000e+00> : vector<256x128xf32>
    %26 = tpu.matmul %23, %25, %cst_36 {dimension_numbers = #tpu.dot_dimension_numbers<[1], [0], [0], [1], [0, 0, 1, 1], [], []>} : vector<256x4xf32>, vector<4x128xf32>, vector<256x128xf32> -> vector<256x128xf32>
    %27 = arith.addf %22, %26 : vector<256x128xf32>
    %28 = vector.extract_strided_slice %16 {offsets = [0, 0], sizes = [256, 4], strides = [1, 1]} : vector<288x4xf32> to vector<256x4xf32>
    %c2_37 = arith.constant 2 : index
    %c0_38 = arith.constant 0 : index
    %c0_39 = arith.constant 0 : index
    %29 = vector.load %arg2[%c2_37, %c0_38, %c0_39] : memref<9x4x128xf32, #tpu.memory_space<vmem>>, vector<1x4x128xf32>
    %30 = vector.shape_cast %29 : vector<1x4x128xf32> to vector<4x128xf32>
    %cst_40 = arith.constant dense<0.000000e+00> : vector<256x128xf32>
    %31 = tpu.matmul %28, %30, %cst_40 {dimension_numbers = #tpu.dot_dimension_numbers<[1], [0], [0], [1], [0, 0, 1, 1], [], []>} : vector<256x4xf32>, vector<4x128xf32>, vector<256x128xf32> -> vector<256x128xf32>
    %32 = arith.addf %27, %31 : vector<256x128xf32>
    %33 = vector.extract_strided_slice %12 {offsets = [16, 0], sizes = [256, 4], strides = [1, 1]} : vector<288x4xf32> to vector<256x4xf32>
    %c3 = arith.constant 3 : index
    %c0_41 = arith.constant 0 : index
    %c0_42 = arith.constant 0 : index
    %34 = vector.load %arg2[%c3, %c0_41, %c0_42] : memref<9x4x128xf32, #tpu.memory_space<vmem>>, vector<1x4x128xf32>
    %35 = vector.shape_cast %34 : vector<1x4x128xf32> to vector<4x128xf32>
    %cst_43 = arith.constant dense<0.000000e+00> : vector<256x128xf32>
    %36 = tpu.matmul %33, %35, %cst_43 {dimension_numbers = #tpu.dot_dimension_numbers<[1], [0], [0], [1], [0, 0, 1, 1], [], []>} : vector<256x4xf32>, vector<4x128xf32>, vector<256x128xf32> -> vector<256x128xf32>
    %37 = arith.addf %32, %36 : vector<256x128xf32>
    %38 = vector.extract_strided_slice %14 {offsets = [16, 0], sizes = [256, 4], strides = [1, 1]} : vector<288x4xf32> to vector<256x4xf32>
    %c4 = arith.constant 4 : index
    %c0_44 = arith.constant 0 : index
    %c0_45 = arith.constant 0 : index
    %39 = vector.load %arg2[%c4, %c0_44, %c0_45] : memref<9x4x128xf32, #tpu.memory_space<vmem>>, vector<1x4x128xf32>
    %40 = vector.shape_cast %39 : vector<1x4x128xf32> to vector<4x128xf32>
    %cst_46 = arith.constant dense<0.000000e+00> : vector<256x128xf32>
    %41 = tpu.matmul %38, %40, %cst_46 {dimension_numbers = #tpu.dot_dimension_numbers<[1], [0], [0], [1], [0, 0, 1, 1], [], []>} : vector<256x4xf32>, vector<4x128xf32>, vector<256x128xf32> -> vector<256x128xf32>
    %42 = arith.addf %37, %41 : vector<256x128xf32>
    %43 = vector.extract_strided_slice %16 {offsets = [16, 0], sizes = [256, 4], strides = [1, 1]} : vector<288x4xf32> to vector<256x4xf32>
    %c5 = arith.constant 5 : index
    %c0_47 = arith.constant 0 : index
    %c0_48 = arith.constant 0 : index
    %44 = vector.load %arg2[%c5, %c0_47, %c0_48] : memref<9x4x128xf32, #tpu.memory_space<vmem>>, vector<1x4x128xf32>
    %45 = vector.shape_cast %44 : vector<1x4x128xf32> to vector<4x128xf32>
    %cst_49 = arith.constant dense<0.000000e+00> : vector<256x128xf32>
    %46 = tpu.matmul %43, %45, %cst_49 {dimension_numbers = #tpu.dot_dimension_numbers<[1], [0], [0], [1], [0, 0, 1, 1], [], []>} : vector<256x4xf32>, vector<4x128xf32>, vector<256x128xf32> -> vector<256x128xf32>
    %47 = arith.addf %42, %46 : vector<256x128xf32>
    %48 = vector.extract_strided_slice %12 {offsets = [32, 0], sizes = [256, 4], strides = [1, 1]} : vector<288x4xf32> to vector<256x4xf32>
    %c6 = arith.constant 6 : index
    %c0_50 = arith.constant 0 : index
    %c0_51 = arith.constant 0 : index
    %49 = vector.load %arg2[%c6, %c0_50, %c0_51] : memref<9x4x128xf32, #tpu.memory_space<vmem>>, vector<1x4x128xf32>
    %50 = vector.shape_cast %49 : vector<1x4x128xf32> to vector<4x128xf32>
    %cst_52 = arith.constant dense<0.000000e+00> : vector<256x128xf32>
    %51 = tpu.matmul %48, %50, %cst_52 {dimension_numbers = #tpu.dot_dimension_numbers<[1], [0], [0], [1], [0, 0, 1, 1], [], []>} : vector<256x4xf32>, vector<4x128xf32>, vector<256x128xf32> -> vector<256x128xf32>
    %52 = arith.addf %47, %51 : vector<256x128xf32>
    %53 = vector.extract_strided_slice %14 {offsets = [32, 0], sizes = [256, 4], strides = [1, 1]} : vector<288x4xf32> to vector<256x4xf32>
    %c7 = arith.constant 7 : index
    %c0_53 = arith.constant 0 : index
    %c0_54 = arith.constant 0 : index
    %54 = vector.load %arg2[%c7, %c0_53, %c0_54] : memref<9x4x128xf32, #tpu.memory_space<vmem>>, vector<1x4x128xf32>
    %55 = vector.shape_cast %54 : vector<1x4x128xf32> to vector<4x128xf32>
    %cst_55 = arith.constant dense<0.000000e+00> : vector<256x128xf32>
    %56 = tpu.matmul %53, %55, %cst_55 {dimension_numbers = #tpu.dot_dimension_numbers<[1], [0], [0], [1], [0, 0, 1, 1], [], []>} : vector<256x4xf32>, vector<4x128xf32>, vector<256x128xf32> -> vector<256x128xf32>
    %57 = arith.addf %52, %56 : vector<256x128xf32>
    %58 = vector.extract_strided_slice %16 {offsets = [32, 0], sizes = [256, 4], strides = [1, 1]} : vector<288x4xf32> to vector<256x4xf32>
    %c8 = arith.constant 8 : index
    %c0_56 = arith.constant 0 : index
    %c0_57 = arith.constant 0 : index
    %59 = vector.load %arg2[%c8, %c0_56, %c0_57] : memref<9x4x128xf32, #tpu.memory_space<vmem>>, vector<1x4x128xf32>
    %60 = vector.shape_cast %59 : vector<1x4x128xf32> to vector<4x128xf32>
    %cst_58 = arith.constant dense<0.000000e+00> : vector<256x128xf32>
    %61 = tpu.matmul %58, %60, %cst_58 {dimension_numbers = #tpu.dot_dimension_numbers<[1], [0], [0], [1], [0, 0, 1, 1], [], []>} : vector<256x4xf32>, vector<4x128xf32>, vector<256x128xf32> -> vector<256x128xf32>
    %62 = arith.addf %57, %61 : vector<256x128xf32>
    %c0_59 = arith.constant 0 : index
    %c0_60 = arith.constant 0 : index
    %c0_61 = arith.constant 0 : index
    %63 = vector.load %arg3[%c0_59, %c0_60, %c0_61] : memref<1x256x128xf32, #tpu.memory_space<vmem>>, vector<1x256x128xf32>
    %64 = vector.shape_cast %63 : vector<1x256x128xf32> to vector<256x128xf32>
    %65 = vector.shape_cast %62 : vector<256x128xf32> to vector<1x256x128xf32>
    tpu.vector_store %arg3[%c0_59, %c0_60, %c0_61], %65 {strides = array<i32>} : memref<1x256x128xf32, #tpu.memory_space<vmem>>, vector<1x256x128xf32>,
    %cst_62 = arith.constant dense<0.000000e+00> : vector<128xf32>
    %66 = vector.multi_reduction <add>, %62, %cst_62 [0] : vector<256x128xf32> to vector<128xf32>
    %67 = vector.shape_cast %66 : vector<128xf32> to vector<1x128xf32>
    %68 = arith.addf %17, %67 : vector<1x128xf32>
    %69 = arith.mulf %62, %62 : vector<256x128xf32>
    %cst_63 = arith.constant dense<0.000000e+00> : vector<128xf32>
    %70 = vector.multi_reduction <add>, %69, %cst_63 [0] : vector<256x128xf32> to vector<128xf32>
    %71 = vector.shape_cast %70 : vector<128xf32> to vector<1x128xf32>
    %72 = arith.addf %18, %71 : vector<1x128xf32>
    %cst_64 = arith.constant 0.000000e+00 : f32
    %73 = vector.broadcast %cst_64 : f32 to vector<6x128xf32>
    %74 = tpu.concatenate %68, %72, %73 in 0 : vector<1x128xf32>, vector<1x128xf32>, vector<6x128xf32> -> vector<8x128xf32>
    %c0_65 = arith.constant 0 : index
    %c0_66 = arith.constant 0 : index
    %75 = vector.load %arg4[%c0_65, %c0_66] : memref<8x128xf32, #tpu.memory_space<vmem>>, vector<8x128xf32>
    tpu.vector_store %arg4[%c0_65, %c0_66], %74 {strides = array<i32>} : memref<8x128xf32, #tpu.memory_space<vmem>>, vector<8x128xf32>,
    return
  }
  func.func @transform_0(%arg0: i32) -> (i32, i32, i32, i32) {
    %c0_i32 = arith.constant 0 : i32
    %c0_i32_0 = arith.constant 0 : i32
    %c0_i32_1 = arith.constant 0 : i32
    %c0_i32_2 = arith.constant 0 : i32
    return %arg0, %c0_i32, %c0_i32_0, %c0_i32_1 : i32, i32, i32, i32
  }
  func.func @transform_1(%arg0: i32) -> (i32, i32, i32) {
    %c0_i32 = arith.constant 0 : i32
    %c0_i32_0 = arith.constant 0 : i32
    %c0_i32_1 = arith.constant 0 : i32
    %c0_i32_2 = arith.constant 0 : i32
    return %c0_i32, %c0_i32_0, %c0_i32_1 : i32, i32, i32
  }
  func.func @transform_2(%arg0: i32) -> (i32, i32, i32) {
    %c0_i32 = arith.constant 0 : i32
    %c0_i32_0 = arith.constant 0 : i32
    %c0_i32_1 = arith.constant 0 : i32
    return %arg0, %c0_i32, %c0_i32_0 : i32, i32, i32
  }
  func.func @transform_3(%arg0: i32) -> (i32, i32) {
    %c0_i32 = arith.constant 0 : i32
    %c0_i32_0 = arith.constant 0 : i32
    return %arg0, %c0_i32 : i32, i32
  }
}

module attributes {stable_mosaic.version = 11 : i64} {
  func.func @kernel(%arg0: i32, %arg1: memref<1x16x16x128xf32, #tpu.memory_space<vmem>>, %arg2: memref<9x128x128xf32, #tpu.memory_space<vmem>>, %arg3: memref<1x1x128xf32, #tpu.memory_space<vmem>>, %arg4: memref<1x1x128xf32, #tpu.memory_space<vmem>>, %arg5: memref<1x256x128xf32, #tpu.memory_space<vmem>>, %arg6: memref<8x128xf32, #tpu.memory_space<vmem>>, %arg7: memref<18x18x128xf32, #tpu.memory_space<vmem>>) attributes {dimension_semantics = [#tpu.dimension_semantics<parallel>], iteration_bounds = array<i64: 2>, scalar_prefetch = 0 : i64, scratch_operands = 1 : i64, tpu.core_type = #tpu.core_type<tc>, window_params = [{transform_indices = @transform_0, window_bounds = array<i64: 1, 16, 16, 128>}, {pipeline_mode = #tpu.pipeline_mode<synchronous>, transform_indices = @transform_1, window_bounds = array<i64: 9, 128, 128>}, {pipeline_mode = #tpu.pipeline_mode<synchronous>, transform_indices = @transform_2, window_bounds = array<i64: 1, 1, 128>}, {pipeline_mode = #tpu.pipeline_mode<synchronous>, transform_indices = @transform_3, window_bounds = array<i64: 1, 1, 128>}, {transform_indices = @transform_4, window_bounds = array<i64: 1, 256, 128>}, {transform_indices = @transform_5, window_bounds = array<i64: 8, 128>}]} {
    %c0 = arith.constant 0 : index
    %c0_0 = arith.constant 0 : index
    %c0_1 = arith.constant 0 : index
    %c0_2 = arith.constant 0 : index
    %0 = vector.load %arg1[%c0, %c0_0, %c0_1, %c0_2] : memref<1x16x16x128xf32, #tpu.memory_space<vmem>>, vector<1x16x16x128xf32>
    %1 = vector.shape_cast %0 : vector<1x16x16x128xf32> to vector<16x16x128xf32>
    %c0_3 = arith.constant 0 : index
    %c0_4 = arith.constant 0 : index
    %c0_5 = arith.constant 0 : index
    %2 = vector.load %arg3[%c0_3, %c0_4, %c0_5] : memref<1x1x128xf32, #tpu.memory_space<vmem>>, vector<1x1x128xf32>
    %3 = vector.broadcast %2 : vector<1x1x128xf32> to vector<16x16x128xf32>
    %4 = arith.mulf %1, %3 : vector<16x16x128xf32>
    %c0_6 = arith.constant 0 : index
    %c0_7 = arith.constant 0 : index
    %c0_8 = arith.constant 0 : index
    %5 = vector.load %arg4[%c0_6, %c0_7, %c0_8] : memref<1x1x128xf32, #tpu.memory_space<vmem>>, vector<1x1x128xf32>
    %6 = vector.broadcast %5 : vector<1x1x128xf32> to vector<16x16x128xf32>
    %7 = arith.addf %4, %6 : vector<16x16x128xf32>
    %cst = arith.constant 0.000000e+00 : f32
    %8 = vector.broadcast %cst : f32 to vector<16x16x128xf32>
    %9 = arith.maximumf %7, %8 : vector<16x16x128xf32>
    %cst_9 = arith.constant 0.000000e+00 : f32
    %10 = vector.broadcast %cst_9 : f32 to vector<1x18x128xf32>
    %c0_10 = arith.constant 0 : index
    %c0_11 = arith.constant 0 : index
    %c0_12 = arith.constant 0 : index
    %11 = vector.load %arg7[%c0_10, %c0_11, %c0_12] : memref<18x18x128xf32, #tpu.memory_space<vmem>>, vector<1x18x128xf32>
    tpu.vector_store %arg7[%c0_10, %c0_11, %c0_12], %10 {strides = array<i32>} : memref<18x18x128xf32, #tpu.memory_space<vmem>>, vector<1x18x128xf32>,
    %cst_13 = arith.constant 0.000000e+00 : f32
    %12 = vector.broadcast %cst_13 : f32 to vector<1x18x128xf32>
    %c17 = arith.constant 17 : index
    %c0_14 = arith.constant 0 : index
    %c0_15 = arith.constant 0 : index
    %13 = vector.load %arg7[%c17, %c0_14, %c0_15] : memref<18x18x128xf32, #tpu.memory_space<vmem>>, vector<1x18x128xf32>
    tpu.vector_store %arg7[%c17, %c0_14, %c0_15], %12 {strides = array<i32>} : memref<18x18x128xf32, #tpu.memory_space<vmem>>, vector<1x18x128xf32>,
    %cst_16 = arith.constant 0.000000e+00 : f32
    %14 = vector.broadcast %cst_16 : f32 to vector<18x1x128xf32>
    %c0_17 = arith.constant 0 : index
    %c0_18 = arith.constant 0 : index
    %c0_19 = arith.constant 0 : index
    %15 = vector.load %arg7[%c0_17, %c0_18, %c0_19] : memref<18x18x128xf32, #tpu.memory_space<vmem>>, vector<18x1x128xf32>
    tpu.vector_store %arg7[%c0_17, %c0_18, %c0_19], %14 {strides = array<i32>} : memref<18x18x128xf32, #tpu.memory_space<vmem>>, vector<18x1x128xf32>,
    %cst_20 = arith.constant 0.000000e+00 : f32
    %16 = vector.broadcast %cst_20 : f32 to vector<18x1x128xf32>
    %c0_21 = arith.constant 0 : index
    %c17_22 = arith.constant 17 : index
    %c0_23 = arith.constant 0 : index
    %17 = vector.load %arg7[%c0_21, %c17_22, %c0_23] : memref<18x18x128xf32, #tpu.memory_space<vmem>>, vector<18x1x128xf32>
    tpu.vector_store %arg7[%c0_21, %c17_22, %c0_23], %16 {strides = array<i32>} : memref<18x18x128xf32, #tpu.memory_space<vmem>>, vector<18x1x128xf32>,
    %c1 = arith.constant 1 : index
    %c1_24 = arith.constant 1 : index
    %c0_25 = arith.constant 0 : index
    %18 = vector.load %arg7[%c1, %c1_24, %c0_25] : memref<18x18x128xf32, #tpu.memory_space<vmem>>, vector<16x16x128xf32>
    tpu.vector_store %arg7[%c1, %c1_24, %c0_25], %9 {strides = array<i32>} : memref<18x18x128xf32, #tpu.memory_space<vmem>>, vector<16x16x128xf32>,
    %c0_26 = arith.constant 0 : index
    %c0_27 = arith.constant 0 : index
    %c0_28 = arith.constant 0 : index
    %19 = vector.load %arg7[%c0_26, %c0_27, %c0_28] : memref<18x18x128xf32, #tpu.memory_space<vmem>>, vector<18x16x128xf32>
    %20 = vector.shape_cast %19 : vector<18x16x128xf32> to vector<288x128xf32>
    %c0_29 = arith.constant 0 : index
    %c1_30 = arith.constant 1 : index
    %c0_31 = arith.constant 0 : index
    %21 = vector.load %arg7[%c0_29, %c1_30, %c0_31] : memref<18x18x128xf32, #tpu.memory_space<vmem>>, vector<18x16x128xf32>
    %22 = vector.shape_cast %21 : vector<18x16x128xf32> to vector<288x128xf32>
    %c0_32 = arith.constant 0 : index
    %c2 = arith.constant 2 : index
    %c0_33 = arith.constant 0 : index
    %23 = vector.load %arg7[%c0_32, %c2, %c0_33] : memref<18x18x128xf32, #tpu.memory_space<vmem>>, vector<18x16x128xf32>
    %24 = vector.shape_cast %23 : vector<18x16x128xf32> to vector<288x128xf32>
    %cst_34 = arith.constant 0.000000e+00 : f32
    %25 = vector.broadcast %cst_34 : f32 to vector<1x128xf32>
    %cst_35 = arith.constant 0.000000e+00 : f32
    %26 = vector.broadcast %cst_35 : f32 to vector<1x128xf32>
    %27 = vector.extract_strided_slice %20 {offsets = [0, 0], sizes = [256, 128], strides = [1, 1]} : vector<288x128xf32> to vector<256x128xf32>
    %c0_36 = arith.constant 0 : index
    %c0_37 = arith.constant 0 : index
    %c0_38 = arith.constant 0 : index
    %28 = vector.load %arg2[%c0_36, %c0_37, %c0_38] : memref<9x128x128xf32, #tpu.memory_space<vmem>>, vector<1x128x128xf32>
    %29 = vector.shape_cast %28 : vector<1x128x128xf32> to vector<128x128xf32>
    %cst_39 = arith.constant dense<0.000000e+00> : vector<256x128xf32>
    %30 = tpu.matmul %27, %29, %cst_39 {dimension_numbers = #tpu.dot_dimension_numbers<[1], [0], [0], [1], [0, 0, 1, 1], [], []>} : vector<256x128xf32>, vector<128x128xf32>, vector<256x128xf32> -> vector<256x128xf32>
    %31 = vector.extract_strided_slice %22 {offsets = [0, 0], sizes = [256, 128], strides = [1, 1]} : vector<288x128xf32> to vector<256x128xf32>
    %c1_40 = arith.constant 1 : index
    %c0_41 = arith.constant 0 : index
    %c0_42 = arith.constant 0 : index
    %32 = vector.load %arg2[%c1_40, %c0_41, %c0_42] : memref<9x128x128xf32, #tpu.memory_space<vmem>>, vector<1x128x128xf32>
    %33 = vector.shape_cast %32 : vector<1x128x128xf32> to vector<128x128xf32>
    %cst_43 = arith.constant dense<0.000000e+00> : vector<256x128xf32>
    %34 = tpu.matmul %31, %33, %cst_43 {dimension_numbers = #tpu.dot_dimension_numbers<[1], [0], [0], [1], [0, 0, 1, 1], [], []>} : vector<256x128xf32>, vector<128x128xf32>, vector<256x128xf32> -> vector<256x128xf32>
    %35 = arith.addf %30, %34 : vector<256x128xf32>
    %36 = vector.extract_strided_slice %24 {offsets = [0, 0], sizes = [256, 128], strides = [1, 1]} : vector<288x128xf32> to vector<256x128xf32>
    %c2_44 = arith.constant 2 : index
    %c0_45 = arith.constant 0 : index
    %c0_46 = arith.constant 0 : index
    %37 = vector.load %arg2[%c2_44, %c0_45, %c0_46] : memref<9x128x128xf32, #tpu.memory_space<vmem>>, vector<1x128x128xf32>
    %38 = vector.shape_cast %37 : vector<1x128x128xf32> to vector<128x128xf32>
    %cst_47 = arith.constant dense<0.000000e+00> : vector<256x128xf32>
    %39 = tpu.matmul %36, %38, %cst_47 {dimension_numbers = #tpu.dot_dimension_numbers<[1], [0], [0], [1], [0, 0, 1, 1], [], []>} : vector<256x128xf32>, vector<128x128xf32>, vector<256x128xf32> -> vector<256x128xf32>
    %40 = arith.addf %35, %39 : vector<256x128xf32>
    %41 = vector.extract_strided_slice %20 {offsets = [16, 0], sizes = [256, 128], strides = [1, 1]} : vector<288x128xf32> to vector<256x128xf32>
    %c3 = arith.constant 3 : index
    %c0_48 = arith.constant 0 : index
    %c0_49 = arith.constant 0 : index
    %42 = vector.load %arg2[%c3, %c0_48, %c0_49] : memref<9x128x128xf32, #tpu.memory_space<vmem>>, vector<1x128x128xf32>
    %43 = vector.shape_cast %42 : vector<1x128x128xf32> to vector<128x128xf32>
    %cst_50 = arith.constant dense<0.000000e+00> : vector<256x128xf32>
    %44 = tpu.matmul %41, %43, %cst_50 {dimension_numbers = #tpu.dot_dimension_numbers<[1], [0], [0], [1], [0, 0, 1, 1], [], []>} : vector<256x128xf32>, vector<128x128xf32>, vector<256x128xf32> -> vector<256x128xf32>
    %45 = arith.addf %40, %44 : vector<256x128xf32>
    %46 = vector.extract_strided_slice %22 {offsets = [16, 0], sizes = [256, 128], strides = [1, 1]} : vector<288x128xf32> to vector<256x128xf32>
    %c4 = arith.constant 4 : index
    %c0_51 = arith.constant 0 : index
    %c0_52 = arith.constant 0 : index
    %47 = vector.load %arg2[%c4, %c0_51, %c0_52] : memref<9x128x128xf32, #tpu.memory_space<vmem>>, vector<1x128x128xf32>
    %48 = vector.shape_cast %47 : vector<1x128x128xf32> to vector<128x128xf32>
    %cst_53 = arith.constant dense<0.000000e+00> : vector<256x128xf32>
    %49 = tpu.matmul %46, %48, %cst_53 {dimension_numbers = #tpu.dot_dimension_numbers<[1], [0], [0], [1], [0, 0, 1, 1], [], []>} : vector<256x128xf32>, vector<128x128xf32>, vector<256x128xf32> -> vector<256x128xf32>
    %50 = arith.addf %45, %49 : vector<256x128xf32>
    %51 = vector.extract_strided_slice %24 {offsets = [16, 0], sizes = [256, 128], strides = [1, 1]} : vector<288x128xf32> to vector<256x128xf32>
    %c5 = arith.constant 5 : index
    %c0_54 = arith.constant 0 : index
    %c0_55 = arith.constant 0 : index
    %52 = vector.load %arg2[%c5, %c0_54, %c0_55] : memref<9x128x128xf32, #tpu.memory_space<vmem>>, vector<1x128x128xf32>
    %53 = vector.shape_cast %52 : vector<1x128x128xf32> to vector<128x128xf32>
    %cst_56 = arith.constant dense<0.000000e+00> : vector<256x128xf32>
    %54 = tpu.matmul %51, %53, %cst_56 {dimension_numbers = #tpu.dot_dimension_numbers<[1], [0], [0], [1], [0, 0, 1, 1], [], []>} : vector<256x128xf32>, vector<128x128xf32>, vector<256x128xf32> -> vector<256x128xf32>
    %55 = arith.addf %50, %54 : vector<256x128xf32>
    %56 = vector.extract_strided_slice %20 {offsets = [32, 0], sizes = [256, 128], strides = [1, 1]} : vector<288x128xf32> to vector<256x128xf32>
    %c6 = arith.constant 6 : index
    %c0_57 = arith.constant 0 : index
    %c0_58 = arith.constant 0 : index
    %57 = vector.load %arg2[%c6, %c0_57, %c0_58] : memref<9x128x128xf32, #tpu.memory_space<vmem>>, vector<1x128x128xf32>
    %58 = vector.shape_cast %57 : vector<1x128x128xf32> to vector<128x128xf32>
    %cst_59 = arith.constant dense<0.000000e+00> : vector<256x128xf32>
    %59 = tpu.matmul %56, %58, %cst_59 {dimension_numbers = #tpu.dot_dimension_numbers<[1], [0], [0], [1], [0, 0, 1, 1], [], []>} : vector<256x128xf32>, vector<128x128xf32>, vector<256x128xf32> -> vector<256x128xf32>
    %60 = arith.addf %55, %59 : vector<256x128xf32>
    %61 = vector.extract_strided_slice %22 {offsets = [32, 0], sizes = [256, 128], strides = [1, 1]} : vector<288x128xf32> to vector<256x128xf32>
    %c7 = arith.constant 7 : index
    %c0_60 = arith.constant 0 : index
    %c0_61 = arith.constant 0 : index
    %62 = vector.load %arg2[%c7, %c0_60, %c0_61] : memref<9x128x128xf32, #tpu.memory_space<vmem>>, vector<1x128x128xf32>
    %63 = vector.shape_cast %62 : vector<1x128x128xf32> to vector<128x128xf32>
    %cst_62 = arith.constant dense<0.000000e+00> : vector<256x128xf32>
    %64 = tpu.matmul %61, %63, %cst_62 {dimension_numbers = #tpu.dot_dimension_numbers<[1], [0], [0], [1], [0, 0, 1, 1], [], []>} : vector<256x128xf32>, vector<128x128xf32>, vector<256x128xf32> -> vector<256x128xf32>
    %65 = arith.addf %60, %64 : vector<256x128xf32>
    %66 = vector.extract_strided_slice %24 {offsets = [32, 0], sizes = [256, 128], strides = [1, 1]} : vector<288x128xf32> to vector<256x128xf32>
    %c8 = arith.constant 8 : index
    %c0_63 = arith.constant 0 : index
    %c0_64 = arith.constant 0 : index
    %67 = vector.load %arg2[%c8, %c0_63, %c0_64] : memref<9x128x128xf32, #tpu.memory_space<vmem>>, vector<1x128x128xf32>
    %68 = vector.shape_cast %67 : vector<1x128x128xf32> to vector<128x128xf32>
    %cst_65 = arith.constant dense<0.000000e+00> : vector<256x128xf32>
    %69 = tpu.matmul %66, %68, %cst_65 {dimension_numbers = #tpu.dot_dimension_numbers<[1], [0], [0], [1], [0, 0, 1, 1], [], []>} : vector<256x128xf32>, vector<128x128xf32>, vector<256x128xf32> -> vector<256x128xf32>
    %70 = arith.addf %65, %69 : vector<256x128xf32>
    %c0_66 = arith.constant 0 : index
    %c0_67 = arith.constant 0 : index
    %c0_68 = arith.constant 0 : index
    %71 = vector.load %arg5[%c0_66, %c0_67, %c0_68] : memref<1x256x128xf32, #tpu.memory_space<vmem>>, vector<1x256x128xf32>
    %72 = vector.shape_cast %71 : vector<1x256x128xf32> to vector<256x128xf32>
    %73 = vector.shape_cast %70 : vector<256x128xf32> to vector<1x256x128xf32>
    tpu.vector_store %arg5[%c0_66, %c0_67, %c0_68], %73 {strides = array<i32>} : memref<1x256x128xf32, #tpu.memory_space<vmem>>, vector<1x256x128xf32>,
    %cst_69 = arith.constant dense<0.000000e+00> : vector<128xf32>
    %74 = vector.multi_reduction <add>, %70, %cst_69 [0] : vector<256x128xf32> to vector<128xf32>
    %75 = vector.shape_cast %74 : vector<128xf32> to vector<1x128xf32>
    %76 = arith.addf %25, %75 : vector<1x128xf32>
    %77 = arith.mulf %70, %70 : vector<256x128xf32>
    %cst_70 = arith.constant dense<0.000000e+00> : vector<128xf32>
    %78 = vector.multi_reduction <add>, %77, %cst_70 [0] : vector<256x128xf32> to vector<128xf32>
    %79 = vector.shape_cast %78 : vector<128xf32> to vector<1x128xf32>
    %80 = arith.addf %26, %79 : vector<1x128xf32>
    %cst_71 = arith.constant 0.000000e+00 : f32
    %81 = vector.broadcast %cst_71 : f32 to vector<6x128xf32>
    %82 = tpu.concatenate %76, %80, %81 in 0 : vector<1x128xf32>, vector<1x128xf32>, vector<6x128xf32> -> vector<8x128xf32>
    %c0_72 = arith.constant 0 : index
    %c0_73 = arith.constant 0 : index
    %83 = vector.load %arg6[%c0_72, %c0_73] : memref<8x128xf32, #tpu.memory_space<vmem>>, vector<8x128xf32>
    tpu.vector_store %arg6[%c0_72, %c0_73], %82 {strides = array<i32>} : memref<8x128xf32, #tpu.memory_space<vmem>>, vector<8x128xf32>,
    return
  }
  func.func @transform_0(%arg0: i32) -> (i32, i32, i32, i32) {
    %c0_i32 = arith.constant 0 : i32
    %c0_i32_0 = arith.constant 0 : i32
    %c0_i32_1 = arith.constant 0 : i32
    %c0_i32_2 = arith.constant 0 : i32
    return %arg0, %c0_i32, %c0_i32_0, %c0_i32_1 : i32, i32, i32, i32
  }
  func.func @transform_1(%arg0: i32) -> (i32, i32, i32) {
    %c0_i32 = arith.constant 0 : i32
    %c0_i32_0 = arith.constant 0 : i32
    %c0_i32_1 = arith.constant 0 : i32
    %c0_i32_2 = arith.constant 0 : i32
    return %c0_i32, %c0_i32_0, %c0_i32_1 : i32, i32, i32
  }
  func.func @transform_2(%arg0: i32) -> (i32, i32, i32) {
    %c0_i32 = arith.constant 0 : i32
    %c0_i32_0 = arith.constant 0 : i32
    %c0_i32_1 = arith.constant 0 : i32
    %c0_i32_2 = arith.constant 0 : i32
    return %c0_i32, %c0_i32_0, %c0_i32_1 : i32, i32, i32
  }
  func.func @transform_3(%arg0: i32) -> (i32, i32, i32) {
    %c0_i32 = arith.constant 0 : i32
    %c0_i32_0 = arith.constant 0 : i32
    %c0_i32_1 = arith.constant 0 : i32
    %c0_i32_2 = arith.constant 0 : i32
    return %c0_i32, %c0_i32_0, %c0_i32_1 : i32, i32, i32
  }
  func.func @transform_4(%arg0: i32) -> (i32, i32, i32) {
    %c0_i32 = arith.constant 0 : i32
    %c0_i32_0 = arith.constant 0 : i32
    %c0_i32_1 = arith.constant 0 : i32
    return %arg0, %c0_i32, %c0_i32_0 : i32, i32, i32
  }
  func.func @transform_5(%arg0: i32) -> (i32, i32) {
    %c0_i32 = arith.constant 0 : i32
    %c0_i32_0 = arith.constant 0 : i32
    return %arg0, %c0_i32 : i32, i32
  }
}

module attributes {stable_mosaic.version = 11 : i64} {
  func.func @_bn_relu_kernel(%arg0: i32, %arg1: memref<512x128xf32, #tpu.memory_space<vmem>>, %arg2: memref<1x128xf32, #tpu.memory_space<vmem>>, %arg3: memref<1x128xf32, #tpu.memory_space<vmem>>, %arg4: memref<512x128xf32, #tpu.memory_space<vmem>>) attributes {dimension_semantics = [#tpu.dimension_semantics<parallel>], iteration_bounds = array<i64: 1>, scalar_prefetch = 0 : i64, scratch_operands = 0 : i64, tpu.core_type = #tpu.core_type<tc>, window_params = [{transform_indices = @transform_0, window_bounds = array<i64: 512, 128>}, {pipeline_mode = #tpu.pipeline_mode<synchronous>, transform_indices = @transform_1, window_bounds = array<i64: 1, 128>}, {pipeline_mode = #tpu.pipeline_mode<synchronous>, transform_indices = @transform_2, window_bounds = array<i64: 1, 128>}, {transform_indices = @transform_3, window_bounds = array<i64: 512, 128>}]} {
    %c0 = arith.constant 0 : index
    %c0_0 = arith.constant 0 : index
    %0 = vector.load %arg1[%c0, %c0_0] : memref<512x128xf32, #tpu.memory_space<vmem>>, vector<512x128xf32>
    %c0_1 = arith.constant 0 : index
    %c0_2 = arith.constant 0 : index
    %1 = vector.load %arg2[%c0_1, %c0_2] : memref<1x128xf32, #tpu.memory_space<vmem>>, vector<1x128xf32>
    %2 = vector.broadcast %1 : vector<1x128xf32> to vector<512x128xf32>
    %3 = arith.mulf %0, %2 : vector<512x128xf32>
    %c0_3 = arith.constant 0 : index
    %c0_4 = arith.constant 0 : index
    %4 = vector.load %arg3[%c0_3, %c0_4] : memref<1x128xf32, #tpu.memory_space<vmem>>, vector<1x128xf32>
    %5 = vector.broadcast %4 : vector<1x128xf32> to vector<512x128xf32>
    %6 = arith.addf %3, %5 : vector<512x128xf32>
    %cst = arith.constant 0.000000e+00 : f32
    %7 = vector.broadcast %cst : f32 to vector<512x128xf32>
    %8 = arith.maximumf %6, %7 : vector<512x128xf32>
    %c0_5 = arith.constant 0 : index
    %c0_6 = arith.constant 0 : index
    %9 = vector.load %arg4[%c0_5, %c0_6] : memref<512x128xf32, #tpu.memory_space<vmem>>, vector<512x128xf32>
    tpu.vector_store %arg4[%c0_5, %c0_6], %8 {strides = array<i32>} : memref<512x128xf32, #tpu.memory_space<vmem>>, vector<512x128xf32>,
    return
  }
  func.func @transform_0(%arg0: i32) -> (i32, i32) {
    %c0_i32 = arith.constant 0 : i32
    %c0_i32_0 = arith.constant 0 : i32
    return %arg0, %c0_i32 : i32, i32
  }
  func.func @transform_1(%arg0: i32) -> (i32, i32) {
    %c0_i32 = arith.constant 0 : i32
    %c0_i32_0 = arith.constant 0 : i32
    %c0_i32_1 = arith.constant 0 : i32
    return %c0_i32, %c0_i32_0 : i32, i32
  }
  func.func @transform_2(%arg0: i32) -> (i32, i32) {
    %c0_i32 = arith.constant 0 : i32
    %c0_i32_0 = arith.constant 0 : i32
    %c0_i32_1 = arith.constant 0 : i32
    return %c0_i32, %c0_i32_0 : i32, i32
  }
  func.func @transform_3(%arg0: i32) -> (i32, i32) {
    %c0_i32 = arith.constant 0 : i32
    %c0_i32_0 = arith.constant 0 : i32
    return %arg0, %c0_i32 : i32, i32
  }
}

</mosaic_0001>

<llo_original>
// kernel: double_conv_forward.5
$region0: #{double_conv_forward.5}
  #allocation0 [shape = 'u32[]', space=smem, size = 0x4, offset = 0x4, fixed_abs, tag = 'smem constant byte address 0x4 - core index']
  #allocation1 [shape = 'u32[144,128]{1,0:T(1,128)}', space=vmem, size = 0x12000, scoped, tag = 'internal scratch']
  %s0 = inlined_call_operand.vmem [shape: f32[512,128], index: 0, kind: input, shape index: {}]
  %s1 = inlined_call_operand.vmem [shape: f32[1,128], index: 1, kind: input, shape index: {}]
  %s2 = inlined_call_operand.vmem [shape: f32[1,128], index: 2, kind: input, shape index: {}]
  %s3 = inlined_call_operand.vmem [shape: f32[512,128], index: 3, kind: output, shape index: {}]
  %s4 = sld [smem:[#allocation0]]
  $region22: #{double_conv_forward.5} parent=0
    _
  %s6 = ssub.s32 1, %s4
  %s7 = scalar_select 0, %s6, %s4
  // Predicated region
  $region2: #{double_conv_forward.5} parent=0 // pred_check
    _
  $region3: #{double_conv_forward.5} parent=0 // pred_check_branch
    %9 = sbr.rel (0) target = $region5
  $region4: #{double_conv_forward.5} parent=0 // pred_region
    _
  $region5: #{double_conv_forward.5} parent=0 // pred_fallthru
    _
  // Predicated region
  $region6: #{double_conv_forward.5} parent=0 // pred_check
    _
  $region7: #{double_conv_forward.5} parent=0 // pred_check_branch
    %11 = sbr.rel (0) target = $region9
  $region8: #{double_conv_forward.5} parent=0 // pred_region
    _
  $region9: #{double_conv_forward.5} parent=0 // pred_fallthru
    _
  // Predicated region
  $region10: #{double_conv_forward.5} parent=0 // pred_check
    _
  $region11: #{double_conv_forward.5} parent=0 // pred_check_branch
    %13 = sbr.rel (0) target = $region13
  $region12: #{double_conv_forward.5} parent=0 // pred_region
    _
  $region13: #{double_conv_forward.5} parent=0 // pred_fallthru
    _
  %v14 = vld [vmem:[%s0] sm:$0xff]
  %v15 = vld [vmem:[%s0 + $0x8] sm:$0xff]
  %v16 = vld [vmem:[%s0 + $0x10] sm:$0xff]
  %v17 = vld [vmem:[%s0 + $0x18] sm:$0xff]
  %v18 = vld [vmem:[%s0 + $0x20] sm:$0xff]
  %v19 = vld [vmem:[%s0 + $0x28] sm:$0xff]
  %v20 = vld [vmem:[%s0 + $0x30] sm:$0xff]
  %v21 = vld [vmem:[%s0 + $0x38] sm:$0xff]
  %v22 = vld [vmem:[%s0 + $0x40] sm:$0xff]
  %v23 = vld [vmem:[%s0 + $0x48] sm:$0xff]
  %v24 = vld [vmem:[%s0 + $0x50] sm:$0xff]
  %v25 = vld [vmem:[%s0 + $0x58] sm:$0xff]
  %v26 = vld [vmem:[%s0 + $0x60] sm:$0xff]
  %v27 = vld [vmem:[%s0 + $0x68] sm:$0xff]
  %v28 = vld [vmem:[%s0 + $0x70] sm:$0xff]
  %v29 = vld [vmem:[%s0 + $0x78] sm:$0xff]
  %v30 = vld [vmem:[%s0 + $0x80] sm:$0xff]
  %v31 = vld [vmem:[%s0 + $0x88] sm:$0xff]
  %v32 = vld [vmem:[%s0 + $0x90] sm:$0xff]
  %v33 = vld [vmem:[%s0 + $0x98] sm:$0xff]
  %v34 = vld [vmem:[%s0 + $0xa0] sm:$0xff]
  %v35 = vld [vmem:[%s0 + $0xa8] sm:$0xff]
  %v36 = vld [vmem:[%s0 + $0xb0] sm:$0xff]
  %v37 = vld [vmem:[%s0 + $0xb8] sm:$0xff]
  %v38 = vld [vmem:[%s0 + $0xc0] sm:$0xff]
  %v39 = vld [vmem:[%s0 + $0xc8] sm:$0xff]
  %v40 = vld [vmem:[%s0 + $0xd0] sm:$0xff]
  %v41 = vld [vmem:[%s0 + $0xd8] sm:$0xff]
  %v42 = vld [vmem:[%s0 + $0xe0] sm:$0xff]
  %v43 = vld [vmem:[%s0 + $0xe8] sm:$0xff]
  %v44 = vld [vmem:[%s0 + $0xf0] sm:$0xff]
  %v45 = vld [vmem:[%s0 + $0xf8] sm:$0xff]
  %v46 = vld [vmem:[%s0 + $0x100] sm:$0xff]
  %v47 = vld [vmem:[%s0 + $0x108] sm:$0xff]
  %v48 = vld [vmem:[%s0 + $0x110] sm:$0xff]
  %v49 = vld [vmem:[%s0 + $0x118] sm:$0xff]
  %v50 = vld [vmem:[%s0 + $0x120] sm:$0xff]
  %v51 = vld [vmem:[%s0 + $0x128] sm:$0xff]
  %v52 = vld [vmem:[%s0 + $0x130] sm:$0xff]
  %v53 = vld [vmem:[%s0 + $0x138] sm:$0xff]
  %v54 = vld [vmem:[%s0 + $0x140] sm:$0xff]
  %v55 = vld [vmem:[%s0 + $0x148] sm:$0xff]
  %v56 = vld [vmem:[%s0 + $0x150] sm:$0xff]
  %v57 = vld [vmem:[%s0 + $0x158] sm:$0xff]
  %v58 = vld [vmem:[%s0 + $0x160] sm:$0xff]
  %v59 = vld [vmem:[%s0 + $0x168] sm:$0xff]
  %v60 = vld [vmem:[%s0 + $0x170] sm:$0xff]
  %v61 = vld [vmem:[%s0 + $0x178] sm:$0xff]
  %v62 = vld [vmem:[%s0 + $0x180] sm:$0xff]
  %v63 = vld [vmem:[%s0 + $0x188] sm:$0xff]
  %v64 = vld [vmem:[%s0 + $0x190] sm:$0xff]
  %v65 = vld [vmem:[%s0 + $0x198] sm:$0xff]
  %v66 = vld [vmem:[%s0 + $0x1a0] sm:$0xff]
  %v67 = vld [vmem:[%s0 + $0x1a8] sm:$0xff]
  %v68 = vld [vmem:[%s0 + $0x1b0] sm:$0xff]
  %v69 = vld [vmem:[%s0 + $0x1b8] sm:$0xff]
  %v70 = vld [vmem:[%s0 + $0x1c0] sm:$0xff]
  %v71 = vld [vmem:[%s0 + $0x1c8] sm:$0xff]
  %v72 = vld [vmem:[%s0 + $0x1d0] sm:$0xff]
  %v73 = vld [vmem:[%s0 + $0x1d8] sm:$0xff]
  %v74 = vld [vmem:[%s0 + $0x1e0] sm:$0xff]
  %v75 = vld [vmem:[%s0 + $0x1e8] sm:$0xff]
  %v76 = vld [vmem:[%s0 + $0x1f0] sm:$0xff]
  %v77 = vld [vmem:[%s0 + $0x1f8] sm:$0xff]
  %v78 = vld [vmem:[%s1] sm:$0x1]
  %v80 = vlaneseq
  %v81 = vshrl.u32 %v80, 7
  %v82 = vsub.s32 0, %v81
  %v83 = vrot.slane %v78, %v82
  %v85 = vmul.f32 %v14, %v83
  %v86 = vmul.f32 %v15, %v83
  %v87 = vmul.f32 %v16, %v83
  %v88 = vmul.f32 %v17, %v83
  %v89 = vmul.f32 %v18, %v83
  %v90 = vmul.f32 %v19, %v83
  %v91 = vmul.f32 %v20, %v83
  %v92 = vmul.f32 %v21, %v83
  %v93 = vmul.f32 %v22, %v83
  %v94 = vmul.f32 %v23, %v83
  %v95 = vmul.f32 %v24, %v83
  %v96 = vmul.f32 %v25, %v83
  %v97 = vmul.f32 %v26, %v83
  %v98 = vmul.f32 %v27, %v83
  %v99 = vmul.f32 %v28, %v83
  %v100 = vmul.f32 %v29, %v83
  %v101 = vmul.f32 %v30, %v83
  %v102 = vmul.f32 %v31, %v83
  %v103 = vmul.f32 %v32, %v83
  %v104 = vmul.f32 %v33, %v83
  %v105 = vmul.f32 %v34, %v83
  %v106 = vmul.f32 %v35, %v83
  %v107 = vmul.f32 %v36, %v83
  %v108 = vmul.f32 %v37, %v83
  %v109 = vmul.f32 %v38, %v83
  %v110 = vmul.f32 %v39, %v83
  %v111 = vmul.f32 %v40, %v83
  %v112 = vmul.f32 %v41, %v83
  %v113 = vmul.f32 %v42, %v83
  %v114 = vmul.f32 %v43, %v83
  %v115 = vmul.f32 %v44, %v83
  %v116 = vmul.f32 %v45, %v83
  %v117 = vmul.f32 %v46, %v83
  %v118 = vmul.f32 %v47, %v83
  %v119 = vmul.f32 %v48, %v83
  %v120 = vmul.f32 %v49, %v83
  %v121 = vmul.f32 %v50, %v83
  %v122 = vmul.f32 %v51, %v83
  %v123 = vmul.f32 %v52, %v83
  %v124 = vmul.f32 %v53, %v83
  %v125 = vmul.f32 %v54, %v83
  %v126 = vmul.f32 %v55, %v83
  %v127 = vmul.f32 %v56, %v83
  %v128 = vmul.f32 %v57, %v83
  %v129 = vmul.f32 %v58, %v83
  %v130 = vmul.f32 %v59, %v83
  %v131 = vmul.f32 %v60, %v83
  %v132 = vmul.f32 %v61, %v83
  %v133 = vmul.f32 %v62, %v83
  %v134 = vmul.f32 %v63, %v83
  %v135 = vmul.f32 %v64, %v83
  %v136 = vmul.f32 %v65, %v83
  %v137 = vmul.f32 %v66, %v83
  %v138 = vmul.f32 %v67, %v83
  %v139 = vmul.f32 %v68, %v83
  %v140 = vmul.f32 %v69, %v83
  %v141 = vmul.f32 %v70, %v83
  %v142 = vmul.f32 %v71, %v83
  %v143 = vmul.f32 %v72, %v83
  %v144 = vmul.f32 %v73, %v83
  %v145 = vmul.f32 %v74, %v83
  %v146 = vmul.f32 %v75, %v83
  %v147 = vmul.f32 %v76, %v83
  %v148 = vmul.f32 %v77, %v83
  %v149 = vld [vmem:[%s2] sm:$0x1]
  %v151 = vlaneseq
  %v152 = vshrl.u32 %v151, 7
  %v153 = vsub.s32 0, %v152
  %v154 = vrot.slane %v149, %v153
  %v156 = vadd.f32 %v85, %v154
  %v157 = vadd.f32 %v86, %v154
  %v158 = vadd.f32 %v87, %v154
  %v159 = vadd.f32 %v88, %v154
  %v160 = vadd.f32 %v89, %v154
  %v161 = vadd.f32 %v90, %v154
  %v162 = vadd.f32 %v91, %v154
  %v163 = vadd.f32 %v92, %v154
  %v164 = vadd.f32 %v93, %v154
  %v165 = vadd.f32 %v94, %v154
  %v166 = vadd.f32 %v95, %v154
  %v167 = vadd.f32 %v96, %v154
  %v168 = vadd.f32 %v97, %v154
  %v169 = vadd.f32 %v98, %v154
  %v170 = vadd.f32 %v99, %v154
  %v171 = vadd.f32 %v100, %v154
  %v172 = vadd.f32 %v101, %v154
  %v173 = vadd.f32 %v102, %v154
  %v174 = vadd.f32 %v103, %v154
  %v175 = vadd.f32 %v104, %v154
  %v176 = vadd.f32 %v105, %v154
  %v177 = vadd.f32 %v106, %v154
  %v178 = vadd.f32 %v107, %v154
  %v179 = vadd.f32 %v108, %v154
  %v180 = vadd.f32 %v109, %v154
  %v181 = vadd.f32 %v110, %v154
  %v182 = vadd.f32 %v111, %v154
  %v183 = vadd.f32 %v112, %v154
  %v184 = vadd.f32 %v113, %v154
  %v185 = vadd.f32 %v114, %v154
  %v186 = vadd.f32 %v115, %v154
  %v187 = vadd.f32 %v116, %v154
  %v188 = vadd.f32 %v117, %v154
  %v189 = vadd.f32 %v118, %v154
  %v190 = vadd.f32 %v119, %v154
  %v191 = vadd.f32 %v120, %v154
  %v192 = vadd.f32 %v121, %v154
  %v193 = vadd.f32 %v122, %v154
  %v194 = vadd.f32 %v123, %v154
  %v195 = vadd.f32 %v124, %v154
  %v196 = vadd.f32 %v125, %v154
  %v197 = vadd.f32 %v126, %v154
  %v198 = vadd.f32 %v127, %v154
  %v199 = vadd.f32 %v128, %v154
  %v200 = vadd.f32 %v129, %v154
  %v201 = vadd.f32 %v130, %v154
  %v202 = vadd.f32 %v131, %v154
  %v203 = vadd.f32 %v132, %v154
  %v204 = vadd.f32 %v133, %v154
  %v205 = vadd.f32 %v134, %v154
  %v206 = vadd.f32 %v135, %v154
  %v207 = vadd.f32 %v136, %v154
  %v208 = vadd.f32 %v137, %v154
  %v209 = vadd.f32 %v138, %v154
  %v210 = vadd.f32 %v139, %v154
  %v211 = vadd.f32 %v140, %v154
  %v212 = vadd.f32 %v141, %v154
  %v213 = vadd.f32 %v142, %v154
  %v214 = vadd.f32 %v143, %v154
  %v215 = vadd.f32 %v144, %v154
  %v216 = vadd.f32 %v145, %v154
  %v217 = vadd.f32 %v146, %v154
  %v218 = vadd.f32 %v147, %v154
  %v219 = vadd.f32 %v148, %v154
  %v220 = vmax.f32 %v156, 0.0
  %v221 = vmax.f32 %v157, 0.0
  %v222 = vmax.f32 %v158, 0.0
  %v223 = vmax.f32 %v159, 0.0
  %v224 = vmax.f32 %v160, 0.0
  %v225 = vmax.f32 %v161, 0.0
  %v226 = vmax.f32 %v162, 0.0
  %v227 = vmax.f32 %v163, 0.0
  %v228 = vmax.f32 %v164, 0.0
  %v229 = vmax.f32 %v165, 0.0
  %v230 = vmax.f32 %v166, 0.0
  %v231 = vmax.f32 %v167, 0.0
  %v232 = vmax.f32 %v168, 0.0
  %v233 = vmax.f32 %v169, 0.0
  %v234 = vmax.f32 %v170, 0.0
  %v235 = vmax.f32 %v171, 0.0
  %v236 = vmax.f32 %v172, 0.0
  %v237 = vmax.f32 %v173, 0.0
  %v238 = vmax.f32 %v174, 0.0
  %v239 = vmax.f32 %v175, 0.0
  %v240 = vmax.f32 %v176, 0.0
  %v241 = vmax.f32 %v177, 0.0
  %v242 = vmax.f32 %v178, 0.0
  %v243 = vmax.f32 %v179, 0.0
  %v244 = vmax.f32 %v180, 0.0
  %v245 = vmax.f32 %v181, 0.0
  %v246 = vmax.f32 %v182, 0.0
  %v247 = vmax.f32 %v183, 0.0
  %v248 = vmax.f32 %v184, 0.0
  %v249 = vmax.f32 %v185, 0.0
  %v250 = vmax.f32 %v186, 0.0
  %v251 = vmax.f32 %v187, 0.0
  %v252 = vmax.f32 %v188, 0.0
  %v253 = vmax.f32 %v189, 0.0
  %v254 = vmax.f32 %v190, 0.0
  %v255 = vmax.f32 %v191, 0.0
  %v256 = vmax.f32 %v192, 0.0
  %v257 = vmax.f32 %v193, 0.0
  %v258 = vmax.f32 %v194, 0.0
  %v259 = vmax.f32 %v195, 0.0
  %v260 = vmax.f32 %v196, 0.0
  %v261 = vmax.f32 %v197, 0.0
  %v262 = vmax.f32 %v198, 0.0
  %v263 = vmax.f32 %v199, 0.0
  %v264 = vmax.f32 %v200, 0.0
  %v265 = vmax.f32 %v201, 0.0
  %v266 = vmax.f32 %v202, 0.0
  %v267 = vmax.f32 %v203, 0.0
  %v268 = vmax.f32 %v204, 0.0
  %v269 = vmax.f32 %v205, 0.0
  %v270 = vmax.f32 %v206, 0.0
  %v271 = vmax.f32 %v207, 0.0
  %v272 = vmax.f32 %v208, 0.0
  %v273 = vmax.f32 %v209, 0.0
  %v274 = vmax.f32 %v210, 0.0
  %v275 = vmax.f32 %v211, 0.0
  %v276 = vmax.f32 %v212, 0.0
  %v277 = vmax.f32 %v213, 0.0
  %v278 = vmax.f32 %v214, 0.0
  %v279 = vmax.f32 %v215, 0.0
  %v280 = vmax.f32 %v216, 0.0
  %v281 = vmax.f32 %v217, 0.0
  %v282 = vmax.f32 %v218, 0.0
  %v283 = vmax.f32 %v219, 0.0
  %284 = vst [vmem:[%s3] sm:$0xff] %v220
  %285 = vst [vmem:[%s3 + $0x8] sm:$0xff] %v221
  %286 = vst [vmem:[%s3 + $0x10] sm:$0xff] %v222
  %287 = vst [vmem:[%s3 + $0x18] sm:$0xff] %v223
  %288 = vst [vmem:[%s3 + $0x20] sm:$0xff] %v224
  %289 = vst [vmem:[%s3 + $0x28] sm:$0xff] %v225
  %290 = vst [vmem:[%s3 + $0x30] sm:$0xff] %v226
  %291 = vst [vmem:[%s3 + $0x38] sm:$0xff] %v227
  %292 = vst [vmem:[%s3 + $0x40] sm:$0xff] %v228
  %293 = vst [vmem:[%s3 + $0x48] sm:$0xff] %v229
  %294 = vst [vmem:[%s3 + $0x50] sm:$0xff] %v230
  %295 = vst [vmem:[%s3 + $0x58] sm:$0xff] %v231
  %296 = vst [vmem:[%s3 + $0x60] sm:$0xff] %v232
  %297 = vst [vmem:[%s3 + $0x68] sm:$0xff] %v233
  %298 = vst [vmem:[%s3 + $0x70] sm:$0xff] %v234
  %299 = vst [vmem:[%s3 + $0x78] sm:$0xff] %v235
  %300 = vst [vmem:[%s3 + $0x80] sm:$0xff] %v236
  %301 = vst [vmem:[%s3 + $0x88] sm:$0xff] %v237
  %302 = vst [vmem:[%s3 + $0x90] sm:$0xff] %v238
  %303 = vst [vmem:[%s3 + $0x98] sm:$0xff] %v239
  %304 = vst [vmem:[%s3 + $0xa0] sm:$0xff] %v240
  %305 = vst [vmem:[%s3 + $0xa8] sm:$0xff] %v241
  %306 = vst [vmem:[%s3 + $0xb0] sm:$0xff] %v242
  %307 = vst [vmem:[%s3 + $0xb8] sm:$0xff] %v243
  %308 = vst [vmem:[%s3 + $0xc0] sm:$0xff] %v244
  %309 = vst [vmem:[%s3 + $0xc8] sm:$0xff] %v245
  %310 = vst [vmem:[%s3 + $0xd0] sm:$0xff] %v246
  %311 = vst [vmem:[%s3 + $0xd8] sm:$0xff] %v247
  %312 = vst [vmem:[%s3 + $0xe0] sm:$0xff] %v248
  %313 = vst [vmem:[%s3 + $0xe8] sm:$0xff] %v249
  %314 = vst [vmem:[%s3 + $0xf0] sm:$0xff] %v250
  %315 = vst [vmem:[%s3 + $0xf8] sm:$0xff] %v251
  %316 = vst [vmem:[%s3 + $0x100] sm:$0xff] %v252
  %317 = vst [vmem:[%s3 + $0x108] sm:$0xff] %v253
  %318 = vst [vmem:[%s3 + $0x110] sm:$0xff] %v254
  %319 = vst [vmem:[%s3 + $0x118] sm:$0xff] %v255
  %320 = vst [vmem:[%s3 + $0x120] sm:$0xff] %v256
  %321 = vst [vmem:[%s3 + $0x128] sm:$0xff] %v257
  %322 = vst [vmem:[%s3 + $0x130] sm:$0xff] %v258
  %323 = vst [vmem:[%s3 + $0x138] sm:$0xff] %v259
  %324 = vst [vmem:[%s3 + $0x140] sm:$0xff] %v260
  %325 = vst [vmem:[%s3 + $0x148] sm:$0xff] %v261
  %326 = vst [vmem:[%s3 + $0x150] sm:$0xff] %v262
  %327 = vst [vmem:[%s3 + $0x158] sm:$0xff] %v263
  %328 = vst [vmem:[%s3 + $0x160] sm:$0xff] %v264
  %329 = vst [vmem:[%s3 + $0x168] sm:$0xff] %v265
  %330 = vst [vmem:[%s3 + $0x170] sm:$0xff] %v266
  %331 = vst [vmem:[%s3 + $0x178] sm:$0xff] %v267
  %332 = vst [vmem:[%s3 + $0x180] sm:$0xff] %v268
  %333 = vst [vmem:[%s3 + $0x188] sm:$0xff] %v269
  %334 = vst [vmem:[%s3 + $0x190] sm:$0xff] %v270
  %335 = vst [vmem:[%s3 + $0x198] sm:$0xff] %v271
  %336 = vst [vmem:[%s3 + $0x1a0] sm:$0xff] %v272
  %337 = vst [vmem:[%s3 + $0x1a8] sm:$0xff] %v273
  %338 = vst [vmem:[%s3 + $0x1b0] sm:$0xff] %v274
  %339 = vst [vmem:[%s3 + $0x1b8] sm:$0xff] %v275
  %340 = vst [vmem:[%s3 + $0x1c0] sm:$0xff] %v276
  %341 = vst [vmem:[%s3 + $0x1c8] sm:$0xff] %v277
  %342 = vst [vmem:[%s3 + $0x1d0] sm:$0xff] %v278
  %343 = vst [vmem:[%s3 + $0x1d8] sm:$0xff] %v279
  %344 = vst [vmem:[%s3 + $0x1e0] sm:$0xff] %v280
  %345 = vst [vmem:[%s3 + $0x1e8] sm:$0xff] %v281
  %346 = vst [vmem:[%s3 + $0x1f0] sm:$0xff] %v282
  %347 = vst [vmem:[%s3 + $0x1f8] sm:$0xff] %v283
  // Predicated region
  $region14: #{double_conv_forward.5} parent=0 // pred_check
    _
  $region15: #{double_conv_forward.5} parent=0 // pred_check_branch
    %349 = sbr.rel (0) target = $region17
  $region16: #{double_conv_forward.5} parent=0 // pred_region
    _
  $region17: #{double_conv_forward.5} parent=0 // pred_fallthru
    _
  // Predicated region
  $region18: #{double_conv_forward.5} parent=0 // pred_check
    _
  $region19: #{double_conv_forward.5} parent=0 // pred_check_branch
    %351 = sbr.rel (0) target = $region21
  $region20: #{double_conv_forward.5} parent=0 // pred_region
    _
  $region21: #{double_conv_forward.5} parent=0 // pred_fallthru
    _

// kernel: double_conv_forward.4
$region0: #{double_conv_forward.4}
  #allocation0 [shape = 'u32[]', space=smem, size = 0x4, offset = 0x4, fixed_abs, tag = 'smem constant byte address 0x4 - core index']
  #allocation1 [shape = 'u32[144,128]{1,0:T(1,128)}', space=vmem, size = 0x12000, scoped, tag = 'internal scratch']
  #allocation2 [shape = 'f32[18,18,128]{2,1,0:T(8,128)}', space=vmem, size = 0x36000, scoped, tag = 'scratch operand']
  %s0 = inlined_call_operand.vmem [shape: f32[2,16,16,128], index: 0, kind: input, shape index: {}]
  %s1 = inlined_call_operand.vmem [shape: f32[9,128,128], index: 1, kind: input, shape index: {}]
  %s2 = inlined_call_operand.vmem [shape: f32[1,1,128], index: 2, kind: input, shape index: {}]
  %s3 = inlined_call_operand.vmem [shape: f32[1,1,128], index: 3, kind: input, shape index: {}]
  %s4 = inlined_call_operand.vmem [shape: f32[2,256,128], index: 4, kind: output, shape index: {0}]
  %s5 = inlined_call_operand.vmem [shape: f32[16,128], index: 5, kind: output, shape index: {1}]
  %6 = xla_tuple %s4, %s5
  %s7 = sld [smem:[#allocation0]]
  $region57: #{double_conv_forward.4} parent=0
    _
  %s9 = ssub.s32 1, %s7
  %s10 = scalar_select 0, %s9, %s7
  loop: start=0, step=1, limit=4
  $region2: #{double_conv_forward.4} parent=0 // loop_pre_header
    _
  $region3: #{double_conv_forward.4} parent=0 // loop_header
    %s12 = sphi 0, %s16
    %p13 = scmp.ge.s32.totalorder %s12, 4
    %s22 = sphi 0, %s24
    %s25 = sphi 0, %s22
    %s26 = sphi 0, %s25
    %s42 = sphi 0, %s26
    %s46 = sphi 0, %s46
    %s48 = sphi 0, %s46
    %s49 = sphi 0, %s48
    %s63 = sphi 0, %s49
    %s67 = sphi 0, %s67
    %s69 = sphi 0, %s67
    %s70 = sphi 0, %s69
    %s84 = sphi 0, %s70
    %s88 = sphi 0, %s88
    %s90 = sphi 0, %s88
    %s91 = sphi 0, %s90
    %s105 = sphi 0, %s91
    %s111 = sphi 0, %s113
    %s114 = sphi 0, %s111
    %s115 = sphi 0, %s114
    %s131 = sphi 0, %s115
    %s137 = sphi 0, %s139
    %s140 = sphi 0, %s137
    %s141 = sphi 0, %s140
    %s157 = sphi 0, %s141
  $region4: #{double_conv_forward.4} parent=0 // loop_header_branch
    %15 = sbr.rel (%p13) target = $region8
  $region5: #{double_conv_forward.4} parent=0 // loop_body
    %s17 = ssub.s32 %s12, 1
    %s18 = ssub.s32 %s12, 2
    %s19 = sadd.s32 %s12, 1
    %s20 = ssub.s32 %s12, %s19
    %p21 = scmp.eq.s32.totalorder %s20, 0
    %s23 = sadd.s32 %s22, 1
    %s24 = scalar_select %p21, %s22, %s23
    %p27 = pneg %p21
    %p28 = scmp.eq.s32.totalorder %s12, 1
    %p29 = por %p27, %p28
    %p30 = scmp.ne.s32.totalorder %s22, %s25
    %p31 = scmp.eq.s32.totalorder %s12, 0
    %p32 = por %p30, %p31
    %p33 = scmp.ne.s32.totalorder %s22, %s25
    %p34 = scmp.eq.s32.totalorder %s17, 1
    %p35 = por %p33, %p34
    %p36 = scmp.ne.s32.totalorder %s25, %s26
    %p37 = scmp.eq.s32.totalorder %s17, 0
    %p38 = por %p36, %p37
    %p39 = scmp.ne.s32.totalorder %s25, %s26
    %p40 = scmp.eq.s32.totalorder %s18, 1
    %p41 = por %p39, %p40
    %p43 = scmp.ne.s32.totalorder %s26, %s42
    %p44 = scmp.eq.s32.totalorder %s18, 0
    %p45 = por %p43, %p44
    %s47 = sadd.s32 %s46, 1
    %p50 = scmp.eq.s32.totalorder %s12, 1
    %p51 = scmp.ne.s32.totalorder %s46, %s48
    %p52 = scmp.eq.s32.totalorder %s12, 0
    %p53 = por %p51, %p52
    %p54 = scmp.ne.s32.totalorder %s46, %s48
    %p55 = scmp.eq.s32.totalorder %s17, 1
    %p56 = por %p54, %p55
    %p57 = scmp.ne.s32.totalorder %s48, %s49
    %p58 = scmp.eq.s32.totalorder %s17, 0
    %p59 = por %p57, %p58
    %p60 = scmp.ne.s32.totalorder %s48, %s49
    %p61 = scmp.eq.s32.totalorder %s18, 1
    %p62 = por %p60, %p61
    %p64 = scmp.ne.s32.totalorder %s49, %s63
    %p65 = scmp.eq.s32.totalorder %s18, 0
    %p66 = por %p64, %p65
    %s68 = sadd.s32 %s67, 1
    %p71 = scmp.eq.s32.totalorder %s12, 1
    %p72 = scmp.ne.s32.totalorder %s67, %s69
    %p73 = scmp.eq.s32.totalorder %s12, 0
    %p74 = por %p72, %p73
    %p75 = scmp.ne.s32.totalorder %s67, %s69
    %p76 = scmp.eq.s32.totalorder %s17, 1
    %p77 = por %p75, %p76
    %p78 = scmp.ne.s32.totalorder %s69, %s70
    %p79 = scmp.eq.s32.totalorder %s17, 0
    %p80 = por %p78, %p79
    %p81 = scmp.ne.s32.totalorder %s69, %s70
    %p82 = scmp.eq.s32.totalorder %s18, 1
    %p83 = por %p81, %p82
    %p85 = scmp.ne.s32.totalorder %s70, %s84
    %p86 = scmp.eq.s32.totalorder %s18, 0
    %p87 = por %p85, %p86
    %s89 = sadd.s32 %s88, 1
    %p92 = scmp.eq.s32.totalorder %s12, 1
    %p93 = scmp.ne.s32.totalorder %s88, %s90
    %p94 = scmp.eq.s32.totalorder %s12, 0
    %p95 = por %p93, %p94
    %p96 = scmp.ne.s32.totalorder %s88, %s90
    %p97 = scmp.eq.s32.totalorder %s17, 1
    %p98 = por %p96, %p97
    %p99 = scmp.ne.s32.totalorder %s90, %s91
    %p100 = scmp.eq.s32.totalorder %s17, 0
    %p101 = por %p99, %p100
    %p102 = scmp.ne.s32.totalorder %s90, %s91
    %p103 = scmp.eq.s32.totalorder %s18, 1
    %p104 = por %p102, %p103
    %p106 = scmp.ne.s32.totalorder %s91, %s105
    %p107 = scmp.eq.s32.totalorder %s18, 0
    %p108 = por %p106, %p107
    %s109 = ssub.s32 %s12, %s19
    %p110 = scmp.eq.s32.totalorder %s109, 0
    %s112 = sadd.s32 %s111, 1
    %s113 = scalar_select %p110, %s111, %s112
    %p116 = pneg %p110
    %p117 = scmp.eq.s32.totalorder %s12, 1
    %p118 = por %p116, %p117
    %p119 = scmp.ne.s32.totalorder %s111, %s114
    %p120 = scmp.eq.s32.totalorder %s12, 0
    %p121 = por %p119, %p120
    %p122 = scmp.ne.s32.totalorder %s111, %s114
    %p123 = scmp.eq.s32.totalorder %s17, 1
    %p124 = por %p122, %p123
    %p125 = scmp.ne.s32.totalorder %s114, %s115
    %p126 = scmp.eq.s32.totalorder %s17, 0
    %p127 = por %p125, %p126
    %p128 = scmp.ne.s32.totalorder %s114, %s115
    %p129 = scmp.eq.s32.totalorder %s18, 1
    %p130 = por %p128, %p129
    %p132 = scmp.ne.s32.totalorder %s115, %s131
    %p133 = scmp.eq.s32.totalorder %s18, 0
    %p134 = por %p132, %p133
    %s135 = ssub.s32 %s12, %s19
    %p136 = scmp.eq.s32.totalorder %s135, 0
    %s138 = sadd.s32 %s137, 1
    %s139 = scalar_select %p136, %s137, %s138
    %p142 = pneg %p136
    %p143 = scmp.eq.s32.totalorder %s12, 1
    %p144 = por %p142, %p143
    %p145 = scmp.ne.s32.totalorder %s137, %s140
    %p146 = scmp.eq.s32.totalorder %s12, 0
    %p147 = por %p145, %p146
    %p148 = scmp.ne.s32.totalorder %s137, %s140
    %p149 = scmp.eq.s32.totalorder %s17, 1
    %p150 = por %p148, %p149
    %p151 = scmp.ne.s32.totalorder %s140, %s141
    %p152 = scmp.eq.s32.totalorder %s17, 0
    %p153 = por %p151, %p152
    %p154 = scmp.ne.s32.totalorder %s140, %s141
    %p155 = scmp.eq.s32.totalorder %s18, 1
    %p156 = por %p154, %p155
    %p158 = scmp.ne.s32.totalorder %s141, %s157
    %p159 = scmp.eq.s32.totalorder %s18, 0
    %p160 = por %p158, %p159
    %p161 = scmp.le.s32.totalorder 1, %s12
    %p162 = scmp.lt.s32.totalorder %s12, 3
    %p163 = pnand %p161, %p162
    %p164 = pneg %p163
    // Predicated region
    $region9: #{double_conv_forward.4} parent=5 // pred_check
      _
    $region10: #{double_conv_forward.4} parent=5 // pred_check_branch
      %166 = sbr.rel (%p163) target = $region12
    $region11: #{double_conv_forward.4} parent=5 // pred_region
      %s167 = ssub.s32 %s12, 1
      // Predicated region
      $region13: #{double_conv_forward.4} parent=11 // pred_check
        %p168 = pneg %p59
      $region14: #{double_conv_forward.4} parent=11 // pred_check_branch
        %170 = sbr.rel (%p168) target = $region16
      $region15: #{double_conv_forward.4} parent=11 // pred_region
        _
      $region16: #{double_conv_forward.4} parent=11 // pred_fallthru
        _
      // Predicated region
      $region17: #{double_conv_forward.4} parent=11 // pred_check
        %p171 = pneg %p80
      $region18: #{double_conv_forward.4} parent=11 // pred_check_branch
        %173 = sbr.rel (%p171) target = $region20
      $region19: #{double_conv_forward.4} parent=11 // pred_region
        _
      $region20: #{double_conv_forward.4} parent=11 // pred_fallthru
        _
      // Predicated region
      $region21: #{double_conv_forward.4} parent=11 // pred_check
        %p174 = pneg %p101
      $region22: #{double_conv_forward.4} parent=11 // pred_check_branch
        %176 = sbr.rel (%p174) target = $region24
      $region23: #{double_conv_forward.4} parent=11 // pred_region
        _
      $region24: #{double_conv_forward.4} parent=11 // pred_fallthru
        _
    $region12: #{double_conv_forward.4} parent=5 // pred_fallthru
      _
    %p177 = scmp.lt.s32.totalorder %s12, 2
    // Predicated region
    $region25: #{double_conv_forward.4} parent=5 // pred_check
      %p178 = pneg %p177
    $region26: #{double_conv_forward.4} parent=5 // pred_check_branch
      %180 = sbr.rel (%p178) target = $region28
    $region27: #{double_conv_forward.4} parent=5 // pred_region
      // Predicated region
      $region29: #{double_conv_forward.4} parent=27 // pred_check
        %p181 = pneg %p32
      $region30: #{double_conv_forward.4} parent=27 // pred_check_branch
        %183 = sbr.rel (%p181) target = $region32
      $region31: #{double_conv_forward.4} parent=27 // pred_region
        %p184 = scmp.lt.s32.totalorder %s12, 1
        %s185 = scalar_select %p184, %s12, 1
        %s186 = smul.addr %s185, 32
        %s187 = smul.addr %s186, 8
        %s188 = scalar_lea.vmem %s0, %s187
      $region32: #{double_conv_forward.4} parent=27 // pred_fallthru
        _
    $region28: #{double_conv_forward.4} parent=5 // pred_fallthru
      _
    %p189 = scmp.le.s32.totalorder 1, %s12
    %p190 = scmp.lt.s32.totalorder %s12, 3
    %p191 = pnand %p189, %p190
    %p192 = pneg %p191
    // Predicated region
    $region33: #{double_conv_forward.4} parent=5 // pred_check
      _
    $region34: #{double_conv_forward.4} parent=5 // pred_check_branch
      %194 = sbr.rel (%p191) target = $region36
    $region35: #{double_conv_forward.4} parent=5 // pred_region
      %s195 = ssub.s32 %s12, 1
      %p196 = scmp.lt.s32.totalorder %s17, 1
      %s197 = scalar_select %p196, %s17, 1
      %s198 = smul.addr %s197, 32
      %s199 = smul.addr %s198, 8
      %s200 = scalar_lea.vmem %s0, %s199
      %p201 = pneg %p38
      %p202 = pneg %p35
      %p203 = pneg %p59
      %p204 = pneg %p56
      %p205 = pneg %p80
      %p206 = pneg %p77
      %p207 = pneg %p101
      %p208 = pneg %p98
      %p209 = pneg %p127
      %p210 = pneg %p124
      %p211 = scmp.lt.s32.totalorder %s17, 1
      %s212 = scalar_select %p211, %s17, 1
      %s213 = smul.addr %s212, 32
      %s214 = smul.addr %s213, 8
      %s215 = scalar_lea.vmem %s4, %s214
      %p216 = pneg %p153
      %p217 = pneg %p150
      %p218 = scmp.lt.s32.totalorder %s17, 1
      %s219 = scalar_select %p218, %s17, 1
      %s220 = smul.addr %s219, 8
      %s221 = scalar_lea.vmem %s5, %s220
      %p222 = scmp.lt.s32.totalorder %s17, 1
      %s223 = scalar_select %p222, %s17, 1
      %s224 = smul.addr %s223, 32
      %s225 = smul.addr %s224, 8
      %s226 = scalar_lea.vmem %s0, %s225
      %p227 = scmp.lt.s32.totalorder %s17, 1
      %s228 = scalar_select %p227, %s17, 1
      %s229 = smul.addr %s228, 32
      %s230 = smul.addr %s229, 8
      %s231 = scalar_lea.vmem %s4, %s230
      %p232 = scmp.lt.s32.totalorder %s17, 1
      %s233 = scalar_select %p232, %s17, 1
      %s234 = smul.addr %s233, 8
      %s235 = scalar_lea.vmem %s5, %s234
      %v236 = vld [vmem:[%s226] sm:$0xff]
      %v237 = vld [vmem:[%s226 + $0x8] sm:$0xff]
      %v238 = vld [vmem:[%s226 + $0x10] sm:$0xff]
      %v239 = vld [vmem:[%s226 + $0x18] sm:$0xff]
      %v240 = vld [vmem:[%s226 + $0x20] sm:$0xff]
      %v241 = vld [vmem:[%s226 + $0x28] sm:$0xff]
      %v242 = vld [vmem:[%s226 + $0x30] sm:$0xff]
      %v243 = vld [vmem:[%s226 + $0x38] sm:$0xff]
      %v244 = vld [vmem:[%s226 + $0x40] sm:$0xff]
      %v245 = vld [vmem:[%s226 + $0x48] sm:$0xff]
      %v246 = vld [vmem:[%s226 + $0x50] sm:$0xff]
      %v247 = vld [vmem:[%s226 + $0x58] sm:$0xff]
      %v248 = vld [vmem:[%s226 + $0x60] sm:$0xff]
      %v249 = vld [vmem:[%s226 + $0x68] sm:$0xff]
      %v250 = vld [vmem:[%s226 + $0x70] sm:$0xff]
      %v251 = vld [vmem:[%s226 + $0x78] sm:$0xff]
      %v252 = vld [vmem:[%s226 + $0x80] sm:$0xff]
      %v253 = vld [vmem:[%s226 + $0x88] sm:$0xff]
      %v254 = vld [vmem:[%s226 + $0x90] sm:$0xff]
      %v255 = vld [vmem:[%s226 + $0x98] sm:$0xff]
      %v256 = vld [vmem:[%s226 + $0xa0] sm:$0xff]
      %v257 = vld [vmem:[%s226 + $0xa8] sm:$0xff]
      %v258 = vld [vmem:[%s226 + $0xb0] sm:$0xff]
      %v259 = vld [vmem:[%s226 + $0xb8] sm:$0xff]
      %v260 = vld [vmem:[%s226 + $0xc0] sm:$0xff]
      %v261 = vld [vmem:[%s226 + $0xc8] sm:$0xff]
      %v262 = vld [vmem:[%s226 + $0xd0] sm:$0xff]
      %v263 = vld [vmem:[%s226 + $0xd8] sm:$0xff]
      %v264 = vld [vmem:[%s226 + $0xe0] sm:$0xff]
      %v265 = vld [vmem:[%s226 + $0xe8] sm:$0xff]
      %v266 = vld [vmem:[%s226 + $0xf0] sm:$0xff]
      %v267 = vld [vmem:[%s226 + $0xf8] sm:$0xff]
      %v268 = vld [vmem:[%s2] sm:$0x1]
      %v270 = vlaneseq
      %v271 = vshrl.u32 %v270, 7
      %v272 = vsub.s32 0, %v271
      %v273 = vrot.slane %v268, %v272
      %v275 = vmul.f32 %v236, %v273
      %v276 = vmul.f32 %v237, %v273
      %v277 = vmul.f32 %v238, %v273
      %v278 = vmul.f32 %v239, %v273
      %v279 = vmul.f32 %v240, %v273
      %v280 = vmul.f32 %v241, %v273
      %v281 = vmul.f32 %v242, %v273
      %v282 = vmul.f32 %v243, %v273
      %v283 = vmul.f32 %v244, %v273
      %v284 = vmul.f32 %v245, %v273
      %v285 = vmul.f32 %v246, %v273
      %v286 = vmul.f32 %v247, %v273
      %v287 = vmul.f32 %v248, %v273
      %v288 = vmul.f32 %v249, %v273
      %v289 = vmul.f32 %v250, %v273
      %v290 = vmul.f32 %v251, %v273
      %v291 = vmul.f32 %v252, %v273
      %v292 = vmul.f32 %v253, %v273
      %v293 = vmul.f32 %v254, %v273
      %v294 = vmul.f32 %v255, %v273
      %v295 = vmul.f32 %v256, %v273
      %v296 = vmul.f32 %v257, %v273
      %v297 = vmul.f32 %v258, %v273
      %v298 = vmul.f32 %v259, %v273
      %v299 = vmul.f32 %v260, %v273
      %v300 = vmul.f32 %v261, %v273
      %v301 = vmul.f32 %v262, %v273
      %v302 = vmul.f32 %v263, %v273
      %v303 = vmul.f32 %v264, %v273
      %v304 = vmul.f32 %v265, %v273
      %v305 = vmul.f32 %v266, %v273
      %v306 = vmul.f32 %v267, %v273
      %v307 = vld [vmem:[%s3] sm:$0x1]
      %v309 = vlaneseq
      %v310 = vshrl.u32 %v309, 7
      %v311 = vsub.s32 0, %v310
      %v312 = vrot.slane %v307, %v311
      %v314 = vadd.f32 %v275, %v312
      %v315 = vadd.f32 %v276, %v312
      %v316 = vadd.f32 %v277, %v312
      %v317 = vadd.f32 %v278, %v312
      %v318 = vadd.f32 %v279, %v312
      %v319 = vadd.f32 %v280, %v312
      %v320 = vadd.f32 %v281, %v312
      %v321 = vadd.f32 %v282, %v312
      %v322 = vadd.f32 %v283, %v312
      %v323 = vadd.f32 %v284, %v312
      %v324 = vadd.f32 %v285, %v312
      %v325 = vadd.f32 %v286, %v312
      %v326 = vadd.f32 %v287, %v312
      %v327 = vadd.f32 %v288, %v312
      %v328 = vadd.f32 %v289, %v312
      %v329 = vadd.f32 %v290, %v312
      %v330 = vadd.f32 %v291, %v312
      %v331 = vadd.f32 %v292, %v312
      %v332 = vadd.f32 %v293, %v312
      %v333 = vadd.f32 %v294, %v312
      %v334 = vadd.f32 %v295, %v312
      %v335 = vadd.f32 %v296, %v312
      %v336 = vadd.f32 %v297, %v312
      %v337 = vadd.f32 %v298, %v312
      %v338 = vadd.f32 %v299, %v312
      %v339 = vadd.f32 %v300, %v312
      %v340 = vadd.f32 %v301, %v312
      %v341 = vadd.f32 %v302, %v312
      %v342 = vadd.f32 %v303, %v312
      %v343 = vadd.f32 %v304, %v312
      %v344 = vadd.f32 %v305, %v312
      %v345 = vadd.f32 %v306, %v312
      %v346 = vmax.f32 %v314, 0.0
      %v347 = vmax.f32 %v315, 0.0
      %v348 = vmax.f32 %v316, 0.0
      %v349 = vmax.f32 %v317, 0.0
      %v350 = vmax.f32 %v318, 0.0
      %v351 = vmax.f32 %v319, 0.0
      %v352 = vmax.f32 %v320, 0.0
      %v353 = vmax.f32 %v321, 0.0
      %v354 = vmax.f32 %v322, 0.0
      %v355 = vmax.f32 %v323, 0.0
      %v356 = vmax.f32 %v324, 0.0
      %v357 = vmax.f32 %v325, 0.0
      %v358 = vmax.f32 %v326, 0.0
      %v359 = vmax.f32 %v327, 0.0
      %v360 = vmax.f32 %v328, 0.0
      %v361 = vmax.f32 %v329, 0.0
      %v362 = vmax.f32 %v330, 0.0
      %v363 = vmax.f32 %v331, 0.0
      %v364 = vmax.f32 %v332, 0.0
      %v365 = vmax.f32 %v333, 0.0
      %v366 = vmax.f32 %v334, 0.0
      %v367 = vmax.f32 %v335, 0.0
      %v368 = vmax.f32 %v336, 0.0
      %v369 = vmax.f32 %v337, 0.0
      %v370 = vmax.f32 %v338, 0.0
      %v371 = vmax.f32 %v339, 0.0
      %v372 = vmax.f32 %v340, 0.0
      %v373 = vmax.f32 %v341, 0.0
      %v374 = vmax.f32 %v342, 0.0
      %v375 = vmax.f32 %v343, 0.0
      %v376 = vmax.f32 %v344, 0.0
      %v377 = vmax.f32 %v345, 0.0
      %378 = vst [vmem:[#allocation2] sm:$0xff] 0.0
      %379 = vst [vmem:[#allocation2 + $0x8] sm:$0xff] 0.0
      %380 = vst [vmem:[#allocation2 + $0x10] sm:$0x3] 0.0
      %s381 = scalar_lea.vmem [#allocation2], 408
      %382 = vst [vmem:[%s381] sm:$0xff] 0.0
      %383 = vst [vmem:[%s381 + $0x8] sm:$0xff] 0.0
      %384 = vst [vmem:[%s381 + $0x10] sm:$0x3] 0.0
      %385 = vst [vmem:[#allocation2] sm:$0x1] 0.0
      %386 = vst [vmem:[#allocation2 + $0x18] sm:$0x1] 0.0
      %387 = vst [vmem:[#allocation2 + $0x30] sm:$0x1] 0.0
      %388 = vst [vmem:[#allocation2 + $0x48] sm:$0x1] 0.0
      %389 = vst [vmem:[#allocation2 + $0x60] sm:$0x1] 0.0
      %390 = vst [vmem:[#allocation2 + $0x78] sm:$0x1] 0.0
      %391 = vst [vmem:[#allocation2 + $0x90] sm:$0x1] 0.0
      %392 = vst [vmem:[#allocation2 + $0xa8] sm:$0x1] 0.0
      %393 = vst [vmem:[#allocation2 + $0xc0] sm:$0x1] 0.0
      %394 = vst [vmem:[#allocation2 + $0xd8] sm:$0x1] 0.0
      %395 = vst [vmem:[#allocation2 + $0xf0] sm:$0x1] 0.0
      %396 = vst [vmem:[#allocation2 + $0x108] sm:$0x1] 0.0
      %397 = vst [vmem:[#allocation2 + $0x120] sm:$0x1] 0.0
      %398 = vst [vmem:[#allocation2 + $0x138] sm:$0x1] 0.0
      %399 = vst [vmem:[#allocation2 + $0x150] sm:$0x1] 0.0
      %400 = vst [vmem:[#allocation2 + $0x168] sm:$0x1] 0.0
      %401 = vst [vmem:[#allocation2 + $0x180] sm:$0x1] 0.0
      %402 = vst [vmem:[#allocation2 + $0x198] sm:$0x1] 0.0
      %403 = vst [vmem:[#allocation2 + $0x11] sm:$0x1] 0.0
      %404 = vst [vmem:[#allocation2 + $0x29] sm:$0x1] 0.0
      %405 = vst [vmem:[#allocation2 + $0x41] sm:$0x1] 0.0
      %406 = vst [vmem:[#allocation2 + $0x59] sm:$0x1] 0.0
      %407 = vst [vmem:[#allocation2 + $0x71] sm:$0x1] 0.0
      %408 = vst [vmem:[#allocation2 + $0x89] sm:$0x1] 0.0
      %409 = vst [vmem:[#allocation2 + $0xa1] sm:$0x1] 0.0
      %410 = vst [vmem:[#allocation2 + $0xb9] sm:$0x1] 0.0
      %411 = vst [vmem:[#allocation2 + $0xd1] sm:$0x1] 0.0
      %412 = vst [vmem:[#allocation2 + $0xe9] sm:$0x1] 0.0
      %413 = vst [vmem:[#allocation2 + $0x101] sm:$0x1] 0.0
      %414 = vst [vmem:[#allocation2 + $0x119] sm:$0x1] 0.0
      %415 = vst [vmem:[#allocation2 + $0x131] sm:$0x1] 0.0
      %416 = vst [vmem:[#allocation2 + $0x149] sm:$0x1] 0.0
      %417 = vst [vmem:[#allocation2 + $0x161] sm:$0x1] 0.0
      %418 = vst [vmem:[#allocation2 + $0x179] sm:$0x1] 0.0
      %419 = vst [vmem:[#allocation2 + $0x191] sm:$0x1] 0.0
      %420 = vst [vmem:[#allocation2 + $0x1a9] sm:$0x1] 0.0
      %s421 = scalar_lea.vmem [#allocation2], 24
      %422 = vst [vmem:[%s421 + $0x1] sm:$0xff] %v346
      %423 = vst [vmem:[%s421 + $0x9] sm:$0xff] %v347
      %424 = vst [vmem:[%s421 + $0x19] sm:$0xff] %v348
      %425 = vst [vmem:[%s421 + $0x21] sm:$0xff] %v349
      %426 = vst [vmem:[%s421 + $0x31] sm:$0xff] %v350
      %427 = vst [vmem:[%s421 + $0x39] sm:$0xff] %v351
      %428 = vst [vmem:[%s421 + $0x49] sm:$0xff] %v352
      %429 = vst [vmem:[%s421 + $0x51] sm:$0xff] %v353
      %430 = vst [vmem:[%s421 + $0x61] sm:$0xff] %v354
      %431 = vst [vmem:[%s421 + $0x69] sm:$0xff] %v355
      %432 = vst [vmem:[%s421 + $0x79] sm:$0xff] %v356
      %433 = vst [vmem:[%s421 + $0x81] sm:$0xff] %v357
      %434 = vst [vmem:[%s421 + $0x91] sm:$0xff] %v358
      %435 = vst [vmem:[%s421 + $0x99] sm:$0xff] %v359
      %436 = vst [vmem:[%s421 + $0xa9] sm:$0xff] %v360
      %437 = vst [vmem:[%s421 + $0xb1] sm:$0xff] %v361
      %438 = vst [vmem:[%s421 + $0xc1] sm:$0xff] %v362
      %439 = vst [vmem:[%s421 + $0xc9] sm:$0xff] %v363
      %440 = vst [vmem:[%s421 + $0xd9] sm:$0xff] %v364
      %441 = vst [vmem:[%s421 + $0xe1] sm:$0xff] %v365
      %442 = vst [vmem:[%s421 + $0xf1] sm:$0xff] %v366
      %443 = vst [vmem:[%s421 + $0xf9] sm:$0xff] %v367
      %444 = vst [vmem:[%s421 + $0x109] sm:$0xff] %v368
      %445 = vst [vmem:[%s421 + $0x111] sm:$0xff] %v369
      %446 = vst [vmem:[%s421 + $0x121] sm:$0xff] %v370
      %447 = vst [vmem:[%s421 + $0x129] sm:$0xff] %v371
      %448 = vst [vmem:[%s421 + $0x139] sm:$0xff] %v372
      %449 = vst [vmem:[%s421 + $0x141] sm:$0xff] %v373
      %450 = vst [vmem:[%s421 + $0x151] sm:$0xff] %v374
      %451 = vst [vmem:[%s421 + $0x159] sm:$0xff] %v375
      %452 = vst [vmem:[%s421 + $0x169] sm:$0xff] %v376
      %453 = vst [vmem:[%s421 + $0x171] sm:$0xff] %v377
      %v454 = vld [vmem:[#allocation2] sm:$0xff]
      %v455 = vld [vmem:[#allocation2 + $0x8] sm:$0xff]
      %v456 = vld [vmem:[#allocation2 + $0x18] sm:$0xff]
      %v457 = vld [vmem:[#allocation2 + $0x20] sm:$0xff]
      %v458 = vld [vmem:[#allocation2 + $0x30] sm:$0xff]
      %v459 = vld [vmem:[#allocation2 + $0x38] sm:$0xff]
      %v460 = vld [vmem:[#allocation2 + $0x48] sm:$0xff]
      %v461 = vld [vmem:[#allocation2 + $0x50] sm:$0xff]
      %v462 = vld [vmem:[#allocation2 + $0x60] sm:$0xff]
      %v463 = vld [vmem:[#allocation2 + $0x68] sm:$0xff]
      %v464 = vld [vmem:[#allocation2 + $0x78] sm:$0xff]
      %v465 = vld [vmem:[#allocation2 + $0x80] sm:$0xff]
      %v466 = vld [vmem:[#allocation2 + $0x90] sm:$0xff]
      %v467 = vld [vmem:[#allocation2 + $0x98] sm:$0xff]
      %v468 = vld [vmem:[#allocation2 + $0xa8] sm:$0xff]
      %v469 = vld [vmem:[#allocation2 + $0xb0] sm:$0xff]
      %v470 = vld [vmem:[#allocation2 + $0xc0] sm:$0xff]
      %v471 = vld [vmem:[#allocation2 + $0xc8] sm:$0xff]
      %v472 = vld [vmem:[#allocation2 + $0xd8] sm:$0xff]
      %v473 = vld [vmem:[#allocation2 + $0xe0] sm:$0xff]
      %v474 = vld [vmem:[#allocation2 + $0xf0] sm:$0xff]
      %v475 = vld [vmem:[#allocation2 + $0xf8] sm:$0xff]
      %v476 = vld [vmem:[#allocation2 + $0x108] sm:$0xff]
      %v477 = vld [vmem:[#allocation2 + $0x110] sm:$0xff]
      %v478 = vld [vmem:[#allocation2 + $0x120] sm:$0xff]
      %v479 = vld [vmem:[#allocation2 + $0x128] sm:$0xff]
      %v480 = vld [vmem:[#allocation2 + $0x138] sm:$0xff]
      %v481 = vld [vmem:[#allocation2 + $0x140] sm:$0xff]
      %v482 = vld [vmem:[#allocation2 + $0x150] sm:$0xff]
      %v483 = vld [vmem:[#allocation2 + $0x158] sm:$0xff]
      %v484 = vld [vmem:[#allocation2 + $0x168] sm:$0xff]
      %v485 = vld [vmem:[#allocation2 + $0x170] sm:$0xff]
      %v486 = vld [vmem:[#allocation2 + $0x180] sm:$0xff]
      %v487 = vld [vmem:[#allocation2 + $0x188] sm:$0xff]
      %v488 = vld [vmem:[#allocation2 + $0x198] sm:$0xff]
      %v489 = vld [vmem:[#allocation2 + $0x1a0] sm:$0xff]
      %v490 = vld [vmem:[#allocation2 + $0x1] sm:$0xff]
      %v491 = vld [vmem:[#allocation2 + $0x9] sm:$0xff]
      %v492 = vld [vmem:[#allocation2 + $0x19] sm:$0xff]
      %v493 = vld [vmem:[#allocation2 + $0x21] sm:$0xff]
      %v494 = vld [vmem:[#allocation2 + $0x31] sm:$0xff]
      %v495 = vld [vmem:[#allocation2 + $0x39] sm:$0xff]
      %v496 = vld [vmem:[#allocation2 + $0x49] sm:$0xff]
      %v497 = vld [vmem:[#allocation2 + $0x51] sm:$0xff]
      %v498 = vld [vmem:[#allocation2 + $0x61] sm:$0xff]
      %v499 = vld [vmem:[#allocation2 + $0x69] sm:$0xff]
      %v500 = vld [vmem:[#allocation2 + $0x79] sm:$0xff]
      %v501 = vld [vmem:[#allocation2 + $0x81] sm:$0xff]
      %v502 = vld [vmem:[#allocation2 + $0x91] sm:$0xff]
      %v503 = vld [vmem:[#allocation2 + $0x99] sm:$0xff]
      %v504 = vld [vmem:[#allocation2 + $0xa9] sm:$0xff]
      %v505 = vld [vmem:[#allocation2 + $0xb1] sm:$0xff]
      %v506 = vld [vmem:[#allocation2 + $0xc1] sm:$0xff]
      %v507 = vld [vmem:[#allocation2 + $0xc9] sm:$0xff]
      %v508 = vld [vmem:[#allocation2 + $0xd9] sm:$0xff]
      %v509 = vld [vmem:[#allocation2 + $0xe1] sm:$0xff]
      %v510 = vld [vmem:[#allocation2 + $0xf1] sm:$0xff]
      %v511 = vld [vmem:[#allocation2 + $0xf9] sm:$0xff]
      %v512 = vld [vmem:[#allocation2 + $0x109] sm:$0xff]
      %v513 = vld [vmem:[#allocation2 + $0x111] sm:$0xff]
      %v514 = vld [vmem:[#allocation2 + $0x121] sm:$0xff]
      %v515 = vld [vmem:[#allocation2 + $0x129] sm:$0xff]
      %v516 = vld [vmem:[#allocation2 + $0x139] sm:$0xff]
      %v517 = vld [vmem:[#allocation2 + $0x141] sm:$0xff]
      %v518 = vld [vmem:[#allocation2 + $0x151] sm:$0xff]
      %v519 = vld [vmem:[#allocation2 + $0x159] sm:$0xff]
      %v520 = vld [vmem:[#allocation2 + $0x169] sm:$0xff]
      %v521 = vld [vmem:[#allocation2 + $0x171] sm:$0xff]
      %v522 = vld [vmem:[#allocation2 + $0x181] sm:$0xff]
      %v523 = vld [vmem:[#allocation2 + $0x189] sm:$0xff]
      %v524 = vld [vmem:[#allocation2 + $0x199] sm:$0xff]
      %v525 = vld [vmem:[#allocation2 + $0x1a1] sm:$0xff]
      %v526 = vld [vmem:[#allocation2 + $0x2] sm:$0xff]
      %v527 = vld [vmem:[#allocation2 + $0xa] sm:$0xff]
      %v528 = vld [vmem:[#allocation2 + $0x1a] sm:$0xff]
      %v529 = vld [vmem:[#allocation2 + $0x22] sm:$0xff]
      %v530 = vld [vmem:[#allocation2 + $0x32] sm:$0xff]
      %v531 = vld [vmem:[#allocation2 + $0x3a] sm:$0xff]
      %v532 = vld [vmem:[#allocation2 + $0x4a] sm:$0xff]
      %v533 = vld [vmem:[#allocation2 + $0x52] sm:$0xff]
      %v534 = vld [vmem:[#allocation2 + $0x62] sm:$0xff]
      %v535 = vld [vmem:[#allocation2 + $0x6a] sm:$0xff]
      %v536 = vld [vmem:[#allocation2 + $0x7a] sm:$0xff]
      %v537 = vld [vmem:[#allocation2 + $0x82] sm:$0xff]
      %v538 = vld [vmem:[#allocation2 + $0x92] sm:$0xff]
      %v539 = vld [vmem:[#allocation2 + $0x9a] sm:$0xff]
      %v540 = vld [vmem:[#allocation2 + $0xaa] sm:$0xff]
      %v541 = vld [vmem:[#allocation2 + $0xb2] sm:$0xff]
      %v542 = vld [vmem:[#allocation2 + $0xc2] sm:$0xff]
      %v543 = vld [vmem:[#allocation2 + $0xca] sm:$0xff]
      %v544 = vld [vmem:[#allocation2 + $0xda] sm:$0xff]
      %v545 = vld [vmem:[#allocation2 + $0xe2] sm:$0xff]
      %v546 = vld [vmem:[#allocation2 + $0xf2] sm:$0xff]
      %v547 = vld [vmem:[#allocation2 + $0xfa] sm:$0xff]
      %v548 = vld [vmem:[#allocation2 + $0x10a] sm:$0xff]
      %v549 = vld [vmem:[#allocation2 + $0x112] sm:$0xff]
      %v550 = vld [vmem:[#allocation2 + $0x122] sm:$0xff]
      %v551 = vld [vmem:[#allocation2 + $0x12a] sm:$0xff]
      %v552 = vld [vmem:[#allocation2 + $0x13a] sm:$0xff]
      %v553 = vld [vmem:[#allocation2 + $0x142] sm:$0xff]
      %v554 = vld [vmem:[#allocation2 + $0x152] sm:$0xff]
      %v555 = vld [vmem:[#allocation2 + $0x15a] sm:$0xff]
      %v556 = vld [vmem:[#allocation2 + $0x16a] sm:$0xff]
      %v557 = vld [vmem:[#allocation2 + $0x172] sm:$0xff]
      %v558 = vld [vmem:[#allocation2 + $0x182] sm:$0xff]
      %v559 = vld [vmem:[#allocation2 + $0x18a] sm:$0xff]
      %v560 = vld [vmem:[#allocation2 + $0x19a] sm:$0xff]
      %v561 = vld [vmem:[#allocation2 + $0x1a2] sm:$0xff]
      %v562 = vld [vmem:[%s1] sm:$0xff]
      %v563 = vld [vmem:[%s1 + $0x8] sm:$0xff]
      %v564 = vld [vmem:[%s1 + $0x10] sm:$0xff]
      %v565 = vld [vmem:[%s1 + $0x18] sm:$0xff]
      %v566 = vld [vmem:[%s1 + $0x20] sm:$0xff]
      %v567 = vld [vmem:[%s1 + $0x28] sm:$0xff]
      %v568 = vld [vmem:[%s1 + $0x30] sm:$0xff]
      %v569 = vld [vmem:[%s1 + $0x38] sm:$0xff]
      %v570 = vld [vmem:[%s1 + $0x40] sm:$0xff]
      %v571 = vld [vmem:[%s1 + $0x48] sm:$0xff]
      %v572 = vld [vmem:[%s1 + $0x50] sm:$0xff]
      %v573 = vld [vmem:[%s1 + $0x58] sm:$0xff]
      %v574 = vld [vmem:[%s1 + $0x60] sm:$0xff]
      %v575 = vld [vmem:[%s1 + $0x68] sm:$0xff]
      %v576 = vld [vmem:[%s1 + $0x70] sm:$0xff]
      %v577 = vld [vmem:[%s1 + $0x78] sm:$0xff]
      %s578 = scalar_lea.vmem %s1, 128
      %v579 = vld [vmem:[%s578] sm:$0xff]
      %v580 = vld [vmem:[%s578 + $0x8] sm:$0xff]
      %v581 = vld [vmem:[%s578 + $0x10] sm:$0xff]
      %v582 = vld [vmem:[%s578 + $0x18] sm:$0xff]
      %v583 = vld [vmem:[%s578 + $0x20] sm:$0xff]
      %v584 = vld [vmem:[%s578 + $0x28] sm:$0xff]
      %v585 = vld [vmem:[%s578 + $0x30] sm:$0xff]
      %v586 = vld [vmem:[%s578 + $0x38] sm:$0xff]
      %v587 = vld [vmem:[%s578 + $0x40] sm:$0xff]
      %v588 = vld [vmem:[%s578 + $0x48] sm:$0xff]
      %v589 = vld [vmem:[%s578 + $0x50] sm:$0xff]
      %v590 = vld [vmem:[%s578 + $0x58] sm:$0xff]
      %v591 = vld [vmem:[%s578 + $0x60] sm:$0xff]
      %v592 = vld [vmem:[%s578 + $0x68] sm:$0xff]
      %v593 = vld [vmem:[%s578 + $0x70] sm:$0xff]
      %v594 = vld [vmem:[%s578 + $0x78] sm:$0xff]
      %595 = vmatprep.subr.mxu0 0.0
      %596 = vmatpush1.msra.mxu0 %v579
      %597 = vmatprep.subr.mxu0 0.0
      %598 = vmatpush1.msra.mxu0 %v580
      %599 = vmatprep.subr.mxu0 0.0
      %600 = vmatpush1.msra.mxu0 %v581
      %601 = vmatprep.subr.mxu0 0.0
      %602 = vmatpush1.msra.mxu0 %v582
      %603 = vmatprep.subr.mxu0 0.0
      %604 = vmatpush1.msra.mxu0 %v583
      %605 = vmatprep.subr.mxu0 0.0
      %606 = vmatpush1.msra.mxu0 %v584
      %607 = vmatprep.subr.mxu0 0.0
      %608 = vmatpush1.msra.mxu0 %v585
      %609 = vmatprep.subr.mxu0 0.0
      %610 = vmatpush1.msra.mxu0 %v586
      %611 = vmatprep.subr.mxu0 0.0
      %612 = vmatpush1.msra.mxu0 %v587
      %613 = vmatprep.subr.mxu0 0.0
      %614 = vmatpush1.msra.mxu0 %v588
      %615 = vmatprep.subr.mxu0 0.0
      %616 = vmatpush1.msra.mxu0 %v589
      %617 = vmatprep.subr.mxu0 0.0
      %618 = vmatpush1.msra.mxu0 %v590
      %619 = vmatprep.subr.mxu0 0.0
      %620 = vmatpush1.msra.mxu0 %v591
      %621 = vmatprep.subr.mxu0 0.0
      %622 = vmatpush1.msra.mxu0 %v592
      %623 = vmatprep.subr.mxu0 0.0
      %624 = vmatpush1.msra.mxu0 %v593
      %625 = vmatprep.subr.mxu0 0.0
      %626 = vmatpush1.msra.mxu0 %v594
      %627 = vmatprep.subr.mxu0 0.0
      %628 = vmatpush1.msra.mxu0 0.0
      %629 = vmatprep.subr.mxu0 0.0
      %630 = vmatpush1.msra.mxu0 0.0
      %631 = vmatprep.subr.mxu0 0.0
      %632 = vmatpush1.msra.mxu0 0.0
      %633 = vmatprep.subr.mxu0 0.0
      %634 = vmatpush1.msra.mxu0 0.0
      %635 = vmatprep.subr.mxu0 0.0
      %636 = vmatpush1.msra.mxu0 0.0
      %637 = vmatprep.subr.mxu0 0.0
      %638 = vmatpush1.msra.mxu0 0.0
      %639 = vmatprep.subr.mxu0 0.0
      %640 = vmatpush1.msra.mxu0 0.0
      %641 = vmatprep.subr.mxu0 0.0
      %642 = vmatpush1.msra.mxu0 0.0
      %643 = vmatprep.subr.mxu0 0.0
      %644 = vmatpush1.msra.mxu0 0.0
      %645 = vmatprep.subr.mxu0 0.0
      %646 = vmatpush1.msra.mxu0 0.0
      %647 = vmatprep.subr.mxu0 0.0
      %648 = vmatpush1.msra.mxu0 0.0
      %649 = vmatprep.subr.mxu0 0.0
      %650 = vmatpush1.msra.mxu0 0.0
      %651 = vmatprep.subr.mxu0 0.0
      %652 = vmatpush1.msra.mxu0 0.0
      %653 = vmatprep.subr.mxu0 0.0
      %654 = vmatpush1.msra.mxu0 0.0
      %655 = vmatprep.subr.mxu0 0.0
      %656 = vmatpush1.msra.mxu0 0.0
      %657 = vmatprep.subr.mxu0 0.0
      %658 = vmatpush1.msra.mxu0 0.0
      %659 = vmatprep.mubr.f32.mxu0 0.0
      %660 = vmatmul.mubr.f32.gmra.mrb[0].mxu0 %v490
      %v661 = vpop.f32.mrb[0].mxu0
      %v662 = vadd.f32 0.0, %v661
      %v663 = vpop.f32.mrb[0].mxu0
      %664 = vmatprep.mubr.f32.mxu0 0.0
      %665 = vmatmul.mubr.f32.gmra.mrb[0].mxu0 %v491
      %v666 = vpop.f32.mrb[0].mxu0
      %v667 = vadd.f32 0.0, %v666
      %v668 = vpop.f32.mrb[0].mxu0
      %669 = vmatprep.mubr.f32.mxu0 0.0
      %670 = vmatmul.mubr.f32.gmra.mrb[0].mxu0 %v492
      %v671 = vpop.f32.mrb[0].mxu0
      %v672 = vadd.f32 0.0, %v671
      %v673 = vpop.f32.mrb[0].mxu0
      %674 = vmatprep.mubr.f32.mxu0 0.0
      %675 = vmatmul.mubr.f32.gmra.mrb[0].mxu0 %v493
      %v676 = vpop.f32.mrb[0].mxu0
      %v677 = vadd.f32 0.0, %v676
      %v678 = vpop.f32.mrb[0].mxu0
      %679 = vmatprep.mubr.f32.mxu0 0.0
      %680 = vmatmul.mubr.f32.gmra.mrb[0].mxu0 %v494
      %v681 = vpop.f32.mrb[0].mxu0
      %v682 = vadd.f32 0.0, %v681
      %v683 = vpop.f32.mrb[0].mxu0
      %684 = vmatprep.mubr.f32.mxu0 0.0
      %685 = vmatmul.mubr.f32.gmra.mrb[0].mxu0 %v495
      %v686 = vpop.f32.mrb[0].mxu0
      %v687 = vadd.f32 0.0, %v686
      %v688 = vpop.f32.mrb[0].mxu0
      %689 = vmatprep.mubr.f32.mxu0 0.0
      %690 = vmatmul.mubr.f32.gmra.mrb[0].mxu0 %v496
      %v691 = vpop.f32.mrb[0].mxu0
      %v692 = vadd.f32 0.0, %v691
      %v693 = vpop.f32.mrb[0].mxu0
      %694 = vmatprep.mubr.f32.mxu0 0.0
      %695 = vmatmul.mubr.f32.gmra.mrb[0].mxu0 %v497
      %v696 = vpop.f32.mrb[0].mxu0
      %v697 = vadd.f32 0.0, %v696
      %v698 = vpop.f32.mrb[0].mxu0
      %699 = vmatprep.mubr.f32.mxu0 0.0
      %700 = vmatmul.mubr.f32.gmra.mrb[0].mxu0 %v498
      %v701 = vpop.f32.mrb[0].mxu0
      %v702 = vadd.f32 0.0, %v701
      %v703 = vpop.f32.mrb[0].mxu0
      %704 = vmatprep.mubr.f32.mxu0 0.0
      %705 = vmatmul.mubr.f32.gmra.mrb[0].mxu0 %v499
      %v706 = vpop.f32.mrb[0].mxu0
      %v707 = vadd.f32 0.0, %v706
      %v708 = vpop.f32.mrb[0].mxu0
      %709 = vmatprep.mubr.f32.mxu0 0.0
      %710 = vmatmul.mubr.f32.gmra.mrb[0].mxu0 %v500
      %v711 = vpop.f32.mrb[0].mxu0
      %v712 = vadd.f32 0.0, %v711
      %v713 = vpop.f32.mrb[0].mxu0
      %714 = vmatprep.mubr.f32.mxu0 0.0
      %715 = vmatmul.mubr.f32.gmra.mrb[0].mxu0 %v501
      %v716 = vpop.f32.mrb[0].mxu0
      %v717 = vadd.f32 0.0, %v716
      %v718 = vpop.f32.mrb[0].mxu0
      %719 = vmatprep.mubr.f32.mxu0 0.0
      %720 = vmatmul.mubr.f32.gmra.mrb[0].mxu0 %v502
      %v721 = vpop.f32.mrb[0].mxu0
      %v722 = vadd.f32 0.0, %v721
      %v723 = vpop.f32.mrb[0].mxu0
      %724 = vmatprep.mubr.f32.mxu0 0.0
      %725 = vmatmul.mubr.f32.gmra.mrb[0].mxu0 %v503
      %v726 = vpop.f32.mrb[0].mxu0
      %v727 = vadd.f32 0.0, %v726
      %v728 = vpop.f32.mrb[0].mxu0
      %729 = vmatprep.mubr.f32.mxu0 0.0
      %730 = vmatmul.mubr.f32.gmra.mrb[0].mxu0 %v504
      %v731 = vpop.f32.mrb[0].mxu0
      %v732 = vadd.f32 0.0, %v731
      %v733 = vpop.f32.mrb[0].mxu0
      %734 = vmatprep.mubr.f32.mxu0 0.0
      %735 = vmatmul.mubr.f32.gmra.mrb[0].mxu0 %v505
      %v736 = vpop.f32.mrb[0].mxu0
      %v737 = vadd.f32 0.0, %v736
      %v738 = vpop.f32.mrb[0].mxu0
      %739 = vmatprep.mubr.f32.mxu0 0.0
      %740 = vmatmul.mubr.f32.gmra.mrb[0].mxu0 %v506
      %v741 = vpop.f32.mrb[0].mxu0
      %v742 = vadd.f32 0.0, %v741
      %v743 = vpop.f32.mrb[0].mxu0
      %744 = vmatprep.mubr.f32.mxu0 0.0
      %745 = vmatmul.mubr.f32.gmra.mrb[0].mxu0 %v507
      %v746 = vpop.f32.mrb[0].mxu0
      %v747 = vadd.f32 0.0, %v746
      %v748 = vpop.f32.mrb[0].mxu0
      %749 = vmatprep.mubr.f32.mxu0 0.0
      %750 = vmatmul.mubr.f32.gmra.mrb[0].mxu0 %v508
      %v751 = vpop.f32.mrb[0].mxu0
      %v752 = vadd.f32 0.0, %v751
      %v753 = vpop.f32.mrb[0].mxu0
      %754 = vmatprep.mubr.f32.mxu0 0.0
      %755 = vmatmul.mubr.f32.gmra.mrb[0].mxu0 %v509
      %v756 = vpop.f32.mrb[0].mxu0
      %v757 = vadd.f32 0.0, %v756
      %v758 = vpop.f32.mrb[0].mxu0
      %759 = vmatprep.mubr.f32.mxu0 0.0
      %760 = vmatmul.mubr.f32.gmra.mrb[0].mxu0 %v510
      %v761 = vpop.f32.mrb[0].mxu0
      %v762 = vadd.f32 0.0, %v761
      %v763 = vpop.f32.mrb[0].mxu0
      %764 = vmatprep.mubr.f32.mxu0 0.0
      %765 = vmatmul.mubr.f32.gmra.mrb[0].mxu0 %v511
      %v766 = vpop.f32.mrb[0].mxu0
      %v767 = vadd.f32 0.0, %v766
      %v768 = vpop.f32.mrb[0].mxu0
      %769 = vmatprep.mubr.f32.mxu0 0.0
      %770 = vmatmul.mubr.f32.gmra.mrb[0].mxu0 %v512
      %v771 = vpop.f32.mrb[0].mxu0
      %v772 = vadd.f32 0.0, %v771
      %v773 = vpop.f32.mrb[0].mxu0
      %774 = vmatprep.mubr.f32.mxu0 0.0
      %775 = vmatmul.mubr.f32.gmra.mrb[0].mxu0 %v513
      %v776 = vpop.f32.mrb[0].mxu0
      %v777 = vadd.f32 0.0, %v776
      %v778 = vpop.f32.mrb[0].mxu0
      %779 = vmatprep.mubr.f32.mxu0 0.0
      %780 = vmatmul.mubr.f32.gmra.mrb[0].mxu0 %v514
      %v781 = vpop.f32.mrb[0].mxu0
      %v782 = vadd.f32 0.0, %v781
      %v783 = vpop.f32.mrb[0].mxu0
      %784 = vmatprep.mubr.f32.mxu0 0.0
      %785 = vmatmul.mubr.f32.gmra.mrb[0].mxu0 %v515
      %v786 = vpop.f32.mrb[0].mxu0
      %v787 = vadd.f32 0.0, %v786
      %v788 = vpop.f32.mrb[0].mxu0
      %789 = vmatprep.mubr.f32.mxu0 0.0
      %790 = vmatmul.mubr.f32.gmra.mrb[0].mxu0 %v516
      %v791 = vpop.f32.mrb[0].mxu0
      %v792 = vadd.f32 0.0, %v791
      %v793 = vpop.f32.mrb[0].mxu0
      %794 = vmatprep.mubr.f32.mxu0 0.0
      %795 = vmatmul.mubr.f32.gmra.mrb[0].mxu0 %v517
      %v796 = vpop.f32.mrb[0].mxu0
      %v797 = vadd.f32 0.0, %v796
      %v798 = vpop.f32.mrb[0].mxu0
      %799 = vmatprep.mubr.f32.mxu0 0.0
      %800 = vmatmul.mubr.f32.gmra.mrb[0].mxu0 %v518
      %v801 = vpop.f32.mrb[0].mxu0
      %v802 = vadd.f32 0.0, %v801
      %v803 = vpop.f32.mrb[0].mxu0
      %804 = vmatprep.mubr.f32.mxu0 0.0
      %805 = vmatmul.mubr.f32.gmra.mrb[0].mxu0 %v519
      %v806 = vpop.f32.mrb[0].mxu0
      %v807 = vadd.f32 0.0, %v806
      %v808 = vpop.f32.mrb[0].mxu0
      %809 = vmatprep.mubr.f32.mxu0 0.0
      %810 = vmatmul.mubr.f32.gmra.mrb[0].mxu0 %v520
      %v811 = vpop.f32.mrb[0].mxu0
      %v812 = vadd.f32 0.0, %v811
      %v813 = vpop.f32.mrb[0].mxu0
      %814 = vmatprep.mubr.f32.mxu0 0.0
      %815 = vmatmul.mubr.f32.gmra.mrb[0].mxu0 %v521
      %v816 = vpop.f32.mrb[0].mxu0
      %v817 = vadd.f32 0.0, %v816
      %v818 = vpop.f32.mrb[0].mxu0
      %819 = vdwg.mxu0
      %820 = vmatprep.subr.mxu0 0.0
      %821 = vmatpush1.msra.mxu0 %v562
      %822 = vmatprep.subr.mxu0 0.0
      %823 = vmatpush1.msra.mxu0 %v563
      %824 = vmatprep.subr.mxu0 0.0
      %825 = vmatpush1.msra.mxu0 %v564
      %826 = vmatprep.subr.mxu0 0.0
      %827 = vmatpush1.msra.mxu0 %v565
      %828 = vmatprep.subr.mxu0 0.0
      %829 = vmatpush1.msra.mxu0 %v566
      %830 = vmatprep.subr.mxu0 0.0
      %831 = vmatpush1.msra.mxu0 %v567
      %832 = vmatprep.subr.mxu0 0.0
      %833 = vmatpush1.msra.mxu0 %v568
      %834 = vmatprep.subr.mxu0 0.0
      %835 = vmatpush1.msra.mxu0 %v569
      %836 = vmatprep.subr.mxu0 0.0
      %837 = vmatpush1.msra.mxu0 %v570
      %838 = vmatprep.subr.mxu0 0.0
      %839 = vmatpush1.msra.mxu0 %v571
      %840 = vmatprep.subr.mxu0 0.0
      %841 = vmatpush1.msra.mxu0 %v572
      %842 = vmatprep.subr.mxu0 0.0
      %843 = vmatpush1.msra.mxu0 %v573
      %844 = vmatprep.subr.mxu0 0.0
      %845 = vmatpush1.msra.mxu0 %v574
      %846 = vmatprep.subr.mxu0 0.0
      %847 = vmatpush1.msra.mxu0 %v575
      %848 = vmatprep.subr.mxu0 0.0
      %849 = vmatpush1.msra.mxu0 %v576
      %850 = vmatprep.subr.mxu0 0.0
      %851 = vmatpush1.msra.mxu0 %v577
      %852 = vmatprep.subr.mxu0 0.0
      %853 = vmatpush1.msra.mxu0 0.0
      %854 = vmatprep.subr.mxu0 0.0
      %855 = vmatpush1.msra.mxu0 0.0
      %856 = vmatprep.subr.mxu0 0.0
      %857 = vmatpush1.msra.mxu0 0.0
      %858 = vmatprep.subr.mxu0 0.0
      %859 = vmatpush1.msra.mxu0 0.0
      %860 = vmatprep.subr.mxu0 0.0
      %861 = vmatpush1.msra.mxu0 0.0
      %862 = vmatprep.subr.mxu0 0.0
      %863 = vmatpush1.msra.mxu0 0.0
      %864 = vmatprep.subr.mxu0 0.0
      %865 = vmatpush1.msra.mxu0 0.0
      %866 = vmatprep.subr.mxu0 0.0
      %867 = vmatpush1.msra.mxu0 0.0
      %868 = vmatprep.subr.mxu0 0.0
      %869 = vmatpush1.msra.mxu0 0.0
      %870 = vmatprep.subr.mxu0 0.0
      %871 = vmatpush1.msra.mxu0 0.0
      %872 = vmatprep.subr.mxu0 0.0
      %873 = vmatpush1.msra.mxu0 0.0
      %874 = vmatprep.subr.mxu0 0.0
      %875 = vmatpush1.msra.mxu0 0.0
      %876 = vmatprep.subr.mxu0 0.0
      %877 = vmatpush1.msra.mxu0 0.0
      %878 = vmatprep.subr.mxu0 0.0
      %879 = vmatpush1.msra.mxu0 0.0
      %880 = vmatprep.subr.mxu0 0.0
      %881 = vmatpush1.msra.mxu0 0.0
      %882 = vmatprep.subr.mxu0 0.0
      %883 = vmatpush1.msra.mxu0 0.0
      %884 = vmatprep.mubr.f32.mxu0 0.0
      %885 = vmatmul.mubr.f32.gmra.mrb[0].mxu0 %v454
      %v886 = vpop.f32.mrb[0].mxu0
      %v887 = vadd.f32 %v662, %v886
      %v888 = vpop.f32.mrb[0].mxu0
      %889 = vmatprep.mubr.f32.mxu0 0.0
      %890 = vmatmul.mubr.f32.gmra.mrb[0].mxu0 %v455
      %v891 = vpop.f32.mrb[0].mxu0
      %v892 = vadd.f32 %v667, %v891
      %v893 = vpop.f32.mrb[0].mxu0
      %894 = vmatprep.mubr.f32.mxu0 0.0
      %895 = vmatmul.mubr.f32.gmra.mrb[0].mxu0 %v456
      %v896 = vpop.f32.mrb[0].mxu0
      %v897 = vadd.f32 %v672, %v896
      %v898 = vpop.f32.mrb[0].mxu0
      %899 = vmatprep.mubr.f32.mxu0 0.0
      %900 = vmatmul.mubr.f32.gmra.mrb[0].mxu0 %v457
      %v901 = vpop.f32.mrb[0].mxu0
      %v902 = vadd.f32 %v677, %v901
      %v903 = vpop.f32.mrb[0].mxu0
      %904 = vmatprep.mubr.f32.mxu0 0.0
      %905 = vmatmul.mubr.f32.gmra.mrb[0].mxu0 %v458
      %v906 = vpop.f32.mrb[0].mxu0
      %v907 = vadd.f32 %v682, %v906
      %v908 = vpop.f32.mrb[0].mxu0
      %909 = vmatprep.mubr.f32.mxu0 0.0
      %910 = vmatmul.mubr.f32.gmra.mrb[0].mxu0 %v459
      %v911 = vpop.f32.mrb[0].mxu0
      %v912 = vadd.f32 %v687, %v911
      %v913 = vpop.f32.mrb[0].mxu0
      %914 = vmatprep.mubr.f32.mxu0 0.0
      %915 = vmatmul.mubr.f32.gmra.mrb[0].mxu0 %v460
      %v916 = vpop.f32.mrb[0].mxu0
      %v917 = vadd.f32 %v692, %v916
      %v918 = vpop.f32.mrb[0].mxu0
      %919 = vmatprep.mubr.f32.mxu0 0.0
      %920 = vmatmul.mubr.f32.gmra.mrb[0].mxu0 %v461
      %v921 = vpop.f32.mrb[0].mxu0
      %v922 = vadd.f32 %v697, %v921
      %v923 = vpop.f32.mrb[0].mxu0
      %924 = vmatprep.mubr.f32.mxu0 0.0
      %925 = vmatmul.mubr.f32.gmra.mrb[0].mxu0 %v462
      %v926 = vpop.f32.mrb[0].mxu0
      %v927 = vadd.f32 %v702, %v926
      %v928 = vpop.f32.mrb[0].mxu0
      %929 = vmatprep.mubr.f32.mxu0 0.0
      %930 = vmatmul.mubr.f32.gmra.mrb[0].mxu0 %v463
      %v931 = vpop.f32.mrb[0].mxu0
      %v932 = vadd.f32 %v707, %v931
      %v933 = vpop.f32.mrb[0].mxu0
      %934 = vmatprep.mubr.f32.mxu0 0.0
      %935 = vmatmul.mubr.f32.gmra.mrb[0].mxu0 %v464
      %v936 = vpop.f32.mrb[0].mxu0
      %v937 = vadd.f32 %v712, %v936
      %v938 = vpop.f32.mrb[0].mxu0
      %939 = vmatprep.mubr.f32.mxu0 0.0
      %940 = vmatmul.mubr.f32.gmra.mrb[0].mxu0 %v465
      %v941 = vpop.f32.mrb[0].mxu0
      %v942 = vadd.f32 %v717, %v941
      %v943 = vpop.f32.mrb[0].mxu0
      %944 = vmatprep.mubr.f32.mxu0 0.0
      %945 = vmatmul.mubr.f32.gmra.mrb[0].mxu0 %v466
      %v946 = vpop.f32.mrb[0].mxu0
      %v947 = vadd.f32 %v722, %v946
      %v948 = vpop.f32.mrb[0].mxu0
      %949 = vmatprep.mubr.f32.mxu0 0.0
      %950 = vmatmul.mubr.f32.gmra.mrb[0].mxu0 %v467
      %v951 = vpop.f32.mrb[0].mxu0
      %v952 = vadd.f32 %v727, %v951
      %v953 = vpop.f32.mrb[0].mxu0
      %954 = vmatprep.mubr.f32.mxu0 0.0
      %955 = vmatmul.mubr.f32.gmra.mrb[0].mxu0 %v468
      %v956 = vpop.f32.mrb[0].mxu0
      %v957 = vadd.f32 %v732, %v956
      %v958 = vpop.f32.mrb[0].mxu0
      %959 = vmatprep.mubr.f32.mxu0 0.0
      %960 = vmatmul.mubr.f32.gmra.mrb[0].mxu0 %v469
      %v961 = vpop.f32.mrb[0].mxu0
      %v962 = vadd.f32 %v737, %v961
      %v963 = vpop.f32.mrb[0].mxu0
      %964 = vmatprep.mubr.f32.mxu0 0.0
      %965 = vmatmul.mubr.f32.gmra.mrb[0].mxu0 %v470
      %v966 = vpop.f32.mrb[0].mxu0
      %v967 = vadd.f32 %v742, %v966
      %v968 = vpop.f32.mrb[0].mxu0
      %969 = vmatprep.mubr.f32.mxu0 0.0
      %970 = vmatmul.mubr.f32.gmra.mrb[0].mxu0 %v471
      %v971 = vpop.f32.mrb[0].mxu0
      %v972 = vadd.f32 %v747, %v971
      %v973 = vpop.f32.mrb[0].mxu0
      %974 = vmatprep.mubr.f32.mxu0 0.0
      %975 = vmatmul.mubr.f32.gmra.mrb[0].mxu0 %v472
      %v976 = vpop.f32.mrb[0].mxu0
      %v977 = vadd.f32 %v752, %v976
      %v978 = vpop.f32.mrb[0].mxu0
      %979 = vmatprep.mubr.f32.mxu0 0.0
      %980 = vmatmul.mubr.f32.gmra.mrb[0].mxu0 %v473
      %v981 = vpop.f32.mrb[0].mxu0
      %v982 = vadd.f32 %v757, %v981
      %v983 = vpop.f32.mrb[0].mxu0
      %984 = vmatprep.mubr.f32.mxu0 0.0
      %985 = vmatmul.mubr.f32.gmra.mrb[0].mxu0 %v474
      %v986 = vpop.f32.mrb[0].mxu0
      %v987 = vadd.f32 %v762, %v986
      %v988 = vpop.f32.mrb[0].mxu0
      %989 = vmatprep.mubr.f32.mxu0 0.0
      %990 = vmatmul.mubr.f32.gmra.mrb[0].mxu0 %v475
      %v991 = vpop.f32.mrb[0].mxu0
      %v992 = vadd.f32 %v767, %v991
      %v993 = vpop.f32.mrb[0].mxu0
      %994 = vmatprep.mubr.f32.mxu0 0.0
      %995 = vmatmul.mubr.f32.gmra.mrb[0].mxu0 %v476
      %v996 = vpop.f32.mrb[0].mxu0
      %v997 = vadd.f32 %v772, %v996
      %v998 = vpop.f32.mrb[0].mxu0
      %999 = vmatprep.mubr.f32.mxu0 0.0
      %1000 = vmatmul.mubr.f32.gmra.mrb[0].mxu0 %v477
      %v1001 = vpop.f32.mrb[0].mxu0
      %v1002 = vadd.f32 %v777, %v1001
      %v1003 = vpop.f32.mrb[0].mxu0
      %1004 = vmatprep.mubr.f32.mxu0 0.0
      %1005 = vmatmul.mubr.f32.gmra.mrb[0].mxu0 %v478
      %v1006 = vpop.f32.mrb[0].mxu0
      %v1007 = vadd.f32 %v782, %v1006
      %v1008 = vpop.f32.mrb[0].mxu0
      %1009 = vmatprep.mubr.f32.mxu0 0.0
      %1010 = vmatmul.mubr.f32.gmra.mrb[0].mxu0 %v479
      %v1011 = vpop.f32.mrb[0].mxu0
      %v1012 = vadd.f32 %v787, %v1011
      %v1013 = vpop.f32.mrb[0].mxu0
      %1014 = vmatprep.mubr.f32.mxu0 0.0
      %1015 = vmatmul.mubr.f32.gmra.mrb[0].mxu0 %v480
      %v1016 = vpop.f32.mrb[0].mxu0
      %v1017 = vadd.f32 %v792, %v1016
      %v1018 = vpop.f32.mrb[0].mxu0
      %1019 = vmatprep.mubr.f32.mxu0 0.0
      %1020 = vmatmul.mubr.f32.gmra.mrb[0].mxu0 %v481
      %v1021 = vpop.f32.mrb[0].mxu0
      %v1022 = vadd.f32 %v797, %v1021
      %v1023 = vpop.f32.mrb[0].mxu0
      %1024 = vmatprep.mubr.f32.mxu0 0.0
      %1025 = vmatmul.mubr.f32.gmra.mrb[0].mxu0 %v482
      %v1026 = vpop.f32.mrb[0].mxu0
      %v1027 = vadd.f32 %v802, %v1026
      %v1028 = vpop.f32.mrb[0].mxu0
      %1029 = vmatprep.mubr.f32.mxu0 0.0
      %1030 = vmatmul.mubr.f32.gmra.mrb[0].mxu0 %v483
      %v1031 = vpop.f32.mrb[0].mxu0
      %v1032 = vadd.f32 %v807, %v1031
      %v1033 = vpop.f32.mrb[0].mxu0
      %1034 = vmatprep.mubr.f32.mxu0 0.0
      %1035 = vmatmul.mubr.f32.gmra.mrb[0].mxu0 %v484
      %v1036 = vpop.f32.mrb[0].mxu0
      %v1037 = vadd.f32 %v812, %v1036
      %v1038 = vpop.f32.mrb[0].mxu0
      %1039 = vmatprep.mubr.f32.mxu0 0.0
      %1040 = vmatmul.mubr.f32.gmra.mrb[0].mxu0 %v485
      %v1041 = vpop.f32.mrb[0].mxu0
      %v1042 = vadd.f32 %v817, %v1041
      %v1043 = vpop.f32.mrb[0].mxu0
      %1044 = vdwg.mxu0
      %s1045 = scalar_lea.vmem %s1, 256
      %v1046 = vld [vmem:[%s1045] sm:$0xff]
      %v1047 = vld [vmem:[%s1045 + $0x8] sm:$0xff]
      %v1048 = vld [vmem:[%s1045 + $0x10] sm:$0xff]
      %v1049 = vld [vmem:[%s1045 + $0x18] sm:$0xff]
      %v1050 = vld [vmem:[%s1045 + $0x20] sm:$0xff]
      %v1051 = vld [vmem:[%s1045 + $0x28] sm:$0xff]
      %v1052 = vld [vmem:[%s1045 + $0x30] sm:$0xff]
      %v1053 = vld [vmem:[%s1045 + $0x38] sm:$0xff]
      %v1054 = vld [vmem:[%s1045 + $0x40] sm:$0xff]
      %v1055 = vld [vmem:[%s1045 + $0x48] sm:$0xff]
      %v1056 = vld [vmem:[%s1045 + $0x50] sm:$0xff]
      %v1057 = vld [vmem:[%s1045 + $0x58] sm:$0xff]
      %v1058 = vld [vmem:[%s1045 + $0x60] sm:$0xff]
      %v1059 = vld [vmem:[%s1045 + $0x68] sm:$0xff]
      %v1060 = vld [vmem:[%s1045 + $0x70] sm:$0xff]
      %v1061 = vld [vmem:[%s1045 + $0x78] sm:$0xff]
      %1062 = vmatprep.subr.mxu0 0.0
      %1063 = vmatpush1.msra.mxu0 %v1046
      %1064 = vmatprep.subr.mxu0 0.0
      %1065 = vmatpush1.msra.mxu0 %v1047
      %1066 = vmatprep.subr.mxu0 0.0
      %1067 = vmatpush1.msra.mxu0 %v1048
      %1068 = vmatprep.subr.mxu0 0.0
      %1069 = vmatpush1.msra.mxu0 %v1049
      %1070 = vmatprep.subr.mxu0 0.0
      %1071 = vmatpush1.msra.mxu0 %v1050
      %1072 = vmatprep.subr.mxu0 0.0
      %1073 = vmatpush1.msra.mxu0 %v1051
      %1074 = vmatprep.subr.mxu0 0.0
      %1075 = vmatpush1.msra.mxu0 %v1052
      %1076 = vmatprep.subr.mxu0 0.0
      %1077 = vmatpush1.msra.mxu0 %v1053
      %1078 = vmatprep.subr.mxu0 0.0
      %1079 = vmatpush1.msra.mxu0 %v1054
      %1080 = vmatprep.subr.mxu0 0.0
      %1081 = vmatpush1.msra.mxu0 %v1055
      %1082 = vmatprep.subr.mxu0 0.0
      %1083 = vmatpush1.msra.mxu0 %v1056
      %1084 = vmatprep.subr.mxu0 0.0
      %1085 = vmatpush1.msra.mxu0 %v1057
      %1086 = vmatprep.subr.mxu0 0.0
      %1087 = vmatpush1.msra.mxu0 %v1058
      %1088 = vmatprep.subr.mxu0 0.0
      %1089 = vmatpush1.msra.mxu0 %v1059
      %1090 = vmatprep.subr.mxu0 0.0
      %1091 = vmatpush1.msra.mxu0 %v1060
      %1092 = vmatprep.subr.mxu0 0.0
      %1093 = vmatpush1.msra.mxu0 %v1061
      %1094 = vmatprep.subr.mxu0 0.0
      %1095 = vmatpush1.msra.mxu0 0.0
      %1096 = vmatprep.subr.mxu0 0.0
      %1097 = vmatpush1.msra.mxu0 0.0
      %1098 = vmatprep.subr.mxu0 0.0
      %1099 = vmatpush1.msra.mxu0 0.0
      %1100 = vmatprep.subr.mxu0 0.0
      %1101 = vmatpush1.msra.mxu0 0.0
      %1102 = vmatprep.subr.mxu0 0.0
      %1103 = vmatpush1.msra.mxu0 0.0
      %1104 = vmatprep.subr.mxu0 0.0
      %1105 = vmatpush1.msra.mxu0 0.0
      %1106 = vmatprep.subr.mxu0 0.0
      %1107 = vmatpush1.msra.mxu0 0.0
      %1108 = vmatprep.subr.mxu0 0.0
      %1109 = vmatpush1.msra.mxu0 0.0
      %1110 = vmatprep.subr.mxu0 0.0
      %1111 = vmatpush1.msra.mxu0 0.0
      %1112 = vmatprep.subr.mxu0 0.0
      %1113 = vmatpush1.msra.mxu0 0.0
      %1114 = vmatprep.subr.mxu0 0.0
      %1115 = vmatpush1.msra.mxu0 0.0
      %1116 = vmatprep.subr.mxu0 0.0
      %1117 = vmatpush1.msra.mxu0 0.0
      %1118 = vmatprep.subr.mxu0 0.0
      %1119 = vmatpush1.msra.mxu0 0.0
      %1120 = vmatprep.subr.mxu0 0.0
      %1121 = vmatpush1.msra.mxu0 0.0
      %1122 = vmatprep.subr.mxu0 0.0
      %1123 = vmatpush1.msra.mxu0 0.0
      %1124 = vmatprep.subr.mxu0 0.0
      %1125 = vmatpush1.msra.mxu0 0.0
      %1126 = vmatprep.mubr.f32.mxu0 0.0
      %1127 = vmatmul.mubr.f32.gmra.mrb[0].mxu0 %v526
      %v1128 = vpop.f32.mrb[0].mxu0
      %v1129 = vadd.f32 0.0, %v1128
      %v1130 = vpop.f32.mrb[0].mxu0
      %1131 = vmatprep.mubr.f32.mxu0 0.0
      %1132 = vmatmul.mubr.f32.gmra.mrb[0].mxu0 %v527
      %v1133 = vpop.f32.mrb[0].mxu0
      %v1134 = vadd.f32 0.0, %v1133
      %v1135 = vpop.f32.mrb[0].mxu0
      %1136 = vmatprep.mubr.f32.mxu0 0.0
      %1137 = vmatmul.mubr.f32.gmra.mrb[0].mxu0 %v528
      %v1138 = vpop.f32.mrb[0].mxu0
      %v1139 = vadd.f32 0.0, %v1138
      %v1140 = vpop.f32.mrb[0].mxu0
      %1141 = vmatprep.mubr.f32.mxu0 0.0
      %1142 = vmatmul.mubr.f32.gmra.mrb[0].mxu0 %v529
      %v1143 = vpop.f32.mrb[0].mxu0
      %v1144 = vadd.f32 0.0, %v1143
      %v1145 = vpop.f32.mrb[0].mxu0
      %1146 = vmatprep.mubr.f32.mxu0 0.0
      %1147 = vmatmul.mubr.f32.gmra.mrb[0].mxu0 %v530
      %v1148 = vpop.f32.mrb[0].mxu0
      %v1149 = vadd.f32 0.0, %v1148
      %v1150 = vpop.f32.mrb[0].mxu0
      %1151 = vmatprep.mubr.f32.mxu0 0.0
      %1152 = vmatmul.mubr.f32.gmra.mrb[0].mxu0 %v531
      %v1153 = vpop.f32.mrb[0].mxu0
      %v1154 = vadd.f32 0.0, %v1153
      %v1155 = vpop.f32.mrb[0].mxu0
      %1156 = vmatprep.mubr.f32.mxu0 0.0
      %1157 = vmatmul.mubr.f32.gmra.mrb[0].mxu0 %v532
      %v1158 = vpop.f32.mrb[0].mxu0
      %v1159 = vadd.f32 0.0, %v1158
      %v1160 = vpop.f32.mrb[0].mxu0
      %1161 = vmatprep.mubr.f32.mxu0 0.0
      %1162 = vmatmul.mubr.f32.gmra.mrb[0].mxu0 %v533
      %v1163 = vpop.f32.mrb[0].mxu0
      %v1164 = vadd.f32 0.0, %v1163
      %v1165 = vpop.f32.mrb[0].mxu0
      %1166 = vmatprep.mubr.f32.mxu0 0.0
      %1167 = vmatmul.mubr.f32.gmra.mrb[0].mxu0 %v534
      %v1168 = vpop.f32.mrb[0].mxu0
      %v1169 = vadd.f32 0.0, %v1168
      %v1170 = vpop.f32.mrb[0].mxu0
      %1171 = vmatprep.mubr.f32.mxu0 0.0
      %1172 = vmatmul.mubr.f32.gmra.mrb[0].mxu0 %v535
      %v1173 = vpop.f32.mrb[0].mxu0
      %v1174 = vadd.f32 0.0, %v1173
      %v1175 = vpop.f32.mrb[0].mxu0
      %1176 = vmatprep.mubr.f32.mxu0 0.0
      %1177 = vmatmul.mubr.f32.gmra.mrb[0].mxu0 %v536
      %v1178 = vpop.f32.mrb[0].mxu0
      %v1179 = vadd.f32 0.0, %v1178
      %v1180 = vpop.f32.mrb[0].mxu0
      %1181 = vmatprep.mubr.f32.mxu0 0.0
      %1182 = vmatmul.mubr.f32.gmra.mrb[0].mxu0 %v537
      %v1183 = vpop.f32.mrb[0].mxu0
      %v1184 = vadd.f32 0.0, %v1183
      %v1185 = vpop.f32.mrb[0].mxu0
      %1186 = vmatprep.mubr.f32.mxu0 0.0
      %1187 = vmatmul.mubr.f32.gmra.mrb[0].mxu0 %v538
      %v1188 = vpop.f32.mrb[0].mxu0
      %v1189 = vadd.f32 0.0, %v1188
      %v1190 = vpop.f32.mrb[0].mxu0
      %1191 = vmatprep.mubr.f32.mxu0 0.0
      %1192 = vmatmul.mubr.f32.gmra.mrb[0].mxu0 %v539
      %v1193 = vpop.f32.mrb[0].mxu0
      %v1194 = vadd.f32 0.0, %v1193
      %v1195 = vpop.f32.mrb[0].mxu0
      %1196 = vmatprep.mubr.f32.mxu0 0.0
      %1197 = vmatmul.mubr.f32.gmra.mrb[0].mxu0 %v540
      %v1198 = vpop.f32.mrb[0].mxu0
      %v1199 = vadd.f32 0.0, %v1198
      %v1200 = vpop.f32.mrb[0].mxu0
      %1201 = vmatprep.mubr.f32.mxu0 0.0
      %1202 = vmatmul.mubr.f32.gmra.mrb[0].mxu0 %v541
      %v1203 = vpop.f32.mrb[0].mxu0
      %v1204 = vadd.f32 0.0, %v1203
      %v1205 = vpop.f32.mrb[0].mxu0
      %1206 = vmatprep.mubr.f32.mxu0 0.0
      %1207 = vmatmul.mubr.f32.gmra.mrb[0].mxu0 %v542
      %v1208 = vpop.f32.mrb[0].mxu0
      %v1209 = vadd.f32 0.0, %v1208
      %v1210 = vpop.f32.mrb[0].mxu0
      %1211 = vmatprep.mubr.f32.mxu0 0.0
      %1212 = vmatmul.mubr.f32.gmra.mrb[0].mxu0 %v543
      %v1213 = vpop.f32.mrb[0].mxu0
      %v1214 = vadd.f32 0.0, %v1213
      %v1215 = vpop.f32.mrb[0].mxu0
      %1216 = vmatprep.mubr.f32.mxu0 0.0
      %1217 = vmatmul.mubr.f32.gmra.mrb[0].mxu0 %v544
      %v1218 = vpop.f32.mrb[0].mxu0
      %v1219 = vadd.f32 0.0, %v1218
      %v1220 = vpop.f32.mrb[0].mxu0
      %1221 = vmatprep.mubr.f32.mxu0 0.0
      %1222 = vmatmul.mubr.f32.gmra.mrb[0].mxu0 %v545
      %v1223 = vpop.f32.mrb[0].mxu0
      %v1224 = vadd.f32 0.0, %v1223
      %v1225 = vpop.f32.mrb[0].mxu0
      %1226 = vmatprep.mubr.f32.mxu0 0.0
      %1227 = vmatmul.mubr.f32.gmra.mrb[0].mxu0 %v546
      %v1228 = vpop.f32.mrb[0].mxu0
      %v1229 = vadd.f32 0.0, %v1228
      %v1230 = vpop.f32.mrb[0].mxu0
      %1231 = vmatprep.mubr.f32.mxu0 0.0
      %1232 = vmatmul.mubr.f32.gmra.mrb[0].mxu0 %v547
      %v1233 = vpop.f32.mrb[0].mxu0
      %v1234 = vadd.f32 0.0, %v1233
      %v1235 = vpop.f32.mrb[0].mxu0
      %1236 = vmatprep.mubr.f32.mxu0 0.0
      %1237 = vmatmul.mubr.f32.gmra.mrb[0].mxu0 %v548
      %v1238 = vpop.f32.mrb[0].mxu0
      %v1239 = vadd.f32 0.0, %v1238
      %v1240 = vpop.f32.mrb[0].mxu0
      %1241 = vmatprep.mubr.f32.mxu0 0.0
      %1242 = vmatmul.mubr.f32.gmra.mrb[0].mxu0 %v549
      %v1243 = vpop.f32.mrb[0].mxu0
      %v1244 = vadd.f32 0.0, %v1243
      %v1245 = vpop.f32.mrb[0].mxu0
      %1246 = vmatprep.mubr.f32.mxu0 0.0
      %1247 = vmatmul.mubr.f32.gmra.mrb[0].mxu0 %v550
      %v1248 = vpop.f32.mrb[0].mxu0
      %v1249 = vadd.f32 0.0, %v1248
      %v1250 = vpop.f32.mrb[0].mxu0
      %1251 = vmatprep.mubr.f32.mxu0 0.0
      %1252 = vmatmul.mubr.f32.gmra.mrb[0].mxu0 %v551
      %v1253 = vpop.f32.mrb[0].mxu0
      %v1254 = vadd.f32 0.0, %v1253
      %v1255 = vpop.f32.mrb[0].mxu0
      %1256 = vmatprep.mubr.f32.mxu0 0.0
      %1257 = vmatmul.mubr.f32.gmra.mrb[0].mxu0 %v552
      %v1258 = vpop.f32.mrb[0].mxu0
      %v1259 = vadd.f32 0.0, %v1258
      %v1260 = vpop.f32.mrb[0].mxu0
      %1261 = vmatprep.mubr.f32.mxu0 0.0
      %1262 = vmatmul.mubr.f32.gmra.mrb[0].mxu0 %v553
      %v1263 = vpop.f32.mrb[0].mxu0
      %v1264 = vadd.f32 0.0, %v1263
      %v1265 = vpop.f32.mrb[0].mxu0
      %1266 = vmatprep.mubr.f32.mxu0 0.0
      %1267 = vmatmul.mubr.f32.gmra.mrb[0].mxu0 %v554
      %v1268 = vpop.f32.mrb[0].mxu0
      %v1269 = vadd.f32 0.0, %v1268
      %v1270 = vpop.f32.mrb[0].mxu0
      %1271 = vmatprep.mubr.f32.mxu0 0.0
      %1272 = vmatmul.mubr.f32.gmra.mrb[0].mxu0 %v555
      %v1273 = vpop.f32.mrb[0].mxu0
      %v1274 = vadd.f32 0.0, %v1273
      %v1275 = vpop.f32.mrb[0].mxu0
      %1276 = vmatprep.mubr.f32.mxu0 0.0
      %1277 = vmatmul.mubr.f32.gmra.mrb[0].mxu0 %v556
      %v1278 = vpop.f32.mrb[0].mxu0
      %v1279 = vadd.f32 0.0, %v1278
      %v1280 = vpop.f32.mrb[0].mxu0
      %1281 = vmatprep.mubr.f32.mxu0 0.0
      %1282 = vmatmul.mubr.f32.gmra.mrb[0].mxu0 %v557
      %v1283 = vpop.f32.mrb[0].mxu0
      %v1284 = vadd.f32 0.0, %v1283
      %v1285 = vpop.f32.mrb[0].mxu0
      %1286 = vdwg.mxu0
      %v1287 = vadd.f32 %v887, %v1129
      %v1288 = vadd.f32 %v892, %v1134
      %v1289 = vadd.f32 %v897, %v1139
      %v1290 = vadd.f32 %v902, %v1144
      %v1291 = vadd.f32 %v907, %v1149
      %v1292 = vadd.f32 %v912, %v1154
      %v1293 = vadd.f32 %v917, %v1159
      %v1294 = vadd.f32 %v922, %v1164
      %v1295 = vadd.f32 %v927, %v1169
      %v1296 = vadd.f32 %v932, %v1174
      %v1297 = vadd.f32 %v937, %v1179
      %v1298 = vadd.f32 %v942, %v1184
      %v1299 = vadd.f32 %v947, %v1189
      %v1300 = vadd.f32 %v952, %v1194
      %v1301 = vadd.f32 %v957, %v1199
      %v1302 = vadd.f32 %v962, %v1204
      %v1303 = vadd.f32 %v967, %v1209
      %v1304 = vadd.f32 %v972, %v1214
      %v1305 = vadd.f32 %v977, %v1219
      %v1306 = vadd.f32 %v982, %v1224
      %v1307 = vadd.f32 %v987, %v1229
      %v1308 = vadd.f32 %v992, %v1234
      %v1309 = vadd.f32 %v997, %v1239
      %v1310 = vadd.f32 %v1002, %v1244
      %v1311 = vadd.f32 %v1007, %v1249
      %v1312 = vadd.f32 %v1012, %v1254
      %v1313 = vadd.f32 %v1017, %v1259
      %v1314 = vadd.f32 %v1022, %v1264
      %v1315 = vadd.f32 %v1027, %v1269
      %v1316 = vadd.f32 %v1032, %v1274
      %v1317 = vadd.f32 %v1037, %v1279
      %v1318 = vadd.f32 %v1042, %v1284
      %s1319 = scalar_lea.vmem %s1, 384
      %v1320 = vld [vmem:[%s1319] sm:$0xff]
      %v1321 = vld [vmem:[%s1319 + $0x8] sm:$0xff]
      %v1322 = vld [vmem:[%s1319 + $0x10] sm:$0xff]
      %v1323 = vld [vmem:[%s1319 + $0x18] sm:$0xff]
      %v1324 = vld [vmem:[%s1319 + $0x20] sm:$0xff]
      %v1325 = vld [vmem:[%s1319 + $0x28] sm:$0xff]
      %v1326 = vld [vmem:[%s1319 + $0x30] sm:$0xff]
      %v1327 = vld [vmem:[%s1319 + $0x38] sm:$0xff]
      %v1328 = vld [vmem:[%s1319 + $0x40] sm:$0xff]
      %v1329 = vld [vmem:[%s1319 + $0x48] sm:$0xff]
      %v1330 = vld [vmem:[%s1319 + $0x50] sm:$0xff]
      %v1331 = vld [vmem:[%s1319 + $0x58] sm:$0xff]
      %v1332 = vld [vmem:[%s1319 + $0x60] sm:$0xff]
      %v1333 = vld [vmem:[%s1319 + $0x68] sm:$0xff]
      %v1334 = vld [vmem:[%s1319 + $0x70] sm:$0xff]
      %v1335 = vld [vmem:[%s1319 + $0x78] sm:$0xff]
      %1336 = vmatprep.subr.mxu0 0.0
      %1337 = vmatpush1.msra.mxu0 %v1320
      %1338 = vmatprep.subr.mxu0 0.0
      %1339 = vmatpush1.msra.mxu0 %v1321
      %1340 = vmatprep.subr.mxu0 0.0
      %1341 = vmatpush1.msra.mxu0 %v1322
      %1342 = vmatprep.subr.mxu0 0.0
      %1343 = vmatpush1.msra.mxu0 %v1323
      %1344 = vmatprep.subr.mxu0 0.0
      %1345 = vmatpush1.msra.mxu0 %v1324
      %1346 = vmatprep.subr.mxu0 0.0
      %1347 = vmatpush1.msra.mxu0 %v1325
      %1348 = vmatprep.subr.mxu0 0.0
      %1349 = vmatpush1.msra.mxu0 %v1326
      %1350 = vmatprep.subr.mxu0 0.0
      %1351 = vmatpush1.msra.mxu0 %v1327
      %1352 = vmatprep.subr.mxu0 0.0
      %1353 = vmatpush1.msra.mxu0 %v1328
      %1354 = vmatprep.subr.mxu0 0.0
      %1355 = vmatpush1.msra.mxu0 %v1329
      %1356 = vmatprep.subr.mxu0 0.0
      %1357 = vmatpush1.msra.mxu0 %v1330
      %1358 = vmatprep.subr.mxu0 0.0
      %1359 = vmatpush1.msra.mxu0 %v1331
      %1360 = vmatprep.subr.mxu0 0.0
      %1361 = vmatpush1.msra.mxu0 %v1332
      %1362 = vmatprep.subr.mxu0 0.0
      %1363 = vmatpush1.msra.mxu0 %v1333
      %1364 = vmatprep.subr.mxu0 0.0
      %1365 = vmatpush1.msra.mxu0 %v1334
      %1366 = vmatprep.subr.mxu0 0.0
      %1367 = vmatpush1.msra.mxu0 %v1335
      %1368 = vmatprep.subr.mxu0 0.0
      %1369 = vmatpush1.msra.mxu0 0.0
      %1370 = vmatprep.subr.mxu0 0.0
      %1371 = vmatpush1.msra.mxu0 0.0
      %1372 = vmatprep.subr.mxu0 0.0
      %1373 = vmatpush1.msra.mxu0 0.0
      %1374 = vmatprep.subr.mxu0 0.0
      %1375 = vmatpush1.msra.mxu0 0.0
      %1376 = vmatprep.subr.mxu0 0.0
      %1377 = vmatpush1.msra.mxu0 0.0
      %1378 = vmatprep.subr.mxu0 0.0
      %1379 = vmatpush1.msra.mxu0 0.0
      %1380 = vmatprep.subr.mxu0 0.0
      %1381 = vmatpush1.msra.mxu0 0.0
      %1382 = vmatprep.subr.mxu0 0.0
      %1383 = vmatpush1.msra.mxu0 0.0
      %1384 = vmatprep.subr.mxu0 0.0
      %1385 = vmatpush1.msra.mxu0 0.0
      %1386 = vmatprep.subr.mxu0 0.0
      %1387 = vmatpush1.msra.mxu0 0.0
      %1388 = vmatprep.subr.mxu0 0.0
      %1389 = vmatpush1.msra.mxu0 0.0
      %1390 = vmatprep.subr.mxu0 0.0
      %1391 = vmatpush1.msra.mxu0 0.0
      %1392 = vmatprep.subr.mxu0 0.0
      %1393 = vmatpush1.msra.mxu0 0.0
      %1394 = vmatprep.subr.mxu0 0.0
      %1395 = vmatpush1.msra.mxu0 0.0
      %1396 = vmatprep.subr.mxu0 0.0
      %1397 = vmatpush1.msra.mxu0 0.0
      %1398 = vmatprep.subr.mxu0 0.0
      %1399 = vmatpush1.msra.mxu0 0.0
      %1400 = vmatprep.mubr.f32.mxu0 0.0
      %1401 = vmatmul.mubr.f32.gmra.mrb[0].mxu0 %v456
      %v1402 = vpop.f32.mrb[0].mxu0
      %v1403 = vadd.f32 0.0, %v1402
      %v1404 = vpop.f32.mrb[0].mxu0
      %1405 = vmatprep.mubr.f32.mxu0 0.0
      %1406 = vmatmul.mubr.f32.gmra.mrb[0].mxu0 %v457
      %v1407 = vpop.f32.mrb[0].mxu0
      %v1408 = vadd.f32 0.0, %v1407
      %v1409 = vpop.f32.mrb[0].mxu0
      %1410 = vmatprep.mubr.f32.mxu0 0.0
      %1411 = vmatmul.mubr.f32.gmra.mrb[0].mxu0 %v458
      %v1412 = vpop.f32.mrb[0].mxu0
      %v1413 = vadd.f32 0.0, %v1412
      %v1414 = vpop.f32.mrb[0].mxu0
      %1415 = vmatprep.mubr.f32.mxu0 0.0
      %1416 = vmatmul.mubr.f32.gmra.mrb[0].mxu0 %v459
      %v1417 = vpop.f32.mrb[0].mxu0
      %v1418 = vadd.f32 0.0, %v1417
      %v1419 = vpop.f32.mrb[0].mxu0
      %1420 = vmatprep.mubr.f32.mxu0 0.0
      %1421 = vmatmul.mubr.f32.gmra.mrb[0].mxu0 %v460
      %v1422 = vpop.f32.mrb[0].mxu0
      %v1423 = vadd.f32 0.0, %v1422
      %v1424 = vpop.f32.mrb[0].mxu0
      %1425 = vmatprep.mubr.f32.mxu0 0.0
      %1426 = vmatmul.mubr.f32.gmra.mrb[0].mxu0 %v461
      %v1427 = vpop.f32.mrb[0].mxu0
      %v1428 = vadd.f32 0.0, %v1427
      %v1429 = vpop.f32.mrb[0].mxu0
      %1430 = vmatprep.mubr.f32.mxu0 0.0
      %1431 = vmatmul.mubr.f32.gmra.mrb[0].mxu0 %v462
      %v1432 = vpop.f32.mrb[0].mxu0
      %v1433 = vadd.f32 0.0, %v1432
      %v1434 = vpop.f32.mrb[0].mxu0
      %1435 = vmatprep.mubr.f32.mxu0 0.0
      %1436 = vmatmul.mubr.f32.gmra.mrb[0].mxu0 %v463
      %v1437 = vpop.f32.mrb[0].mxu0
      %v1438 = vadd.f32 0.0, %v1437
      %v1439 = vpop.f32.mrb[0].mxu0
      %1440 = vmatprep.mubr.f32.mxu0 0.0
      %1441 = vmatmul.mubr.f32.gmra.mrb[0].mxu0 %v464
      %v1442 = vpop.f32.mrb[0].mxu0
      %v1443 = vadd.f32 0.0, %v1442
      %v1444 = vpop.f32.mrb[0].mxu0
      %1445 = vmatprep.mubr.f32.mxu0 0.0
      %1446 = vmatmul.mubr.f32.gmra.mrb[0].mxu0 %v465
      %v1447 = vpop.f32.mrb[0].mxu0
      %v1448 = vadd.f32 0.0, %v1447
      %v1449 = vpop.f32.mrb[0].mxu0
      %1450 = vmatprep.mubr.f32.mxu0 0.0
      %1451 = vmatmul.mubr.f32.gmra.mrb[0].mxu0 %v466
      %v1452 = vpop.f32.mrb[0].mxu0
      %v1453 = vadd.f32 0.0, %v1452
      %v1454 = vpop.f32.mrb[0].mxu0
      %1455 = vmatprep.mubr.f32.mxu0 0.0
      %1456 = vmatmul.mubr.f32.gmra.mrb[0].mxu0 %v467
      %v1457 = vpop.f32.mrb[0].mxu0
      %v1458 = vadd.f32 0.0, %v1457
      %v1459 = vpop.f32.mrb[0].mxu0
      %1460 = vmatprep.mubr.f32.mxu0 0.0
      %1461 = vmatmul.mubr.f32.gmra.mrb[0].mxu0 %v468
      %v1462 = vpop.f32.mrb[0].mxu0
      %v1463 = vadd.f32 0.0, %v1462
      %v1464 = vpop.f32.mrb[0].mxu0
      %1465 = vmatprep.mubr.f32.mxu0 0.0
      %1466 = vmatmul.mubr.f32.gmra.mrb[0].mxu0 %v469
      %v1467 = vpop.f32.mrb[0].mxu0
      %v1468 = vadd.f32 0.0, %v1467
      %v1469 = vpop.f32.mrb[0].mxu0
      %1470 = vmatprep.mubr.f32.mxu0 0.0
      %1471 = vmatmul.mubr.f32.gmra.mrb[0].mxu0 %v470
      %v1472 = vpop.f32.mrb[0].mxu0
      %v1473 = vadd.f32 0.0, %v1472
      %v1474 = vpop.f32.mrb[0].mxu0
      %1475 = vmatprep.mubr.f32.mxu0 0.0
      %1476 = vmatmul.mubr.f32.gmra.mrb[0].mxu0 %v471
      %v1477 = vpop.f32.mrb[0].mxu0
      %v1478 = vadd.f32 0.0, %v1477
      %v1479 = vpop.f32.mrb[0].mxu0
      %1480 = vmatprep.mubr.f32.mxu0 0.0
      %1481 = vmatmul.mubr.f32.gmra.mrb[0].mxu0 %v472
      %v1482 = vpop.f32.mrb[0].mxu0
      %v1483 = vadd.f32 0.0, %v1482
      %v1484 = vpop.f32.mrb[0].mxu0
      %1485 = vmatprep.mubr.f32.mxu0 0.0
      %1486 = vmatmul.mubr.f32.gmra.mrb[0].mxu0 %v473
      %v1487 = vpop.f32.mrb[0].mxu0
      %v1488 = vadd.f32 0.0, %v1487
      %v1489 = vpop.f32.mrb[0].mxu0
      %1490 = vmatprep.mubr.f32.mxu0 0.0
      %1491 = vmatmul.mubr.f32.gmra.mrb[0].mxu0 %v474
      %v1492 = vpop.f32.mrb[0].mxu0
      %v1493 = vadd.f32 0.0, %v1492
      %v1494 = vpop.f32.mrb[0].mxu0
      %1495 = vmatprep.mubr.f32.mxu0 0.0
      %1496 = vmatmul.mubr.f32.gmra.mrb[0].mxu0 %v475
      %v1497 = vpop.f32.mrb[0].mxu0
      %v1498 = vadd.f32 0.0, %v1497
      %v1499 = vpop.f32.mrb[0].mxu0
      %1500 = vmatprep.mubr.f32.mxu0 0.0
      %1501 = vmatmul.mubr.f32.gmra.mrb[0].mxu0 %v476
      %v1502 = vpop.f32.mrb[0].mxu0
      %v1503 = vadd.f32 0.0, %v1502
      %v1504 = vpop.f32.mrb[0].mxu0
      %1505 = vmatprep.mubr.f32.mxu0 0.0
      %1506 = vmatmul.mubr.f32.gmra.mrb[0].mxu0 %v477
      %v1507 = vpop.f32.mrb[0].mxu0
      %v1508 = vadd.f32 0.0, %v1507
      %v1509 = vpop.f32.mrb[0].mxu0
      %1510 = vmatprep.mubr.f32.mxu0 0.0
      %1511 = vmatmul.mubr.f32.gmra.mrb[0].mxu0 %v478
      %v1512 = vpop.f32.mrb[0].mxu0
      %v1513 = vadd.f32 0.0, %v1512
      %v1514 = vpop.f32.mrb[0].mxu0
      %1515 = vmatprep.mubr.f32.mxu0 0.0
      %1516 = vmatmul.mubr.f32.gmra.mrb[0].mxu0 %v479
      %v1517 = vpop.f32.mrb[0].mxu0
      %v1518 = vadd.f32 0.0, %v1517
      %v1519 = vpop.f32.mrb[0].mxu0
      %1520 = vmatprep.mubr.f32.mxu0 0.0
      %1521 = vmatmul.mubr.f32.gmra.mrb[0].mxu0 %v480
      %v1522 = vpop.f32.mrb[0].mxu0
      %v1523 = vadd.f32 0.0, %v1522
      %v1524 = vpop.f32.mrb[0].mxu0
      %1525 = vmatprep.mubr.f32.mxu0 0.0
      %1526 = vmatmul.mubr.f32.gmra.mrb[0].mxu0 %v481
      %v1527 = vpop.f32.mrb[0].mxu0
      %v1528 = vadd.f32 0.0, %v1527
      %v1529 = vpop.f32.mrb[0].mxu0
      %1530 = vmatprep.mubr.f32.mxu0 0.0
      %1531 = vmatmul.mubr.f32.gmra.mrb[0].mxu0 %v482
      %v1532 = vpop.f32.mrb[0].mxu0
      %v1533 = vadd.f32 0.0, %v1532
      %v1534 = vpop.f32.mrb[0].mxu0
      %1535 = vmatprep.mubr.f32.mxu0 0.0
      %1536 = vmatmul.mubr.f32.gmra.mrb[0].mxu0 %v483
      %v1537 = vpop.f32.mrb[0].mxu0
      %v1538 = vadd.f32 0.0, %v1537
      %v1539 = vpop.f32.mrb[0].mxu0
      %1540 = vmatprep.mubr.f32.mxu0 0.0
      %1541 = vmatmul.mubr.f32.gmra.mrb[0].mxu0 %v484
      %v1542 = vpop.f32.mrb[0].mxu0
      %v1543 = vadd.f32 0.0, %v1542
      %v1544 = vpop.f32.mrb[0].mxu0
      %1545 = vmatprep.mubr.f32.mxu0 0.0
      %1546 = vmatmul.mubr.f32.gmra.mrb[0].mxu0 %v485
      %v1547 = vpop.f32.mrb[0].mxu0
      %v1548 = vadd.f32 0.0, %v1547
      %v1549 = vpop.f32.mrb[0].mxu0
      %1550 = vmatprep.mubr.f32.mxu0 0.0
      %1551 = vmatmul.mubr.f32.gmra.mrb[0].mxu0 %v486
      %v1552 = vpop.f32.mrb[0].mxu0
      %v1553 = vadd.f32 0.0, %v1552
      %v1554 = vpop.f32.mrb[0].mxu0
      %1555 = vmatprep.mubr.f32.mxu0 0.0
      %1556 = vmatmul.mubr.f32.gmra.mrb[0].mxu0 %v487
      %v1557 = vpop.f32.mrb[0].mxu0
      %v1558 = vadd.f32 0.0, %v1557
      %v1559 = vpop.f32.mrb[0].mxu0
      %1560 = vdwg.mxu0
      %v1561 = vadd.f32 %v1287, %v1403
      %v1562 = vadd.f32 %v1288, %v1408
      %v1563 = vadd.f32 %v1289, %v1413
      %v1564 = vadd.f32 %v1290, %v1418
      %v1565 = vadd.f32 %v1291, %v1423
      %v1566 = vadd.f32 %v1292, %v1428
      %v1567 = vadd.f32 %v1293, %v1433
      %v1568 = vadd.f32 %v1294, %v1438
      %v1569 = vadd.f32 %v1295, %v1443
      %v1570 = vadd.f32 %v1296, %v1448
      %v1571 = vadd.f32 %v1297, %v1453
      %v1572 = vadd.f32 %v1298, %v1458
      %v1573 = vadd.f32 %v1299, %v1463
      %v1574 = vadd.f32 %v1300, %v1468
      %v1575 = vadd.f32 %v1301, %v1473
      %v1576 = vadd.f32 %v1302, %v1478
      %v1577 = vadd.f32 %v1303, %v1483
      %v1578 = vadd.f32 %v1304, %v1488
      %v1579 = vadd.f32 %v1305, %v1493
      %v1580 = vadd.f32 %v1306, %v1498
      %v1581 = vadd.f32 %v1307, %v1503
      %v1582 = vadd.f32 %v1308, %v1508
      %v1583 = vadd.f32 %v1309, %v1513
      %v1584 = vadd.f32 %v1310, %v1518
      %v1585 = vadd.f32 %v1311, %v1523
      %v1586 = vadd.f32 %v1312, %v1528
      %v1587 = vadd.f32 %v1313, %v1533
      %v1588 = vadd.f32 %v1314, %v1538
      %v1589 = vadd.f32 %v1315, %v1543
      %v1590 = vadd.f32 %v1316, %v1548
      %v1591 = vadd.f32 %v1317, %v1553
      %v1592 = vadd.f32 %v1318, %v1558
      %s1593 = scalar_lea.vmem %s1, 512
      %v1594 = vld [vmem:[%s1593] sm:$0xff]
      %v1595 = vld [vmem:[%s1593 + $0x8] sm:$0xff]
      %v1596 = vld [vmem:[%s1593 + $0x10] sm:$0xff]
      %v1597 = vld [vmem:[%s1593 + $0x18] sm:$0xff]
      %v1598 = vld [vmem:[%s1593 + $0x20] sm:$0xff]
      %v1599 = vld [vmem:[%s1593 + $0x28] sm:$0xff]
      %v1600 = vld [vmem:[%s1593 + $0x30] sm:$0xff]
      %v1601 = vld [vmem:[%s1593 + $0x38] sm:$0xff]
      %v1602 = vld [vmem:[%s1593 + $0x40] sm:$0xff]
      %v1603 = vld [vmem:[%s1593 + $0x48] sm:$0xff]
      %v1604 = vld [vmem:[%s1593 + $0x50] sm:$0xff]
      %v1605 = vld [vmem:[%s1593 + $0x58] sm:$0xff]
      %v1606 = vld [vmem:[%s1593 + $0x60] sm:$0xff]
      %v1607 = vld [vmem:[%s1593 + $0x68] sm:$0xff]
      %v1608 = vld [vmem:[%s1593 + $0x70] sm:$0xff]
      %v1609 = vld [vmem:[%s1593 + $0x78] sm:$0xff]
      %1610 = vmatprep.subr.mxu0 0.0
      %1611 = vmatpush1.msra.mxu0 %v1594
      %1612 = vmatprep.subr.mxu0 0.0
      %1613 = vmatpush1.msra.mxu0 %v1595
      %1614 = vmatprep.subr.mxu0 0.0
      %1615 = vmatpush1.msra.mxu0 %v1596
      %1616 = vmatprep.subr.mxu0 0.0
      %1617 = vmatpush1.msra.mxu0 %v1597
      %1618 = vmatprep.subr.mxu0 0.0
      %1619 = vmatpush1.msra.mxu0 %v1598
      %1620 = vmatprep.subr.mxu0 0.0
      %1621 = vmatpush1.msra.mxu0 %v1599
      %1622 = vmatprep.subr.mxu0 0.0
      %1623 = vmatpush1.msra.mxu0 %v1600
      %1624 = vmatprep.subr.mxu0 0.0
      %1625 = vmatpush1.msra.mxu0 %v1601
      %1626 = vmatprep.subr.mxu0 0.0
      %1627 = vmatpush1.msra.mxu0 %v1602
      %1628 = vmatprep.subr.mxu0 0.0
      %1629 = vmatpush1.msra.mxu0 %v1603
      %1630 = vmatprep.subr.mxu0 0.0
      %1631 = vmatpush1.msra.mxu0 %v1604
      %1632 = vmatprep.subr.mxu0 0.0
      %1633 = vmatpush1.msra.mxu0 %v1605
      %1634 = vmatprep.subr.mxu0 0.0
      %1635 = vmatpush1.msra.mxu0 %v1606
      %1636 = vmatprep.subr.mxu0 0.0
      %1637 = vmatpush1.msra.mxu0 %v1607
      %1638 = vmatprep.subr.mxu0 0.0
      %1639 = vmatpush1.msra.mxu0 %v1608
      %1640 = vmatprep.subr.mxu0 0.0
      %1641 = vmatpush1.msra.mxu0 %v1609
      %1642 = vmatprep.subr.mxu0 0.0
      %1643 = vmatpush1.msra.mxu0 0.0
      %1644 = vmatprep.subr.mxu0 0.0
      %1645 = vmatpush1.msra.mxu0 0.0
      %1646 = vmatprep.subr.mxu0 0.0
      %1647 = vmatpush1.msra.mxu0 0.0
      %1648 = vmatprep.subr.mxu0 0.0
      %1649 = vmatpush1.msra.mxu0 0.0
      %1650 = vmatprep.subr.mxu0 0.0
      %1651 = vmatpush1.msra.mxu0 0.0
      %1652 = vmatprep.subr.mxu0 0.0
      %1653 = vmatpush1.msra.mxu0 0.0
      %1654 = vmatprep.subr.mxu0 0.0
      %1655 = vmatpush1.msra.mxu0 0.0
      %1656 = vmatprep.subr.mxu0 0.0
      %1657 = vmatpush1.msra.mxu0 0.0
      %1658 = vmatprep.subr.mxu0 0.0
      %1659 = vmatpush1.msra.mxu0 0.0
      %1660 = vmatprep.subr.mxu0 0.0
      %1661 = vmatpush1.msra.mxu0 0.0
      %1662 = vmatprep.subr.mxu0 0.0
      %1663 = vmatpush1.msra.mxu0 0.0
      %1664 = vmatprep.subr.mxu0 0.0
      %1665 = vmatpush1.msra.mxu0 0.0
      %1666 = vmatprep.subr.mxu0 0.0
      %1667 = vmatpush1.msra.mxu0 0.0
      %1668 = vmatprep.subr.mxu0 0.0
      %1669 = vmatpush1.msra.mxu0 0.0
      %1670 = vmatprep.subr.mxu0 0.0
      %1671 = vmatpush1.msra.mxu0 0.0
      %1672 = vmatprep.subr.mxu0 0.0
      %1673 = vmatpush1.msra.mxu0 0.0
      %1674 = vmatprep.mubr.f32.mxu0 0.0
      %1675 = vmatmul.mubr.f32.gmra.mrb[0].mxu0 %v492
      %v1676 = vpop.f32.mrb[0].mxu0
      %v1677 = vadd.f32 0.0, %v1676
      %v1678 = vpop.f32.mrb[0].mxu0
      %1679 = vmatprep.mubr.f32.mxu0 0.0
      %1680 = vmatmul.mubr.f32.gmra.mrb[0].mxu0 %v493
      %v1681 = vpop.f32.mrb[0].mxu0
      %v1682 = vadd.f32 0.0, %v1681
      %v1683 = vpop.f32.mrb[0].mxu0
      %1684 = vmatprep.mubr.f32.mxu0 0.0
      %1685 = vmatmul.mubr.f32.gmra.mrb[0].mxu0 %v494
      %v1686 = vpop.f32.mrb[0].mxu0
      %v1687 = vadd.f32 0.0, %v1686
      %v1688 = vpop.f32.mrb[0].mxu0
      %1689 = vmatprep.mubr.f32.mxu0 0.0
      %1690 = vmatmul.mubr.f32.gmra.mrb[0].mxu0 %v495
      %v1691 = vpop.f32.mrb[0].mxu0
      %v1692 = vadd.f32 0.0, %v1691
      %v1693 = vpop.f32.mrb[0].mxu0
      %1694 = vmatprep.mubr.f32.mxu0 0.0
      %1695 = vmatmul.mubr.f32.gmra.mrb[0].mxu0 %v496
      %v1696 = vpop.f32.mrb[0].mxu0
      %v1697 = vadd.f32 0.0, %v1696
      %v1698 = vpop.f32.mrb[0].mxu0
      %1699 = vmatprep.mubr.f32.mxu0 0.0
      %1700 = vmatmul.mubr.f32.gmra.mrb[0].mxu0 %v497
      %v1701 = vpop.f32.mrb[0].mxu0
      %v1702 = vadd.f32 0.0, %v1701
      %v1703 = vpop.f32.mrb[0].mxu0
      %1704 = vmatprep.mubr.f32.mxu0 0.0
      %1705 = vmatmul.mubr.f32.gmra.mrb[0].mxu0 %v498
      %v1706 = vpop.f32.mrb[0].mxu0
      %v1707 = vadd.f32 0.0, %v1706
      %v1708 = vpop.f32.mrb[0].mxu0
      %1709 = vmatprep.mubr.f32.mxu0 0.0
      %1710 = vmatmul.mubr.f32.gmra.mrb[0].mxu0 %v499
      %v1711 = vpop.f32.mrb[0].mxu0
      %v1712 = vadd.f32 0.0, %v1711
      %v1713 = vpop.f32.mrb[0].mxu0
      %1714 = vmatprep.mubr.f32.mxu0 0.0
      %1715 = vmatmul.mubr.f32.gmra.mrb[0].mxu0 %v500
      %v1716 = vpop.f32.mrb[0].mxu0
      %v1717 = vadd.f32 0.0, %v1716
      %v1718 = vpop.f32.mrb[0].mxu0
      %1719 = vmatprep.mubr.f32.mxu0 0.0
      %1720 = vmatmul.mubr.f32.gmra.mrb[0].mxu0 %v501
      %v1721 = vpop.f32.mrb[0].mxu0
      %v1722 = vadd.f32 0.0, %v1721
      %v1723 = vpop.f32.mrb[0].mxu0
      %1724 = vmatprep.mubr.f32.mxu0 0.0
      %1725 = vmatmul.mubr.f32.gmra.mrb[0].mxu0 %v502
      %v1726 = vpop.f32.mrb[0].mxu0
      %v1727 = vadd.f32 0.0, %v1726
      %v1728 = vpop.f32.mrb[0].mxu0
      %1729 = vmatprep.mubr.f32.mxu0 0.0
      %1730 = vmatmul.mubr.f32.gmra.mrb[0].mxu0 %v503
      %v1731 = vpop.f32.mrb[0].mxu0
      %v1732 = vadd.f32 0.0, %v1731
      %v1733 = vpop.f32.mrb[0].mxu0
      %1734 = vmatprep.mubr.f32.mxu0 0.0
      %1735 = vmatmul.mubr.f32.gmra.mrb[0].mxu0 %v504
      %v1736 = vpop.f32.mrb[0].mxu0
      %v1737 = vadd.f32 0.0, %v1736
      %v1738 = vpop.f32.mrb[0].mxu0
      %1739 = vmatprep.mubr.f32.mxu0 0.0
      %1740 = vmatmul.mubr.f32.gmra.mrb[0].mxu0 %v505
      %v1741 = vpop.f32.mrb[0].mxu0
      %v1742 = vadd.f32 0.0, %v1741
      %v1743 = vpop.f32.mrb[0].mxu0
      %1744 = vmatprep.mubr.f32.mxu0 0.0
      %1745 = vmatmul.mubr.f32.gmra.mrb[0].mxu0 %v506
      %v1746 = vpop.f32.mrb[0].mxu0
      %v1747 = vadd.f32 0.0, %v1746
      %v1748 = vpop.f32.mrb[0].mxu0
      %1749 = vmatprep.mubr.f32.mxu0 0.0
      %1750 = vmatmul.mubr.f32.gmra.mrb[0].mxu0 %v507
      %v1751 = vpop.f32.mrb[0].mxu0
      %v1752 = vadd.f32 0.0, %v1751
      %v1753 = vpop.f32.mrb[0].mxu0
      %1754 = vmatprep.mubr.f32.mxu0 0.0
      %1755 = vmatmul.mubr.f32.gmra.mrb[0].mxu0 %v508
      %v1756 = vpop.f32.mrb[0].mxu0
      %v1757 = vadd.f32 0.0, %v1756
      %v1758 = vpop.f32.mrb[0].mxu0
      %1759 = vmatprep.mubr.f32.mxu0 0.0
      %1760 = vmatmul.mubr.f32.gmra.mrb[0].mxu0 %v509
      %v1761 = vpop.f32.mrb[0].mxu0
      %v1762 = vadd.f32 0.0, %v1761
      %v1763 = vpop.f32.mrb[0].mxu0
      %1764 = vmatprep.mubr.f32.mxu0 0.0
      %1765 = vmatmul.mubr.f32.gmra.mrb[0].mxu0 %v510
      %v1766 = vpop.f32.mrb[0].mxu0
      %v1767 = vadd.f32 0.0, %v1766
      %v1768 = vpop.f32.mrb[0].mxu0
      %1769 = vmatprep.mubr.f32.mxu0 0.0
      %1770 = vmatmul.mubr.f32.gmra.mrb[0].mxu0 %v511
      %v1771 = vpop.f32.mrb[0].mxu0
      %v1772 = vadd.f32 0.0, %v1771
      %v1773 = vpop.f32.mrb[0].mxu0
      %1774 = vmatprep.mubr.f32.mxu0 0.0
      %1775 = vmatmul.mubr.f32.gmra.mrb[0].mxu0 %v512
      %v1776 = vpop.f32.mrb[0].mxu0
      %v1777 = vadd.f32 0.0, %v1776
      %v1778 = vpop.f32.mrb[0].mxu0
      %1779 = vmatprep.mubr.f32.mxu0 0.0
      %1780 = vmatmul.mubr.f32.gmra.mrb[0].mxu0 %v513
      %v1781 = vpop.f32.mrb[0].mxu0
      %v1782 = vadd.f32 0.0, %v1781
      %v1783 = vpop.f32.mrb[0].mxu0
      %1784 = vmatprep.mubr.f32.mxu0 0.0
      %1785 = vmatmul.mubr.f32.gmra.mrb[0].mxu0 %v514
      %v1786 = vpop.f32.mrb[0].mxu0
      %v1787 = vadd.f32 0.0, %v1786
      %v1788 = vpop.f32.mrb[0].mxu0
      %1789 = vmatprep.mubr.f32.mxu0 0.0
      %1790 = vmatmul.mubr.f32.gmra.mrb[0].mxu0 %v515
      %v1791 = vpop.f32.mrb[0].mxu0
      %v1792 = vadd.f32 0.0, %v1791
      %v1793 = vpop.f32.mrb[0].mxu0
      %1794 = vmatprep.mubr.f32.mxu0 0.0
      %1795 = vmatmul.mubr.f32.gmra.mrb[0].mxu0 %v516
      %v1796 = vpop.f32.mrb[0].mxu0
      %v1797 = vadd.f32 0.0, %v1796
      %v1798 = vpop.f32.mrb[0].mxu0
      %1799 = vmatprep.mubr.f32.mxu0 0.0
      %1800 = vmatmul.mubr.f32.gmra.mrb[0].mxu0 %v517
      %v1801 = vpop.f32.mrb[0].mxu0
      %v1802 = vadd.f32 0.0, %v1801
      %v1803 = vpop.f32.mrb[0].mxu0
      %1804 = vmatprep.mubr.f32.mxu0 0.0
      %1805 = vmatmul.mubr.f32.gmra.mrb[0].mxu0 %v518
      %v1806 = vpop.f32.mrb[0].mxu0
      %v1807 = vadd.f32 0.0, %v1806
      %v1808 = vpop.f32.mrb[0].mxu0
      %1809 = vmatprep.mubr.f32.mxu0 0.0
      %1810 = vmatmul.mubr.f32.gmra.mrb[0].mxu0 %v519
      %v1811 = vpop.f32.mrb[0].mxu0
      %v1812 = vadd.f32 0.0, %v1811
      %v1813 = vpop.f32.mrb[0].mxu0
      %1814 = vmatprep.mubr.f32.mxu0 0.0
      %1815 = vmatmul.mubr.f32.gmra.mrb[0].mxu0 %v520
      %v1816 = vpop.f32.mrb[0].mxu0
      %v1817 = vadd.f32 0.0, %v1816
      %v1818 = vpop.f32.mrb[0].mxu0
      %1819 = vmatprep.mubr.f32.mxu0 0.0
      %1820 = vmatmul.mubr.f32.gmra.mrb[0].mxu0 %v521
      %v1821 = vpop.f32.mrb[0].mxu0
      %v1822 = vadd.f32 0.0, %v1821
      %v1823 = vpop.f32.mrb[0].mxu0
      %1824 = vmatprep.mubr.f32.mxu0 0.0
      %1825 = vmatmul.mubr.f32.gmra.mrb[0].mxu0 %v522
      %v1826 = vpop.f32.mrb[0].mxu0
      %v1827 = vadd.f32 0.0, %v1826
      %v1828 = vpop.f32.mrb[0].mxu0
      %1829 = vmatprep.mubr.f32.mxu0 0.0
      %1830 = vmatmul.mubr.f32.gmra.mrb[0].mxu0 %v523
      %v1831 = vpop.f32.mrb[0].mxu0
      %v1832 = vadd.f32 0.0, %v1831
      %v1833 = vpop.f32.mrb[0].mxu0
      %1834 = vdwg.mxu0
      %v1835 = vadd.f32 %v1561, %v1677
      %v1836 = vadd.f32 %v1562, %v1682
      %v1837 = vadd.f32 %v1563, %v1687
      %v1838 = vadd.f32 %v1564, %v1692
      %v1839 = vadd.f32 %v1565, %v1697
      %v1840 = vadd.f32 %v1566, %v1702
      %v1841 = vadd.f32 %v1567, %v1707
      %v1842 = vadd.f32 %v1568, %v1712
      %v1843 = vadd.f32 %v1569, %v1717
      %v1844 = vadd.f32 %v1570, %v1722
      %v1845 = vadd.f32 %v1571, %v1727
      %v1846 = vadd.f32 %v1572, %v1732
      %v1847 = vadd.f32 %v1573, %v1737
      %v1848 = vadd.f32 %v1574, %v1742
      %v1849 = vadd.f32 %v1575, %v1747
      %v1850 = vadd.f32 %v1576, %v1752
      %v1851 = vadd.f32 %v1577, %v1757
      %v1852 = vadd.f32 %v1578, %v1762
      %v1853 = vadd.f32 %v1579, %v1767
      %v1854 = vadd.f32 %v1580, %v1772
      %v1855 = vadd.f32 %v1581, %v1777
      %v1856 = vadd.f32 %v1582, %v1782
      %v1857 = vadd.f32 %v1583, %v1787
      %v1858 = vadd.f32 %v1584, %v1792
      %v1859 = vadd.f32 %v1585, %v1797
      %v1860 = vadd.f32 %v1586, %v1802
      %v1861 = vadd.f32 %v1587, %v1807
      %v1862 = vadd.f32 %v1588, %v1812
      %v1863 = vadd.f32 %v1589, %v1817
      %v1864 = vadd.f32 %v1590, %v1822
      %v1865 = vadd.f32 %v1591, %v1827
      %v1866 = vadd.f32 %v1592, %v1832
      %s1867 = scalar_lea.vmem %s1, 640
      %v1868 = vld [vmem:[%s1867] sm:$0xff]
      %v1869 = vld [vmem:[%s1867 + $0x8] sm:$0xff]
      %v1870 = vld [vmem:[%s1867 + $0x10] sm:$0xff]
      %v1871 = vld [vmem:[%s1867 + $0x18] sm:$0xff]
      %v1872 = vld [vmem:[%s1867 + $0x20] sm:$0xff]
      %v1873 = vld [vmem:[%s1867 + $0x28] sm:$0xff]
      %v1874 = vld [vmem:[%s1867 + $0x30] sm:$0xff]
      %v1875 = vld [vmem:[%s1867 + $0x38] sm:$0xff]
      %v1876 = vld [vmem:[%s1867 + $0x40] sm:$0xff]
      %v1877 = vld [vmem:[%s1867 + $0x48] sm:$0xff]
      %v1878 = vld [vmem:[%s1867 + $0x50] sm:$0xff]
      %v1879 = vld [vmem:[%s1867 + $0x58] sm:$0xff]
      %v1880 = vld [vmem:[%s1867 + $0x60] sm:$0xff]
      %v1881 = vld [vmem:[%s1867 + $0x68] sm:$0xff]
      %v1882 = vld [vmem:[%s1867 + $0x70] sm:$0xff]
      %v1883 = vld [vmem:[%s1867 + $0x78] sm:$0xff]
      %1884 = vmatprep.subr.mxu0 0.0
      %1885 = vmatpush1.msra.mxu0 %v1868
      %1886 = vmatprep.subr.mxu0 0.0
      %1887 = vmatpush1.msra.mxu0 %v1869
      %1888 = vmatprep.subr.mxu0 0.0
      %1889 = vmatpush1.msra.mxu0 %v1870
      %1890 = vmatprep.subr.mxu0 0.0
      %1891 = vmatpush1.msra.mxu0 %v1871
      %1892 = vmatprep.subr.mxu0 0.0
      %1893 = vmatpush1.msra.mxu0 %v1872
      %1894 = vmatprep.subr.mxu0 0.0
      %1895 = vmatpush1.msra.mxu0 %v1873
      %1896 = vmatprep.subr.mxu0 0.0
      %1897 = vmatpush1.msra.mxu0 %v1874
      %1898 = vmatprep.subr.mxu0 0.0
      %1899 = vmatpush1.msra.mxu0 %v1875
      %1900 = vmatprep.subr.mxu0 0.0
      %1901 = vmatpush1.msra.mxu0 %v1876
      %1902 = vmatprep.subr.mxu0 0.0
      %1903 = vmatpush1.msra.mxu0 %v1877
      %1904 = vmatprep.subr.mxu0 0.0
      %1905 = vmatpush1.msra.mxu0 %v1878
      %1906 = vmatprep.subr.mxu0 0.0
      %1907 = vmatpush1.msra.mxu0 %v1879
      %1908 = vmatprep.subr.mxu0 0.0
      %1909 = vmatpush1.msra.mxu0 %v1880
      %1910 = vmatprep.subr.mxu0 0.0
      %1911 = vmatpush1.msra.mxu0 %v1881
      %1912 = vmatprep.subr.mxu0 0.0
      %1913 = vmatpush1.msra.mxu0 %v1882
      %1914 = vmatprep.subr.mxu0 0.0
      %1915 = vmatpush1.msra.mxu0 %v1883
      %1916 = vmatprep.subr.mxu0 0.0
      %1917 = vmatpush1.msra.mxu0 0.0
      %1918 = vmatprep.subr.mxu0 0.0
      %1919 = vmatpush1.msra.mxu0 0.0
      %1920 = vmatprep.subr.mxu0 0.0
      %1921 = vmatpush1.msra.mxu0 0.0
      %1922 = vmatprep.subr.mxu0 0.0
      %1923 = vmatpush1.msra.mxu0 0.0
      %1924 = vmatprep.subr.mxu0 0.0
      %1925 = vmatpush1.msra.mxu0 0.0
      %1926 = vmatprep.subr.mxu0 0.0
      %1927 = vmatpush1.msra.mxu0 0.0
      %1928 = vmatprep.subr.mxu0 0.0
      %1929 = vmatpush1.msra.mxu0 0.0
      %1930 = vmatprep.subr.mxu0 0.0
      %1931 = vmatpush1.msra.mxu0 0.0
      %1932 = vmatprep.subr.mxu0 0.0
      %1933 = vmatpush1.msra.mxu0 0.0
      %1934 = vmatprep.subr.mxu0 0.0
      %1935 = vmatpush1.msra.mxu0 0.0
      %1936 = vmatprep.subr.mxu0 0.0
      %1937 = vmatpush1.msra.mxu0 0.0
      %1938 = vmatprep.subr.mxu0 0.0
      %1939 = vmatpush1.msra.mxu0 0.0
      %1940 = vmatprep.subr.mxu0 0.0
      %1941 = vmatpush1.msra.mxu0 0.0
      %1942 = vmatprep.subr.mxu0 0.0
      %1943 = vmatpush1.msra.mxu0 0.0
      %1944 = vmatprep.subr.mxu0 0.0
      %1945 = vmatpush1.msra.mxu0 0.0
      %1946 = vmatprep.subr.mxu0 0.0
      %1947 = vmatpush1.msra.mxu0 0.0
      %1948 = vmatprep.mubr.f32.mxu0 0.0
      %1949 = vmatmul.mubr.f32.gmra.mrb[0].mxu0 %v528
      %v1950 = vpop.f32.mrb[0].mxu0
      %v1951 = vadd.f32 0.0, %v1950
      %v1952 = vpop.f32.mrb[0].mxu0
      %1953 = vmatprep.mubr.f32.mxu0 0.0
      %1954 = vmatmul.mubr.f32.gmra.mrb[0].mxu0 %v529
      %v1955 = vpop.f32.mrb[0].mxu0
      %v1956 = vadd.f32 0.0, %v1955
      %v1957 = vpop.f32.mrb[0].mxu0
      %1958 = vmatprep.mubr.f32.mxu0 0.0
      %1959 = vmatmul.mubr.f32.gmra.mrb[0].mxu0 %v530
      %v1960 = vpop.f32.mrb[0].mxu0
      %v1961 = vadd.f32 0.0, %v1960
      %v1962 = vpop.f32.mrb[0].mxu0
      %1963 = vmatprep.mubr.f32.mxu0 0.0
      %1964 = vmatmul.mubr.f32.gmra.mrb[0].mxu0 %v531
      %v1965 = vpop.f32.mrb[0].mxu0
      %v1966 = vadd.f32 0.0, %v1965
      %v1967 = vpop.f32.mrb[0].mxu0
      %1968 = vmatprep.mubr.f32.mxu0 0.0
      %1969 = vmatmul.mubr.f32.gmra.mrb[0].mxu0 %v532
      %v1970 = vpop.f32.mrb[0].mxu0
      %v1971 = vadd.f32 0.0, %v1970
      %v1972 = vpop.f32.mrb[0].mxu0
      %1973 = vmatprep.mubr.f32.mxu0 0.0
      %1974 = vmatmul.mubr.f32.gmra.mrb[0].mxu0 %v533
      %v1975 = vpop.f32.mrb[0].mxu0
      %v1976 = vadd.f32 0.0, %v1975
      %v1977 = vpop.f32.mrb[0].mxu0
      %1978 = vmatprep.mubr.f32.mxu0 0.0
      %1979 = vmatmul.mubr.f32.gmra.mrb[0].mxu0 %v534
      %v1980 = vpop.f32.mrb[0].mxu0
      %v1981 = vadd.f32 0.0, %v1980
      %v1982 = vpop.f32.mrb[0].mxu0
      %1983 = vmatprep.mubr.f32.mxu0 0.0
      %1984 = vmatmul.mubr.f32.gmra.mrb[0].mxu0 %v535
      %v1985 = vpop.f32.mrb[0].mxu0
      %v1986 = vadd.f32 0.0, %v1985
      %v1987 = vpop.f32.mrb[0].mxu0
      %1988 = vmatprep.mubr.f32.mxu0 0.0
      %1989 = vmatmul.mubr.f32.gmra.mrb[0].mxu0 %v536
      %v1990 = vpop.f32.mrb[0].mxu0
      %v1991 = vadd.f32 0.0, %v1990
      %v1992 = vpop.f32.mrb[0].mxu0
      %1993 = vmatprep.mubr.f32.mxu0 0.0
      %1994 = vmatmul.mubr.f32.gmra.mrb[0].mxu0 %v537
      %v1995 = vpop.f32.mrb[0].mxu0
      %v1996 = vadd.f32 0.0, %v1995
      %v1997 = vpop.f32.mrb[0].mxu0
      %1998 = vmatprep.mubr.f32.mxu0 0.0
      %1999 = vmatmul.mubr.f32.gmra.mrb[0].mxu0 %v538
      %v2000 = vpop.f32.mrb[0].mxu0
      %v2001 = vadd.f32 0.0, %v2000
      %v2002 = vpop.f32.mrb[0].mxu0
      %2003 = vmatprep.mubr.f32.mxu0 0.0
      %2004 = vmatmul.mubr.f32.gmra.mrb[0].mxu0 %v539
      %v2005 = vpop.f32.mrb[0].mxu0
      %v2006 = vadd.f32 0.0, %v2005
      %v2007 = vpop.f32.mrb[0].mxu0
      %2008 = vmatprep.mubr.f32.mxu0 0.0
      %2009 = vmatmul.mubr.f32.gmra.mrb[0].mxu0 %v540
      %v2010 = vpop.f32.mrb[0].mxu0
      %v2011 = vadd.f32 0.0, %v2010
      %v2012 = vpop.f32.mrb[0].mxu0
      %2013 = vmatprep.mubr.f32.mxu0 0.0
      %2014 = vmatmul.mubr.f32.gmra.mrb[0].mxu0 %v541
      %v2015 = vpop.f32.mrb[0].mxu0
      %v2016 = vadd.f32 0.0, %v2015
      %v2017 = vpop.f32.mrb[0].mxu0
      %2018 = vmatprep.mubr.f32.mxu0 0.0
      %2019 = vmatmul.mubr.f32.gmra.mrb[0].mxu0 %v542
      %v2020 = vpop.f32.mrb[0].mxu0
      %v2021 = vadd.f32 0.0, %v2020
      %v2022 = vpop.f32.mrb[0].mxu0
      %2023 = vmatprep.mubr.f32.mxu0 0.0
      %2024 = vmatmul.mubr.f32.gmra.mrb[0].mxu0 %v543
      %v2025 = vpop.f32.mrb[0].mxu0
      %v2026 = vadd.f32 0.0, %v2025
      %v2027 = vpop.f32.mrb[0].mxu0
      %2028 = vmatprep.mubr.f32.mxu0 0.0
      %2029 = vmatmul.mubr.f32.gmra.mrb[0].mxu0 %v544
      %v2030 = vpop.f32.mrb[0].mxu0
      %v2031 = vadd.f32 0.0, %v2030
      %v2032 = vpop.f32.mrb[0].mxu0
      %2033 = vmatprep.mubr.f32.mxu0 0.0
      %2034 = vmatmul.mubr.f32.gmra.mrb[0].mxu0 %v545
      %v2035 = vpop.f32.mrb[0].mxu0
      %v2036 = vadd.f32 0.0, %v2035
      %v2037 = vpop.f32.mrb[0].mxu0
      %2038 = vmatprep.mubr.f32.mxu0 0.0
      %2039 = vmatmul.mubr.f32.gmra.mrb[0].mxu0 %v546
      %v2040 = vpop.f32.mrb[0].mxu0
      %v2041 = vadd.f32 0.0, %v2040
      %v2042 = vpop.f32.mrb[0].mxu0
      %2043 = vmatprep.mubr.f32.mxu0 0.0
      %2044 = vmatmul.mubr.f32.gmra.mrb[0].mxu0 %v547
      %v2045 = vpop.f32.mrb[0].mxu0
      %v2046 = vadd.f32 0.0, %v2045
      %v2047 = vpop.f32.mrb[0].mxu0
      %2048 = vmatprep.mubr.f32.mxu0 0.0
      %2049 = vmatmul.mubr.f32.gmra.mrb[0].mxu0 %v548
      %v2050 = vpop.f32.mrb[0].mxu0
      %v2051 = vadd.f32 0.0, %v2050
      %v2052 = vpop.f32.mrb[0].mxu0
      %2053 = vmatprep.mubr.f32.mxu0 0.0
      %2054 = vmatmul.mubr.f32.gmra.mrb[0].mxu0 %v549
      %v2055 = vpop.f32.mrb[0].mxu0
      %v2056 = vadd.f32 0.0, %v2055
      %v2057 = vpop.f32.mrb[0].mxu0
      %2058 = vmatprep.mubr.f32.mxu0 0.0
      %2059 = vmatmul.mubr.f32.gmra.mrb[0].mxu0 %v550
      %v2060 = vpop.f32.mrb[0].mxu0
      %v2061 = vadd.f32 0.0, %v2060
      %v2062 = vpop.f32.mrb[0].mxu0
      %2063 = vmatprep.mubr.f32.mxu0 0.0
      %2064 = vmatmul.mubr.f32.gmra.mrb[0].mxu0 %v551
      %v2065 = vpop.f32.mrb[0].mxu0
      %v2066 = vadd.f32 0.0, %v2065
      %v2067 = vpop.f32.mrb[0].mxu0
      %2068 = vmatprep.mubr.f32.mxu0 0.0
      %2069 = vmatmul.mubr.f32.gmra.mrb[0].mxu0 %v552
      %v2070 = vpop.f32.mrb[0].mxu0
      %v2071 = vadd.f32 0.0, %v2070
      %v2072 = vpop.f32.mrb[0].mxu0
      %2073 = vmatprep.mubr.f32.mxu0 0.0
      %2074 = vmatmul.mubr.f32.gmra.mrb[0].mxu0 %v553
      %v2075 = vpop.f32.mrb[0].mxu0
      %v2076 = vadd.f32 0.0, %v2075
      %v2077 = vpop.f32.mrb[0].mxu0
      %2078 = vmatprep.mubr.f32.mxu0 0.0
      %2079 = vmatmul.mubr.f32.gmra.mrb[0].mxu0 %v554
      %v2080 = vpop.f32.mrb[0].mxu0
      %v2081 = vadd.f32 0.0, %v2080
      %v2082 = vpop.f32.mrb[0].mxu0
      %2083 = vmatprep.mubr.f32.mxu0 0.0
      %2084 = vmatmul.mubr.f32.gmra.mrb[0].mxu0 %v555
      %v2085 = vpop.f32.mrb[0].mxu0
      %v2086 = vadd.f32 0.0, %v2085
      %v2087 = vpop.f32.mrb[0].mxu0
      %2088 = vmatprep.mubr.f32.mxu0 0.0
      %2089 = vmatmul.mubr.f32.gmra.mrb[0].mxu0 %v556
      %v2090 = vpop.f32.mrb[0].mxu0
      %v2091 = vadd.f32 0.0, %v2090
      %v2092 = vpop.f32.mrb[0].mxu0
      %2093 = vmatprep.mubr.f32.mxu0 0.0
      %2094 = vmatmul.mubr.f32.gmra.mrb[0].mxu0 %v557
      %v2095 = vpop.f32.mrb[0].mxu0
      %v2096 = vadd.f32 0.0, %v2095
      %v2097 = vpop.f32.mrb[0].mxu0
      %2098 = vmatprep.mubr.f32.mxu0 0.0
      %2099 = vmatmul.mubr.f32.gmra.mrb[0].mxu0 %v558
      %v2100 = vpop.f32.mrb[0].mxu0
      %v2101 = vadd.f32 0.0, %v2100
      %v2102 = vpop.f32.mrb[0].mxu0
      %2103 = vmatprep.mubr.f32.mxu0 0.0
      %2104 = vmatmul.mubr.f32.gmra.mrb[0].mxu0 %v559
      %v2105 = vpop.f32.mrb[0].mxu0
      %v2106 = vadd.f32 0.0, %v2105
      %v2107 = vpop.f32.mrb[0].mxu0
      %2108 = vdwg.mxu0
      %v2109 = vadd.f32 %v1835, %v1951
      %v2110 = vadd.f32 %v1836, %v1956
      %v2111 = vadd.f32 %v1837, %v1961
      %v2112 = vadd.f32 %v1838, %v1966
      %v2113 = vadd.f32 %v1839, %v1971
      %v2114 = vadd.f32 %v1840, %v1976
      %v2115 = vadd.f32 %v1841, %v1981
      %v2116 = vadd.f32 %v1842, %v1986
      %v2117 = vadd.f32 %v1843, %v1991
      %v2118 = vadd.f32 %v1844, %v1996
      %v2119 = vadd.f32 %v1845, %v2001
      %v2120 = vadd.f32 %v1846, %v2006
      %v2121 = vadd.f32 %v1847, %v2011
      %v2122 = vadd.f32 %v1848, %v2016
      %v2123 = vadd.f32 %v1849, %v2021
      %v2124 = vadd.f32 %v1850, %v2026
      %v2125 = vadd.f32 %v1851, %v2031
      %v2126 = vadd.f32 %v1852, %v2036
      %v2127 = vadd.f32 %v1853, %v2041
      %v2128 = vadd.f32 %v1854, %v2046
      %v2129 = vadd.f32 %v1855, %v2051
      %v2130 = vadd.f32 %v1856, %v2056
      %v2131 = vadd.f32 %v1857, %v2061
      %v2132 = vadd.f32 %v1858, %v2066
      %v2133 = vadd.f32 %v1859, %v2071
      %v2134 = vadd.f32 %v1860, %v2076
      %v2135 = vadd.f32 %v1861, %v2081
      %v2136 = vadd.f32 %v1862, %v2086
      %v2137 = vadd.f32 %v1863, %v2091
      %v2138 = vadd.f32 %v1864, %v2096
      %v2139 = vadd.f32 %v1865, %v2101
      %v2140 = vadd.f32 %v1866, %v2106
      %s2141 = scalar_lea.vmem %s1, 768
      %v2142 = vld [vmem:[%s2141] sm:$0xff]
      %v2143 = vld [vmem:[%s2141 + $0x8] sm:$0xff]
      %v2144 = vld [vmem:[%s2141 + $0x10] sm:$0xff]
      %v2145 = vld [vmem:[%s2141 + $0x18] sm:$0xff]
      %v2146 = vld [vmem:[%s2141 + $0x20] sm:$0xff]
      %v2147 = vld [vmem:[%s2141 + $0x28] sm:$0xff]
      %v2148 = vld [vmem:[%s2141 + $0x30] sm:$0xff]
      %v2149 = vld [vmem:[%s2141 + $0x38] sm:$0xff]
      %v2150 = vld [vmem:[%s2141 + $0x40] sm:$0xff]
      %v2151 = vld [vmem:[%s2141 + $0x48] sm:$0xff]
      %v2152 = vld [vmem:[%s2141 + $0x50] sm:$0xff]
      %v2153 = vld [vmem:[%s2141 + $0x58] sm:$0xff]
      %v2154 = vld [vmem:[%s2141 + $0x60] sm:$0xff]
      %v2155 = vld [vmem:[%s2141 + $0x68] sm:$0xff]
      %v2156 = vld [vmem:[%s2141 + $0x70] sm:$0xff]
      %v2157 = vld [vmem:[%s2141 + $0x78] sm:$0xff]
      %2158 = vmatprep.subr.mxu0 0.0
      %2159 = vmatpush1.msra.mxu0 %v2142
      %2160 = vmatprep.subr.mxu0 0.0
      %2161 = vmatpush1.msra.mxu0 %v2143
      %2162 = vmatprep.subr.mxu0 0.0
      %2163 = vmatpush1.msra.mxu0 %v2144
      %2164 = vmatprep.subr.mxu0 0.0
      %2165 = vmatpush1.msra.mxu0 %v2145
      %2166 = vmatprep.subr.mxu0 0.0
      %2167 = vmatpush1.msra.mxu0 %v2146
      %2168 = vmatprep.subr.mxu0 0.0
      %2169 = vmatpush1.msra.mxu0 %v2147
      %2170 = vmatprep.subr.mxu0 0.0
      %2171 = vmatpush1.msra.mxu0 %v2148
      %2172 = vmatprep.subr.mxu0 0.0
      %2173 = vmatpush1.msra.mxu0 %v2149
      %2174 = vmatprep.subr.mxu0 0.0
      %2175 = vmatpush1.msra.mxu0 %v2150
      %2176 = vmatprep.subr.mxu0 0.0
      %2177 = vmatpush1.msra.mxu0 %v2151
      %2178 = vmatprep.subr.mxu0 0.0
      %2179 = vmatpush1.msra.mxu0 %v2152
      %2180 = vmatprep.subr.mxu0 0.0
      %2181 = vmatpush1.msra.mxu0 %v2153
      %2182 = vmatprep.subr.mxu0 0.0
      %2183 = vmatpush1.msra.mxu0 %v2154
      %2184 = vmatprep.subr.mxu0 0.0
      %2185 = vmatpush1.msra.mxu0 %v2155
      %2186 = vmatprep.subr.mxu0 0.0
      %2187 = vmatpush1.msra.mxu0 %v2156
      %2188 = vmatprep.subr.mxu0 0.0
      %2189 = vmatpush1.msra.mxu0 %v2157
      %2190 = vmatprep.subr.mxu0 0.0
      %2191 = vmatpush1.msra.mxu0 0.0
      %2192 = vmatprep.subr.mxu0 0.0
      %2193 = vmatpush1.msra.mxu0 0.0
      %2194 = vmatprep.subr.mxu0 0.0
      %2195 = vmatpush1.msra.mxu0 0.0
      %2196 = vmatprep.subr.mxu0 0.0
      %2197 = vmatpush1.msra.mxu0 0.0
      %2198 = vmatprep.subr.mxu0 0.0
      %2199 = vmatpush1.msra.mxu0 0.0
      %2200 = vmatprep.subr.mxu0 0.0
      %2201 = vmatpush1.msra.mxu0 0.0
      %2202 = vmatprep.subr.mxu0 0.0
      %2203 = vmatpush1.msra.mxu0 0.0
      %2204 = vmatprep.subr.mxu0 0.0
      %2205 = vmatpush1.msra.mxu0 0.0
      %2206 = vmatprep.subr.mxu0 0.0
      %2207 = vmatpush1.msra.mxu0 0.0
      %2208 = vmatprep.subr.mxu0 0.0
      %2209 = vmatpush1.msra.mxu0 0.0
      %2210 = vmatprep.subr.mxu0 0.0
      %2211 = vmatpush1.msra.mxu0 0.0
      %2212 = vmatprep.subr.mxu0 0.0
      %2213 = vmatpush1.msra.mxu0 0.0
      %2214 = vmatprep.subr.mxu0 0.0
      %2215 = vmatpush1.msra.mxu0 0.0
      %2216 = vmatprep.subr.mxu0 0.0
      %2217 = vmatpush1.msra.mxu0 0.0
      %2218 = vmatprep.subr.mxu0 0.0
      %2219 = vmatpush1.msra.mxu0 0.0
      %2220 = vmatprep.subr.mxu0 0.0
      %2221 = vmatpush1.msra.mxu0 0.0
      %2222 = vmatprep.mubr.f32.mxu0 0.0
      %2223 = vmatmul.mubr.f32.gmra.mrb[0].mxu0 %v458
      %v2224 = vpop.f32.mrb[0].mxu0
      %v2225 = vadd.f32 0.0, %v2224
      %v2226 = vpop.f32.mrb[0].mxu0
      %2227 = vmatprep.mubr.f32.mxu0 0.0
      %2228 = vmatmul.mubr.f32.gmra.mrb[0].mxu0 %v459
      %v2229 = vpop.f32.mrb[0].mxu0
      %v2230 = vadd.f32 0.0, %v2229
      %v2231 = vpop.f32.mrb[0].mxu0
      %2232 = vmatprep.mubr.f32.mxu0 0.0
      %2233 = vmatmul.mubr.f32.gmra.mrb[0].mxu0 %v460
      %v2234 = vpop.f32.mrb[0].mxu0
      %v2235 = vadd.f32 0.0, %v2234
      %v2236 = vpop.f32.mrb[0].mxu0
      %2237 = vmatprep.mubr.f32.mxu0 0.0
      %2238 = vmatmul.mubr.f32.gmra.mrb[0].mxu0 %v461
      %v2239 = vpop.f32.mrb[0].mxu0
      %v2240 = vadd.f32 0.0, %v2239
      %v2241 = vpop.f32.mrb[0].mxu0
      %2242 = vmatprep.mubr.f32.mxu0 0.0
      %2243 = vmatmul.mubr.f32.gmra.mrb[0].mxu0 %v462
      %v2244 = vpop.f32.mrb[0].mxu0
      %v2245 = vadd.f32 0.0, %v2244
      %v2246 = vpop.f32.mrb[0].mxu0
      %2247 = vmatprep.mubr.f32.mxu0 0.0
      %2248 = vmatmul.mubr.f32.gmra.mrb[0].mxu0 %v463
      %v2249 = vpop.f32.mrb[0].mxu0
      %v2250 = vadd.f32 0.0, %v2249
      %v2251 = vpop.f32.mrb[0].mxu0
      %2252 = vmatprep.mubr.f32.mxu0 0.0
      %2253 = vmatmul.mubr.f32.gmra.mrb[0].mxu0 %v464
      %v2254 = vpop.f32.mrb[0].mxu0
      %v2255 = vadd.f32 0.0, %v2254
      %v2256 = vpop.f32.mrb[0].mxu0
      %2257 = vmatprep.mubr.f32.mxu0 0.0
      %2258 = vmatmul.mubr.f32.gmra.mrb[0].mxu0 %v465
      %v2259 = vpop.f32.mrb[0].mxu0
      %v2260 = vadd.f32 0.0, %v2259
      %v2261 = vpop.f32.mrb[0].mxu0
      %2262 = vmatprep.mubr.f32.mxu0 0.0
      %2263 = vmatmul.mubr.f32.gmra.mrb[0].mxu0 %v466
      %v2264 = vpop.f32.mrb[0].mxu0
      %v2265 = vadd.f32 0.0, %v2264
      %v2266 = vpop.f32.mrb[0].mxu0
      %2267 = vmatprep.mubr.f32.mxu0 0.0
      %2268 = vmatmul.mubr.f32.gmra.mrb[0].mxu0 %v467
      %v2269 = vpop.f32.mrb[0].mxu0
      %v2270 = vadd.f32 0.0, %v2269
      %v2271 = vpop.f32.mrb[0].mxu0
      %2272 = vmatprep.mubr.f32.mxu0 0.0
      %2273 = vmatmul.mubr.f32.gmra.mrb[0].mxu0 %v468
      %v2274 = vpop.f32.mrb[0].mxu0
      %v2275 = vadd.f32 0.0, %v2274
      %v2276 = vpop.f32.mrb[0].mxu0
      %2277 = vmatprep.mubr.f32.mxu0 0.0
      %2278 = vmatmul.mubr.f32.gmra.mrb[0].mxu0 %v469
      %v2279 = vpop.f32.mrb[0].mxu0
      %v2280 = vadd.f32 0.0, %v2279
      %v2281 = vpop.f32.mrb[0].mxu0
      %2282 = vmatprep.mubr.f32.mxu0 0.0
      %2283 = vmatmul.mubr.f32.gmra.mrb[0].mxu0 %v470
      %v2284 = vpop.f32.mrb[0].mxu0
      %v2285 = vadd.f32 0.0, %v2284
      %v2286 = vpop.f32.mrb[0].mxu0
      %2287 = vmatprep.mubr.f32.mxu0 0.0
      %2288 = vmatmul.mubr.f32.gmra.mrb[0].mxu0 %v471
      %v2289 = vpop.f32.mrb[0].mxu0
      %v2290 = vadd.f32 0.0, %v2289
      %v2291 = vpop.f32.mrb[0].mxu0
      %2292 = vmatprep.mubr.f32.mxu0 0.0
      %2293 = vmatmul.mubr.f32.gmra.mrb[0].mxu0 %v472
      %v2294 = vpop.f32.mrb[0].mxu0
      %v2295 = vadd.f32 0.0, %v2294
      %v2296 = vpop.f32.mrb[0].mxu0
      %2297 = vmatprep.mubr.f32.mxu0 0.0
      %2298 = vmatmul.mubr.f32.gmra.mrb[0].mxu0 %v473
      %v2299 = vpop.f32.mrb[0].mxu0
      %v2300 = vadd.f32 0.0, %v2299
      %v2301 = vpop.f32.mrb[0].mxu0
      %2302 = vmatprep.mubr.f32.mxu0 0.0
      %2303 = vmatmul.mubr.f32.gmra.mrb[0].mxu0 %v474
      %v2304 = vpop.f32.mrb[0].mxu0
      %v2305 = vadd.f32 0.0, %v2304
      %v2306 = vpop.f32.mrb[0].mxu0
      %2307 = vmatprep.mubr.f32.mxu0 0.0
      %2308 = vmatmul.mubr.f32.gmra.mrb[0].mxu0 %v475
      %v2309 = vpop.f32.mrb[0].mxu0
      %v2310 = vadd.f32 0.0, %v2309
      %v2311 = vpop.f32.mrb[0].mxu0
      %2312 = vmatprep.mubr.f32.mxu0 0.0
      %2313 = vmatmul.mubr.f32.gmra.mrb[0].mxu0 %v476
      %v2314 = vpop.f32.mrb[0].mxu0
      %v2315 = vadd.f32 0.0, %v2314
      %v2316 = vpop.f32.mrb[0].mxu0
      %2317 = vmatprep.mubr.f32.mxu0 0.0
      %2318 = vmatmul.mubr.f32.gmra.mrb[0].mxu0 %v477
      %v2319 = vpop.f32.mrb[0].mxu0
      %v2320 = vadd.f32 0.0, %v2319
      %v2321 = vpop.f32.mrb[0].mxu0
      %2322 = vmatprep.mubr.f32.mxu0 0.0
      %2323 = vmatmul.mubr.f32.gmra.mrb[0].mxu0 %v478
      %v2324 = vpop.f32.mrb[0].mxu0
      %v2325 = vadd.f32 0.0, %v2324
      %v2326 = vpop.f32.mrb[0].mxu0
      %2327 = vmatprep.mubr.f32.mxu0 0.0
      %2328 = vmatmul.mubr.f32.gmra.mrb[0].mxu0 %v479
      %v2329 = vpop.f32.mrb[0].mxu0
      %v2330 = vadd.f32 0.0, %v2329
      %v2331 = vpop.f32.mrb[0].mxu0
      %2332 = vmatprep.mubr.f32.mxu0 0.0
      %2333 = vmatmul.mubr.f32.gmra.mrb[0].mxu0 %v480
      %v2334 = vpop.f32.mrb[0].mxu0
      %v2335 = vadd.f32 0.0, %v2334
      %v2336 = vpop.f32.mrb[0].mxu0
      %2337 = vmatprep.mubr.f32.mxu0 0.0
      %2338 = vmatmul.mubr.f32.gmra.mrb[0].mxu0 %v481
      %v2339 = vpop.f32.mrb[0].mxu0
      %v2340 = vadd.f32 0.0, %v2339
      %v2341 = vpop.f32.mrb[0].mxu0
      %2342 = vmatprep.mubr.f32.mxu0 0.0
      %2343 = vmatmul.mubr.f32.gmra.mrb[0].mxu0 %v482
      %v2344 = vpop.f32.mrb[0].mxu0
      %v2345 = vadd.f32 0.0, %v2344
      %v2346 = vpop.f32.mrb[0].mxu0
      %2347 = vmatprep.mubr.f32.mxu0 0.0
      %2348 = vmatmul.mubr.f32.gmra.mrb[0].mxu0 %v483
      %v2349 = vpop.f32.mrb[0].mxu0
      %v2350 = vadd.f32 0.0, %v2349
      %v2351 = vpop.f32.mrb[0].mxu0
      %2352 = vmatprep.mubr.f32.mxu0 0.0
      %2353 = vmatmul.mubr.f32.gmra.mrb[0].mxu0 %v484
      %v2354 = vpop.f32.mrb[0].mxu0
      %v2355 = vadd.f32 0.0, %v2354
      %v2356 = vpop.f32.mrb[0].mxu0
      %2357 = vmatprep.mubr.f32.mxu0 0.0
      %2358 = vmatmul.mubr.f32.gmra.mrb[0].mxu0 %v485
      %v2359 = vpop.f32.mrb[0].mxu0
      %v2360 = vadd.f32 0.0, %v2359
      %v2361 = vpop.f32.mrb[0].mxu0
      %2362 = vmatprep.mubr.f32.mxu0 0.0
      %2363 = vmatmul.mubr.f32.gmra.mrb[0].mxu0 %v486
      %v2364 = vpop.f32.mrb[0].mxu0
      %v2365 = vadd.f32 0.0, %v2364
      %v2366 = vpop.f32.mrb[0].mxu0
      %2367 = vmatprep.mubr.f32.mxu0 0.0
      %2368 = vmatmul.mubr.f32.gmra.mrb[0].mxu0 %v487
      %v2369 = vpop.f32.mrb[0].mxu0
      %v2370 = vadd.f32 0.0, %v2369
      %v2371 = vpop.f32.mrb[0].mxu0
      %2372 = vmatprep.mubr.f32.mxu0 0.0
      %2373 = vmatmul.mubr.f32.gmra.mrb[0].mxu0 %v488
      %v2374 = vpop.f32.mrb[0].mxu0
      %v2375 = vadd.f32 0.0, %v2374
      %v2376 = vpop.f32.mrb[0].mxu0
      %2377 = vmatprep.mubr.f32.mxu0 0.0
      %2378 = vmatmul.mubr.f32.gmra.mrb[0].mxu0 %v489
      %v2379 = vpop.f32.mrb[0].mxu0
      %v2380 = vadd.f32 0.0, %v2379
      %v2381 = vpop.f32.mrb[0].mxu0
      %2382 = vdwg.mxu0
      %v2383 = vadd.f32 %v2109, %v2225
      %v2384 = vadd.f32 %v2110, %v2230
      %v2385 = vadd.f32 %v2111, %v2235
      %v2386 = vadd.f32 %v2112, %v2240
      %v2387 = vadd.f32 %v2113, %v2245
      %v2388 = vadd.f32 %v2114, %v2250
      %v2389 = vadd.f32 %v2115, %v2255
      %v2390 = vadd.f32 %v2116, %v2260
      %v2391 = vadd.f32 %v2117, %v2265
      %v2392 = vadd.f32 %v2118, %v2270
      %v2393 = vadd.f32 %v2119, %v2275
      %v2394 = vadd.f32 %v2120, %v2280
      %v2395 = vadd.f32 %v2121, %v2285
      %v2396 = vadd.f32 %v2122, %v2290
      %v2397 = vadd.f32 %v2123, %v2295
      %v2398 = vadd.f32 %v2124, %v2300
      %v2399 = vadd.f32 %v2125, %v2305
      %v2400 = vadd.f32 %v2126, %v2310
      %v2401 = vadd.f32 %v2127, %v2315
      %v2402 = vadd.f32 %v2128, %v2320
      %v2403 = vadd.f32 %v2129, %v2325
      %v2404 = vadd.f32 %v2130, %v2330
      %v2405 = vadd.f32 %v2131, %v2335
      %v2406 = vadd.f32 %v2132, %v2340
      %v2407 = vadd.f32 %v2133, %v2345
      %v2408 = vadd.f32 %v2134, %v2350
      %v2409 = vadd.f32 %v2135, %v2355
      %v2410 = vadd.f32 %v2136, %v2360
      %v2411 = vadd.f32 %v2137, %v2365
      %v2412 = vadd.f32 %v2138, %v2370
      %v2413 = vadd.f32 %v2139, %v2375
      %v2414 = vadd.f32 %v2140, %v2380
      %s2415 = scalar_lea.vmem %s1, 896
      %v2416 = vld [vmem:[%s2415] sm:$0xff]
      %v2417 = vld [vmem:[%s2415 + $0x8] sm:$0xff]
      %v2418 = vld [vmem:[%s2415 + $0x10] sm:$0xff]
      %v2419 = vld [vmem:[%s2415 + $0x18] sm:$0xff]
      %v2420 = vld [vmem:[%s2415 + $0x20] sm:$0xff]
      %v2421 = vld [vmem:[%s2415 + $0x28] sm:$0xff]
      %v2422 = vld [vmem:[%s2415 + $0x30] sm:$0xff]
      %v2423 = vld [vmem:[%s2415 + $0x38] sm:$0xff]
      %v2424 = vld [vmem:[%s2415 + $0x40] sm:$0xff]
      %v2425 = vld [vmem:[%s2415 + $0x48] sm:$0xff]
      %v2426 = vld [vmem:[%s2415 + $0x50] sm:$0xff]
      %v2427 = vld [vmem:[%s2415 + $0x58] sm:$0xff]
      %v2428 = vld [vmem:[%s2415 + $0x60] sm:$0xff]
      %v2429 = vld [vmem:[%s2415 + $0x68] sm:$0xff]
      %v2430 = vld [vmem:[%s2415 + $0x70] sm:$0xff]
      %v2431 = vld [vmem:[%s2415 + $0x78] sm:$0xff]
      %2432 = vmatprep.subr.mxu0 0.0
      %2433 = vmatpush1.msra.mxu0 %v2416
      %2434 = vmatprep.subr.mxu0 0.0
      %2435 = vmatpush1.msra.mxu0 %v2417
      %2436 = vmatprep.subr.mxu0 0.0
      %2437 = vmatpush1.msra.mxu0 %v2418
      %2438 = vmatprep.subr.mxu0 0.0
      %2439 = vmatpush1.msra.mxu0 %v2419
      %2440 = vmatprep.subr.mxu0 0.0
      %2441 = vmatpush1.msra.mxu0 %v2420
      %2442 = vmatprep.subr.mxu0 0.0
      %2443 = vmatpush1.msra.mxu0 %v2421
      %2444 = vmatprep.subr.mxu0 0.0
      %2445 = vmatpush1.msra.mxu0 %v2422
      %2446 = vmatprep.subr.mxu0 0.0
      %2447 = vmatpush1.msra.mxu0 %v2423
      %2448 = vmatprep.subr.mxu0 0.0
      %2449 = vmatpush1.msra.mxu0 %v2424
      %2450 = vmatprep.subr.mxu0 0.0
      %2451 = vmatpush1.msra.mxu0 %v2425
      %2452 = vmatprep.subr.mxu0 0.0
      %2453 = vmatpush1.msra.mxu0 %v2426
      %2454 = vmatprep.subr.mxu0 0.0
      %2455 = vmatpush1.msra.mxu0 %v2427
      %2456 = vmatprep.subr.mxu0 0.0
      %2457 = vmatpush1.msra.mxu0 %v2428
      %2458 = vmatprep.subr.mxu0 0.0
      %2459 = vmatpush1.msra.mxu0 %v2429
      %2460 = vmatprep.subr.mxu0 0.0
      %2461 = vmatpush1.msra.mxu0 %v2430
      %2462 = vmatprep.subr.mxu0 0.0
      %2463 = vmatpush1.msra.mxu0 %v2431
      %2464 = vmatprep.subr.mxu0 0.0
      %2465 = vmatpush1.msra.mxu0 0.0
      %2466 = vmatprep.subr.mxu0 0.0
      %2467 = vmatpush1.msra.mxu0 0.0
      %2468 = vmatprep.subr.mxu0 0.0
      %2469 = vmatpush1.msra.mxu0 0.0
      %2470 = vmatprep.subr.mxu0 0.0
      %2471 = vmatpush1.msra.mxu0 0.0
      %2472 = vmatprep.subr.mxu0 0.0
      %2473 = vmatpush1.msra.mxu0 0.0
      %2474 = vmatprep.subr.mxu0 0.0
      %2475 = vmatpush1.msra.mxu0 0.0
      %2476 = vmatprep.subr.mxu0 0.0
      %2477 = vmatpush1.msra.mxu0 0.0
      %2478 = vmatprep.subr.mxu0 0.0
      %2479 = vmatpush1.msra.mxu0 0.0
      %2480 = vmatprep.subr.mxu0 0.0
      %2481 = vmatpush1.msra.mxu0 0.0
      %2482 = vmatprep.subr.mxu0 0.0
      %2483 = vmatpush1.msra.mxu0 0.0
      %2484 = vmatprep.subr.mxu0 0.0
      %2485 = vmatpush1.msra.mxu0 0.0
      %2486 = vmatprep.subr.mxu0 0.0
      %2487 = vmatpush1.msra.mxu0 0.0
      %2488 = vmatprep.subr.mxu0 0.0
      %2489 = vmatpush1.msra.mxu0 0.0
      %2490 = vmatprep.subr.mxu0 0.0
      %2491 = vmatpush1.msra.mxu0 0.0
      %2492 = vmatprep.subr.mxu0 0.0
      %2493 = vmatpush1.msra.mxu0 0.0
      %2494 = vmatprep.subr.mxu0 0.0
      %2495 = vmatpush1.msra.mxu0 0.0
      %2496 = vmatprep.mubr.f32.mxu0 0.0
      %2497 = vmatmul.mubr.f32.gmra.mrb[0].mxu0 %v494
      %v2498 = vpop.f32.mrb[0].mxu0
      %v2499 = vadd.f32 0.0, %v2498
      %v2500 = vpop.f32.mrb[0].mxu0
      %2501 = vmatprep.mubr.f32.mxu0 0.0
      %2502 = vmatmul.mubr.f32.gmra.mrb[0].mxu0 %v495
      %v2503 = vpop.f32.mrb[0].mxu0
      %v2504 = vadd.f32 0.0, %v2503
      %v2505 = vpop.f32.mrb[0].mxu0
      %2506 = vmatprep.mubr.f32.mxu0 0.0
      %2507 = vmatmul.mubr.f32.gmra.mrb[0].mxu0 %v496
      %v2508 = vpop.f32.mrb[0].mxu0
      %v2509 = vadd.f32 0.0, %v2508
      %v2510 = vpop.f32.mrb[0].mxu0
      %2511 = vmatprep.mubr.f32.mxu0 0.0
      %2512 = vmatmul.mubr.f32.gmra.mrb[0].mxu0 %v497
      %v2513 = vpop.f32.mrb[0].mxu0
      %v2514 = vadd.f32 0.0, %v2513
      %v2515 = vpop.f32.mrb[0].mxu0
      %2516 = vmatprep.mubr.f32.mxu0 0.0
      %2517 = vmatmul.mubr.f32.gmra.mrb[0].mxu0 %v498
      %v2518 = vpop.f32.mrb[0].mxu0
      %v2519 = vadd.f32 0.0, %v2518
      %v2520 = vpop.f32.mrb[0].mxu0
      %2521 = vmatprep.mubr.f32.mxu0 0.0
      %2522 = vmatmul.mubr.f32.gmra.mrb[0].mxu0 %v499
      %v2523 = vpop.f32.mrb[0].mxu0
      %v2524 = vadd.f32 0.0, %v2523
      %v2525 = vpop.f32.mrb[0].mxu0
      %2526 = vmatprep.mubr.f32.mxu0 0.0
      %2527 = vmatmul.mubr.f32.gmra.mrb[0].mxu0 %v500
      %v2528 = vpop.f32.mrb[0].mxu0
      %v2529 = vadd.f32 0.0, %v2528
      %v2530 = vpop.f32.mrb[0].mxu0
      %2531 = vmatprep.mubr.f32.mxu0 0.0
      %2532 = vmatmul.mubr.f32.gmra.mrb[0].mxu0 %v501
      %v2533 = vpop.f32.mrb[0].mxu0
      %v2534 = vadd.f32 0.0, %v2533
      %v2535 = vpop.f32.mrb[0].mxu0
      %2536 = vmatprep.mubr.f32.mxu0 0.0
      %2537 = vmatmul.mubr.f32.gmra.mrb[0].mxu0 %v502
      %v2538 = vpop.f32.mrb[0].mxu0
      %v2539 = vadd.f32 0.0, %v2538
      %v2540 = vpop.f32.mrb[0].mxu0
      %2541 = vmatprep.mubr.f32.mxu0 0.0
      %2542 = vmatmul.mubr.f32.gmra.mrb[0].mxu0 %v503
      %v2543 = vpop.f32.mrb[0].mxu0
      %v2544 = vadd.f32 0.0, %v2543
      %v2545 = vpop.f32.mrb[0].mxu0
      %2546 = vmatprep.mubr.f32.mxu0 0.0
      %2547 = vmatmul.mubr.f32.gmra.mrb[0].mxu0 %v504
      %v2548 = vpop.f32.mrb[0].mxu0
      %v2549 = vadd.f32 0.0, %v2548
      %v2550 = vpop.f32.mrb[0].mxu0
      %2551 = vmatprep.mubr.f32.mxu0 0.0
      %2552 = vmatmul.mubr.f32.gmra.mrb[0].mxu0 %v505
      %v2553 = vpop.f32.mrb[0].mxu0
      %v2554 = vadd.f32 0.0, %v2553
      %v2555 = vpop.f32.mrb[0].mxu0
      %2556 = vmatprep.mubr.f32.mxu0 0.0
      %2557 = vmatmul.mubr.f32.gmra.mrb[0].mxu0 %v506
      %v2558 = vpop.f32.mrb[0].mxu0
      %v2559 = vadd.f32 0.0, %v2558
      %v2560 = vpop.f32.mrb[0].mxu0
      %2561 = vmatprep.mubr.f32.mxu0 0.0
      %2562 = vmatmul.mubr.f32.gmra.mrb[0].mxu0 %v507
      %v2563 = vpop.f32.mrb[0].mxu0
      %v2564 = vadd.f32 0.0, %v2563
      %v2565 = vpop.f32.mrb[0].mxu0
      %2566 = vmatprep.mubr.f32.mxu0 0.0
      %2567 = vmatmul.mubr.f32.gmra.mrb[0].mxu0 %v508
      %v2568 = vpop.f32.mrb[0].mxu0
      %v2569 = vadd.f32 0.0, %v2568
      %v2570 = vpop.f32.mrb[0].mxu0
      %2571 = vmatprep.mubr.f32.mxu0 0.0
      %2572 = vmatmul.mubr.f32.gmra.mrb[0].mxu0 %v509
      %v2573 = vpop.f32.mrb[0].mxu0
      %v2574 = vadd.f32 0.0, %v2573
      %v2575 = vpop.f32.mrb[0].mxu0
      %2576 = vmatprep.mubr.f32.mxu0 0.0
      %2577 = vmatmul.mubr.f32.gmra.mrb[0].mxu0 %v510
      %v2578 = vpop.f32.mrb[0].mxu0
      %v2579 = vadd.f32 0.0, %v2578
      %v2580 = vpop.f32.mrb[0].mxu0
      %2581 = vmatprep.mubr.f32.mxu0 0.0
      %2582 = vmatmul.mubr.f32.gmra.mrb[0].mxu0 %v511
      %v2583 = vpop.f32.mrb[0].mxu0
      %v2584 = vadd.f32 0.0, %v2583
      %v2585 = vpop.f32.mrb[0].mxu0
      %2586 = vmatprep.mubr.f32.mxu0 0.0
      %2587 = vmatmul.mubr.f32.gmra.mrb[0].mxu0 %v512
      %v2588 = vpop.f32.mrb[0].mxu0
      %v2589 = vadd.f32 0.0, %v2588
      %v2590 = vpop.f32.mrb[0].mxu0
      %2591 = vmatprep.mubr.f32.mxu0 0.0
      %2592 = vmatmul.mubr.f32.gmra.mrb[0].mxu0 %v513
      %v2593 = vpop.f32.mrb[0].mxu0
      %v2594 = vadd.f32 0.0, %v2593
      %v2595 = vpop.f32.mrb[0].mxu0
      %2596 = vmatprep.mubr.f32.mxu0 0.0
      %2597 = vmatmul.mubr.f32.gmra.mrb[0].mxu0 %v514
      %v2598 = vpop.f32.mrb[0].mxu0
      %v2599 = vadd.f32 0.0, %v2598
      %v2600 = vpop.f32.mrb[0].mxu0
      %2601 = vmatprep.mubr.f32.mxu0 0.0
      %2602 = vmatmul.mubr.f32.gmra.mrb[0].mxu0 %v515
      %v2603 = vpop.f32.mrb[0].mxu0
      %v2604 = vadd.f32 0.0, %v2603
      %v2605 = vpop.f32.mrb[0].mxu0
      %2606 = vmatprep.mubr.f32.mxu0 0.0
      %2607 = vmatmul.mubr.f32.gmra.mrb[0].mxu0 %v516
      %v2608 = vpop.f32.mrb[0].mxu0
      %v2609 = vadd.f32 0.0, %v2608
      %v2610 = vpop.f32.mrb[0].mxu0
      %2611 = vmatprep.mubr.f32.mxu0 0.0
      %2612 = vmatmul.mubr.f32.gmra.mrb[0].mxu0 %v517
      %v2613 = vpop.f32.mrb[0].mxu0
      %v2614 = vadd.f32 0.0, %v2613
      %v2615 = vpop.f32.mrb[0].mxu0
      %2616 = vmatprep.mubr.f32.mxu0 0.0
      %2617 = vmatmul.mubr.f32.gmra.mrb[0].mxu0 %v518
      %v2618 = vpop.f32.mrb[0].mxu0
      %v2619 = vadd.f32 0.0, %v2618
      %v2620 = vpop.f32.mrb[0].mxu0
      %2621 = vmatprep.mubr.f32.mxu0 0.0
      %2622 = vmatmul.mubr.f32.gmra.mrb[0].mxu0 %v519
      %v2623 = vpop.f32.mrb[0].mxu0
      %v2624 = vadd.f32 0.0, %v2623
      %v2625 = vpop.f32.mrb[0].mxu0
      %2626 = vmatprep.mubr.f32.mxu0 0.0
      %2627 = vmatmul.mubr.f32.gmra.mrb[0].mxu0 %v520
      %v2628 = vpop.f32.mrb[0].mxu0
      %v2629 = vadd.f32 0.0, %v2628
      %v2630 = vpop.f32.mrb[0].mxu0
      %2631 = vmatprep.mubr.f32.mxu0 0.0
      %2632 = vmatmul.mubr.f32.gmra.mrb[0].mxu0 %v521
      %v2633 = vpop.f32.mrb[0].mxu0
      %v2634 = vadd.f32 0.0, %v2633
      %v2635 = vpop.f32.mrb[0].mxu0
      %2636 = vmatprep.mubr.f32.mxu0 0.0
      %2637 = vmatmul.mubr.f32.gmra.mrb[0].mxu0 %v522
      %v2638 = vpop.f32.mrb[0].mxu0
      %v2639 = vadd.f32 0.0, %v2638
      %v2640 = vpop.f32.mrb[0].mxu0
      %2641 = vmatprep.mubr.f32.mxu0 0.0
      %2642 = vmatmul.mubr.f32.gmra.mrb[0].mxu0 %v523
      %v2643 = vpop.f32.mrb[0].mxu0
      %v2644 = vadd.f32 0.0, %v2643
      %v2645 = vpop.f32.mrb[0].mxu0
      %2646 = vmatprep.mubr.f32.mxu0 0.0
      %2647 = vmatmul.mubr.f32.gmra.mrb[0].mxu0 %v524
      %v2648 = vpop.f32.mrb[0].mxu0
      %v2649 = vadd.f32 0.0, %v2648
      %v2650 = vpop.f32.mrb[0].mxu0
      %2651 = vmatprep.mubr.f32.mxu0 0.0
      %2652 = vmatmul.mubr.f32.gmra.mrb[0].mxu0 %v525
      %v2653 = vpop.f32.mrb[0].mxu0
      %v2654 = vadd.f32 0.0, %v2653
      %v2655 = vpop.f32.mrb[0].mxu0
      %2656 = vdwg.mxu0
      %v2657 = vadd.f32 %v2383, %v2499
      %v2658 = vadd.f32 %v2384, %v2504
      %v2659 = vadd.f32 %v2385, %v2509
      %v2660 = vadd.f32 %v2386, %v2514
      %v2661 = vadd.f32 %v2387, %v2519
      %v2662 = vadd.f32 %v2388, %v2524
      %v2663 = vadd.f32 %v2389, %v2529
      %v2664 = vadd.f32 %v2390, %v2534
      %v2665 = vadd.f32 %v2391, %v2539
      %v2666 = vadd.f32 %v2392, %v2544
      %v2667 = vadd.f32 %v2393, %v2549
      %v2668 = vadd.f32 %v2394, %v2554
      %v2669 = vadd.f32 %v2395, %v2559
      %v2670 = vadd.f32 %v2396, %v2564
      %v2671 = vadd.f32 %v2397, %v2569
      %v2672 = vadd.f32 %v2398, %v2574
      %v2673 = vadd.f32 %v2399, %v2579
      %v2674 = vadd.f32 %v2400, %v2584
      %v2675 = vadd.f32 %v2401, %v2589
      %v2676 = vadd.f32 %v2402, %v2594
      %v2677 = vadd.f32 %v2403, %v2599
      %v2678 = vadd.f32 %v2404, %v2604
      %v2679 = vadd.f32 %v2405, %v2609
      %v2680 = vadd.f32 %v2406, %v2614
      %v2681 = vadd.f32 %v2407, %v2619
      %v2682 = vadd.f32 %v2408, %v2624
      %v2683 = vadd.f32 %v2409, %v2629
      %v2684 = vadd.f32 %v2410, %v2634
      %v2685 = vadd.f32 %v2411, %v2639
      %v2686 = vadd.f32 %v2412, %v2644
      %v2687 = vadd.f32 %v2413, %v2649
      %v2688 = vadd.f32 %v2414, %v2654
      %s2689 = scalar_lea.vmem %s1, 1024
      %v2690 = vld [vmem:[%s2689] sm:$0xff]
      %v2691 = vld [vmem:[%s2689 + $0x8] sm:$0xff]
      %v2692 = vld [vmem:[%s2689 + $0x10] sm:$0xff]
      %v2693 = vld [vmem:[%s2689 + $0x18] sm:$0xff]
      %v2694 = vld [vmem:[%s2689 + $0x20] sm:$0xff]
      %v2695 = vld [vmem:[%s2689 + $0x28] sm:$0xff]
      %v2696 = vld [vmem:[%s2689 + $0x30] sm:$0xff]
      %v2697 = vld [vmem:[%s2689 + $0x38] sm:$0xff]
      %v2698 = vld [vmem:[%s2689 + $0x40] sm:$0xff]
      %v2699 = vld [vmem:[%s2689 + $0x48] sm:$0xff]
      %v2700 = vld [vmem:[%s2689 + $0x50] sm:$0xff]
      %v2701 = vld [vmem:[%s2689 + $0x58] sm:$0xff]
      %v2702 = vld [vmem:[%s2689 + $0x60] sm:$0xff]
      %v2703 = vld [vmem:[%s2689 + $0x68] sm:$0xff]
      %v2704 = vld [vmem:[%s2689 + $0x70] sm:$0xff]
      %v2705 = vld [vmem:[%s2689 + $0x78] sm:$0xff]
      %2706 = vmatprep.subr.mxu0 0.0
      %2707 = vmatpush1.msra.mxu0 %v2690
      %2708 = vmatprep.subr.mxu0 0.0
      %2709 = vmatpush1.msra.mxu0 %v2691
      %2710 = vmatprep.subr.mxu0 0.0
      %2711 = vmatpush1.msra.mxu0 %v2692
      %2712 = vmatprep.subr.mxu0 0.0
      %2713 = vmatpush1.msra.mxu0 %v2693
      %2714 = vmatprep.subr.mxu0 0.0
      %2715 = vmatpush1.msra.mxu0 %v2694
      %2716 = vmatprep.subr.mxu0 0.0
      %2717 = vmatpush1.msra.mxu0 %v2695
      %2718 = vmatprep.subr.mxu0 0.0
      %2719 = vmatpush1.msra.mxu0 %v2696
      %2720 = vmatprep.subr.mxu0 0.0
      %2721 = vmatpush1.msra.mxu0 %v2697
      %2722 = vmatprep.subr.mxu0 0.0
      %2723 = vmatpush1.msra.mxu0 %v2698
      %2724 = vmatprep.subr.mxu0 0.0
      %2725 = vmatpush1.msra.mxu0 %v2699
      %2726 = vmatprep.subr.mxu0 0.0
      %2727 = vmatpush1.msra.mxu0 %v2700
      %2728 = vmatprep.subr.mxu0 0.0
      %2729 = vmatpush1.msra.mxu0 %v2701
      %2730 = vmatprep.subr.mxu0 0.0
      %2731 = vmatpush1.msra.mxu0 %v2702
      %2732 = vmatprep.subr.mxu0 0.0
      %2733 = vmatpush1.msra.mxu0 %v2703
      %2734 = vmatprep.subr.mxu0 0.0
      %2735 = vmatpush1.msra.mxu0 %v2704
      %2736 = vmatprep.subr.mxu0 0.0
      %2737 = vmatpush1.msra.mxu0 %v2705
      %2738 = vmatprep.subr.mxu0 0.0
      %2739 = vmatpush1.msra.mxu0 0.0
      %2740 = vmatprep.subr.mxu0 0.0
      %2741 = vmatpush1.msra.mxu0 0.0
      %2742 = vmatprep.subr.mxu0 0.0
      %2743 = vmatpush1.msra.mxu0 0.0
      %2744 = vmatprep.subr.mxu0 0.0
      %2745 = vmatpush1.msra.mxu0 0.0
      %2746 = vmatprep.subr.mxu0 0.0
      %2747 = vmatpush1.msra.mxu0 0.0
      %2748 = vmatprep.subr.mxu0 0.0
      %2749 = vmatpush1.msra.mxu0 0.0
      %2750 = vmatprep.subr.mxu0 0.0
      %2751 = vmatpush1.msra.mxu0 0.0
      %2752 = vmatprep.subr.mxu0 0.0
      %2753 = vmatpush1.msra.mxu0 0.0
      %2754 = vmatprep.subr.mxu0 0.0
      %2755 = vmatpush1.msra.mxu0 0.0
      %2756 = vmatprep.subr.mxu0 0.0
      %2757 = vmatpush1.msra.mxu0 0.0
      %2758 = vmatprep.subr.mxu0 0.0
      %2759 = vmatpush1.msra.mxu0 0.0
      %2760 = vmatprep.subr.mxu0 0.0
      %2761 = vmatpush1.msra.mxu0 0.0
      %2762 = vmatprep.subr.mxu0 0.0
      %2763 = vmatpush1.msra.mxu0 0.0
      %2764 = vmatprep.subr.mxu0 0.0
      %2765 = vmatpush1.msra.mxu0 0.0
      %2766 = vmatprep.subr.mxu0 0.0
      %2767 = vmatpush1.msra.mxu0 0.0
      %2768 = vmatprep.subr.mxu0 0.0
      %2769 = vmatpush1.msra.mxu0 0.0
      %2770 = vmatprep.mubr.f32.mxu0 0.0
      %2771 = vmatmul.mubr.f32.gmra.mrb[0].mxu0 %v530
      %v2772 = vpop.f32.mrb[0].mxu0
      %v2773 = vadd.f32 0.0, %v2772
      %v2774 = vpop.f32.mrb[0].mxu0
      %2775 = vmatprep.mubr.f32.mxu0 0.0
      %2776 = vmatmul.mubr.f32.gmra.mrb[0].mxu0 %v531
      %v2777 = vpop.f32.mrb[0].mxu0
      %v2778 = vadd.f32 0.0, %v2777
      %v2779 = vpop.f32.mrb[0].mxu0
      %2780 = vmatprep.mubr.f32.mxu0 0.0
      %2781 = vmatmul.mubr.f32.gmra.mrb[0].mxu0 %v532
      %v2782 = vpop.f32.mrb[0].mxu0
      %v2783 = vadd.f32 0.0, %v2782
      %v2784 = vpop.f32.mrb[0].mxu0
      %2785 = vmatprep.mubr.f32.mxu0 0.0
      %2786 = vmatmul.mubr.f32.gmra.mrb[0].mxu0 %v533
      %v2787 = vpop.f32.mrb[0].mxu0
      %v2788 = vadd.f32 0.0, %v2787
      %v2789 = vpop.f32.mrb[0].mxu0
      %2790 = vmatprep.mubr.f32.mxu0 0.0
      %2791 = vmatmul.mubr.f32.gmra.mrb[0].mxu0 %v534
      %v2792 = vpop.f32.mrb[0].mxu0
      %v2793 = vadd.f32 0.0, %v2792
      %v2794 = vpop.f32.mrb[0].mxu0
      %2795 = vmatprep.mubr.f32.mxu0 0.0
      %2796 = vmatmul.mubr.f32.gmra.mrb[0].mxu0 %v535
      %v2797 = vpop.f32.mrb[0].mxu0
      %v2798 = vadd.f32 0.0, %v2797
      %v2799 = vpop.f32.mrb[0].mxu0
      %2800 = vmatprep.mubr.f32.mxu0 0.0
      %2801 = vmatmul.mubr.f32.gmra.mrb[0].mxu0 %v536
      %v2802 = vpop.f32.mrb[0].mxu0
      %v2803 = vadd.f32 0.0, %v2802
      %v2804 = vpop.f32.mrb[0].mxu0
      %2805 = vmatprep.mubr.f32.mxu0 0.0
      %2806 = vmatmul.mubr.f32.gmra.mrb[0].mxu0 %v537
      %v2807 = vpop.f32.mrb[0].mxu0
      %v2808 = vadd.f32 0.0, %v2807
      %v2809 = vpop.f32.mrb[0].mxu0
      %2810 = vmatprep.mubr.f32.mxu0 0.0
      %2811 = vmatmul.mubr.f32.gmra.mrb[0].mxu0 %v538
      %v2812 = vpop.f32.mrb[0].mxu0
      %v2813 = vadd.f32 0.0, %v2812
      %v2814 = vpop.f32.mrb[0].mxu0
      %2815 = vmatprep.mubr.f32.mxu0 0.0
      %2816 = vmatmul.mubr.f32.gmra.mrb[0].mxu0 %v539
      %v2817 = vpop.f32.mrb[0].mxu0
      %v2818 = vadd.f32 0.0, %v2817
      %v2819 = vpop.f32.mrb[0].mxu0
      %2820 = vmatprep.mubr.f32.mxu0 0.0
      %2821 = vmatmul.mubr.f32.gmra.mrb[0].mxu0 %v540
      %v2822 = vpop.f32.mrb[0].mxu0
      %v2823 = vadd.f32 0.0, %v2822
      %v2824 = vpop.f32.mrb[0].mxu0
      %2825 = vmatprep.mubr.f32.mxu0 0.0
      %2826 = vmatmul.mubr.f32.gmra.mrb[0].mxu0 %v541
      %v2827 = vpop.f32.mrb[0].mxu0
      %v2828 = vadd.f32 0.0, %v2827
      %v2829 = vpop.f32.mrb[0].mxu0
      %2830 = vmatprep.mubr.f32.mxu0 0.0
      %2831 = vmatmul.mubr.f32.gmra.mrb[0].mxu0 %v542
      %v2832 = vpop.f32.mrb[0].mxu0
      %v2833 = vadd.f32 0.0, %v2832
      %v2834 = vpop.f32.mrb[0].mxu0
      %2835 = vmatprep.mubr.f32.mxu0 0.0
      %2836 = vmatmul.mubr.f32.gmra.mrb[0].mxu0 %v543
      %v2837 = vpop.f32.mrb[0].mxu0
      %v2838 = vadd.f32 0.0, %v2837
      %v2839 = vpop.f32.mrb[0].mxu0
      %2840 = vmatprep.mubr.f32.mxu0 0.0
      %2841 = vmatmul.mubr.f32.gmra.mrb[0].mxu0 %v544
      %v2842 = vpop.f32.mrb[0].mxu0
      %v2843 = vadd.f32 0.0, %v2842
      %v2844 = vpop.f32.mrb[0].mxu0
      %2845 = vmatprep.mubr.f32.mxu0 0.0
      %2846 = vmatmul.mubr.f32.gmra.mrb[0].mxu0 %v545
      %v2847 = vpop.f32.mrb[0].mxu0
      %v2848 = vadd.f32 0.0, %v2847
      %v2849 = vpop.f32.mrb[0].mxu0
      %2850 = vmatprep.mubr.f32.mxu0 0.0
      %2851 = vmatmul.mubr.f32.gmra.mrb[0].mxu0 %v546
      %v2852 = vpop.f32.mrb[0].mxu0
      %v2853 = vadd.f32 0.0, %v2852
      %v2854 = vpop.f32.mrb[0].mxu0
      %2855 = vmatprep.mubr.f32.mxu0 0.0
      %2856 = vmatmul.mubr.f32.gmra.mrb[0].mxu0 %v547
      %v2857 = vpop.f32.mrb[0].mxu0
      %v2858 = vadd.f32 0.0, %v2857
      %v2859 = vpop.f32.mrb[0].mxu0
      %2860 = vmatprep.mubr.f32.mxu0 0.0
      %2861 = vmatmul.mubr.f32.gmra.mrb[0].mxu0 %v548
      %v2862 = vpop.f32.mrb[0].mxu0
      %v2863 = vadd.f32 0.0, %v2862
      %v2864 = vpop.f32.mrb[0].mxu0
      %2865 = vmatprep.mubr.f32.mxu0 0.0
      %2866 = vmatmul.mubr.f32.gmra.mrb[0].mxu0 %v549
      %v2867 = vpop.f32.mrb[0].mxu0
      %v2868 = vadd.f32 0.0, %v2867
      %v2869 = vpop.f32.mrb[0].mxu0
      %2870 = vmatprep.mubr.f32.mxu0 0.0
      %2871 = vmatmul.mubr.f32.gmra.mrb[0].mxu0 %v550
      %v2872 = vpop.f32.mrb[0].mxu0
      %v2873 = vadd.f32 0.0, %v2872
      %v2874 = vpop.f32.mrb[0].mxu0
      %2875 = vmatprep.mubr.f32.mxu0 0.0
      %2876 = vmatmul.mubr.f32.gmra.mrb[0].mxu0 %v551
      %v2877 = vpop.f32.mrb[0].mxu0
      %v2878 = vadd.f32 0.0, %v2877
      %v2879 = vpop.f32.mrb[0].mxu0
      %2880 = vmatprep.mubr.f32.mxu0 0.0
      %2881 = vmatmul.mubr.f32.gmra.mrb[0].mxu0 %v552
      %v2882 = vpop.f32.mrb[0].mxu0
      %v2883 = vadd.f32 0.0, %v2882
      %v2884 = vpop.f32.mrb[0].mxu0
      %2885 = vmatprep.mubr.f32.mxu0 0.0
      %2886 = vmatmul.mubr.f32.gmra.mrb[0].mxu0 %v553
      %v2887 = vpop.f32.mrb[0].mxu0
      %v2888 = vadd.f32 0.0, %v2887
      %v2889 = vpop.f32.mrb[0].mxu0
      %2890 = vmatprep.mubr.f32.mxu0 0.0
      %2891 = vmatmul.mubr.f32.gmra.mrb[0].mxu0 %v554
      %v2892 = vpop.f32.mrb[0].mxu0
      %v2893 = vadd.f32 0.0, %v2892
      %v2894 = vpop.f32.mrb[0].mxu0
      %2895 = vmatprep.mubr.f32.mxu0 0.0
      %2896 = vmatmul.mubr.f32.gmra.mrb[0].mxu0 %v555
      %v2897 = vpop.f32.mrb[0].mxu0
      %v2898 = vadd.f32 0.0, %v2897
      %v2899 = vpop.f32.mrb[0].mxu0
      %2900 = vmatprep.mubr.f32.mxu0 0.0
      %2901 = vmatmul.mubr.f32.gmra.mrb[0].mxu0 %v556
      %v2902 = vpop.f32.mrb[0].mxu0
      %v2903 = vadd.f32 0.0, %v2902
      %v2904 = vpop.f32.mrb[0].mxu0
      %2905 = vmatprep.mubr.f32.mxu0 0.0
      %2906 = vmatmul.mubr.f32.gmra.mrb[0].mxu0 %v557
      %v2907 = vpop.f32.mrb[0].mxu0
      %v2908 = vadd.f32 0.0, %v2907
      %v2909 = vpop.f32.mrb[0].mxu0
      %2910 = vmatprep.mubr.f32.mxu0 0.0
      %2911 = vmatmul.mubr.f32.gmra.mrb[0].mxu0 %v558
      %v2912 = vpop.f32.mrb[0].mxu0
      %v2913 = vadd.f32 0.0, %v2912
      %v2914 = vpop.f32.mrb[0].mxu0
      %2915 = vmatprep.mubr.f32.mxu0 0.0
      %2916 = vmatmul.mubr.f32.gmra.mrb[0].mxu0 %v559
      %v2917 = vpop.f32.mrb[0].mxu0
      %v2918 = vadd.f32 0.0, %v2917
      %v2919 = vpop.f32.mrb[0].mxu0
      %2920 = vmatprep.mubr.f32.mxu0 0.0
      %2921 = vmatmul.mubr.f32.gmra.mrb[0].mxu0 %v560
      %v2922 = vpop.f32.mrb[0].mxu0
      %v2923 = vadd.f32 0.0, %v2922
      %v2924 = vpop.f32.mrb[0].mxu0
      %2925 = vmatprep.mubr.f32.mxu0 0.0
      %2926 = vmatmul.mubr.f32.gmra.mrb[0].mxu0 %v561
      %v2927 = vpop.f32.mrb[0].mxu0
      %v2928 = vadd.f32 0.0, %v2927
      %v2929 = vpop.f32.mrb[0].mxu0
      %2930 = vdwg.mxu0
      %v2931 = vadd.f32 %v2657, %v2773
      %v2932 = vadd.f32 %v2658, %v2778
      %v2933 = vadd.f32 %v2659, %v2783
      %v2934 = vadd.f32 %v2660, %v2788
      %v2935 = vadd.f32 %v2661, %v2793
      %v2936 = vadd.f32 %v2662, %v2798
      %v2937 = vadd.f32 %v2663, %v2803
      %v2938 = vadd.f32 %v2664, %v2808
      %v2939 = vadd.f32 %v2665, %v2813
      %v2940 = vadd.f32 %v2666, %v2818
      %v2941 = vadd.f32 %v2667, %v2823
      %v2942 = vadd.f32 %v2668, %v2828
      %v2943 = vadd.f32 %v2669, %v2833
      %v2944 = vadd.f32 %v2670, %v2838
      %v2945 = vadd.f32 %v2671, %v2843
      %v2946 = vadd.f32 %v2672, %v2848
      %v2947 = vadd.f32 %v2673, %v2853
      %v2948 = vadd.f32 %v2674, %v2858
      %v2949 = vadd.f32 %v2675, %v2863
      %v2950 = vadd.f32 %v2676, %v2868
      %v2951 = vadd.f32 %v2677, %v2873
      %v2952 = vadd.f32 %v2678, %v2878
      %v2953 = vadd.f32 %v2679, %v2883
      %v2954 = vadd.f32 %v2680, %v2888
      %v2955 = vadd.f32 %v2681, %v2893
      %v2956 = vadd.f32 %v2682, %v2898
      %v2957 = vadd.f32 %v2683, %v2903
      %v2958 = vadd.f32 %v2684, %v2908
      %v2959 = vadd.f32 %v2685, %v2913
      %v2960 = vadd.f32 %v2686, %v2918
      %v2961 = vadd.f32 %v2687, %v2923
      %v2962 = vadd.f32 %v2688, %v2928
      %2963 = vst [vmem:[%s231] sm:$0xff] %v2931
      %2964 = vst [vmem:[%s231 + $0x8] sm:$0xff] %v2932
      %2965 = vst [vmem:[%s231 + $0x10] sm:$0xff] %v2933
      %2966 = vst [vmem:[%s231 + $0x18] sm:$0xff] %v2934
      %2967 = vst [vmem:[%s231 + $0x20] sm:$0xff] %v2935
      %2968 = vst [vmem:[%s231 + $0x28] sm:$0xff] %v2936
      %2969 = vst [vmem:[%s231 + $0x30] sm:$0xff] %v2937
      %2970 = vst [vmem:[%s231 + $0x38] sm:$0xff] %v2938
      %2971 = vst [vmem:[%s231 + $0x40] sm:$0xff] %v2939
      %2972 = vst [vmem:[%s231 + $0x48] sm:$0xff] %v2940
      %2973 = vst [vmem:[%s231 + $0x50] sm:$0xff] %v2941
      %2974 = vst [vmem:[%s231 + $0x58] sm:$0xff] %v2942
      %2975 = vst [vmem:[%s231 + $0x60] sm:$0xff] %v2943
      %2976 = vst [vmem:[%s231 + $0x68] sm:$0xff] %v2944
      %2977 = vst [vmem:[%s231 + $0x70] sm:$0xff] %v2945
      %2978 = vst [vmem:[%s231 + $0x78] sm:$0xff] %v2946
      %2979 = vst [vmem:[%s231 + $0x80] sm:$0xff] %v2947
      %2980 = vst [vmem:[%s231 + $0x88] sm:$0xff] %v2948
      %2981 = vst [vmem:[%s231 + $0x90] sm:$0xff] %v2949
      %2982 = vst [vmem:[%s231 + $0x98] sm:$0xff] %v2950
      %2983 = vst [vmem:[%s231 + $0xa0] sm:$0xff] %v2951
      %2984 = vst [vmem:[%s231 + $0xa8] sm:$0xff] %v2952
      %2985 = vst [vmem:[%s231 + $0xb0] sm:$0xff] %v2953
      %2986 = vst [vmem:[%s231 + $0xb8] sm:$0xff] %v2954
      %2987 = vst [vmem:[%s231 + $0xc0] sm:$0xff] %v2955
      %2988 = vst [vmem:[%s231 + $0xc8] sm:$0xff] %v2956
      %2989 = vst [vmem:[%s231 + $0xd0] sm:$0xff] %v2957
      %2990 = vst [vmem:[%s231 + $0xd8] sm:$0xff] %v2958
      %2991 = vst [vmem:[%s231 + $0xe0] sm:$0xff] %v2959
      %2992 = vst [vmem:[%s231 + $0xe8] sm:$0xff] %v2960
      %2993 = vst [vmem:[%s231 + $0xf0] sm:$0xff] %v2961
      %2994 = vst [vmem:[%s231 + $0xf8] sm:$0xff] %v2962
      %v2995 = vadd.f32 %v2931, %v2932
      %v2996 = vadd.f32 %v2995, %v2933
      %v2997 = vadd.f32 %v2996, %v2934
      %v2998 = vadd.f32 %v2997, %v2935
      %v2999 = vadd.f32 %v2998, %v2936
      %v3000 = vadd.f32 %v2999, %v2937
      %v3001 = vadd.f32 %v3000, %v2938
      %v3002 = vadd.f32 %v3001, %v2939
      %v3003 = vadd.f32 %v3002, %v2940
      %v3004 = vadd.f32 %v3003, %v2941
      %v3005 = vadd.f32 %v3004, %v2942
      %v3006 = vadd.f32 %v3005, %v2943
      %v3007 = vadd.f32 %v3006, %v2944
      %v3008 = vadd.f32 %v3007, %v2945
      %v3009 = vadd.f32 %v3008, %v2946
      %v3010 = vadd.f32 %v3009, %v2947
      %v3011 = vadd.f32 %v3010, %v2948
      %v3012 = vadd.f32 %v3011, %v2949
      %v3013 = vadd.f32 %v3012, %v2950
      %v3014 = vadd.f32 %v3013, %v2951
      %v3015 = vadd.f32 %v3014, %v2952
      %v3016 = vadd.f32 %v3015, %v2953
      %v3017 = vadd.f32 %v3016, %v2954
      %v3018 = vadd.f32 %v3017, %v2955
      %v3019 = vadd.f32 %v3018, %v2956
      %v3020 = vadd.f32 %v3019, %v2957
      %v3021 = vadd.f32 %v3020, %v2958
      %v3022 = vadd.f32 %v3021, %v2959
      %v3023 = vadd.f32 %v3022, %v2960
      %v3024 = vadd.f32 %v3023, %v2961
      %v3025 = vadd.f32 %v3024, %v2962
      %v3026 = vrot.slane %v3025, 4
      %v3027 = vadd.f32 %v3025, %v3026
      %v3028 = vrot.slane %v3027, 2
      %v3029 = vadd.f32 %v3027, %v3028
      %v3030 = vrot.slane %v3029, 1
      %v3031 = vadd.f32 %v3029, %v3030
      %v3032 = vadd.f32 %v3031, 0.0
      %v3033 = vmul.f32 %v2931, %v2931
      %v3034 = vmul.f32 %v2932, %v2932
      %v3035 = vmul.f32 %v2933, %v2933
      %v3036 = vmul.f32 %v2934, %v2934
      %v3037 = vmul.f32 %v2935, %v2935
      %v3038 = vmul.f32 %v2936, %v2936
      %v3039 = vmul.f32 %v2937, %v2937
      %v3040 = vmul.f32 %v2938, %v2938
      %v3041 = vmul.f32 %v2939, %v2939
      %v3042 = vmul.f32 %v2940, %v2940
      %v3043 = vmul.f32 %v2941, %v2941
      %v3044 = vmul.f32 %v2942, %v2942
      %v3045 = vmul.f32 %v2943, %v2943
      %v3046 = vmul.f32 %v2944, %v2944
      %v3047 = vmul.f32 %v2945, %v2945
      %v3048 = vmul.f32 %v2946, %v2946
      %v3049 = vmul.f32 %v2947, %v2947
      %v3050 = vmul.f32 %v2948, %v2948
      %v3051 = vmul.f32 %v2949, %v2949
      %v3052 = vmul.f32 %v2950, %v2950
      %v3053 = vmul.f32 %v2951, %v2951
      %v3054 = vmul.f32 %v2952, %v2952
      %v3055 = vmul.f32 %v2953, %v2953
      %v3056 = vmul.f32 %v2954, %v2954
      %v3057 = vmul.f32 %v2955, %v2955
      %v3058 = vmul.f32 %v2956, %v2956
      %v3059 = vmul.f32 %v2957, %v2957
      %v3060 = vmul.f32 %v2958, %v2958
      %v3061 = vmul.f32 %v2959, %v2959
      %v3062 = vmul.f32 %v2960, %v2960
      %v3063 = vmul.f32 %v2961, %v2961
      %v3064 = vmul.f32 %v2962, %v2962
      %v3065 = vadd.f32 %v3033, %v3034
      %v3066 = vadd.f32 %v3065, %v3035
      %v3067 = vadd.f32 %v3066, %v3036
      %v3068 = vadd.f32 %v3067, %v3037
      %v3069 = vadd.f32 %v3068, %v3038
      %v3070 = vadd.f32 %v3069, %v3039
      %v3071 = vadd.f32 %v3070, %v3040
      %v3072 = vadd.f32 %v3071, %v3041
      %v3073 = vadd.f32 %v3072, %v3042
      %v3074 = vadd.f32 %v3073, %v3043
      %v3075 = vadd.f32 %v3074, %v3044
      %v3076 = vadd.f32 %v3075, %v3045
      %v3077 = vadd.f32 %v3076, %v3046
      %v3078 = vadd.f32 %v3077, %v3047
      %v3079 = vadd.f32 %v3078, %v3048
      %v3080 = vadd.f32 %v3079, %v3049
      %v3081 = vadd.f32 %v3080, %v3050
      %v3082 = vadd.f32 %v3081, %v3051
      %v3083 = vadd.f32 %v3082, %v3052
      %v3084 = vadd.f32 %v3083, %v3053
      %v3085 = vadd.f32 %v3084, %v3054
      %v3086 = vadd.f32 %v3085, %v3055
      %v3087 = vadd.f32 %v3086, %v3056
      %v3088 = vadd.f32 %v3087, %v3057
      %v3089 = vadd.f32 %v3088, %v3058
      %v3090 = vadd.f32 %v3089, %v3059
      %v3091 = vadd.f32 %v3090, %v3060
      %v3092 = vadd.f32 %v3091, %v3061
      %v3093 = vadd.f32 %v3092, %v3062
      %v3094 = vadd.f32 %v3093, %v3063
      %v3095 = vadd.f32 %v3094, %v3064
      %v3096 = vrot.slane %v3095, 4
      %v3097 = vadd.f32 %v3095, %v3096
      %v3098 = vrot.slane %v3097, 2
      %v3099 = vadd.f32 %v3097, %v3098
      %v3100 = vrot.slane %v3099, 1
      %v3101 = vadd.f32 %v3099, %v3100
      %v3102 = vadd.f32 %v3101, 0.0
      %vm3103 = vcmask 1040384
      %v3104 = vsel %vm3103, %v3032, %v3102
      %vm3105 = vcmask 1041408
      %v3106 = vsel %vm3105, %v3104, 0.0
      %3107 = vst [vmem:[%s235] sm:$0xff] %v3106
      %p3108 = scmp.lt.s32.totalorder %s17, 1
      %s3109 = scalar_select %p3108, %s17, 1
      %s3110 = smul.addr %s3109, 32
      %s3111 = smul.addr %s3110, 8
      %s3112 = scalar_lea.vmem %s4, %s3111
      %p3113 = scmp.lt.s32.totalorder %s17, 1
      %s3114 = scalar_select %p3113, %s17, 1
      %s3115 = smul.addr %s3114, 8
      %s3116 = scalar_lea.vmem %s5, %s3115
      // Predicated region
      $region37: #{double_conv_forward.4} parent=35 // pred_check
        %p3117 = pneg %p124
      $region38: #{double_conv_forward.4} parent=35 // pred_check_branch
        %3119 = sbr.rel (%p3117) target = $region40
      $region39: #{double_conv_forward.4} parent=35 // pred_region
        _
      $region40: #{double_conv_forward.4} parent=35 // pred_fallthru
        _
      // Predicated region
      $region41: #{double_conv_forward.4} parent=35 // pred_check
        %p3120 = pneg %p150
      $region42: #{double_conv_forward.4} parent=35 // pred_check_branch
        %3122 = sbr.rel (%p3120) target = $region44
      $region43: #{double_conv_forward.4} parent=35 // pred_region
        _
      $region44: #{double_conv_forward.4} parent=35 // pred_fallthru
        _
    $region36: #{double_conv_forward.4} parent=5 // pred_fallthru
      _
    %p3123 = scmp.le.s32.totalorder 2, %s12
    // Predicated region
    $region45: #{double_conv_forward.4} parent=5 // pred_check
      %p3124 = pneg %p3123
    $region46: #{double_conv_forward.4} parent=5 // pred_check_branch
      %3126 = sbr.rel (%p3124) target = $region48
    $region47: #{double_conv_forward.4} parent=5 // pred_region
      %s3127 = ssub.s32 %s12, 2
      // Predicated region
      $region49: #{double_conv_forward.4} parent=47 // pred_check
        %p3128 = pneg %p130
      $region50: #{double_conv_forward.4} parent=47 // pred_check_branch
        %3130 = sbr.rel (%p3128) target = $region52
      $region51: #{double_conv_forward.4} parent=47 // pred_region
        %p3131 = scmp.lt.s32.totalorder %s18, 1
        %s3132 = scalar_select %p3131, %s18, 1
        %s3133 = smul.addr %s3132, 32
        %s3134 = smul.addr %s3133, 8
        %s3135 = scalar_lea.vmem %s4, %s3134
      $region52: #{double_conv_forward.4} parent=47 // pred_fallthru
        _
      // Predicated region
      $region53: #{double_conv_forward.4} parent=47 // pred_check
        %p3136 = pneg %p156
      $region54: #{double_conv_forward.4} parent=47 // pred_check_branch
        %3138 = sbr.rel (%p3136) target = $region56
      $region55: #{double_conv_forward.4} parent=47 // pred_region
        %p3139 = scmp.lt.s32.totalorder %s18, 1
        %s3140 = scalar_select %p3139, %s18, 1
        %s3141 = smul.addr %s3140, 8
        %s3142 = scalar_lea.vmem %s5, %s3141
      $region56: #{double_conv_forward.4} parent=47 // pred_fallthru
        _
    $region48: #{double_conv_forward.4} parent=5 // pred_fallthru
      _
  $region6: #{double_conv_forward.4} parent=0 // loop_footer
    %s16 = sadd.s32 1, %s12
  $region7: #{double_conv_forward.4} parent=0 // loop_footer_branch
    %11 = sbr.rel target = $region3
  $region8: #{double_conv_forward.4} parent=0 // loop_exit
    _

// kernel: double_conv_forward.3
$region0: #{double_conv_forward.3}
  #allocation0 [shape = 'u32[]', space=smem, size = 0x4, offset = 0x4, fixed_abs, tag = 'smem constant byte address 0x4 - core index']
  #allocation1 [shape = 'u32[144,128]{1,0:T(1,128)}', space=vmem, size = 0x12000, scoped, tag = 'internal scratch']
  #allocation2 [shape = 'f32[18,18,4]{2,1,0:T(8,128)}', space=vmem, size = 0x36000, scoped, tag = 'scratch operand']
  %s0 = inlined_call_operand.vmem [shape: f32[2,16,16,4], index: 0, kind: input, shape index: {}]
  %s1 = inlined_call_operand.vmem [shape: f32[9,4,128], index: 1, kind: input, shape index: {}]
  %s2 = inlined_call_operand.vmem [shape: f32[2,256,128], index: 2, kind: output, shape index: {0}]
  %s3 = inlined_call_operand.vmem [shape: f32[16,128], index: 3, kind: output, shape index: {1}]
  %4 = xla_tuple %s2, %s3
  %s5 = sld [smem:[#allocation0]]
  $region49: #{double_conv_forward.3} parent=0
    _
  %s7 = ssub.s32 1, %s5
  %s8 = scalar_select 0, %s7, %s5
  loop: start=0, step=1, limit=4
  $region2: #{double_conv_forward.3} parent=0 // loop_pre_header
    _
  $region3: #{double_conv_forward.3} parent=0 // loop_header
    %s10 = sphi 0, %s14
    %p11 = scmp.ge.s32.totalorder %s10, 4
    %s20 = sphi 0, %s22
    %s23 = sphi 0, %s20
    %s24 = sphi 0, %s23
    %s40 = sphi 0, %s24
    %s44 = sphi 0, %s44
    %s46 = sphi 0, %s44
    %s47 = sphi 0, %s46
    %s61 = sphi 0, %s47
    %s67 = sphi 0, %s69
    %s70 = sphi 0, %s67
    %s71 = sphi 0, %s70
    %s87 = sphi 0, %s71
    %s93 = sphi 0, %s95
    %s96 = sphi 0, %s93
    %s97 = sphi 0, %s96
    %s113 = sphi 0, %s97
  $region4: #{double_conv_forward.3} parent=0 // loop_header_branch
    %13 = sbr.rel (%p11) target = $region8
  $region5: #{double_conv_forward.3} parent=0 // loop_body
    %s15 = ssub.s32 %s10, 1
    %s16 = ssub.s32 %s10, 2
    %s17 = sadd.s32 %s10, 1
    %s18 = ssub.s32 %s10, %s17
    %p19 = scmp.eq.s32.totalorder %s18, 0
    %s21 = sadd.s32 %s20, 1
    %s22 = scalar_select %p19, %s20, %s21
    %p25 = pneg %p19
    %p26 = scmp.eq.s32.totalorder %s10, 1
    %p27 = por %p25, %p26
    %p28 = scmp.ne.s32.totalorder %s20, %s23
    %p29 = scmp.eq.s32.totalorder %s10, 0
    %p30 = por %p28, %p29
    %p31 = scmp.ne.s32.totalorder %s20, %s23
    %p32 = scmp.eq.s32.totalorder %s15, 1
    %p33 = por %p31, %p32
    %p34 = scmp.ne.s32.totalorder %s23, %s24
    %p35 = scmp.eq.s32.totalorder %s15, 0
    %p36 = por %p34, %p35
    %p37 = scmp.ne.s32.totalorder %s23, %s24
    %p38 = scmp.eq.s32.totalorder %s16, 1
    %p39 = por %p37, %p38
    %p41 = scmp.ne.s32.totalorder %s24, %s40
    %p42 = scmp.eq.s32.totalorder %s16, 0
    %p43 = por %p41, %p42
    %s45 = sadd.s32 %s44, 1
    %p48 = scmp.eq.s32.totalorder %s10, 1
    %p49 = scmp.ne.s32.totalorder %s44, %s46
    %p50 = scmp.eq.s32.totalorder %s10, 0
    %p51 = por %p49, %p50
    %p52 = scmp.ne.s32.totalorder %s44, %s46
    %p53 = scmp.eq.s32.totalorder %s15, 1
    %p54 = por %p52, %p53
    %p55 = scmp.ne.s32.totalorder %s46, %s47
    %p56 = scmp.eq.s32.totalorder %s15, 0
    %p57 = por %p55, %p56
    %p58 = scmp.ne.s32.totalorder %s46, %s47
    %p59 = scmp.eq.s32.totalorder %s16, 1
    %p60 = por %p58, %p59
    %p62 = scmp.ne.s32.totalorder %s47, %s61
    %p63 = scmp.eq.s32.totalorder %s16, 0
    %p64 = por %p62, %p63
    %s65 = ssub.s32 %s10, %s17
    %p66 = scmp.eq.s32.totalorder %s65, 0
    %s68 = sadd.s32 %s67, 1
    %s69 = scalar_select %p66, %s67, %s68
    %p72 = pneg %p66
    %p73 = scmp.eq.s32.totalorder %s10, 1
    %p74 = por %p72, %p73
    %p75 = scmp.ne.s32.totalorder %s67, %s70
    %p76 = scmp.eq.s32.totalorder %s10, 0
    %p77 = por %p75, %p76
    %p78 = scmp.ne.s32.totalorder %s67, %s70
    %p79 = scmp.eq.s32.totalorder %s15, 1
    %p80 = por %p78, %p79
    %p81 = scmp.ne.s32.totalorder %s70, %s71
    %p82 = scmp.eq.s32.totalorder %s15, 0
    %p83 = por %p81, %p82
    %p84 = scmp.ne.s32.totalorder %s70, %s71
    %p85 = scmp.eq.s32.totalorder %s16, 1
    %p86 = por %p84, %p85
    %p88 = scmp.ne.s32.totalorder %s71, %s87
    %p89 = scmp.eq.s32.totalorder %s16, 0
    %p90 = por %p88, %p89
    %s91 = ssub.s32 %s10, %s17
    %p92 = scmp.eq.s32.totalorder %s91, 0
    %s94 = sadd.s32 %s93, 1
    %s95 = scalar_select %p92, %s93, %s94
    %p98 = pneg %p92
    %p99 = scmp.eq.s32.totalorder %s10, 1
    %p100 = por %p98, %p99
    %p101 = scmp.ne.s32.totalorder %s93, %s96
    %p102 = scmp.eq.s32.totalorder %s10, 0
    %p103 = por %p101, %p102
    %p104 = scmp.ne.s32.totalorder %s93, %s96
    %p105 = scmp.eq.s32.totalorder %s15, 1
    %p106 = por %p104, %p105
    %p107 = scmp.ne.s32.totalorder %s96, %s97
    %p108 = scmp.eq.s32.totalorder %s15, 0
    %p109 = por %p107, %p108
    %p110 = scmp.ne.s32.totalorder %s96, %s97
    %p111 = scmp.eq.s32.totalorder %s16, 1
    %p112 = por %p110, %p111
    %p114 = scmp.ne.s32.totalorder %s97, %s113
    %p115 = scmp.eq.s32.totalorder %s16, 0
    %p116 = por %p114, %p115
    %p117 = scmp.le.s32.totalorder 1, %s10
    %p118 = scmp.lt.s32.totalorder %s10, 3
    %p119 = pnand %p117, %p118
    %p120 = pneg %p119
    // Predicated region
    $region9: #{double_conv_forward.3} parent=5 // pred_check
      _
    $region10: #{double_conv_forward.3} parent=5 // pred_check_branch
      %122 = sbr.rel (%p119) target = $region12
    $region11: #{double_conv_forward.3} parent=5 // pred_region
      %s123 = ssub.s32 %s10, 1
      // Predicated region
      $region13: #{double_conv_forward.3} parent=11 // pred_check
        %p124 = pneg %p57
      $region14: #{double_conv_forward.3} parent=11 // pred_check_branch
        %126 = sbr.rel (%p124) target = $region16
      $region15: #{double_conv_forward.3} parent=11 // pred_region
        _
      $region16: #{double_conv_forward.3} parent=11 // pred_fallthru
        _
    $region12: #{double_conv_forward.3} parent=5 // pred_fallthru
      _
    %p127 = scmp.lt.s32.totalorder %s10, 2
    // Predicated region
    $region17: #{double_conv_forward.3} parent=5 // pred_check
      %p128 = pneg %p127
    $region18: #{double_conv_forward.3} parent=5 // pred_check_branch
      %130 = sbr.rel (%p128) target = $region20
    $region19: #{double_conv_forward.3} parent=5 // pred_region
      // Predicated region
      $region21: #{double_conv_forward.3} parent=19 // pred_check
        %p131 = pneg %p30
      $region22: #{double_conv_forward.3} parent=19 // pred_check_branch
        %133 = sbr.rel (%p131) target = $region24
      $region23: #{double_conv_forward.3} parent=19 // pred_region
        %p134 = scmp.lt.s32.totalorder %s10, 1
        %s135 = scalar_select %p134, %s10, 1
        %s136 = smul.addr %s135, 32
        %s137 = smul.addr %s136, 8
        %s138 = scalar_lea.vmem %s0, %s137
      $region24: #{double_conv_forward.3} parent=19 // pred_fallthru
        _
    $region20: #{double_conv_forward.3} parent=5 // pred_fallthru
      _
    %p139 = scmp.le.s32.totalorder 1, %s10
    %p140 = scmp.lt.s32.totalorder %s10, 3
    %p141 = pnand %p139, %p140
    %p142 = pneg %p141
    // Predicated region
    $region25: #{double_conv_forward.3} parent=5 // pred_check
      _
    $region26: #{double_conv_forward.3} parent=5 // pred_check_branch
      %144 = sbr.rel (%p141) target = $region28
    $region27: #{double_conv_forward.3} parent=5 // pred_region
      %s145 = ssub.s32 %s10, 1
      %p146 = scmp.lt.s32.totalorder %s15, 1
      %s147 = scalar_select %p146, %s15, 1
      %s148 = smul.addr %s147, 32
      %s149 = smul.addr %s148, 8
      %s150 = scalar_lea.vmem %s0, %s149
      %p151 = pneg %p36
      %p152 = pneg %p33
      %p153 = pneg %p57
      %p154 = pneg %p54
      %p155 = pneg %p83
      %p156 = pneg %p80
      %p157 = scmp.lt.s32.totalorder %s15, 1
      %s158 = scalar_select %p157, %s15, 1
      %s159 = smul.addr %s158, 32
      %s160 = smul.addr %s159, 8
      %s161 = scalar_lea.vmem %s2, %s160
      %p162 = pneg %p109
      %p163 = pneg %p106
      %p164 = scmp.lt.s32.totalorder %s15, 1
      %s165 = scalar_select %p164, %s15, 1
      %s166 = smul.addr %s165, 8
      %s167 = scalar_lea.vmem %s3, %s166
      %p168 = scmp.lt.s32.totalorder %s15, 1
      %s169 = scalar_select %p168, %s15, 1
      %s170 = smul.addr %s169, 32
      %s171 = smul.addr %s170, 8
      %s172 = scalar_lea.vmem %s0, %s171
      %p173 = scmp.lt.s32.totalorder %s15, 1
      %s174 = scalar_select %p173, %s15, 1
      %s175 = smul.addr %s174, 32
      %s176 = smul.addr %s175, 8
      %s177 = scalar_lea.vmem %s2, %s176
      %p178 = scmp.lt.s32.totalorder %s15, 1
      %s179 = scalar_select %p178, %s15, 1
      %s180 = smul.addr %s179, 8
      %s181 = scalar_lea.vmem %s3, %s180
      %v182 = vld [vmem:[%s172] sm:$0xff]
      %v183 = vld [vmem:[%s172 + $0x8] sm:$0xff]
      %v184 = vld [vmem:[%s172 + $0x10] sm:$0xff]
      %v185 = vld [vmem:[%s172 + $0x18] sm:$0xff]
      %v186 = vld [vmem:[%s172 + $0x20] sm:$0xff]
      %v187 = vld [vmem:[%s172 + $0x28] sm:$0xff]
      %v188 = vld [vmem:[%s172 + $0x30] sm:$0xff]
      %v189 = vld [vmem:[%s172 + $0x38] sm:$0xff]
      %v190 = vld [vmem:[%s172 + $0x40] sm:$0xff]
      %v191 = vld [vmem:[%s172 + $0x48] sm:$0xff]
      %v192 = vld [vmem:[%s172 + $0x50] sm:$0xff]
      %v193 = vld [vmem:[%s172 + $0x58] sm:$0xff]
      %v194 = vld [vmem:[%s172 + $0x60] sm:$0xff]
      %v195 = vld [vmem:[%s172 + $0x68] sm:$0xff]
      %v196 = vld [vmem:[%s172 + $0x70] sm:$0xff]
      %v197 = vld [vmem:[%s172 + $0x78] sm:$0xff]
      %v198 = vld [vmem:[%s172 + $0x80] sm:$0xff]
      %v199 = vld [vmem:[%s172 + $0x88] sm:$0xff]
      %v200 = vld [vmem:[%s172 + $0x90] sm:$0xff]
      %v201 = vld [vmem:[%s172 + $0x98] sm:$0xff]
      %v202 = vld [vmem:[%s172 + $0xa0] sm:$0xff]
      %v203 = vld [vmem:[%s172 + $0xa8] sm:$0xff]
      %v204 = vld [vmem:[%s172 + $0xb0] sm:$0xff]
      %v205 = vld [vmem:[%s172 + $0xb8] sm:$0xff]
      %v206 = vld [vmem:[%s172 + $0xc0] sm:$0xff]
      %v207 = vld [vmem:[%s172 + $0xc8] sm:$0xff]
      %v208 = vld [vmem:[%s172 + $0xd0] sm:$0xff]
      %v209 = vld [vmem:[%s172 + $0xd8] sm:$0xff]
      %v210 = vld [vmem:[%s172 + $0xe0] sm:$0xff]
      %v211 = vld [vmem:[%s172 + $0xe8] sm:$0xff]
      %v212 = vld [vmem:[%s172 + $0xf0] sm:$0xff]
      %v213 = vld [vmem:[%s172 + $0xf8] sm:$0xff]
      %vm214 = vcmask 31744
      %215 = vst.msk [vmem:[#allocation2] sm:$0xff] %vm214, 0.0
      %216 = vst.msk [vmem:[#allocation2 + $0x8] sm:$0xff] %vm214, 0.0
      %vm217 = vcmask 25600
      %218 = vst.msk [vmem:[#allocation2 + $0x10] sm:$0x3] %vm217, 0.0
      %s219 = scalar_lea.vmem [#allocation2], 408
      %220 = vst.msk [vmem:[%s219] sm:$0xff] %vm214, 0.0
      %221 = vst.msk [vmem:[%s219 + $0x8] sm:$0xff] %vm214, 0.0
      %222 = vst.msk [vmem:[%s219 + $0x10] sm:$0x3] %vm217, 0.0
      %vm223 = vcmask 24576
      %224 = vst.msk [vmem:[#allocation2] sm:$0x1] %vm223, 0.0
      %225 = vst.msk [vmem:[#allocation2 + $0x18] sm:$0x1] %vm223, 0.0
      %226 = vst.msk [vmem:[#allocation2 + $0x30] sm:$0x1] %vm223, 0.0
      %227 = vst.msk [vmem:[#allocation2 + $0x48] sm:$0x1] %vm223, 0.0
      %228 = vst.msk [vmem:[#allocation2 + $0x60] sm:$0x1] %vm223, 0.0
      %229 = vst.msk [vmem:[#allocation2 + $0x78] sm:$0x1] %vm223, 0.0
      %230 = vst.msk [vmem:[#allocation2 + $0x90] sm:$0x1] %vm223, 0.0
      %231 = vst.msk [vmem:[#allocation2 + $0xa8] sm:$0x1] %vm223, 0.0
      %232 = vst.msk [vmem:[#allocation2 + $0xc0] sm:$0x1] %vm223, 0.0
      %233 = vst.msk [vmem:[#allocation2 + $0xd8] sm:$0x1] %vm223, 0.0
      %234 = vst.msk [vmem:[#allocation2 + $0xf0] sm:$0x1] %vm223, 0.0
      %235 = vst.msk [vmem:[#allocation2 + $0x108] sm:$0x1] %vm223, 0.0
      %236 = vst.msk [vmem:[#allocation2 + $0x120] sm:$0x1] %vm223, 0.0
      %237 = vst.msk [vmem:[#allocation2 + $0x138] sm:$0x1] %vm223, 0.0
      %238 = vst.msk [vmem:[#allocation2 + $0x150] sm:$0x1] %vm223, 0.0
      %239 = vst.msk [vmem:[#allocation2 + $0x168] sm:$0x1] %vm223, 0.0
      %240 = vst.msk [vmem:[#allocation2 + $0x180] sm:$0x1] %vm223, 0.0
      %241 = vst.msk [vmem:[#allocation2 + $0x198] sm:$0x1] %vm223, 0.0
      %242 = vst.msk [vmem:[#allocation2 + $0x11] sm:$0x1] %vm223, 0.0
      %243 = vst.msk [vmem:[#allocation2 + $0x29] sm:$0x1] %vm223, 0.0
      %244 = vst.msk [vmem:[#allocation2 + $0x41] sm:$0x1] %vm223, 0.0
      %245 = vst.msk [vmem:[#allocation2 + $0x59] sm:$0x1] %vm223, 0.0
      %246 = vst.msk [vmem:[#allocation2 + $0x71] sm:$0x1] %vm223, 0.0
      %247 = vst.msk [vmem:[#allocation2 + $0x89] sm:$0x1] %vm223, 0.0
      %248 = vst.msk [vmem:[#allocation2 + $0xa1] sm:$0x1] %vm223, 0.0
      %249 = vst.msk [vmem:[#allocation2 + $0xb9] sm:$0x1] %vm223, 0.0
      %250 = vst.msk [vmem:[#allocation2 + $0xd1] sm:$0x1] %vm223, 0.0
      %251 = vst.msk [vmem:[#allocation2 + $0xe9] sm:$0x1] %vm223, 0.0
      %252 = vst.msk [vmem:[#allocation2 + $0x101] sm:$0x1] %vm223, 0.0
      %253 = vst.msk [vmem:[#allocation2 + $0x119] sm:$0x1] %vm223, 0.0
      %254 = vst.msk [vmem:[#allocation2 + $0x131] sm:$0x1] %vm223, 0.0
      %255 = vst.msk [vmem:[#allocation2 + $0x149] sm:$0x1] %vm223, 0.0
      %256 = vst.msk [vmem:[#allocation2 + $0x161] sm:$0x1] %vm223, 0.0
      %257 = vst.msk [vmem:[#allocation2 + $0x179] sm:$0x1] %vm223, 0.0
      %258 = vst.msk [vmem:[#allocation2 + $0x191] sm:$0x1] %vm223, 0.0
      %259 = vst.msk [vmem:[#allocation2 + $0x1a9] sm:$0x1] %vm223, 0.0
      %s260 = scalar_lea.vmem [#allocation2], 24
      %261 = vst.msk [vmem:[%s260 + $0x1] sm:$0xff] %vm214, %v182
      %262 = vst.msk [vmem:[%s260 + $0x9] sm:$0xff] %vm214, %v183
      %263 = vst.msk [vmem:[%s260 + $0x19] sm:$0xff] %vm214, %v184
      %264 = vst.msk [vmem:[%s260 + $0x21] sm:$0xff] %vm214, %v185
      %265 = vst.msk [vmem:[%s260 + $0x31] sm:$0xff] %vm214, %v186
      %266 = vst.msk [vmem:[%s260 + $0x39] sm:$0xff] %vm214, %v187
      %267 = vst.msk [vmem:[%s260 + $0x49] sm:$0xff] %vm214, %v188
      %268 = vst.msk [vmem:[%s260 + $0x51] sm:$0xff] %vm214, %v189
      %269 = vst.msk [vmem:[%s260 + $0x61] sm:$0xff] %vm214, %v190
      %270 = vst.msk [vmem:[%s260 + $0x69] sm:$0xff] %vm214, %v191
      %271 = vst.msk [vmem:[%s260 + $0x79] sm:$0xff] %vm214, %v192
      %272 = vst.msk [vmem:[%s260 + $0x81] sm:$0xff] %vm214, %v193
      %273 = vst.msk [vmem:[%s260 + $0x91] sm:$0xff] %vm214, %v194
      %274 = vst.msk [vmem:[%s260 + $0x99] sm:$0xff] %vm214, %v195
      %275 = vst.msk [vmem:[%s260 + $0xa9] sm:$0xff] %vm214, %v196
      %276 = vst.msk [vmem:[%s260 + $0xb1] sm:$0xff] %vm214, %v197
      %277 = vst.msk [vmem:[%s260 + $0xc1] sm:$0xff] %vm214, %v198
      %278 = vst.msk [vmem:[%s260 + $0xc9] sm:$0xff] %vm214, %v199
      %279 = vst.msk [vmem:[%s260 + $0xd9] sm:$0xff] %vm214, %v200
      %280 = vst.msk [vmem:[%s260 + $0xe1] sm:$0xff] %vm214, %v201
      %281 = vst.msk [vmem:[%s260 + $0xf1] sm:$0xff] %vm214, %v202
      %282 = vst.msk [vmem:[%s260 + $0xf9] sm:$0xff] %vm214, %v203
      %283 = vst.msk [vmem:[%s260 + $0x109] sm:$0xff] %vm214, %v204
      %284 = vst.msk [vmem:[%s260 + $0x111] sm:$0xff] %vm214, %v205
      %285 = vst.msk [vmem:[%s260 + $0x121] sm:$0xff] %vm214, %v206
      %286 = vst.msk [vmem:[%s260 + $0x129] sm:$0xff] %vm214, %v207
      %287 = vst.msk [vmem:[%s260 + $0x139] sm:$0xff] %vm214, %v208
      %288 = vst.msk [vmem:[%s260 + $0x141] sm:$0xff] %vm214, %v209
      %289 = vst.msk [vmem:[%s260 + $0x151] sm:$0xff] %vm214, %v210
      %290 = vst.msk [vmem:[%s260 + $0x159] sm:$0xff] %vm214, %v211
      %291 = vst.msk [vmem:[%s260 + $0x169] sm:$0xff] %vm214, %v212
      %292 = vst.msk [vmem:[%s260 + $0x171] sm:$0xff] %vm214, %v213
      %v293 = vld [vmem:[#allocation2] sm:$0xff]
      %v294 = vld [vmem:[#allocation2 + $0x8] sm:$0xff]
      %v295 = vld [vmem:[#allocation2 + $0x18] sm:$0xff]
      %v296 = vld [vmem:[#allocation2 + $0x20] sm:$0xff]
      %v297 = vld [vmem:[#allocation2 + $0x30] sm:$0xff]
      %v298 = vld [vmem:[#allocation2 + $0x38] sm:$0xff]
      %v299 = vld [vmem:[#allocation2 + $0x48] sm:$0xff]
      %v300 = vld [vmem:[#allocation2 + $0x50] sm:$0xff]
      %v301 = vld [vmem:[#allocation2 + $0x60] sm:$0xff]
      %v302 = vld [vmem:[#allocation2 + $0x68] sm:$0xff]
      %v303 = vld [vmem:[#allocation2 + $0x78] sm:$0xff]
      %v304 = vld [vmem:[#allocation2 + $0x80] sm:$0xff]
      %v305 = vld [vmem:[#allocation2 + $0x90] sm:$0xff]
      %v306 = vld [vmem:[#allocation2 + $0x98] sm:$0xff]
      %v307 = vld [vmem:[#allocation2 + $0xa8] sm:$0xff]
      %v308 = vld [vmem:[#allocation2 + $0xb0] sm:$0xff]
      %v309 = vld [vmem:[#allocation2 + $0xc0] sm:$0xff]
      %v310 = vld [vmem:[#allocation2 + $0xc8] sm:$0xff]
      %v311 = vld [vmem:[#allocation2 + $0xd8] sm:$0xff]
      %v312 = vld [vmem:[#allocation2 + $0xe0] sm:$0xff]
      %v313 = vld [vmem:[#allocation2 + $0xf0] sm:$0xff]
      %v314 = vld [vmem:[#allocation2 + $0xf8] sm:$0xff]
      %v315 = vld [vmem:[#allocation2 + $0x108] sm:$0xff]
      %v316 = vld [vmem:[#allocation2 + $0x110] sm:$0xff]
      %v317 = vld [vmem:[#allocation2 + $0x120] sm:$0xff]
      %v318 = vld [vmem:[#allocation2 + $0x128] sm:$0xff]
      %v319 = vld [vmem:[#allocation2 + $0x138] sm:$0xff]
      %v320 = vld [vmem:[#allocation2 + $0x140] sm:$0xff]
      %v321 = vld [vmem:[#allocation2 + $0x150] sm:$0xff]
      %v322 = vld [vmem:[#allocation2 + $0x158] sm:$0xff]
      %v323 = vld [vmem:[#allocation2 + $0x168] sm:$0xff]
      %v324 = vld [vmem:[#allocation2 + $0x170] sm:$0xff]
      %v325 = vld [vmem:[#allocation2 + $0x180] sm:$0xff]
      %v326 = vld [vmem:[#allocation2 + $0x188] sm:$0xff]
      %v327 = vld [vmem:[#allocation2 + $0x198] sm:$0xff]
      %v328 = vld [vmem:[#allocation2 + $0x1a0] sm:$0xff]
      %v329 = vld [vmem:[#allocation2 + $0x1] sm:$0xff]
      %v330 = vld [vmem:[#allocation2 + $0x9] sm:$0xff]
      %v331 = vld [vmem:[#allocation2 + $0x19] sm:$0xff]
      %v332 = vld [vmem:[#allocation2 + $0x21] sm:$0xff]
      %v333 = vld [vmem:[#allocation2 + $0x31] sm:$0xff]
      %v334 = vld [vmem:[#allocation2 + $0x39] sm:$0xff]
      %v335 = vld [vmem:[#allocation2 + $0x49] sm:$0xff]
      %v336 = vld [vmem:[#allocation2 + $0x51] sm:$0xff]
      %v337 = vld [vmem:[#allocation2 + $0x61] sm:$0xff]
      %v338 = vld [vmem:[#allocation2 + $0x69] sm:$0xff]
      %v339 = vld [vmem:[#allocation2 + $0x79] sm:$0xff]
      %v340 = vld [vmem:[#allocation2 + $0x81] sm:$0xff]
      %v341 = vld [vmem:[#allocation2 + $0x91] sm:$0xff]
      %v342 = vld [vmem:[#allocation2 + $0x99] sm:$0xff]
      %v343 = vld [vmem:[#allocation2 + $0xa9] sm:$0xff]
      %v344 = vld [vmem:[#allocation2 + $0xb1] sm:$0xff]
      %v345 = vld [vmem:[#allocation2 + $0xc1] sm:$0xff]
      %v346 = vld [vmem:[#allocation2 + $0xc9] sm:$0xff]
      %v347 = vld [vmem:[#allocation2 + $0xd9] sm:$0xff]
      %v348 = vld [vmem:[#allocation2 + $0xe1] sm:$0xff]
      %v349 = vld [vmem:[#allocation2 + $0xf1] sm:$0xff]
      %v350 = vld [vmem:[#allocation2 + $0xf9] sm:$0xff]
      %v351 = vld [vmem:[#allocation2 + $0x109] sm:$0xff]
      %v352 = vld [vmem:[#allocation2 + $0x111] sm:$0xff]
      %v353 = vld [vmem:[#allocation2 + $0x121] sm:$0xff]
      %v354 = vld [vmem:[#allocation2 + $0x129] sm:$0xff]
      %v355 = vld [vmem:[#allocation2 + $0x139] sm:$0xff]
      %v356 = vld [vmem:[#allocation2 + $0x141] sm:$0xff]
      %v357 = vld [vmem:[#allocation2 + $0x151] sm:$0xff]
      %v358 = vld [vmem:[#allocation2 + $0x159] sm:$0xff]
      %v359 = vld [vmem:[#allocation2 + $0x169] sm:$0xff]
      %v360 = vld [vmem:[#allocation2 + $0x171] sm:$0xff]
      %v361 = vld [vmem:[#allocation2 + $0x181] sm:$0xff]
      %v362 = vld [vmem:[#allocation2 + $0x189] sm:$0xff]
      %v363 = vld [vmem:[#allocation2 + $0x199] sm:$0xff]
      %v364 = vld [vmem:[#allocation2 + $0x1a1] sm:$0xff]
      %v365 = vld [vmem:[#allocation2 + $0x2] sm:$0xff]
      %v366 = vld [vmem:[#allocation2 + $0xa] sm:$0xff]
      %v367 = vld [vmem:[#allocation2 + $0x1a] sm:$0xff]
      %v368 = vld [vmem:[#allocation2 + $0x22] sm:$0xff]
      %v369 = vld [vmem:[#allocation2 + $0x32] sm:$0xff]
      %v370 = vld [vmem:[#allocation2 + $0x3a] sm:$0xff]
      %v371 = vld [vmem:[#allocation2 + $0x4a] sm:$0xff]
      %v372 = vld [vmem:[#allocation2 + $0x52] sm:$0xff]
      %v373 = vld [vmem:[#allocation2 + $0x62] sm:$0xff]
      %v374 = vld [vmem:[#allocation2 + $0x6a] sm:$0xff]
      %v375 = vld [vmem:[#allocation2 + $0x7a] sm:$0xff]
      %v376 = vld [vmem:[#allocation2 + $0x82] sm:$0xff]
      %v377 = vld [vmem:[#allocation2 + $0x92] sm:$0xff]
      %v378 = vld [vmem:[#allocation2 + $0x9a] sm:$0xff]
      %v379 = vld [vmem:[#allocation2 + $0xaa] sm:$0xff]
      %v380 = vld [vmem:[#allocation2 + $0xb2] sm:$0xff]
      %v381 = vld [vmem:[#allocation2 + $0xc2] sm:$0xff]
      %v382 = vld [vmem:[#allocation2 + $0xca] sm:$0xff]
      %v383 = vld [vmem:[#allocation2 + $0xda] sm:$0xff]
      %v384 = vld [vmem:[#allocation2 + $0xe2] sm:$0xff]
      %v385 = vld [vmem:[#allocation2 + $0xf2] sm:$0xff]
      %v386 = vld [vmem:[#allocation2 + $0xfa] sm:$0xff]
      %v387 = vld [vmem:[#allocation2 + $0x10a] sm:$0xff]
      %v388 = vld [vmem:[#allocation2 + $0x112] sm:$0xff]
      %v389 = vld [vmem:[#allocation2 + $0x122] sm:$0xff]
      %v390 = vld [vmem:[#allocation2 + $0x12a] sm:$0xff]
      %v391 = vld [vmem:[#allocation2 + $0x13a] sm:$0xff]
      %v392 = vld [vmem:[#allocation2 + $0x142] sm:$0xff]
      %v393 = vld [vmem:[#allocation2 + $0x152] sm:$0xff]
      %v394 = vld [vmem:[#allocation2 + $0x15a] sm:$0xff]
      %v395 = vld [vmem:[#allocation2 + $0x16a] sm:$0xff]
      %v396 = vld [vmem:[#allocation2 + $0x172] sm:$0xff]
      %v397 = vld [vmem:[#allocation2 + $0x182] sm:$0xff]
      %v398 = vld [vmem:[#allocation2 + $0x18a] sm:$0xff]
      %v399 = vld [vmem:[#allocation2 + $0x19a] sm:$0xff]
      %v400 = vld [vmem:[#allocation2 + $0x1a2] sm:$0xff]
      %v401 = vld [vmem:[%s1] sm:$0xf]
      %s402 = scalar_lea.vmem %s1, 4
      %v403 = vld [vmem:[%s402] sm:$0xf]
      %v405 = vsel %vm214, %v329, 0
      %v408 = vsel %vm214, %v330, 0
      %v411 = vsel %vm214, %v331, 0
      %v414 = vsel %vm214, %v332, 0
      %v417 = vsel %vm214, %v333, 0
      %v420 = vsel %vm214, %v334, 0
      %v423 = vsel %vm214, %v335, 0
      %v426 = vsel %vm214, %v336, 0
      %v429 = vsel %vm214, %v337, 0
      %v432 = vsel %vm214, %v338, 0
      %v435 = vsel %vm214, %v339, 0
      %v438 = vsel %vm214, %v340, 0
      %v441 = vsel %vm214, %v341, 0
      %v444 = vsel %vm214, %v342, 0
      %v447 = vsel %vm214, %v343, 0
      %v450 = vsel %vm214, %v344, 0
      %v453 = vsel %vm214, %v345, 0
      %v456 = vsel %vm214, %v346, 0
      %v459 = vsel %vm214, %v347, 0
      %v462 = vsel %vm214, %v348, 0
      %v465 = vsel %vm214, %v349, 0
      %v468 = vsel %vm214, %v350, 0
      %v471 = vsel %vm214, %v351, 0
      %v474 = vsel %vm214, %v352, 0
      %v477 = vsel %vm214, %v353, 0
      %v480 = vsel %vm214, %v354, 0
      %v483 = vsel %vm214, %v355, 0
      %v486 = vsel %vm214, %v356, 0
      %v489 = vsel %vm214, %v357, 0
      %v492 = vsel %vm214, %v358, 0
      %v495 = vsel %vm214, %v359, 0
      %v498 = vsel %vm214, %v360, 0
      %vm500 = vcmask 1043456
      %v502 = vsel %vm500, %v403, 0
      %504 = vmatprep.subr.mxu0 0.0
      %505 = vmatpush1.msra.mxu0 %v502
      %506 = vmatprep.subr.mxu0 0.0
      %507 = vmatpush1.msra.mxu0 0.0
      %508 = vmatprep.subr.mxu0 0.0
      %509 = vmatpush1.msra.mxu0 0.0
      %510 = vmatprep.subr.mxu0 0.0
      %511 = vmatpush1.msra.mxu0 0.0
      %512 = vmatprep.subr.mxu0 0.0
      %513 = vmatpush1.msra.mxu0 0.0
      %514 = vmatprep.subr.mxu0 0.0
      %515 = vmatpush1.msra.mxu0 0.0
      %516 = vmatprep.subr.mxu0 0.0
      %517 = vmatpush1.msra.mxu0 0.0
      %518 = vmatprep.subr.mxu0 0.0
      %519 = vmatpush1.msra.mxu0 0.0
      %520 = vmatprep.subr.mxu0 0.0
      %521 = vmatpush1.msra.mxu0 0.0
      %522 = vmatprep.subr.mxu0 0.0
      %523 = vmatpush1.msra.mxu0 0.0
      %524 = vmatprep.subr.mxu0 0.0
      %525 = vmatpush1.msra.mxu0 0.0
      %526 = vmatprep.subr.mxu0 0.0
      %527 = vmatpush1.msra.mxu0 0.0
      %528 = vmatprep.subr.mxu0 0.0
      %529 = vmatpush1.msra.mxu0 0.0
      %530 = vmatprep.subr.mxu0 0.0
      %531 = vmatpush1.msra.mxu0 0.0
      %532 = vmatprep.subr.mxu0 0.0
      %533 = vmatpush1.msra.mxu0 0.0
      %534 = vmatprep.subr.mxu0 0.0
      %535 = vmatpush1.msra.mxu0 0.0
      %536 = vmatprep.subr.mxu0 0.0
      %537 = vmatpush1.msra.mxu0 0.0
      %538 = vmatprep.subr.mxu0 0.0
      %539 = vmatpush1.msra.mxu0 0.0
      %540 = vmatprep.subr.mxu0 0.0
      %541 = vmatpush1.msra.mxu0 0.0
      %542 = vmatprep.subr.mxu0 0.0
      %543 = vmatpush1.msra.mxu0 0.0
      %544 = vmatprep.subr.mxu0 0.0
      %545 = vmatpush1.msra.mxu0 0.0
      %546 = vmatprep.subr.mxu0 0.0
      %547 = vmatpush1.msra.mxu0 0.0
      %548 = vmatprep.subr.mxu0 0.0
      %549 = vmatpush1.msra.mxu0 0.0
      %550 = vmatprep.subr.mxu0 0.0
      %551 = vmatpush1.msra.mxu0 0.0
      %552 = vmatprep.subr.mxu0 0.0
      %553 = vmatpush1.msra.mxu0 0.0
      %554 = vmatprep.subr.mxu0 0.0
      %555 = vmatpush1.msra.mxu0 0.0
      %556 = vmatprep.subr.mxu0 0.0
      %557 = vmatpush1.msra.mxu0 0.0
      %558 = vmatprep.subr.mxu0 0.0
      %559 = vmatpush1.msra.mxu0 0.0
      %560 = vmatprep.subr.mxu0 0.0
      %561 = vmatpush1.msra.mxu0 0.0
      %562 = vmatprep.subr.mxu0 0.0
      %563 = vmatpush1.msra.mxu0 0.0
      %564 = vmatprep.subr.mxu0 0.0
      %565 = vmatpush1.msra.mxu0 0.0
      %566 = vmatprep.subr.mxu0 0.0
      %567 = vmatpush1.msra.mxu0 0.0
      %568 = vmatprep.mubr.f32.mxu0 0.0
      %569 = vmatmul.mubr.f32.gmra.mrb[0].mxu0 %v405
      %v570 = vpop.f32.mrb[0].mxu0
      %v571 = vadd.f32 0.0, %v570
      %v572 = vpop.f32.mrb[0].mxu0
      %573 = vmatprep.mubr.f32.mxu0 0.0
      %574 = vmatmul.mubr.f32.gmra.mrb[0].mxu0 %v408
      %v575 = vpop.f32.mrb[0].mxu0
      %v576 = vadd.f32 0.0, %v575
      %v577 = vpop.f32.mrb[0].mxu0
      %578 = vmatprep.mubr.f32.mxu0 0.0
      %579 = vmatmul.mubr.f32.gmra.mrb[0].mxu0 %v411
      %v580 = vpop.f32.mrb[0].mxu0
      %v581 = vadd.f32 0.0, %v580
      %v582 = vpop.f32.mrb[0].mxu0
      %583 = vmatprep.mubr.f32.mxu0 0.0
      %584 = vmatmul.mubr.f32.gmra.mrb[0].mxu0 %v414
      %v585 = vpop.f32.mrb[0].mxu0
      %v586 = vadd.f32 0.0, %v585
      %v587 = vpop.f32.mrb[0].mxu0
      %588 = vmatprep.mubr.f32.mxu0 0.0
      %589 = vmatmul.mubr.f32.gmra.mrb[0].mxu0 %v417
      %v590 = vpop.f32.mrb[0].mxu0
      %v591 = vadd.f32 0.0, %v590
      %v592 = vpop.f32.mrb[0].mxu0
      %593 = vmatprep.mubr.f32.mxu0 0.0
      %594 = vmatmul.mubr.f32.gmra.mrb[0].mxu0 %v420
      %v595 = vpop.f32.mrb[0].mxu0
      %v596 = vadd.f32 0.0, %v595
      %v597 = vpop.f32.mrb[0].mxu0
      %598 = vmatprep.mubr.f32.mxu0 0.0
      %599 = vmatmul.mubr.f32.gmra.mrb[0].mxu0 %v423
      %v600 = vpop.f32.mrb[0].mxu0
      %v601 = vadd.f32 0.0, %v600
      %v602 = vpop.f32.mrb[0].mxu0
      %603 = vmatprep.mubr.f32.mxu0 0.0
      %604 = vmatmul.mubr.f32.gmra.mrb[0].mxu0 %v426
      %v605 = vpop.f32.mrb[0].mxu0
      %v606 = vadd.f32 0.0, %v605
      %v607 = vpop.f32.mrb[0].mxu0
      %608 = vmatprep.mubr.f32.mxu0 0.0
      %609 = vmatmul.mubr.f32.gmra.mrb[0].mxu0 %v429
      %v610 = vpop.f32.mrb[0].mxu0
      %v611 = vadd.f32 0.0, %v610
      %v612 = vpop.f32.mrb[0].mxu0
      %613 = vmatprep.mubr.f32.mxu0 0.0
      %614 = vmatmul.mubr.f32.gmra.mrb[0].mxu0 %v432
      %v615 = vpop.f32.mrb[0].mxu0
      %v616 = vadd.f32 0.0, %v615
      %v617 = vpop.f32.mrb[0].mxu0
      %618 = vmatprep.mubr.f32.mxu0 0.0
      %619 = vmatmul.mubr.f32.gmra.mrb[0].mxu0 %v435
      %v620 = vpop.f32.mrb[0].mxu0
      %v621 = vadd.f32 0.0, %v620
      %v622 = vpop.f32.mrb[0].mxu0
      %623 = vmatprep.mubr.f32.mxu0 0.0
      %624 = vmatmul.mubr.f32.gmra.mrb[0].mxu0 %v438
      %v625 = vpop.f32.mrb[0].mxu0
      %v626 = vadd.f32 0.0, %v625
      %v627 = vpop.f32.mrb[0].mxu0
      %628 = vmatprep.mubr.f32.mxu0 0.0
      %629 = vmatmul.mubr.f32.gmra.mrb[0].mxu0 %v441
      %v630 = vpop.f32.mrb[0].mxu0
      %v631 = vadd.f32 0.0, %v630
      %v632 = vpop.f32.mrb[0].mxu0
      %633 = vmatprep.mubr.f32.mxu0 0.0
      %634 = vmatmul.mubr.f32.gmra.mrb[0].mxu0 %v444
      %v635 = vpop.f32.mrb[0].mxu0
      %v636 = vadd.f32 0.0, %v635
      %v637 = vpop.f32.mrb[0].mxu0
      %638 = vmatprep.mubr.f32.mxu0 0.0
      %639 = vmatmul.mubr.f32.gmra.mrb[0].mxu0 %v447
      %v640 = vpop.f32.mrb[0].mxu0
      %v641 = vadd.f32 0.0, %v640
      %v642 = vpop.f32.mrb[0].mxu0
      %643 = vmatprep.mubr.f32.mxu0 0.0
      %644 = vmatmul.mubr.f32.gmra.mrb[0].mxu0 %v450
      %v645 = vpop.f32.mrb[0].mxu0
      %v646 = vadd.f32 0.0, %v645
      %v647 = vpop.f32.mrb[0].mxu0
      %648 = vmatprep.mubr.f32.mxu0 0.0
      %649 = vmatmul.mubr.f32.gmra.mrb[0].mxu0 %v453
      %v650 = vpop.f32.mrb[0].mxu0
      %v651 = vadd.f32 0.0, %v650
      %v652 = vpop.f32.mrb[0].mxu0
      %653 = vmatprep.mubr.f32.mxu0 0.0
      %654 = vmatmul.mubr.f32.gmra.mrb[0].mxu0 %v456
      %v655 = vpop.f32.mrb[0].mxu0
      %v656 = vadd.f32 0.0, %v655
      %v657 = vpop.f32.mrb[0].mxu0
      %658 = vmatprep.mubr.f32.mxu0 0.0
      %659 = vmatmul.mubr.f32.gmra.mrb[0].mxu0 %v459
      %v660 = vpop.f32.mrb[0].mxu0
      %v661 = vadd.f32 0.0, %v660
      %v662 = vpop.f32.mrb[0].mxu0
      %663 = vmatprep.mubr.f32.mxu0 0.0
      %664 = vmatmul.mubr.f32.gmra.mrb[0].mxu0 %v462
      %v665 = vpop.f32.mrb[0].mxu0
      %v666 = vadd.f32 0.0, %v665
      %v667 = vpop.f32.mrb[0].mxu0
      %668 = vmatprep.mubr.f32.mxu0 0.0
      %669 = vmatmul.mubr.f32.gmra.mrb[0].mxu0 %v465
      %v670 = vpop.f32.mrb[0].mxu0
      %v671 = vadd.f32 0.0, %v670
      %v672 = vpop.f32.mrb[0].mxu0
      %673 = vmatprep.mubr.f32.mxu0 0.0
      %674 = vmatmul.mubr.f32.gmra.mrb[0].mxu0 %v468
      %v675 = vpop.f32.mrb[0].mxu0
      %v676 = vadd.f32 0.0, %v675
      %v677 = vpop.f32.mrb[0].mxu0
      %678 = vmatprep.mubr.f32.mxu0 0.0
      %679 = vmatmul.mubr.f32.gmra.mrb[0].mxu0 %v471
      %v680 = vpop.f32.mrb[0].mxu0
      %v681 = vadd.f32 0.0, %v680
      %v682 = vpop.f32.mrb[0].mxu0
      %683 = vmatprep.mubr.f32.mxu0 0.0
      %684 = vmatmul.mubr.f32.gmra.mrb[0].mxu0 %v474
      %v685 = vpop.f32.mrb[0].mxu0
      %v686 = vadd.f32 0.0, %v685
      %v687 = vpop.f32.mrb[0].mxu0
      %688 = vmatprep.mubr.f32.mxu0 0.0
      %689 = vmatmul.mubr.f32.gmra.mrb[0].mxu0 %v477
      %v690 = vpop.f32.mrb[0].mxu0
      %v691 = vadd.f32 0.0, %v690
      %v692 = vpop.f32.mrb[0].mxu0
      %693 = vmatprep.mubr.f32.mxu0 0.0
      %694 = vmatmul.mubr.f32.gmra.mrb[0].mxu0 %v480
      %v695 = vpop.f32.mrb[0].mxu0
      %v696 = vadd.f32 0.0, %v695
      %v697 = vpop.f32.mrb[0].mxu0
      %698 = vmatprep.mubr.f32.mxu0 0.0
      %699 = vmatmul.mubr.f32.gmra.mrb[0].mxu0 %v483
      %v700 = vpop.f32.mrb[0].mxu0
      %v701 = vadd.f32 0.0, %v700
      %v702 = vpop.f32.mrb[0].mxu0
      %703 = vmatprep.mubr.f32.mxu0 0.0
      %704 = vmatmul.mubr.f32.gmra.mrb[0].mxu0 %v486
      %v705 = vpop.f32.mrb[0].mxu0
      %v706 = vadd.f32 0.0, %v705
      %v707 = vpop.f32.mrb[0].mxu0
      %708 = vmatprep.mubr.f32.mxu0 0.0
      %709 = vmatmul.mubr.f32.gmra.mrb[0].mxu0 %v489
      %v710 = vpop.f32.mrb[0].mxu0
      %v711 = vadd.f32 0.0, %v710
      %v712 = vpop.f32.mrb[0].mxu0
      %713 = vmatprep.mubr.f32.mxu0 0.0
      %714 = vmatmul.mubr.f32.gmra.mrb[0].mxu0 %v492
      %v715 = vpop.f32.mrb[0].mxu0
      %v716 = vadd.f32 0.0, %v715
      %v717 = vpop.f32.mrb[0].mxu0
      %718 = vmatprep.mubr.f32.mxu0 0.0
      %719 = vmatmul.mubr.f32.gmra.mrb[0].mxu0 %v495
      %v720 = vpop.f32.mrb[0].mxu0
      %v721 = vadd.f32 0.0, %v720
      %v722 = vpop.f32.mrb[0].mxu0
      %723 = vmatprep.mubr.f32.mxu0 0.0
      %724 = vmatmul.mubr.f32.gmra.mrb[0].mxu0 %v498
      %v725 = vpop.f32.mrb[0].mxu0
      %v726 = vadd.f32 0.0, %v725
      %v727 = vpop.f32.mrb[0].mxu0
      %728 = vdwg.mxu0
      %v730 = vsel %vm214, %v293, 0
      %v733 = vsel %vm214, %v294, 0
      %v736 = vsel %vm214, %v295, 0
      %v739 = vsel %vm214, %v296, 0
      %v742 = vsel %vm214, %v297, 0
      %v745 = vsel %vm214, %v298, 0
      %v748 = vsel %vm214, %v299, 0
      %v751 = vsel %vm214, %v300, 0
      %v754 = vsel %vm214, %v301, 0
      %v757 = vsel %vm214, %v302, 0
      %v760 = vsel %vm214, %v303, 0
      %v763 = vsel %vm214, %v304, 0
      %v766 = vsel %vm214, %v305, 0
      %v769 = vsel %vm214, %v306, 0
      %v772 = vsel %vm214, %v307, 0
      %v775 = vsel %vm214, %v308, 0
      %v778 = vsel %vm214, %v309, 0
      %v781 = vsel %vm214, %v310, 0
      %v784 = vsel %vm214, %v311, 0
      %v787 = vsel %vm214, %v312, 0
      %v790 = vsel %vm214, %v313, 0
      %v793 = vsel %vm214, %v314, 0
      %v796 = vsel %vm214, %v315, 0
      %v799 = vsel %vm214, %v316, 0
      %v802 = vsel %vm214, %v317, 0
      %v805 = vsel %vm214, %v318, 0
      %v808 = vsel %vm214, %v319, 0
      %v811 = vsel %vm214, %v320, 0
      %v814 = vsel %vm214, %v321, 0
      %v817 = vsel %vm214, %v322, 0
      %v820 = vsel %vm214, %v323, 0
      %v823 = vsel %vm214, %v324, 0
      %v826 = vsel %vm500, %v401, 0
      %828 = vmatprep.subr.mxu0 0.0
      %829 = vmatpush1.msra.mxu0 %v826
      %830 = vmatprep.subr.mxu0 0.0
      %831 = vmatpush1.msra.mxu0 0.0
      %832 = vmatprep.subr.mxu0 0.0
      %833 = vmatpush1.msra.mxu0 0.0
      %834 = vmatprep.subr.mxu0 0.0
      %835 = vmatpush1.msra.mxu0 0.0
      %836 = vmatprep.subr.mxu0 0.0
      %837 = vmatpush1.msra.mxu0 0.0
      %838 = vmatprep.subr.mxu0 0.0
      %839 = vmatpush1.msra.mxu0 0.0
      %840 = vmatprep.subr.mxu0 0.0
      %841 = vmatpush1.msra.mxu0 0.0
      %842 = vmatprep.subr.mxu0 0.0
      %843 = vmatpush1.msra.mxu0 0.0
      %844 = vmatprep.subr.mxu0 0.0
      %845 = vmatpush1.msra.mxu0 0.0
      %846 = vmatprep.subr.mxu0 0.0
      %847 = vmatpush1.msra.mxu0 0.0
      %848 = vmatprep.subr.mxu0 0.0
      %849 = vmatpush1.msra.mxu0 0.0
      %850 = vmatprep.subr.mxu0 0.0
      %851 = vmatpush1.msra.mxu0 0.0
      %852 = vmatprep.subr.mxu0 0.0
      %853 = vmatpush1.msra.mxu0 0.0
      %854 = vmatprep.subr.mxu0 0.0
      %855 = vmatpush1.msra.mxu0 0.0
      %856 = vmatprep.subr.mxu0 0.0
      %857 = vmatpush1.msra.mxu0 0.0
      %858 = vmatprep.subr.mxu0 0.0
      %859 = vmatpush1.msra.mxu0 0.0
      %860 = vmatprep.subr.mxu0 0.0
      %861 = vmatpush1.msra.mxu0 0.0
      %862 = vmatprep.subr.mxu0 0.0
      %863 = vmatpush1.msra.mxu0 0.0
      %864 = vmatprep.subr.mxu0 0.0
      %865 = vmatpush1.msra.mxu0 0.0
      %866 = vmatprep.subr.mxu0 0.0
      %867 = vmatpush1.msra.mxu0 0.0
      %868 = vmatprep.subr.mxu0 0.0
      %869 = vmatpush1.msra.mxu0 0.0
      %870 = vmatprep.subr.mxu0 0.0
      %871 = vmatpush1.msra.mxu0 0.0
      %872 = vmatprep.subr.mxu0 0.0
      %873 = vmatpush1.msra.mxu0 0.0
      %874 = vmatprep.subr.mxu0 0.0
      %875 = vmatpush1.msra.mxu0 0.0
      %876 = vmatprep.subr.mxu0 0.0
      %877 = vmatpush1.msra.mxu0 0.0
      %878 = vmatprep.subr.mxu0 0.0
      %879 = vmatpush1.msra.mxu0 0.0
      %880 = vmatprep.subr.mxu0 0.0
      %881 = vmatpush1.msra.mxu0 0.0
      %882 = vmatprep.subr.mxu0 0.0
      %883 = vmatpush1.msra.mxu0 0.0
      %884 = vmatprep.subr.mxu0 0.0
      %885 = vmatpush1.msra.mxu0 0.0
      %886 = vmatprep.subr.mxu0 0.0
      %887 = vmatpush1.msra.mxu0 0.0
      %888 = vmatprep.subr.mxu0 0.0
      %889 = vmatpush1.msra.mxu0 0.0
      %890 = vmatprep.subr.mxu0 0.0
      %891 = vmatpush1.msra.mxu0 0.0
      %892 = vmatprep.mubr.f32.mxu0 0.0
      %893 = vmatmul.mubr.f32.gmra.mrb[0].mxu0 %v730
      %v894 = vpop.f32.mrb[0].mxu0
      %v895 = vadd.f32 %v571, %v894
      %v896 = vpop.f32.mrb[0].mxu0
      %897 = vmatprep.mubr.f32.mxu0 0.0
      %898 = vmatmul.mubr.f32.gmra.mrb[0].mxu0 %v733
      %v899 = vpop.f32.mrb[0].mxu0
      %v900 = vadd.f32 %v576, %v899
      %v901 = vpop.f32.mrb[0].mxu0
      %902 = vmatprep.mubr.f32.mxu0 0.0
      %903 = vmatmul.mubr.f32.gmra.mrb[0].mxu0 %v736
      %v904 = vpop.f32.mrb[0].mxu0
      %v905 = vadd.f32 %v581, %v904
      %v906 = vpop.f32.mrb[0].mxu0
      %907 = vmatprep.mubr.f32.mxu0 0.0
      %908 = vmatmul.mubr.f32.gmra.mrb[0].mxu0 %v739
      %v909 = vpop.f32.mrb[0].mxu0
      %v910 = vadd.f32 %v586, %v909
      %v911 = vpop.f32.mrb[0].mxu0
      %912 = vmatprep.mubr.f32.mxu0 0.0
      %913 = vmatmul.mubr.f32.gmra.mrb[0].mxu0 %v742
      %v914 = vpop.f32.mrb[0].mxu0
      %v915 = vadd.f32 %v591, %v914
      %v916 = vpop.f32.mrb[0].mxu0
      %917 = vmatprep.mubr.f32.mxu0 0.0
      %918 = vmatmul.mubr.f32.gmra.mrb[0].mxu0 %v745
      %v919 = vpop.f32.mrb[0].mxu0
      %v920 = vadd.f32 %v596, %v919
      %v921 = vpop.f32.mrb[0].mxu0
      %922 = vmatprep.mubr.f32.mxu0 0.0
      %923 = vmatmul.mubr.f32.gmra.mrb[0].mxu0 %v748
      %v924 = vpop.f32.mrb[0].mxu0
      %v925 = vadd.f32 %v601, %v924
      %v926 = vpop.f32.mrb[0].mxu0
      %927 = vmatprep.mubr.f32.mxu0 0.0
      %928 = vmatmul.mubr.f32.gmra.mrb[0].mxu0 %v751
      %v929 = vpop.f32.mrb[0].mxu0
      %v930 = vadd.f32 %v606, %v929
      %v931 = vpop.f32.mrb[0].mxu0
      %932 = vmatprep.mubr.f32.mxu0 0.0
      %933 = vmatmul.mubr.f32.gmra.mrb[0].mxu0 %v754
      %v934 = vpop.f32.mrb[0].mxu0
      %v935 = vadd.f32 %v611, %v934
      %v936 = vpop.f32.mrb[0].mxu0
      %937 = vmatprep.mubr.f32.mxu0 0.0
      %938 = vmatmul.mubr.f32.gmra.mrb[0].mxu0 %v757
      %v939 = vpop.f32.mrb[0].mxu0
      %v940 = vadd.f32 %v616, %v939
      %v941 = vpop.f32.mrb[0].mxu0
      %942 = vmatprep.mubr.f32.mxu0 0.0
      %943 = vmatmul.mubr.f32.gmra.mrb[0].mxu0 %v760
      %v944 = vpop.f32.mrb[0].mxu0
      %v945 = vadd.f32 %v621, %v944
      %v946 = vpop.f32.mrb[0].mxu0
      %947 = vmatprep.mubr.f32.mxu0 0.0
      %948 = vmatmul.mubr.f32.gmra.mrb[0].mxu0 %v763
      %v949 = vpop.f32.mrb[0].mxu0
      %v950 = vadd.f32 %v626, %v949
      %v951 = vpop.f32.mrb[0].mxu0
      %952 = vmatprep.mubr.f32.mxu0 0.0
      %953 = vmatmul.mubr.f32.gmra.mrb[0].mxu0 %v766
      %v954 = vpop.f32.mrb[0].mxu0
      %v955 = vadd.f32 %v631, %v954
      %v956 = vpop.f32.mrb[0].mxu0
      %957 = vmatprep.mubr.f32.mxu0 0.0
      %958 = vmatmul.mubr.f32.gmra.mrb[0].mxu0 %v769
      %v959 = vpop.f32.mrb[0].mxu0
      %v960 = vadd.f32 %v636, %v959
      %v961 = vpop.f32.mrb[0].mxu0
      %962 = vmatprep.mubr.f32.mxu0 0.0
      %963 = vmatmul.mubr.f32.gmra.mrb[0].mxu0 %v772
      %v964 = vpop.f32.mrb[0].mxu0
      %v965 = vadd.f32 %v641, %v964
      %v966 = vpop.f32.mrb[0].mxu0
      %967 = vmatprep.mubr.f32.mxu0 0.0
      %968 = vmatmul.mubr.f32.gmra.mrb[0].mxu0 %v775
      %v969 = vpop.f32.mrb[0].mxu0
      %v970 = vadd.f32 %v646, %v969
      %v971 = vpop.f32.mrb[0].mxu0
      %972 = vmatprep.mubr.f32.mxu0 0.0
      %973 = vmatmul.mubr.f32.gmra.mrb[0].mxu0 %v778
      %v974 = vpop.f32.mrb[0].mxu0
      %v975 = vadd.f32 %v651, %v974
      %v976 = vpop.f32.mrb[0].mxu0
      %977 = vmatprep.mubr.f32.mxu0 0.0
      %978 = vmatmul.mubr.f32.gmra.mrb[0].mxu0 %v781
      %v979 = vpop.f32.mrb[0].mxu0
      %v980 = vadd.f32 %v656, %v979
      %v981 = vpop.f32.mrb[0].mxu0
      %982 = vmatprep.mubr.f32.mxu0 0.0
      %983 = vmatmul.mubr.f32.gmra.mrb[0].mxu0 %v784
      %v984 = vpop.f32.mrb[0].mxu0
      %v985 = vadd.f32 %v661, %v984
      %v986 = vpop.f32.mrb[0].mxu0
      %987 = vmatprep.mubr.f32.mxu0 0.0
      %988 = vmatmul.mubr.f32.gmra.mrb[0].mxu0 %v787
      %v989 = vpop.f32.mrb[0].mxu0
      %v990 = vadd.f32 %v666, %v989
      %v991 = vpop.f32.mrb[0].mxu0
      %992 = vmatprep.mubr.f32.mxu0 0.0
      %993 = vmatmul.mubr.f32.gmra.mrb[0].mxu0 %v790
      %v994 = vpop.f32.mrb[0].mxu0
      %v995 = vadd.f32 %v671, %v994
      %v996 = vpop.f32.mrb[0].mxu0
      %997 = vmatprep.mubr.f32.mxu0 0.0
      %998 = vmatmul.mubr.f32.gmra.mrb[0].mxu0 %v793
      %v999 = vpop.f32.mrb[0].mxu0
      %v1000 = vadd.f32 %v676, %v999
      %v1001 = vpop.f32.mrb[0].mxu0
      %1002 = vmatprep.mubr.f32.mxu0 0.0
      %1003 = vmatmul.mubr.f32.gmra.mrb[0].mxu0 %v796
      %v1004 = vpop.f32.mrb[0].mxu0
      %v1005 = vadd.f32 %v681, %v1004
      %v1006 = vpop.f32.mrb[0].mxu0
      %1007 = vmatprep.mubr.f32.mxu0 0.0
      %1008 = vmatmul.mubr.f32.gmra.mrb[0].mxu0 %v799
      %v1009 = vpop.f32.mrb[0].mxu0
      %v1010 = vadd.f32 %v686, %v1009
      %v1011 = vpop.f32.mrb[0].mxu0
      %1012 = vmatprep.mubr.f32.mxu0 0.0
      %1013 = vmatmul.mubr.f32.gmra.mrb[0].mxu0 %v802
      %v1014 = vpop.f32.mrb[0].mxu0
      %v1015 = vadd.f32 %v691, %v1014
      %v1016 = vpop.f32.mrb[0].mxu0
      %1017 = vmatprep.mubr.f32.mxu0 0.0
      %1018 = vmatmul.mubr.f32.gmra.mrb[0].mxu0 %v805
      %v1019 = vpop.f32.mrb[0].mxu0
      %v1020 = vadd.f32 %v696, %v1019
      %v1021 = vpop.f32.mrb[0].mxu0
      %1022 = vmatprep.mubr.f32.mxu0 0.0
      %1023 = vmatmul.mubr.f32.gmra.mrb[0].mxu0 %v808
      %v1024 = vpop.f32.mrb[0].mxu0
      %v1025 = vadd.f32 %v701, %v1024
      %v1026 = vpop.f32.mrb[0].mxu0
      %1027 = vmatprep.mubr.f32.mxu0 0.0
      %1028 = vmatmul.mubr.f32.gmra.mrb[0].mxu0 %v811
      %v1029 = vpop.f32.mrb[0].mxu0
      %v1030 = vadd.f32 %v706, %v1029
      %v1031 = vpop.f32.mrb[0].mxu0
      %1032 = vmatprep.mubr.f32.mxu0 0.0
      %1033 = vmatmul.mubr.f32.gmra.mrb[0].mxu0 %v814
      %v1034 = vpop.f32.mrb[0].mxu0
      %v1035 = vadd.f32 %v711, %v1034
      %v1036 = vpop.f32.mrb[0].mxu0
      %1037 = vmatprep.mubr.f32.mxu0 0.0
      %1038 = vmatmul.mubr.f32.gmra.mrb[0].mxu0 %v817
      %v1039 = vpop.f32.mrb[0].mxu0
      %v1040 = vadd.f32 %v716, %v1039
      %v1041 = vpop.f32.mrb[0].mxu0
      %1042 = vmatprep.mubr.f32.mxu0 0.0
      %1043 = vmatmul.mubr.f32.gmra.mrb[0].mxu0 %v820
      %v1044 = vpop.f32.mrb[0].mxu0
      %v1045 = vadd.f32 %v721, %v1044
      %v1046 = vpop.f32.mrb[0].mxu0
      %1047 = vmatprep.mubr.f32.mxu0 0.0
      %1048 = vmatmul.mubr.f32.gmra.mrb[0].mxu0 %v823
      %v1049 = vpop.f32.mrb[0].mxu0
      %v1050 = vadd.f32 %v726, %v1049
      %v1051 = vpop.f32.mrb[0].mxu0
      %1052 = vdwg.mxu0
      %s1053 = scalar_lea.vmem %s1, 8
      %v1054 = vld [vmem:[%s1053] sm:$0xf]
      %v1056 = vsel %vm214, %v365, 0
      %v1059 = vsel %vm214, %v366, 0
      %v1062 = vsel %vm214, %v367, 0
      %v1065 = vsel %vm214, %v368, 0
      %v1068 = vsel %vm214, %v369, 0
      %v1071 = vsel %vm214, %v370, 0
      %v1074 = vsel %vm214, %v371, 0
      %v1077 = vsel %vm214, %v372, 0
      %v1080 = vsel %vm214, %v373, 0
      %v1083 = vsel %vm214, %v374, 0
      %v1086 = vsel %vm214, %v375, 0
      %v1089 = vsel %vm214, %v376, 0
      %v1092 = vsel %vm214, %v377, 0
      %v1095 = vsel %vm214, %v378, 0
      %v1098 = vsel %vm214, %v379, 0
      %v1101 = vsel %vm214, %v380, 0
      %v1104 = vsel %vm214, %v381, 0
      %v1107 = vsel %vm214, %v382, 0
      %v1110 = vsel %vm214, %v383, 0
      %v1113 = vsel %vm214, %v384, 0
      %v1116 = vsel %vm214, %v385, 0
      %v1119 = vsel %vm214, %v386, 0
      %v1122 = vsel %vm214, %v387, 0
      %v1125 = vsel %vm214, %v388, 0
      %v1128 = vsel %vm214, %v389, 0
      %v1131 = vsel %vm214, %v390, 0
      %v1134 = vsel %vm214, %v391, 0
      %v1137 = vsel %vm214, %v392, 0
      %v1140 = vsel %vm214, %v393, 0
      %v1143 = vsel %vm214, %v394, 0
      %v1146 = vsel %vm214, %v395, 0
      %v1149 = vsel %vm214, %v396, 0
      %v1152 = vsel %vm500, %v1054, 0
      %1154 = vmatprep.subr.mxu0 0.0
      %1155 = vmatpush1.msra.mxu0 %v1152
      %1156 = vmatprep.subr.mxu0 0.0
      %1157 = vmatpush1.msra.mxu0 0.0
      %1158 = vmatprep.subr.mxu0 0.0
      %1159 = vmatpush1.msra.mxu0 0.0
      %1160 = vmatprep.subr.mxu0 0.0
      %1161 = vmatpush1.msra.mxu0 0.0
      %1162 = vmatprep.subr.mxu0 0.0
      %1163 = vmatpush1.msra.mxu0 0.0
      %1164 = vmatprep.subr.mxu0 0.0
      %1165 = vmatpush1.msra.mxu0 0.0
      %1166 = vmatprep.subr.mxu0 0.0
      %1167 = vmatpush1.msra.mxu0 0.0
      %1168 = vmatprep.subr.mxu0 0.0
      %1169 = vmatpush1.msra.mxu0 0.0
      %1170 = vmatprep.subr.mxu0 0.0
      %1171 = vmatpush1.msra.mxu0 0.0
      %1172 = vmatprep.subr.mxu0 0.0
      %1173 = vmatpush1.msra.mxu0 0.0
      %1174 = vmatprep.subr.mxu0 0.0
      %1175 = vmatpush1.msra.mxu0 0.0
      %1176 = vmatprep.subr.mxu0 0.0
      %1177 = vmatpush1.msra.mxu0 0.0
      %1178 = vmatprep.subr.mxu0 0.0
      %1179 = vmatpush1.msra.mxu0 0.0
      %1180 = vmatprep.subr.mxu0 0.0
      %1181 = vmatpush1.msra.mxu0 0.0
      %1182 = vmatprep.subr.mxu0 0.0
      %1183 = vmatpush1.msra.mxu0 0.0
      %1184 = vmatprep.subr.mxu0 0.0
      %1185 = vmatpush1.msra.mxu0 0.0
      %1186 = vmatprep.subr.mxu0 0.0
      %1187 = vmatpush1.msra.mxu0 0.0
      %1188 = vmatprep.subr.mxu0 0.0
      %1189 = vmatpush1.msra.mxu0 0.0
      %1190 = vmatprep.subr.mxu0 0.0
      %1191 = vmatpush1.msra.mxu0 0.0
      %1192 = vmatprep.subr.mxu0 0.0
      %1193 = vmatpush1.msra.mxu0 0.0
      %1194 = vmatprep.subr.mxu0 0.0
      %1195 = vmatpush1.msra.mxu0 0.0
      %1196 = vmatprep.subr.mxu0 0.0
      %1197 = vmatpush1.msra.mxu0 0.0
      %1198 = vmatprep.subr.mxu0 0.0
      %1199 = vmatpush1.msra.mxu0 0.0
      %1200 = vmatprep.subr.mxu0 0.0
      %1201 = vmatpush1.msra.mxu0 0.0
      %1202 = vmatprep.subr.mxu0 0.0
      %1203 = vmatpush1.msra.mxu0 0.0
      %1204 = vmatprep.subr.mxu0 0.0
      %1205 = vmatpush1.msra.mxu0 0.0
      %1206 = vmatprep.subr.mxu0 0.0
      %1207 = vmatpush1.msra.mxu0 0.0
      %1208 = vmatprep.subr.mxu0 0.0
      %1209 = vmatpush1.msra.mxu0 0.0
      %1210 = vmatprep.subr.mxu0 0.0
      %1211 = vmatpush1.msra.mxu0 0.0
      %1212 = vmatprep.subr.mxu0 0.0
      %1213 = vmatpush1.msra.mxu0 0.0
      %1214 = vmatprep.subr.mxu0 0.0
      %1215 = vmatpush1.msra.mxu0 0.0
      %1216 = vmatprep.subr.mxu0 0.0
      %1217 = vmatpush1.msra.mxu0 0.0
      %1218 = vmatprep.mubr.f32.mxu0 0.0
      %1219 = vmatmul.mubr.f32.gmra.mrb[0].mxu0 %v1056
      %v1220 = vpop.f32.mrb[0].mxu0
      %v1221 = vadd.f32 0.0, %v1220
      %v1222 = vpop.f32.mrb[0].mxu0
      %1223 = vmatprep.mubr.f32.mxu0 0.0
      %1224 = vmatmul.mubr.f32.gmra.mrb[0].mxu0 %v1059
      %v1225 = vpop.f32.mrb[0].mxu0
      %v1226 = vadd.f32 0.0, %v1225
      %v1227 = vpop.f32.mrb[0].mxu0
      %1228 = vmatprep.mubr.f32.mxu0 0.0
      %1229 = vmatmul.mubr.f32.gmra.mrb[0].mxu0 %v1062
      %v1230 = vpop.f32.mrb[0].mxu0
      %v1231 = vadd.f32 0.0, %v1230
      %v1232 = vpop.f32.mrb[0].mxu0
      %1233 = vmatprep.mubr.f32.mxu0 0.0
      %1234 = vmatmul.mubr.f32.gmra.mrb[0].mxu0 %v1065
      %v1235 = vpop.f32.mrb[0].mxu0
      %v1236 = vadd.f32 0.0, %v1235
      %v1237 = vpop.f32.mrb[0].mxu0
      %1238 = vmatprep.mubr.f32.mxu0 0.0
      %1239 = vmatmul.mubr.f32.gmra.mrb[0].mxu0 %v1068
      %v1240 = vpop.f32.mrb[0].mxu0
      %v1241 = vadd.f32 0.0, %v1240
      %v1242 = vpop.f32.mrb[0].mxu0
      %1243 = vmatprep.mubr.f32.mxu0 0.0
      %1244 = vmatmul.mubr.f32.gmra.mrb[0].mxu0 %v1071
      %v1245 = vpop.f32.mrb[0].mxu0
      %v1246 = vadd.f32 0.0, %v1245
      %v1247 = vpop.f32.mrb[0].mxu0
      %1248 = vmatprep.mubr.f32.mxu0 0.0
      %1249 = vmatmul.mubr.f32.gmra.mrb[0].mxu0 %v1074
      %v1250 = vpop.f32.mrb[0].mxu0
      %v1251 = vadd.f32 0.0, %v1250
      %v1252 = vpop.f32.mrb[0].mxu0
      %1253 = vmatprep.mubr.f32.mxu0 0.0
      %1254 = vmatmul.mubr.f32.gmra.mrb[0].mxu0 %v1077
      %v1255 = vpop.f32.mrb[0].mxu0
      %v1256 = vadd.f32 0.0, %v1255
      %v1257 = vpop.f32.mrb[0].mxu0
      %1258 = vmatprep.mubr.f32.mxu0 0.0
      %1259 = vmatmul.mubr.f32.gmra.mrb[0].mxu0 %v1080
      %v1260 = vpop.f32.mrb[0].mxu0
      %v1261 = vadd.f32 0.0, %v1260
      %v1262 = vpop.f32.mrb[0].mxu0
      %1263 = vmatprep.mubr.f32.mxu0 0.0
      %1264 = vmatmul.mubr.f32.gmra.mrb[0].mxu0 %v1083
      %v1265 = vpop.f32.mrb[0].mxu0
      %v1266 = vadd.f32 0.0, %v1265
      %v1267 = vpop.f32.mrb[0].mxu0
      %1268 = vmatprep.mubr.f32.mxu0 0.0
      %1269 = vmatmul.mubr.f32.gmra.mrb[0].mxu0 %v1086
      %v1270 = vpop.f32.mrb[0].mxu0
      %v1271 = vadd.f32 0.0, %v1270
      %v1272 = vpop.f32.mrb[0].mxu0
      %1273 = vmatprep.mubr.f32.mxu0 0.0
      %1274 = vmatmul.mubr.f32.gmra.mrb[0].mxu0 %v1089
      %v1275 = vpop.f32.mrb[0].mxu0
      %v1276 = vadd.f32 0.0, %v1275
      %v1277 = vpop.f32.mrb[0].mxu0
      %1278 = vmatprep.mubr.f32.mxu0 0.0
      %1279 = vmatmul.mubr.f32.gmra.mrb[0].mxu0 %v1092
      %v1280 = vpop.f32.mrb[0].mxu0
      %v1281 = vadd.f32 0.0, %v1280
      %v1282 = vpop.f32.mrb[0].mxu0
      %1283 = vmatprep.mubr.f32.mxu0 0.0
      %1284 = vmatmul.mubr.f32.gmra.mrb[0].mxu0 %v1095
      %v1285 = vpop.f32.mrb[0].mxu0
      %v1286 = vadd.f32 0.0, %v1285
      %v1287 = vpop.f32.mrb[0].mxu0
      %1288 = vmatprep.mubr.f32.mxu0 0.0
      %1289 = vmatmul.mubr.f32.gmra.mrb[0].mxu0 %v1098
      %v1290 = vpop.f32.mrb[0].mxu0
      %v1291 = vadd.f32 0.0, %v1290
      %v1292 = vpop.f32.mrb[0].mxu0
      %1293 = vmatprep.mubr.f32.mxu0 0.0
      %1294 = vmatmul.mubr.f32.gmra.mrb[0].mxu0 %v1101
      %v1295 = vpop.f32.mrb[0].mxu0
      %v1296 = vadd.f32 0.0, %v1295
      %v1297 = vpop.f32.mrb[0].mxu0
      %1298 = vmatprep.mubr.f32.mxu0 0.0
      %1299 = vmatmul.mubr.f32.gmra.mrb[0].mxu0 %v1104
      %v1300 = vpop.f32.mrb[0].mxu0
      %v1301 = vadd.f32 0.0, %v1300
      %v1302 = vpop.f32.mrb[0].mxu0
      %1303 = vmatprep.mubr.f32.mxu0 0.0
      %1304 = vmatmul.mubr.f32.gmra.mrb[0].mxu0 %v1107
      %v1305 = vpop.f32.mrb[0].mxu0
      %v1306 = vadd.f32 0.0, %v1305
      %v1307 = vpop.f32.mrb[0].mxu0
      %1308 = vmatprep.mubr.f32.mxu0 0.0
      %1309 = vmatmul.mubr.f32.gmra.mrb[0].mxu0 %v1110
      %v1310 = vpop.f32.mrb[0].mxu0
      %v1311 = vadd.f32 0.0, %v1310
      %v1312 = vpop.f32.mrb[0].mxu0
      %1313 = vmatprep.mubr.f32.mxu0 0.0
      %1314 = vmatmul.mubr.f32.gmra.mrb[0].mxu0 %v1113
      %v1315 = vpop.f32.mrb[0].mxu0
      %v1316 = vadd.f32 0.0, %v1315
      %v1317 = vpop.f32.mrb[0].mxu0
      %1318 = vmatprep.mubr.f32.mxu0 0.0
      %1319 = vmatmul.mubr.f32.gmra.mrb[0].mxu0 %v1116
      %v1320 = vpop.f32.mrb[0].mxu0
      %v1321 = vadd.f32 0.0, %v1320
      %v1322 = vpop.f32.mrb[0].mxu0
      %1323 = vmatprep.mubr.f32.mxu0 0.0
      %1324 = vmatmul.mubr.f32.gmra.mrb[0].mxu0 %v1119
      %v1325 = vpop.f32.mrb[0].mxu0
      %v1326 = vadd.f32 0.0, %v1325
      %v1327 = vpop.f32.mrb[0].mxu0
      %1328 = vmatprep.mubr.f32.mxu0 0.0
      %1329 = vmatmul.mubr.f32.gmra.mrb[0].mxu0 %v1122
      %v1330 = vpop.f32.mrb[0].mxu0
      %v1331 = vadd.f32 0.0, %v1330
      %v1332 = vpop.f32.mrb[0].mxu0
      %1333 = vmatprep.mubr.f32.mxu0 0.0
      %1334 = vmatmul.mubr.f32.gmra.mrb[0].mxu0 %v1125
      %v1335 = vpop.f32.mrb[0].mxu0
      %v1336 = vadd.f32 0.0, %v1335
      %v1337 = vpop.f32.mrb[0].mxu0
      %1338 = vmatprep.mubr.f32.mxu0 0.0
      %1339 = vmatmul.mubr.f32.gmra.mrb[0].mxu0 %v1128
      %v1340 = vpop.f32.mrb[0].mxu0
      %v1341 = vadd.f32 0.0, %v1340
      %v1342 = vpop.f32.mrb[0].mxu0
      %1343 = vmatprep.mubr.f32.mxu0 0.0
      %1344 = vmatmul.mubr.f32.gmra.mrb[0].mxu0 %v1131
      %v1345 = vpop.f32.mrb[0].mxu0
      %v1346 = vadd.f32 0.0, %v1345
      %v1347 = vpop.f32.mrb[0].mxu0
      %1348 = vmatprep.mubr.f32.mxu0 0.0
      %1349 = vmatmul.mubr.f32.gmra.mrb[0].mxu0 %v1134
      %v1350 = vpop.f32.mrb[0].mxu0
      %v1351 = vadd.f32 0.0, %v1350
      %v1352 = vpop.f32.mrb[0].mxu0
      %1353 = vmatprep.mubr.f32.mxu0 0.0
      %1354 = vmatmul.mubr.f32.gmra.mrb[0].mxu0 %v1137
      %v1355 = vpop.f32.mrb[0].mxu0
      %v1356 = vadd.f32 0.0, %v1355
      %v1357 = vpop.f32.mrb[0].mxu0
      %1358 = vmatprep.mubr.f32.mxu0 0.0
      %1359 = vmatmul.mubr.f32.gmra.mrb[0].mxu0 %v1140
      %v1360 = vpop.f32.mrb[0].mxu0
      %v1361 = vadd.f32 0.0, %v1360
      %v1362 = vpop.f32.mrb[0].mxu0
      %1363 = vmatprep.mubr.f32.mxu0 0.0
      %1364 = vmatmul.mubr.f32.gmra.mrb[0].mxu0 %v1143
      %v1365 = vpop.f32.mrb[0].mxu0
      %v1366 = vadd.f32 0.0, %v1365
      %v1367 = vpop.f32.mrb[0].mxu0
      %1368 = vmatprep.mubr.f32.mxu0 0.0
      %1369 = vmatmul.mubr.f32.gmra.mrb[0].mxu0 %v1146
      %v1370 = vpop.f32.mrb[0].mxu0
      %v1371 = vadd.f32 0.0, %v1370
      %v1372 = vpop.f32.mrb[0].mxu0
      %1373 = vmatprep.mubr.f32.mxu0 0.0
      %1374 = vmatmul.mubr.f32.gmra.mrb[0].mxu0 %v1149
      %v1375 = vpop.f32.mrb[0].mxu0
      %v1376 = vadd.f32 0.0, %v1375
      %v1377 = vpop.f32.mrb[0].mxu0
      %1378 = vdwg.mxu0
      %v1379 = vadd.f32 %v895, %v1221
      %v1380 = vadd.f32 %v900, %v1226
      %v1381 = vadd.f32 %v905, %v1231
      %v1382 = vadd.f32 %v910, %v1236
      %v1383 = vadd.f32 %v915, %v1241
      %v1384 = vadd.f32 %v920, %v1246
      %v1385 = vadd.f32 %v925, %v1251
      %v1386 = vadd.f32 %v930, %v1256
      %v1387 = vadd.f32 %v935, %v1261
      %v1388 = vadd.f32 %v940, %v1266
      %v1389 = vadd.f32 %v945, %v1271
      %v1390 = vadd.f32 %v950, %v1276
      %v1391 = vadd.f32 %v955, %v1281
      %v1392 = vadd.f32 %v960, %v1286
      %v1393 = vadd.f32 %v965, %v1291
      %v1394 = vadd.f32 %v970, %v1296
      %v1395 = vadd.f32 %v975, %v1301
      %v1396 = vadd.f32 %v980, %v1306
      %v1397 = vadd.f32 %v985, %v1311
      %v1398 = vadd.f32 %v990, %v1316
      %v1399 = vadd.f32 %v995, %v1321
      %v1400 = vadd.f32 %v1000, %v1326
      %v1401 = vadd.f32 %v1005, %v1331
      %v1402 = vadd.f32 %v1010, %v1336
      %v1403 = vadd.f32 %v1015, %v1341
      %v1404 = vadd.f32 %v1020, %v1346
      %v1405 = vadd.f32 %v1025, %v1351
      %v1406 = vadd.f32 %v1030, %v1356
      %v1407 = vadd.f32 %v1035, %v1361
      %v1408 = vadd.f32 %v1040, %v1366
      %v1409 = vadd.f32 %v1045, %v1371
      %v1410 = vadd.f32 %v1050, %v1376
      %s1411 = scalar_lea.vmem %s1, 12
      %v1412 = vld [vmem:[%s1411] sm:$0xf]
      %v1414 = vsel %vm214, %v325, 0
      %v1417 = vsel %vm214, %v326, 0
      %v1420 = vsel %vm500, %v1412, 0
      %1422 = vmatprep.subr.mxu0 0.0
      %1423 = vmatpush1.msra.mxu0 %v1420
      %1424 = vmatprep.subr.mxu0 0.0
      %1425 = vmatpush1.msra.mxu0 0.0
      %1426 = vmatprep.subr.mxu0 0.0
      %1427 = vmatpush1.msra.mxu0 0.0
      %1428 = vmatprep.subr.mxu0 0.0
      %1429 = vmatpush1.msra.mxu0 0.0
      %1430 = vmatprep.subr.mxu0 0.0
      %1431 = vmatpush1.msra.mxu0 0.0
      %1432 = vmatprep.subr.mxu0 0.0
      %1433 = vmatpush1.msra.mxu0 0.0
      %1434 = vmatprep.subr.mxu0 0.0
      %1435 = vmatpush1.msra.mxu0 0.0
      %1436 = vmatprep.subr.mxu0 0.0
      %1437 = vmatpush1.msra.mxu0 0.0
      %1438 = vmatprep.subr.mxu0 0.0
      %1439 = vmatpush1.msra.mxu0 0.0
      %1440 = vmatprep.subr.mxu0 0.0
      %1441 = vmatpush1.msra.mxu0 0.0
      %1442 = vmatprep.subr.mxu0 0.0
      %1443 = vmatpush1.msra.mxu0 0.0
      %1444 = vmatprep.subr.mxu0 0.0
      %1445 = vmatpush1.msra.mxu0 0.0
      %1446 = vmatprep.subr.mxu0 0.0
      %1447 = vmatpush1.msra.mxu0 0.0
      %1448 = vmatprep.subr.mxu0 0.0
      %1449 = vmatpush1.msra.mxu0 0.0
      %1450 = vmatprep.subr.mxu0 0.0
      %1451 = vmatpush1.msra.mxu0 0.0
      %1452 = vmatprep.subr.mxu0 0.0
      %1453 = vmatpush1.msra.mxu0 0.0
      %1454 = vmatprep.subr.mxu0 0.0
      %1455 = vmatpush1.msra.mxu0 0.0
      %1456 = vmatprep.subr.mxu0 0.0
      %1457 = vmatpush1.msra.mxu0 0.0
      %1458 = vmatprep.subr.mxu0 0.0
      %1459 = vmatpush1.msra.mxu0 0.0
      %1460 = vmatprep.subr.mxu0 0.0
      %1461 = vmatpush1.msra.mxu0 0.0
      %1462 = vmatprep.subr.mxu0 0.0
      %1463 = vmatpush1.msra.mxu0 0.0
      %1464 = vmatprep.subr.mxu0 0.0
      %1465 = vmatpush1.msra.mxu0 0.0
      %1466 = vmatprep.subr.mxu0 0.0
      %1467 = vmatpush1.msra.mxu0 0.0
      %1468 = vmatprep.subr.mxu0 0.0
      %1469 = vmatpush1.msra.mxu0 0.0
      %1470 = vmatprep.subr.mxu0 0.0
      %1471 = vmatpush1.msra.mxu0 0.0
      %1472 = vmatprep.subr.mxu0 0.0
      %1473 = vmatpush1.msra.mxu0 0.0
      %1474 = vmatprep.subr.mxu0 0.0
      %1475 = vmatpush1.msra.mxu0 0.0
      %1476 = vmatprep.subr.mxu0 0.0
      %1477 = vmatpush1.msra.mxu0 0.0
      %1478 = vmatprep.subr.mxu0 0.0
      %1479 = vmatpush1.msra.mxu0 0.0
      %1480 = vmatprep.subr.mxu0 0.0
      %1481 = vmatpush1.msra.mxu0 0.0
      %1482 = vmatprep.subr.mxu0 0.0
      %1483 = vmatpush1.msra.mxu0 0.0
      %1484 = vmatprep.subr.mxu0 0.0
      %1485 = vmatpush1.msra.mxu0 0.0
      %1486 = vmatprep.mubr.f32.mxu0 0.0
      %1487 = vmatmul.mubr.f32.gmra.mrb[0].mxu0 %v736
      %v1488 = vpop.f32.mrb[0].mxu0
      %v1489 = vadd.f32 0.0, %v1488
      %v1490 = vpop.f32.mrb[0].mxu0
      %1491 = vmatprep.mubr.f32.mxu0 0.0
      %1492 = vmatmul.mubr.f32.gmra.mrb[0].mxu0 %v739
      %v1493 = vpop.f32.mrb[0].mxu0
      %v1494 = vadd.f32 0.0, %v1493
      %v1495 = vpop.f32.mrb[0].mxu0
      %1496 = vmatprep.mubr.f32.mxu0 0.0
      %1497 = vmatmul.mubr.f32.gmra.mrb[0].mxu0 %v742
      %v1498 = vpop.f32.mrb[0].mxu0
      %v1499 = vadd.f32 0.0, %v1498
      %v1500 = vpop.f32.mrb[0].mxu0
      %1501 = vmatprep.mubr.f32.mxu0 0.0
      %1502 = vmatmul.mubr.f32.gmra.mrb[0].mxu0 %v745
      %v1503 = vpop.f32.mrb[0].mxu0
      %v1504 = vadd.f32 0.0, %v1503
      %v1505 = vpop.f32.mrb[0].mxu0
      %1506 = vmatprep.mubr.f32.mxu0 0.0
      %1507 = vmatmul.mubr.f32.gmra.mrb[0].mxu0 %v748
      %v1508 = vpop.f32.mrb[0].mxu0
      %v1509 = vadd.f32 0.0, %v1508
      %v1510 = vpop.f32.mrb[0].mxu0
      %1511 = vmatprep.mubr.f32.mxu0 0.0
      %1512 = vmatmul.mubr.f32.gmra.mrb[0].mxu0 %v751
      %v1513 = vpop.f32.mrb[0].mxu0
      %v1514 = vadd.f32 0.0, %v1513
      %v1515 = vpop.f32.mrb[0].mxu0
      %1516 = vmatprep.mubr.f32.mxu0 0.0
      %1517 = vmatmul.mubr.f32.gmra.mrb[0].mxu0 %v754
      %v1518 = vpop.f32.mrb[0].mxu0
      %v1519 = vadd.f32 0.0, %v1518
      %v1520 = vpop.f32.mrb[0].mxu0
      %1521 = vmatprep.mubr.f32.mxu0 0.0
      %1522 = vmatmul.mubr.f32.gmra.mrb[0].mxu0 %v757
      %v1523 = vpop.f32.mrb[0].mxu0
      %v1524 = vadd.f32 0.0, %v1523
      %v1525 = vpop.f32.mrb[0].mxu0
      %1526 = vmatprep.mubr.f32.mxu0 0.0
      %1527 = vmatmul.mubr.f32.gmra.mrb[0].mxu0 %v760
      %v1528 = vpop.f32.mrb[0].mxu0
      %v1529 = vadd.f32 0.0, %v1528
      %v1530 = vpop.f32.mrb[0].mxu0
      %1531 = vmatprep.mubr.f32.mxu0 0.0
      %1532 = vmatmul.mubr.f32.gmra.mrb[0].mxu0 %v763
      %v1533 = vpop.f32.mrb[0].mxu0
      %v1534 = vadd.f32 0.0, %v1533
      %v1535 = vpop.f32.mrb[0].mxu0
      %1536 = vmatprep.mubr.f32.mxu0 0.0
      %1537 = vmatmul.mubr.f32.gmra.mrb[0].mxu0 %v766
      %v1538 = vpop.f32.mrb[0].mxu0
      %v1539 = vadd.f32 0.0, %v1538
      %v1540 = vpop.f32.mrb[0].mxu0
      %1541 = vmatprep.mubr.f32.mxu0 0.0
      %1542 = vmatmul.mubr.f32.gmra.mrb[0].mxu0 %v769
      %v1543 = vpop.f32.mrb[0].mxu0
      %v1544 = vadd.f32 0.0, %v1543
      %v1545 = vpop.f32.mrb[0].mxu0
      %1546 = vmatprep.mubr.f32.mxu0 0.0
      %1547 = vmatmul.mubr.f32.gmra.mrb[0].mxu0 %v772
      %v1548 = vpop.f32.mrb[0].mxu0
      %v1549 = vadd.f32 0.0, %v1548
      %v1550 = vpop.f32.mrb[0].mxu0
      %1551 = vmatprep.mubr.f32.mxu0 0.0
      %1552 = vmatmul.mubr.f32.gmra.mrb[0].mxu0 %v775
      %v1553 = vpop.f32.mrb[0].mxu0
      %v1554 = vadd.f32 0.0, %v1553
      %v1555 = vpop.f32.mrb[0].mxu0
      %1556 = vmatprep.mubr.f32.mxu0 0.0
      %1557 = vmatmul.mubr.f32.gmra.mrb[0].mxu0 %v778
      %v1558 = vpop.f32.mrb[0].mxu0
      %v1559 = vadd.f32 0.0, %v1558
      %v1560 = vpop.f32.mrb[0].mxu0
      %1561 = vmatprep.mubr.f32.mxu0 0.0
      %1562 = vmatmul.mubr.f32.gmra.mrb[0].mxu0 %v781
      %v1563 = vpop.f32.mrb[0].mxu0
      %v1564 = vadd.f32 0.0, %v1563
      %v1565 = vpop.f32.mrb[0].mxu0
      %1566 = vmatprep.mubr.f32.mxu0 0.0
      %1567 = vmatmul.mubr.f32.gmra.mrb[0].mxu0 %v784
      %v1568 = vpop.f32.mrb[0].mxu0
      %v1569 = vadd.f32 0.0, %v1568
      %v1570 = vpop.f32.mrb[0].mxu0
      %1571 = vmatprep.mubr.f32.mxu0 0.0
      %1572 = vmatmul.mubr.f32.gmra.mrb[0].mxu0 %v787
      %v1573 = vpop.f32.mrb[0].mxu0
      %v1574 = vadd.f32 0.0, %v1573
      %v1575 = vpop.f32.mrb[0].mxu0
      %1576 = vmatprep.mubr.f32.mxu0 0.0
      %1577 = vmatmul.mubr.f32.gmra.mrb[0].mxu0 %v790
      %v1578 = vpop.f32.mrb[0].mxu0
      %v1579 = vadd.f32 0.0, %v1578
      %v1580 = vpop.f32.mrb[0].mxu0
      %1581 = vmatprep.mubr.f32.mxu0 0.0
      %1582 = vmatmul.mubr.f32.gmra.mrb[0].mxu0 %v793
      %v1583 = vpop.f32.mrb[0].mxu0
      %v1584 = vadd.f32 0.0, %v1583
      %v1585 = vpop.f32.mrb[0].mxu0
      %1586 = vmatprep.mubr.f32.mxu0 0.0
      %1587 = vmatmul.mubr.f32.gmra.mrb[0].mxu0 %v796
      %v1588 = vpop.f32.mrb[0].mxu0
      %v1589 = vadd.f32 0.0, %v1588
      %v1590 = vpop.f32.mrb[0].mxu0
      %1591 = vmatprep.mubr.f32.mxu0 0.0
      %1592 = vmatmul.mubr.f32.gmra.mrb[0].mxu0 %v799
      %v1593 = vpop.f32.mrb[0].mxu0
      %v1594 = vadd.f32 0.0, %v1593
      %v1595 = vpop.f32.mrb[0].mxu0
      %1596 = vmatprep.mubr.f32.mxu0 0.0
      %1597 = vmatmul.mubr.f32.gmra.mrb[0].mxu0 %v802
      %v1598 = vpop.f32.mrb[0].mxu0
      %v1599 = vadd.f32 0.0, %v1598
      %v1600 = vpop.f32.mrb[0].mxu0
      %1601 = vmatprep.mubr.f32.mxu0 0.0
      %1602 = vmatmul.mubr.f32.gmra.mrb[0].mxu0 %v805
      %v1603 = vpop.f32.mrb[0].mxu0
      %v1604 = vadd.f32 0.0, %v1603
      %v1605 = vpop.f32.mrb[0].mxu0
      %1606 = vmatprep.mubr.f32.mxu0 0.0
      %1607 = vmatmul.mubr.f32.gmra.mrb[0].mxu0 %v808
      %v1608 = vpop.f32.mrb[0].mxu0
      %v1609 = vadd.f32 0.0, %v1608
      %v1610 = vpop.f32.mrb[0].mxu0
      %1611 = vmatprep.mubr.f32.mxu0 0.0
      %1612 = vmatmul.mubr.f32.gmra.mrb[0].mxu0 %v811
      %v1613 = vpop.f32.mrb[0].mxu0
      %v1614 = vadd.f32 0.0, %v1613
      %v1615 = vpop.f32.mrb[0].mxu0
      %1616 = vmatprep.mubr.f32.mxu0 0.0
      %1617 = vmatmul.mubr.f32.gmra.mrb[0].mxu0 %v814
      %v1618 = vpop.f32.mrb[0].mxu0
      %v1619 = vadd.f32 0.0, %v1618
      %v1620 = vpop.f32.mrb[0].mxu0
      %1621 = vmatprep.mubr.f32.mxu0 0.0
      %1622 = vmatmul.mubr.f32.gmra.mrb[0].mxu0 %v817
      %v1623 = vpop.f32.mrb[0].mxu0
      %v1624 = vadd.f32 0.0, %v1623
      %v1625 = vpop.f32.mrb[0].mxu0
      %1626 = vmatprep.mubr.f32.mxu0 0.0
      %1627 = vmatmul.mubr.f32.gmra.mrb[0].mxu0 %v820
      %v1628 = vpop.f32.mrb[0].mxu0
      %v1629 = vadd.f32 0.0, %v1628
      %v1630 = vpop.f32.mrb[0].mxu0
      %1631 = vmatprep.mubr.f32.mxu0 0.0
      %1632 = vmatmul.mubr.f32.gmra.mrb[0].mxu0 %v823
      %v1633 = vpop.f32.mrb[0].mxu0
      %v1634 = vadd.f32 0.0, %v1633
      %v1635 = vpop.f32.mrb[0].mxu0
      %1636 = vmatprep.mubr.f32.mxu0 0.0
      %1637 = vmatmul.mubr.f32.gmra.mrb[0].mxu0 %v1414
      %v1638 = vpop.f32.mrb[0].mxu0
      %v1639 = vadd.f32 0.0, %v1638
      %v1640 = vpop.f32.mrb[0].mxu0
      %1641 = vmatprep.mubr.f32.mxu0 0.0
      %1642 = vmatmul.mubr.f32.gmra.mrb[0].mxu0 %v1417
      %v1643 = vpop.f32.mrb[0].mxu0
      %v1644 = vadd.f32 0.0, %v1643
      %v1645 = vpop.f32.mrb[0].mxu0
      %1646 = vdwg.mxu0
      %v1647 = vadd.f32 %v1379, %v1489
      %v1648 = vadd.f32 %v1380, %v1494
      %v1649 = vadd.f32 %v1381, %v1499
      %v1650 = vadd.f32 %v1382, %v1504
      %v1651 = vadd.f32 %v1383, %v1509
      %v1652 = vadd.f32 %v1384, %v1514
      %v1653 = vadd.f32 %v1385, %v1519
      %v1654 = vadd.f32 %v1386, %v1524
      %v1655 = vadd.f32 %v1387, %v1529
      %v1656 = vadd.f32 %v1388, %v1534
      %v1657 = vadd.f32 %v1389, %v1539
      %v1658 = vadd.f32 %v1390, %v1544
      %v1659 = vadd.f32 %v1391, %v1549
      %v1660 = vadd.f32 %v1392, %v1554
      %v1661 = vadd.f32 %v1393, %v1559
      %v1662 = vadd.f32 %v1394, %v1564
      %v1663 = vadd.f32 %v1395, %v1569
      %v1664 = vadd.f32 %v1396, %v1574
      %v1665 = vadd.f32 %v1397, %v1579
      %v1666 = vadd.f32 %v1398, %v1584
      %v1667 = vadd.f32 %v1399, %v1589
      %v1668 = vadd.f32 %v1400, %v1594
      %v1669 = vadd.f32 %v1401, %v1599
      %v1670 = vadd.f32 %v1402, %v1604
      %v1671 = vadd.f32 %v1403, %v1609
      %v1672 = vadd.f32 %v1404, %v1614
      %v1673 = vadd.f32 %v1405, %v1619
      %v1674 = vadd.f32 %v1406, %v1624
      %v1675 = vadd.f32 %v1407, %v1629
      %v1676 = vadd.f32 %v1408, %v1634
      %v1677 = vadd.f32 %v1409, %v1639
      %v1678 = vadd.f32 %v1410, %v1644
      %s1679 = scalar_lea.vmem %s1, 16
      %v1680 = vld [vmem:[%s1679] sm:$0xf]
      %v1682 = vsel %vm214, %v361, 0
      %v1685 = vsel %vm214, %v362, 0
      %v1688 = vsel %vm500, %v1680, 0
      %1690 = vmatprep.subr.mxu0 0.0
      %1691 = vmatpush1.msra.mxu0 %v1688
      %1692 = vmatprep.subr.mxu0 0.0
      %1693 = vmatpush1.msra.mxu0 0.0
      %1694 = vmatprep.subr.mxu0 0.0
      %1695 = vmatpush1.msra.mxu0 0.0
      %1696 = vmatprep.subr.mxu0 0.0
      %1697 = vmatpush1.msra.mxu0 0.0
      %1698 = vmatprep.subr.mxu0 0.0
      %1699 = vmatpush1.msra.mxu0 0.0
      %1700 = vmatprep.subr.mxu0 0.0
      %1701 = vmatpush1.msra.mxu0 0.0
      %1702 = vmatprep.subr.mxu0 0.0
      %1703 = vmatpush1.msra.mxu0 0.0
      %1704 = vmatprep.subr.mxu0 0.0
      %1705 = vmatpush1.msra.mxu0 0.0
      %1706 = vmatprep.subr.mxu0 0.0
      %1707 = vmatpush1.msra.mxu0 0.0
      %1708 = vmatprep.subr.mxu0 0.0
      %1709 = vmatpush1.msra.mxu0 0.0
      %1710 = vmatprep.subr.mxu0 0.0
      %1711 = vmatpush1.msra.mxu0 0.0
      %1712 = vmatprep.subr.mxu0 0.0
      %1713 = vmatpush1.msra.mxu0 0.0
      %1714 = vmatprep.subr.mxu0 0.0
      %1715 = vmatpush1.msra.mxu0 0.0
      %1716 = vmatprep.subr.mxu0 0.0
      %1717 = vmatpush1.msra.mxu0 0.0
      %1718 = vmatprep.subr.mxu0 0.0
      %1719 = vmatpush1.msra.mxu0 0.0
      %1720 = vmatprep.subr.mxu0 0.0
      %1721 = vmatpush1.msra.mxu0 0.0
      %1722 = vmatprep.subr.mxu0 0.0
      %1723 = vmatpush1.msra.mxu0 0.0
      %1724 = vmatprep.subr.mxu0 0.0
      %1725 = vmatpush1.msra.mxu0 0.0
      %1726 = vmatprep.subr.mxu0 0.0
      %1727 = vmatpush1.msra.mxu0 0.0
      %1728 = vmatprep.subr.mxu0 0.0
      %1729 = vmatpush1.msra.mxu0 0.0
      %1730 = vmatprep.subr.mxu0 0.0
      %1731 = vmatpush1.msra.mxu0 0.0
      %1732 = vmatprep.subr.mxu0 0.0
      %1733 = vmatpush1.msra.mxu0 0.0
      %1734 = vmatprep.subr.mxu0 0.0
      %1735 = vmatpush1.msra.mxu0 0.0
      %1736 = vmatprep.subr.mxu0 0.0
      %1737 = vmatpush1.msra.mxu0 0.0
      %1738 = vmatprep.subr.mxu0 0.0
      %1739 = vmatpush1.msra.mxu0 0.0
      %1740 = vmatprep.subr.mxu0 0.0
      %1741 = vmatpush1.msra.mxu0 0.0
      %1742 = vmatprep.subr.mxu0 0.0
      %1743 = vmatpush1.msra.mxu0 0.0
      %1744 = vmatprep.subr.mxu0 0.0
      %1745 = vmatpush1.msra.mxu0 0.0
      %1746 = vmatprep.subr.mxu0 0.0
      %1747 = vmatpush1.msra.mxu0 0.0
      %1748 = vmatprep.subr.mxu0 0.0
      %1749 = vmatpush1.msra.mxu0 0.0
      %1750 = vmatprep.subr.mxu0 0.0
      %1751 = vmatpush1.msra.mxu0 0.0
      %1752 = vmatprep.subr.mxu0 0.0
      %1753 = vmatpush1.msra.mxu0 0.0
      %1754 = vmatprep.mubr.f32.mxu0 0.0
      %1755 = vmatmul.mubr.f32.gmra.mrb[0].mxu0 %v411
      %v1756 = vpop.f32.mrb[0].mxu0
      %v1757 = vadd.f32 0.0, %v1756
      %v1758 = vpop.f32.mrb[0].mxu0
      %1759 = vmatprep.mubr.f32.mxu0 0.0
      %1760 = vmatmul.mubr.f32.gmra.mrb[0].mxu0 %v414
      %v1761 = vpop.f32.mrb[0].mxu0
      %v1762 = vadd.f32 0.0, %v1761
      %v1763 = vpop.f32.mrb[0].mxu0
      %1764 = vmatprep.mubr.f32.mxu0 0.0
      %1765 = vmatmul.mubr.f32.gmra.mrb[0].mxu0 %v417
      %v1766 = vpop.f32.mrb[0].mxu0
      %v1767 = vadd.f32 0.0, %v1766
      %v1768 = vpop.f32.mrb[0].mxu0
      %1769 = vmatprep.mubr.f32.mxu0 0.0
      %1770 = vmatmul.mubr.f32.gmra.mrb[0].mxu0 %v420
      %v1771 = vpop.f32.mrb[0].mxu0
      %v1772 = vadd.f32 0.0, %v1771
      %v1773 = vpop.f32.mrb[0].mxu0
      %1774 = vmatprep.mubr.f32.mxu0 0.0
      %1775 = vmatmul.mubr.f32.gmra.mrb[0].mxu0 %v423
      %v1776 = vpop.f32.mrb[0].mxu0
      %v1777 = vadd.f32 0.0, %v1776
      %v1778 = vpop.f32.mrb[0].mxu0
      %1779 = vmatprep.mubr.f32.mxu0 0.0
      %1780 = vmatmul.mubr.f32.gmra.mrb[0].mxu0 %v426
      %v1781 = vpop.f32.mrb[0].mxu0
      %v1782 = vadd.f32 0.0, %v1781
      %v1783 = vpop.f32.mrb[0].mxu0
      %1784 = vmatprep.mubr.f32.mxu0 0.0
      %1785 = vmatmul.mubr.f32.gmra.mrb[0].mxu0 %v429
      %v1786 = vpop.f32.mrb[0].mxu0
      %v1787 = vadd.f32 0.0, %v1786
      %v1788 = vpop.f32.mrb[0].mxu0
      %1789 = vmatprep.mubr.f32.mxu0 0.0
      %1790 = vmatmul.mubr.f32.gmra.mrb[0].mxu0 %v432
      %v1791 = vpop.f32.mrb[0].mxu0
      %v1792 = vadd.f32 0.0, %v1791
      %v1793 = vpop.f32.mrb[0].mxu0
      %1794 = vmatprep.mubr.f32.mxu0 0.0
      %1795 = vmatmul.mubr.f32.gmra.mrb[0].mxu0 %v435
      %v1796 = vpop.f32.mrb[0].mxu0
      %v1797 = vadd.f32 0.0, %v1796
      %v1798 = vpop.f32.mrb[0].mxu0
      %1799 = vmatprep.mubr.f32.mxu0 0.0
      %1800 = vmatmul.mubr.f32.gmra.mrb[0].mxu0 %v438
      %v1801 = vpop.f32.mrb[0].mxu0
      %v1802 = vadd.f32 0.0, %v1801
      %v1803 = vpop.f32.mrb[0].mxu0
      %1804 = vmatprep.mubr.f32.mxu0 0.0
      %1805 = vmatmul.mubr.f32.gmra.mrb[0].mxu0 %v441
      %v1806 = vpop.f32.mrb[0].mxu0
      %v1807 = vadd.f32 0.0, %v1806
      %v1808 = vpop.f32.mrb[0].mxu0
      %1809 = vmatprep.mubr.f32.mxu0 0.0
      %1810 = vmatmul.mubr.f32.gmra.mrb[0].mxu0 %v444
      %v1811 = vpop.f32.mrb[0].mxu0
      %v1812 = vadd.f32 0.0, %v1811
      %v1813 = vpop.f32.mrb[0].mxu0
      %1814 = vmatprep.mubr.f32.mxu0 0.0
      %1815 = vmatmul.mubr.f32.gmra.mrb[0].mxu0 %v447
      %v1816 = vpop.f32.mrb[0].mxu0
      %v1817 = vadd.f32 0.0, %v1816
      %v1818 = vpop.f32.mrb[0].mxu0
      %1819 = vmatprep.mubr.f32.mxu0 0.0
      %1820 = vmatmul.mubr.f32.gmra.mrb[0].mxu0 %v450
      %v1821 = vpop.f32.mrb[0].mxu0
      %v1822 = vadd.f32 0.0, %v1821
      %v1823 = vpop.f32.mrb[0].mxu0
      %1824 = vmatprep.mubr.f32.mxu0 0.0
      %1825 = vmatmul.mubr.f32.gmra.mrb[0].mxu0 %v453
      %v1826 = vpop.f32.mrb[0].mxu0
      %v1827 = vadd.f32 0.0, %v1826
      %v1828 = vpop.f32.mrb[0].mxu0
      %1829 = vmatprep.mubr.f32.mxu0 0.0
      %1830 = vmatmul.mubr.f32.gmra.mrb[0].mxu0 %v456
      %v1831 = vpop.f32.mrb[0].mxu0
      %v1832 = vadd.f32 0.0, %v1831
      %v1833 = vpop.f32.mrb[0].mxu0
      %1834 = vmatprep.mubr.f32.mxu0 0.0
      %1835 = vmatmul.mubr.f32.gmra.mrb[0].mxu0 %v459
      %v1836 = vpop.f32.mrb[0].mxu0
      %v1837 = vadd.f32 0.0, %v1836
      %v1838 = vpop.f32.mrb[0].mxu0
      %1839 = vmatprep.mubr.f32.mxu0 0.0
      %1840 = vmatmul.mubr.f32.gmra.mrb[0].mxu0 %v462
      %v1841 = vpop.f32.mrb[0].mxu0
      %v1842 = vadd.f32 0.0, %v1841
      %v1843 = vpop.f32.mrb[0].mxu0
      %1844 = vmatprep.mubr.f32.mxu0 0.0
      %1845 = vmatmul.mubr.f32.gmra.mrb[0].mxu0 %v465
      %v1846 = vpop.f32.mrb[0].mxu0
      %v1847 = vadd.f32 0.0, %v1846
      %v1848 = vpop.f32.mrb[0].mxu0
      %1849 = vmatprep.mubr.f32.mxu0 0.0
      %1850 = vmatmul.mubr.f32.gmra.mrb[0].mxu0 %v468
      %v1851 = vpop.f32.mrb[0].mxu0
      %v1852 = vadd.f32 0.0, %v1851
      %v1853 = vpop.f32.mrb[0].mxu0
      %1854 = vmatprep.mubr.f32.mxu0 0.0
      %1855 = vmatmul.mubr.f32.gmra.mrb[0].mxu0 %v471
      %v1856 = vpop.f32.mrb[0].mxu0
      %v1857 = vadd.f32 0.0, %v1856
      %v1858 = vpop.f32.mrb[0].mxu0
      %1859 = vmatprep.mubr.f32.mxu0 0.0
      %1860 = vmatmul.mubr.f32.gmra.mrb[0].mxu0 %v474
      %v1861 = vpop.f32.mrb[0].mxu0
      %v1862 = vadd.f32 0.0, %v1861
      %v1863 = vpop.f32.mrb[0].mxu0
      %1864 = vmatprep.mubr.f32.mxu0 0.0
      %1865 = vmatmul.mubr.f32.gmra.mrb[0].mxu0 %v477
      %v1866 = vpop.f32.mrb[0].mxu0
      %v1867 = vadd.f32 0.0, %v1866
      %v1868 = vpop.f32.mrb[0].mxu0
      %1869 = vmatprep.mubr.f32.mxu0 0.0
      %1870 = vmatmul.mubr.f32.gmra.mrb[0].mxu0 %v480
      %v1871 = vpop.f32.mrb[0].mxu0
      %v1872 = vadd.f32 0.0, %v1871
      %v1873 = vpop.f32.mrb[0].mxu0
      %1874 = vmatprep.mubr.f32.mxu0 0.0
      %1875 = vmatmul.mubr.f32.gmra.mrb[0].mxu0 %v483
      %v1876 = vpop.f32.mrb[0].mxu0
      %v1877 = vadd.f32 0.0, %v1876
      %v1878 = vpop.f32.mrb[0].mxu0
      %1879 = vmatprep.mubr.f32.mxu0 0.0
      %1880 = vmatmul.mubr.f32.gmra.mrb[0].mxu0 %v486
      %v1881 = vpop.f32.mrb[0].mxu0
      %v1882 = vadd.f32 0.0, %v1881
      %v1883 = vpop.f32.mrb[0].mxu0
      %1884 = vmatprep.mubr.f32.mxu0 0.0
      %1885 = vmatmul.mubr.f32.gmra.mrb[0].mxu0 %v489
      %v1886 = vpop.f32.mrb[0].mxu0
      %v1887 = vadd.f32 0.0, %v1886
      %v1888 = vpop.f32.mrb[0].mxu0
      %1889 = vmatprep.mubr.f32.mxu0 0.0
      %1890 = vmatmul.mubr.f32.gmra.mrb[0].mxu0 %v492
      %v1891 = vpop.f32.mrb[0].mxu0
      %v1892 = vadd.f32 0.0, %v1891
      %v1893 = vpop.f32.mrb[0].mxu0
      %1894 = vmatprep.mubr.f32.mxu0 0.0
      %1895 = vmatmul.mubr.f32.gmra.mrb[0].mxu0 %v495
      %v1896 = vpop.f32.mrb[0].mxu0
      %v1897 = vadd.f32 0.0, %v1896
      %v1898 = vpop.f32.mrb[0].mxu0
      %1899 = vmatprep.mubr.f32.mxu0 0.0
      %1900 = vmatmul.mubr.f32.gmra.mrb[0].mxu0 %v498
      %v1901 = vpop.f32.mrb[0].mxu0
      %v1902 = vadd.f32 0.0, %v1901
      %v1903 = vpop.f32.mrb[0].mxu0
      %1904 = vmatprep.mubr.f32.mxu0 0.0
      %1905 = vmatmul.mubr.f32.gmra.mrb[0].mxu0 %v1682
      %v1906 = vpop.f32.mrb[0].mxu0
      %v1907 = vadd.f32 0.0, %v1906
      %v1908 = vpop.f32.mrb[0].mxu0
      %1909 = vmatprep.mubr.f32.mxu0 0.0
      %1910 = vmatmul.mubr.f32.gmra.mrb[0].mxu0 %v1685
      %v1911 = vpop.f32.mrb[0].mxu0
      %v1912 = vadd.f32 0.0, %v1911
      %v1913 = vpop.f32.mrb[0].mxu0
      %1914 = vdwg.mxu0
      %v1915 = vadd.f32 %v1647, %v1757
      %v1916 = vadd.f32 %v1648, %v1762
      %v1917 = vadd.f32 %v1649, %v1767
      %v1918 = vadd.f32 %v1650, %v1772
      %v1919 = vadd.f32 %v1651, %v1777
      %v1920 = vadd.f32 %v1652, %v1782
      %v1921 = vadd.f32 %v1653, %v1787
      %v1922 = vadd.f32 %v1654, %v1792
      %v1923 = vadd.f32 %v1655, %v1797
      %v1924 = vadd.f32 %v1656, %v1802
      %v1925 = vadd.f32 %v1657, %v1807
      %v1926 = vadd.f32 %v1658, %v1812
      %v1927 = vadd.f32 %v1659, %v1817
      %v1928 = vadd.f32 %v1660, %v1822
      %v1929 = vadd.f32 %v1661, %v1827
      %v1930 = vadd.f32 %v1662, %v1832
      %v1931 = vadd.f32 %v1663, %v1837
      %v1932 = vadd.f32 %v1664, %v1842
      %v1933 = vadd.f32 %v1665, %v1847
      %v1934 = vadd.f32 %v1666, %v1852
      %v1935 = vadd.f32 %v1667, %v1857
      %v1936 = vadd.f32 %v1668, %v1862
      %v1937 = vadd.f32 %v1669, %v1867
      %v1938 = vadd.f32 %v1670, %v1872
      %v1939 = vadd.f32 %v1671, %v1877
      %v1940 = vadd.f32 %v1672, %v1882
      %v1941 = vadd.f32 %v1673, %v1887
      %v1942 = vadd.f32 %v1674, %v1892
      %v1943 = vadd.f32 %v1675, %v1897
      %v1944 = vadd.f32 %v1676, %v1902
      %v1945 = vadd.f32 %v1677, %v1907
      %v1946 = vadd.f32 %v1678, %v1912
      %s1947 = scalar_lea.vmem %s1, 20
      %v1948 = vld [vmem:[%s1947] sm:$0xf]
      %v1950 = vsel %vm214, %v397, 0
      %v1953 = vsel %vm214, %v398, 0
      %v1956 = vsel %vm500, %v1948, 0
      %1958 = vmatprep.subr.mxu0 0.0
      %1959 = vmatpush1.msra.mxu0 %v1956
      %1960 = vmatprep.subr.mxu0 0.0
      %1961 = vmatpush1.msra.mxu0 0.0
      %1962 = vmatprep.subr.mxu0 0.0
      %1963 = vmatpush1.msra.mxu0 0.0
      %1964 = vmatprep.subr.mxu0 0.0
      %1965 = vmatpush1.msra.mxu0 0.0
      %1966 = vmatprep.subr.mxu0 0.0
      %1967 = vmatpush1.msra.mxu0 0.0
      %1968 = vmatprep.subr.mxu0 0.0
      %1969 = vmatpush1.msra.mxu0 0.0
      %1970 = vmatprep.subr.mxu0 0.0
      %1971 = vmatpush1.msra.mxu0 0.0
      %1972 = vmatprep.subr.mxu0 0.0
      %1973 = vmatpush1.msra.mxu0 0.0
      %1974 = vmatprep.subr.mxu0 0.0
      %1975 = vmatpush1.msra.mxu0 0.0
      %1976 = vmatprep.subr.mxu0 0.0
      %1977 = vmatpush1.msra.mxu0 0.0
      %1978 = vmatprep.subr.mxu0 0.0
      %1979 = vmatpush1.msra.mxu0 0.0
      %1980 = vmatprep.subr.mxu0 0.0
      %1981 = vmatpush1.msra.mxu0 0.0
      %1982 = vmatprep.subr.mxu0 0.0
      %1983 = vmatpush1.msra.mxu0 0.0
      %1984 = vmatprep.subr.mxu0 0.0
      %1985 = vmatpush1.msra.mxu0 0.0
      %1986 = vmatprep.subr.mxu0 0.0
      %1987 = vmatpush1.msra.mxu0 0.0
      %1988 = vmatprep.subr.mxu0 0.0
      %1989 = vmatpush1.msra.mxu0 0.0
      %1990 = vmatprep.subr.mxu0 0.0
      %1991 = vmatpush1.msra.mxu0 0.0
      %1992 = vmatprep.subr.mxu0 0.0
      %1993 = vmatpush1.msra.mxu0 0.0
      %1994 = vmatprep.subr.mxu0 0.0
      %1995 = vmatpush1.msra.mxu0 0.0
      %1996 = vmatprep.subr.mxu0 0.0
      %1997 = vmatpush1.msra.mxu0 0.0
      %1998 = vmatprep.subr.mxu0 0.0
      %1999 = vmatpush1.msra.mxu0 0.0
      %2000 = vmatprep.subr.mxu0 0.0
      %2001 = vmatpush1.msra.mxu0 0.0
      %2002 = vmatprep.subr.mxu0 0.0
      %2003 = vmatpush1.msra.mxu0 0.0
      %2004 = vmatprep.subr.mxu0 0.0
      %2005 = vmatpush1.msra.mxu0 0.0
      %2006 = vmatprep.subr.mxu0 0.0
      %2007 = vmatpush1.msra.mxu0 0.0
      %2008 = vmatprep.subr.mxu0 0.0
      %2009 = vmatpush1.msra.mxu0 0.0
      %2010 = vmatprep.subr.mxu0 0.0
      %2011 = vmatpush1.msra.mxu0 0.0
      %2012 = vmatprep.subr.mxu0 0.0
      %2013 = vmatpush1.msra.mxu0 0.0
      %2014 = vmatprep.subr.mxu0 0.0
      %2015 = vmatpush1.msra.mxu0 0.0
      %2016 = vmatprep.subr.mxu0 0.0
      %2017 = vmatpush1.msra.mxu0 0.0
      %2018 = vmatprep.subr.mxu0 0.0
      %2019 = vmatpush1.msra.mxu0 0.0
      %2020 = vmatprep.subr.mxu0 0.0
      %2021 = vmatpush1.msra.mxu0 0.0
      %2022 = vmatprep.mubr.f32.mxu0 0.0
      %2023 = vmatmul.mubr.f32.gmra.mrb[0].mxu0 %v1062
      %v2024 = vpop.f32.mrb[0].mxu0
      %v2025 = vadd.f32 0.0, %v2024
      %v2026 = vpop.f32.mrb[0].mxu0
      %2027 = vmatprep.mubr.f32.mxu0 0.0
      %2028 = vmatmul.mubr.f32.gmra.mrb[0].mxu0 %v1065
      %v2029 = vpop.f32.mrb[0].mxu0
      %v2030 = vadd.f32 0.0, %v2029
      %v2031 = vpop.f32.mrb[0].mxu0
      %2032 = vmatprep.mubr.f32.mxu0 0.0
      %2033 = vmatmul.mubr.f32.gmra.mrb[0].mxu0 %v1068
      %v2034 = vpop.f32.mrb[0].mxu0
      %v2035 = vadd.f32 0.0, %v2034
      %v2036 = vpop.f32.mrb[0].mxu0
      %2037 = vmatprep.mubr.f32.mxu0 0.0
      %2038 = vmatmul.mubr.f32.gmra.mrb[0].mxu0 %v1071
      %v2039 = vpop.f32.mrb[0].mxu0
      %v2040 = vadd.f32 0.0, %v2039
      %v2041 = vpop.f32.mrb[0].mxu0
      %2042 = vmatprep.mubr.f32.mxu0 0.0
      %2043 = vmatmul.mubr.f32.gmra.mrb[0].mxu0 %v1074
      %v2044 = vpop.f32.mrb[0].mxu0
      %v2045 = vadd.f32 0.0, %v2044
      %v2046 = vpop.f32.mrb[0].mxu0
      %2047 = vmatprep.mubr.f32.mxu0 0.0
      %2048 = vmatmul.mubr.f32.gmra.mrb[0].mxu0 %v1077
      %v2049 = vpop.f32.mrb[0].mxu0
      %v2050 = vadd.f32 0.0, %v2049
      %v2051 = vpop.f32.mrb[0].mxu0
      %2052 = vmatprep.mubr.f32.mxu0 0.0
      %2053 = vmatmul.mubr.f32.gmra.mrb[0].mxu0 %v1080
      %v2054 = vpop.f32.mrb[0].mxu0
      %v2055 = vadd.f32 0.0, %v2054
      %v2056 = vpop.f32.mrb[0].mxu0
      %2057 = vmatprep.mubr.f32.mxu0 0.0
      %2058 = vmatmul.mubr.f32.gmra.mrb[0].mxu0 %v1083
      %v2059 = vpop.f32.mrb[0].mxu0
      %v2060 = vadd.f32 0.0, %v2059
      %v2061 = vpop.f32.mrb[0].mxu0
      %2062 = vmatprep.mubr.f32.mxu0 0.0
      %2063 = vmatmul.mubr.f32.gmra.mrb[0].mxu0 %v1086
      %v2064 = vpop.f32.mrb[0].mxu0
      %v2065 = vadd.f32 0.0, %v2064
      %v2066 = vpop.f32.mrb[0].mxu0
      %2067 = vmatprep.mubr.f32.mxu0 0.0
      %2068 = vmatmul.mubr.f32.gmra.mrb[0].mxu0 %v1089
      %v2069 = vpop.f32.mrb[0].mxu0
      %v2070 = vadd.f32 0.0, %v2069
      %v2071 = vpop.f32.mrb[0].mxu0
      %2072 = vmatprep.mubr.f32.mxu0 0.0
      %2073 = vmatmul.mubr.f32.gmra.mrb[0].mxu0 %v1092
      %v2074 = vpop.f32.mrb[0].mxu0
      %v2075 = vadd.f32 0.0, %v2074
      %v2076 = vpop.f32.mrb[0].mxu0
      %2077 = vmatprep.mubr.f32.mxu0 0.0
      %2078 = vmatmul.mubr.f32.gmra.mrb[0].mxu0 %v1095
      %v2079 = vpop.f32.mrb[0].mxu0
      %v2080 = vadd.f32 0.0, %v2079
      %v2081 = vpop.f32.mrb[0].mxu0
      %2082 = vmatprep.mubr.f32.mxu0 0.0
      %2083 = vmatmul.mubr.f32.gmra.mrb[0].mxu0 %v1098
      %v2084 = vpop.f32.mrb[0].mxu0
      %v2085 = vadd.f32 0.0, %v2084
      %v2086 = vpop.f32.mrb[0].mxu0
      %2087 = vmatprep.mubr.f32.mxu0 0.0
      %2088 = vmatmul.mubr.f32.gmra.mrb[0].mxu0 %v1101
      %v2089 = vpop.f32.mrb[0].mxu0
      %v2090 = vadd.f32 0.0, %v2089
      %v2091 = vpop.f32.mrb[0].mxu0
      %2092 = vmatprep.mubr.f32.mxu0 0.0
      %2093 = vmatmul.mubr.f32.gmra.mrb[0].mxu0 %v1104
      %v2094 = vpop.f32.mrb[0].mxu0
      %v2095 = vadd.f32 0.0, %v2094
      %v2096 = vpop.f32.mrb[0].mxu0
      %2097 = vmatprep.mubr.f32.mxu0 0.0
      %2098 = vmatmul.mubr.f32.gmra.mrb[0].mxu0 %v1107
      %v2099 = vpop.f32.mrb[0].mxu0
      %v2100 = vadd.f32 0.0, %v2099
      %v2101 = vpop.f32.mrb[0].mxu0
      %2102 = vmatprep.mubr.f32.mxu0 0.0
      %2103 = vmatmul.mubr.f32.gmra.mrb[0].mxu0 %v1110
      %v2104 = vpop.f32.mrb[0].mxu0
      %v2105 = vadd.f32 0.0, %v2104
      %v2106 = vpop.f32.mrb[0].mxu0
      %2107 = vmatprep.mubr.f32.mxu0 0.0
      %2108 = vmatmul.mubr.f32.gmra.mrb[0].mxu0 %v1113
      %v2109 = vpop.f32.mrb[0].mxu0
      %v2110 = vadd.f32 0.0, %v2109
      %v2111 = vpop.f32.mrb[0].mxu0
      %2112 = vmatprep.mubr.f32.mxu0 0.0
      %2113 = vmatmul.mubr.f32.gmra.mrb[0].mxu0 %v1116
      %v2114 = vpop.f32.mrb[0].mxu0
      %v2115 = vadd.f32 0.0, %v2114
      %v2116 = vpop.f32.mrb[0].mxu0
      %2117 = vmatprep.mubr.f32.mxu0 0.0
      %2118 = vmatmul.mubr.f32.gmra.mrb[0].mxu0 %v1119
      %v2119 = vpop.f32.mrb[0].mxu0
      %v2120 = vadd.f32 0.0, %v2119
      %v2121 = vpop.f32.mrb[0].mxu0
      %2122 = vmatprep.mubr.f32.mxu0 0.0
      %2123 = vmatmul.mubr.f32.gmra.mrb[0].mxu0 %v1122
      %v2124 = vpop.f32.mrb[0].mxu0
      %v2125 = vadd.f32 0.0, %v2124
      %v2126 = vpop.f32.mrb[0].mxu0
      %2127 = vmatprep.mubr.f32.mxu0 0.0
      %2128 = vmatmul.mubr.f32.gmra.mrb[0].mxu0 %v1125
      %v2129 = vpop.f32.mrb[0].mxu0
      %v2130 = vadd.f32 0.0, %v2129
      %v2131 = vpop.f32.mrb[0].mxu0
      %2132 = vmatprep.mubr.f32.mxu0 0.0
      %2133 = vmatmul.mubr.f32.gmra.mrb[0].mxu0 %v1128
      %v2134 = vpop.f32.mrb[0].mxu0
      %v2135 = vadd.f32 0.0, %v2134
      %v2136 = vpop.f32.mrb[0].mxu0
      %2137 = vmatprep.mubr.f32.mxu0 0.0
      %2138 = vmatmul.mubr.f32.gmra.mrb[0].mxu0 %v1131
      %v2139 = vpop.f32.mrb[0].mxu0
      %v2140 = vadd.f32 0.0, %v2139
      %v2141 = vpop.f32.mrb[0].mxu0
      %2142 = vmatprep.mubr.f32.mxu0 0.0
      %2143 = vmatmul.mubr.f32.gmra.mrb[0].mxu0 %v1134
      %v2144 = vpop.f32.mrb[0].mxu0
      %v2145 = vadd.f32 0.0, %v2144
      %v2146 = vpop.f32.mrb[0].mxu0
      %2147 = vmatprep.mubr.f32.mxu0 0.0
      %2148 = vmatmul.mubr.f32.gmra.mrb[0].mxu0 %v1137
      %v2149 = vpop.f32.mrb[0].mxu0
      %v2150 = vadd.f32 0.0, %v2149
      %v2151 = vpop.f32.mrb[0].mxu0
      %2152 = vmatprep.mubr.f32.mxu0 0.0
      %2153 = vmatmul.mubr.f32.gmra.mrb[0].mxu0 %v1140
      %v2154 = vpop.f32.mrb[0].mxu0
      %v2155 = vadd.f32 0.0, %v2154
      %v2156 = vpop.f32.mrb[0].mxu0
      %2157 = vmatprep.mubr.f32.mxu0 0.0
      %2158 = vmatmul.mubr.f32.gmra.mrb[0].mxu0 %v1143
      %v2159 = vpop.f32.mrb[0].mxu0
      %v2160 = vadd.f32 0.0, %v2159
      %v2161 = vpop.f32.mrb[0].mxu0
      %2162 = vmatprep.mubr.f32.mxu0 0.0
      %2163 = vmatmul.mubr.f32.gmra.mrb[0].mxu0 %v1146
      %v2164 = vpop.f32.mrb[0].mxu0
      %v2165 = vadd.f32 0.0, %v2164
      %v2166 = vpop.f32.mrb[0].mxu0
      %2167 = vmatprep.mubr.f32.mxu0 0.0
      %2168 = vmatmul.mubr.f32.gmra.mrb[0].mxu0 %v1149
      %v2169 = vpop.f32.mrb[0].mxu0
      %v2170 = vadd.f32 0.0, %v2169
      %v2171 = vpop.f32.mrb[0].mxu0
      %2172 = vmatprep.mubr.f32.mxu0 0.0
      %2173 = vmatmul.mubr.f32.gmra.mrb[0].mxu0 %v1950
      %v2174 = vpop.f32.mrb[0].mxu0
      %v2175 = vadd.f32 0.0, %v2174
      %v2176 = vpop.f32.mrb[0].mxu0
      %2177 = vmatprep.mubr.f32.mxu0 0.0
      %2178 = vmatmul.mubr.f32.gmra.mrb[0].mxu0 %v1953
      %v2179 = vpop.f32.mrb[0].mxu0
      %v2180 = vadd.f32 0.0, %v2179
      %v2181 = vpop.f32.mrb[0].mxu0
      %2182 = vdwg.mxu0
      %v2183 = vadd.f32 %v1915, %v2025
      %v2184 = vadd.f32 %v1916, %v2030
      %v2185 = vadd.f32 %v1917, %v2035
      %v2186 = vadd.f32 %v1918, %v2040
      %v2187 = vadd.f32 %v1919, %v2045
      %v2188 = vadd.f32 %v1920, %v2050
      %v2189 = vadd.f32 %v1921, %v2055
      %v2190 = vadd.f32 %v1922, %v2060
      %v2191 = vadd.f32 %v1923, %v2065
      %v2192 = vadd.f32 %v1924, %v2070
      %v2193 = vadd.f32 %v1925, %v2075
      %v2194 = vadd.f32 %v1926, %v2080
      %v2195 = vadd.f32 %v1927, %v2085
      %v2196 = vadd.f32 %v1928, %v2090
      %v2197 = vadd.f32 %v1929, %v2095
      %v2198 = vadd.f32 %v1930, %v2100
      %v2199 = vadd.f32 %v1931, %v2105
      %v2200 = vadd.f32 %v1932, %v2110
      %v2201 = vadd.f32 %v1933, %v2115
      %v2202 = vadd.f32 %v1934, %v2120
      %v2203 = vadd.f32 %v1935, %v2125
      %v2204 = vadd.f32 %v1936, %v2130
      %v2205 = vadd.f32 %v1937, %v2135
      %v2206 = vadd.f32 %v1938, %v2140
      %v2207 = vadd.f32 %v1939, %v2145
      %v2208 = vadd.f32 %v1940, %v2150
      %v2209 = vadd.f32 %v1941, %v2155
      %v2210 = vadd.f32 %v1942, %v2160
      %v2211 = vadd.f32 %v1943, %v2165
      %v2212 = vadd.f32 %v1944, %v2170
      %v2213 = vadd.f32 %v1945, %v2175
      %v2214 = vadd.f32 %v1946, %v2180
      %s2215 = scalar_lea.vmem %s1, 24
      %v2216 = vld [vmem:[%s2215] sm:$0xf]
      %v2218 = vsel %vm214, %v327, 0
      %v2221 = vsel %vm214, %v328, 0
      %v2224 = vsel %vm500, %v2216, 0
      %2226 = vmatprep.subr.mxu0 0.0
      %2227 = vmatpush1.msra.mxu0 %v2224
      %2228 = vmatprep.subr.mxu0 0.0
      %2229 = vmatpush1.msra.mxu0 0.0
      %2230 = vmatprep.subr.mxu0 0.0
      %2231 = vmatpush1.msra.mxu0 0.0
      %2232 = vmatprep.subr.mxu0 0.0
      %2233 = vmatpush1.msra.mxu0 0.0
      %2234 = vmatprep.subr.mxu0 0.0
      %2235 = vmatpush1.msra.mxu0 0.0
      %2236 = vmatprep.subr.mxu0 0.0
      %2237 = vmatpush1.msra.mxu0 0.0
      %2238 = vmatprep.subr.mxu0 0.0
      %2239 = vmatpush1.msra.mxu0 0.0
      %2240 = vmatprep.subr.mxu0 0.0
      %2241 = vmatpush1.msra.mxu0 0.0
      %2242 = vmatprep.subr.mxu0 0.0
      %2243 = vmatpush1.msra.mxu0 0.0
      %2244 = vmatprep.subr.mxu0 0.0
      %2245 = vmatpush1.msra.mxu0 0.0
      %2246 = vmatprep.subr.mxu0 0.0
      %2247 = vmatpush1.msra.mxu0 0.0
      %2248 = vmatprep.subr.mxu0 0.0
      %2249 = vmatpush1.msra.mxu0 0.0
      %2250 = vmatprep.subr.mxu0 0.0
      %2251 = vmatpush1.msra.mxu0 0.0
      %2252 = vmatprep.subr.mxu0 0.0
      %2253 = vmatpush1.msra.mxu0 0.0
      %2254 = vmatprep.subr.mxu0 0.0
      %2255 = vmatpush1.msra.mxu0 0.0
      %2256 = vmatprep.subr.mxu0 0.0
      %2257 = vmatpush1.msra.mxu0 0.0
      %2258 = vmatprep.subr.mxu0 0.0
      %2259 = vmatpush1.msra.mxu0 0.0
      %2260 = vmatprep.subr.mxu0 0.0
      %2261 = vmatpush1.msra.mxu0 0.0
      %2262 = vmatprep.subr.mxu0 0.0
      %2263 = vmatpush1.msra.mxu0 0.0
      %2264 = vmatprep.subr.mxu0 0.0
      %2265 = vmatpush1.msra.mxu0 0.0
      %2266 = vmatprep.subr.mxu0 0.0
      %2267 = vmatpush1.msra.mxu0 0.0
      %2268 = vmatprep.subr.mxu0 0.0
      %2269 = vmatpush1.msra.mxu0 0.0
      %2270 = vmatprep.subr.mxu0 0.0
      %2271 = vmatpush1.msra.mxu0 0.0
      %2272 = vmatprep.subr.mxu0 0.0
      %2273 = vmatpush1.msra.mxu0 0.0
      %2274 = vmatprep.subr.mxu0 0.0
      %2275 = vmatpush1.msra.mxu0 0.0
      %2276 = vmatprep.subr.mxu0 0.0
      %2277 = vmatpush1.msra.mxu0 0.0
      %2278 = vmatprep.subr.mxu0 0.0
      %2279 = vmatpush1.msra.mxu0 0.0
      %2280 = vmatprep.subr.mxu0 0.0
      %2281 = vmatpush1.msra.mxu0 0.0
      %2282 = vmatprep.subr.mxu0 0.0
      %2283 = vmatpush1.msra.mxu0 0.0
      %2284 = vmatprep.subr.mxu0 0.0
      %2285 = vmatpush1.msra.mxu0 0.0
      %2286 = vmatprep.subr.mxu0 0.0
      %2287 = vmatpush1.msra.mxu0 0.0
      %2288 = vmatprep.subr.mxu0 0.0
      %2289 = vmatpush1.msra.mxu0 0.0
      %2290 = vmatprep.mubr.f32.mxu0 0.0
      %2291 = vmatmul.mubr.f32.gmra.mrb[0].mxu0 %v742
      %v2292 = vpop.f32.mrb[0].mxu0
      %v2293 = vadd.f32 0.0, %v2292
      %v2294 = vpop.f32.mrb[0].mxu0
      %2295 = vmatprep.mubr.f32.mxu0 0.0
      %2296 = vmatmul.mubr.f32.gmra.mrb[0].mxu0 %v745
      %v2297 = vpop.f32.mrb[0].mxu0
      %v2298 = vadd.f32 0.0, %v2297
      %v2299 = vpop.f32.mrb[0].mxu0
      %2300 = vmatprep.mubr.f32.mxu0 0.0
      %2301 = vmatmul.mubr.f32.gmra.mrb[0].mxu0 %v748
      %v2302 = vpop.f32.mrb[0].mxu0
      %v2303 = vadd.f32 0.0, %v2302
      %v2304 = vpop.f32.mrb[0].mxu0
      %2305 = vmatprep.mubr.f32.mxu0 0.0
      %2306 = vmatmul.mubr.f32.gmra.mrb[0].mxu0 %v751
      %v2307 = vpop.f32.mrb[0].mxu0
      %v2308 = vadd.f32 0.0, %v2307
      %v2309 = vpop.f32.mrb[0].mxu0
      %2310 = vmatprep.mubr.f32.mxu0 0.0
      %2311 = vmatmul.mubr.f32.gmra.mrb[0].mxu0 %v754
      %v2312 = vpop.f32.mrb[0].mxu0
      %v2313 = vadd.f32 0.0, %v2312
      %v2314 = vpop.f32.mrb[0].mxu0
      %2315 = vmatprep.mubr.f32.mxu0 0.0
      %2316 = vmatmul.mubr.f32.gmra.mrb[0].mxu0 %v757
      %v2317 = vpop.f32.mrb[0].mxu0
      %v2318 = vadd.f32 0.0, %v2317
      %v2319 = vpop.f32.mrb[0].mxu0
      %2320 = vmatprep.mubr.f32.mxu0 0.0
      %2321 = vmatmul.mubr.f32.gmra.mrb[0].mxu0 %v760
      %v2322 = vpop.f32.mrb[0].mxu0
      %v2323 = vadd.f32 0.0, %v2322
      %v2324 = vpop.f32.mrb[0].mxu0
      %2325 = vmatprep.mubr.f32.mxu0 0.0
      %2326 = vmatmul.mubr.f32.gmra.mrb[0].mxu0 %v763
      %v2327 = vpop.f32.mrb[0].mxu0
      %v2328 = vadd.f32 0.0, %v2327
      %v2329 = vpop.f32.mrb[0].mxu0
      %2330 = vmatprep.mubr.f32.mxu0 0.0
      %2331 = vmatmul.mubr.f32.gmra.mrb[0].mxu0 %v766
      %v2332 = vpop.f32.mrb[0].mxu0
      %v2333 = vadd.f32 0.0, %v2332
      %v2334 = vpop.f32.mrb[0].mxu0
      %2335 = vmatprep.mubr.f32.mxu0 0.0
      %2336 = vmatmul.mubr.f32.gmra.mrb[0].mxu0 %v769
      %v2337 = vpop.f32.mrb[0].mxu0
      %v2338 = vadd.f32 0.0, %v2337
      %v2339 = vpop.f32.mrb[0].mxu0
      %2340 = vmatprep.mubr.f32.mxu0 0.0
      %2341 = vmatmul.mubr.f32.gmra.mrb[0].mxu0 %v772
      %v2342 = vpop.f32.mrb[0].mxu0
      %v2343 = vadd.f32 0.0, %v2342
      %v2344 = vpop.f32.mrb[0].mxu0
      %2345 = vmatprep.mubr.f32.mxu0 0.0
      %2346 = vmatmul.mubr.f32.gmra.mrb[0].mxu0 %v775
      %v2347 = vpop.f32.mrb[0].mxu0
      %v2348 = vadd.f32 0.0, %v2347
      %v2349 = vpop.f32.mrb[0].mxu0
      %2350 = vmatprep.mubr.f32.mxu0 0.0
      %2351 = vmatmul.mubr.f32.gmra.mrb[0].mxu0 %v778
      %v2352 = vpop.f32.mrb[0].mxu0
      %v2353 = vadd.f32 0.0, %v2352
      %v2354 = vpop.f32.mrb[0].mxu0
      %2355 = vmatprep.mubr.f32.mxu0 0.0
      %2356 = vmatmul.mubr.f32.gmra.mrb[0].mxu0 %v781
      %v2357 = vpop.f32.mrb[0].mxu0
      %v2358 = vadd.f32 0.0, %v2357
      %v2359 = vpop.f32.mrb[0].mxu0
      %2360 = vmatprep.mubr.f32.mxu0 0.0
      %2361 = vmatmul.mubr.f32.gmra.mrb[0].mxu0 %v784
      %v2362 = vpop.f32.mrb[0].mxu0
      %v2363 = vadd.f32 0.0, %v2362
      %v2364 = vpop.f32.mrb[0].mxu0
      %2365 = vmatprep.mubr.f32.mxu0 0.0
      %2366 = vmatmul.mubr.f32.gmra.mrb[0].mxu0 %v787
      %v2367 = vpop.f32.mrb[0].mxu0
      %v2368 = vadd.f32 0.0, %v2367
      %v2369 = vpop.f32.mrb[0].mxu0
      %2370 = vmatprep.mubr.f32.mxu0 0.0
      %2371 = vmatmul.mubr.f32.gmra.mrb[0].mxu0 %v790
      %v2372 = vpop.f32.mrb[0].mxu0
      %v2373 = vadd.f32 0.0, %v2372
      %v2374 = vpop.f32.mrb[0].mxu0
      %2375 = vmatprep.mubr.f32.mxu0 0.0
      %2376 = vmatmul.mubr.f32.gmra.mrb[0].mxu0 %v793
      %v2377 = vpop.f32.mrb[0].mxu0
      %v2378 = vadd.f32 0.0, %v2377
      %v2379 = vpop.f32.mrb[0].mxu0
      %2380 = vmatprep.mubr.f32.mxu0 0.0
      %2381 = vmatmul.mubr.f32.gmra.mrb[0].mxu0 %v796
      %v2382 = vpop.f32.mrb[0].mxu0
      %v2383 = vadd.f32 0.0, %v2382
      %v2384 = vpop.f32.mrb[0].mxu0
      %2385 = vmatprep.mubr.f32.mxu0 0.0
      %2386 = vmatmul.mubr.f32.gmra.mrb[0].mxu0 %v799
      %v2387 = vpop.f32.mrb[0].mxu0
      %v2388 = vadd.f32 0.0, %v2387
      %v2389 = vpop.f32.mrb[0].mxu0
      %2390 = vmatprep.mubr.f32.mxu0 0.0
      %2391 = vmatmul.mubr.f32.gmra.mrb[0].mxu0 %v802
      %v2392 = vpop.f32.mrb[0].mxu0
      %v2393 = vadd.f32 0.0, %v2392
      %v2394 = vpop.f32.mrb[0].mxu0
      %2395 = vmatprep.mubr.f32.mxu0 0.0
      %2396 = vmatmul.mubr.f32.gmra.mrb[0].mxu0 %v805
      %v2397 = vpop.f32.mrb[0].mxu0
      %v2398 = vadd.f32 0.0, %v2397
      %v2399 = vpop.f32.mrb[0].mxu0
      %2400 = vmatprep.mubr.f32.mxu0 0.0
      %2401 = vmatmul.mubr.f32.gmra.mrb[0].mxu0 %v808
      %v2402 = vpop.f32.mrb[0].mxu0
      %v2403 = vadd.f32 0.0, %v2402
      %v2404 = vpop.f32.mrb[0].mxu0
      %2405 = vmatprep.mubr.f32.mxu0 0.0
      %2406 = vmatmul.mubr.f32.gmra.mrb[0].mxu0 %v811
      %v2407 = vpop.f32.mrb[0].mxu0
      %v2408 = vadd.f32 0.0, %v2407
      %v2409 = vpop.f32.mrb[0].mxu0
      %2410 = vmatprep.mubr.f32.mxu0 0.0
      %2411 = vmatmul.mubr.f32.gmra.mrb[0].mxu0 %v814
      %v2412 = vpop.f32.mrb[0].mxu0
      %v2413 = vadd.f32 0.0, %v2412
      %v2414 = vpop.f32.mrb[0].mxu0
      %2415 = vmatprep.mubr.f32.mxu0 0.0
      %2416 = vmatmul.mubr.f32.gmra.mrb[0].mxu0 %v817
      %v2417 = vpop.f32.mrb[0].mxu0
      %v2418 = vadd.f32 0.0, %v2417
      %v2419 = vpop.f32.mrb[0].mxu0
      %2420 = vmatprep.mubr.f32.mxu0 0.0
      %2421 = vmatmul.mubr.f32.gmra.mrb[0].mxu0 %v820
      %v2422 = vpop.f32.mrb[0].mxu0
      %v2423 = vadd.f32 0.0, %v2422
      %v2424 = vpop.f32.mrb[0].mxu0
      %2425 = vmatprep.mubr.f32.mxu0 0.0
      %2426 = vmatmul.mubr.f32.gmra.mrb[0].mxu0 %v823
      %v2427 = vpop.f32.mrb[0].mxu0
      %v2428 = vadd.f32 0.0, %v2427
      %v2429 = vpop.f32.mrb[0].mxu0
      %2430 = vmatprep.mubr.f32.mxu0 0.0
      %2431 = vmatmul.mubr.f32.gmra.mrb[0].mxu0 %v1414
      %v2432 = vpop.f32.mrb[0].mxu0
      %v2433 = vadd.f32 0.0, %v2432
      %v2434 = vpop.f32.mrb[0].mxu0
      %2435 = vmatprep.mubr.f32.mxu0 0.0
      %2436 = vmatmul.mubr.f32.gmra.mrb[0].mxu0 %v1417
      %v2437 = vpop.f32.mrb[0].mxu0
      %v2438 = vadd.f32 0.0, %v2437
      %v2439 = vpop.f32.mrb[0].mxu0
      %2440 = vmatprep.mubr.f32.mxu0 0.0
      %2441 = vmatmul.mubr.f32.gmra.mrb[0].mxu0 %v2218
      %v2442 = vpop.f32.mrb[0].mxu0
      %v2443 = vadd.f32 0.0, %v2442
      %v2444 = vpop.f32.mrb[0].mxu0
      %2445 = vmatprep.mubr.f32.mxu0 0.0
      %2446 = vmatmul.mubr.f32.gmra.mrb[0].mxu0 %v2221
      %v2447 = vpop.f32.mrb[0].mxu0
      %v2448 = vadd.f32 0.0, %v2447
      %v2449 = vpop.f32.mrb[0].mxu0
      %2450 = vdwg.mxu0
      %v2451 = vadd.f32 %v2183, %v2293
      %v2452 = vadd.f32 %v2184, %v2298
      %v2453 = vadd.f32 %v2185, %v2303
      %v2454 = vadd.f32 %v2186, %v2308
      %v2455 = vadd.f32 %v2187, %v2313
      %v2456 = vadd.f32 %v2188, %v2318
      %v2457 = vadd.f32 %v2189, %v2323
      %v2458 = vadd.f32 %v2190, %v2328
      %v2459 = vadd.f32 %v2191, %v2333
      %v2460 = vadd.f32 %v2192, %v2338
      %v2461 = vadd.f32 %v2193, %v2343
      %v2462 = vadd.f32 %v2194, %v2348
      %v2463 = vadd.f32 %v2195, %v2353
      %v2464 = vadd.f32 %v2196, %v2358
      %v2465 = vadd.f32 %v2197, %v2363
      %v2466 = vadd.f32 %v2198, %v2368
      %v2467 = vadd.f32 %v2199, %v2373
      %v2468 = vadd.f32 %v2200, %v2378
      %v2469 = vadd.f32 %v2201, %v2383
      %v2470 = vadd.f32 %v2202, %v2388
      %v2471 = vadd.f32 %v2203, %v2393
      %v2472 = vadd.f32 %v2204, %v2398
      %v2473 = vadd.f32 %v2205, %v2403
      %v2474 = vadd.f32 %v2206, %v2408
      %v2475 = vadd.f32 %v2207, %v2413
      %v2476 = vadd.f32 %v2208, %v2418
      %v2477 = vadd.f32 %v2209, %v2423
      %v2478 = vadd.f32 %v2210, %v2428
      %v2479 = vadd.f32 %v2211, %v2433
      %v2480 = vadd.f32 %v2212, %v2438
      %v2481 = vadd.f32 %v2213, %v2443
      %v2482 = vadd.f32 %v2214, %v2448
      %s2483 = scalar_lea.vmem %s1, 28
      %v2484 = vld [vmem:[%s2483] sm:$0xf]
      %v2486 = vsel %vm214, %v363, 0
      %v2489 = vsel %vm214, %v364, 0
      %v2492 = vsel %vm500, %v2484, 0
      %2494 = vmatprep.subr.mxu0 0.0
      %2495 = vmatpush1.msra.mxu0 %v2492
      %2496 = vmatprep.subr.mxu0 0.0
      %2497 = vmatpush1.msra.mxu0 0.0
      %2498 = vmatprep.subr.mxu0 0.0
      %2499 = vmatpush1.msra.mxu0 0.0
      %2500 = vmatprep.subr.mxu0 0.0
      %2501 = vmatpush1.msra.mxu0 0.0
      %2502 = vmatprep.subr.mxu0 0.0
      %2503 = vmatpush1.msra.mxu0 0.0
      %2504 = vmatprep.subr.mxu0 0.0
      %2505 = vmatpush1.msra.mxu0 0.0
      %2506 = vmatprep.subr.mxu0 0.0
      %2507 = vmatpush1.msra.mxu0 0.0
      %2508 = vmatprep.subr.mxu0 0.0
      %2509 = vmatpush1.msra.mxu0 0.0
      %2510 = vmatprep.subr.mxu0 0.0
      %2511 = vmatpush1.msra.mxu0 0.0
      %2512 = vmatprep.subr.mxu0 0.0
      %2513 = vmatpush1.msra.mxu0 0.0
      %2514 = vmatprep.subr.mxu0 0.0
      %2515 = vmatpush1.msra.mxu0 0.0
      %2516 = vmatprep.subr.mxu0 0.0
      %2517 = vmatpush1.msra.mxu0 0.0
      %2518 = vmatprep.subr.mxu0 0.0
      %2519 = vmatpush1.msra.mxu0 0.0
      %2520 = vmatprep.subr.mxu0 0.0
      %2521 = vmatpush1.msra.mxu0 0.0
      %2522 = vmatprep.subr.mxu0 0.0
      %2523 = vmatpush1.msra.mxu0 0.0
      %2524 = vmatprep.subr.mxu0 0.0
      %2525 = vmatpush1.msra.mxu0 0.0
      %2526 = vmatprep.subr.mxu0 0.0
      %2527 = vmatpush1.msra.mxu0 0.0
      %2528 = vmatprep.subr.mxu0 0.0
      %2529 = vmatpush1.msra.mxu0 0.0
      %2530 = vmatprep.subr.mxu0 0.0
      %2531 = vmatpush1.msra.mxu0 0.0
      %2532 = vmatprep.subr.mxu0 0.0
      %2533 = vmatpush1.msra.mxu0 0.0
      %2534 = vmatprep.subr.mxu0 0.0
      %2535 = vmatpush1.msra.mxu0 0.0
      %2536 = vmatprep.subr.mxu0 0.0
      %2537 = vmatpush1.msra.mxu0 0.0
      %2538 = vmatprep.subr.mxu0 0.0
      %2539 = vmatpush1.msra.mxu0 0.0
      %2540 = vmatprep.subr.mxu0 0.0
      %2541 = vmatpush1.msra.mxu0 0.0
      %2542 = vmatprep.subr.mxu0 0.0
      %2543 = vmatpush1.msra.mxu0 0.0
      %2544 = vmatprep.subr.mxu0 0.0
      %2545 = vmatpush1.msra.mxu0 0.0
      %2546 = vmatprep.subr.mxu0 0.0
      %2547 = vmatpush1.msra.mxu0 0.0
      %2548 = vmatprep.subr.mxu0 0.0
      %2549 = vmatpush1.msra.mxu0 0.0
      %2550 = vmatprep.subr.mxu0 0.0
      %2551 = vmatpush1.msra.mxu0 0.0
      %2552 = vmatprep.subr.mxu0 0.0
      %2553 = vmatpush1.msra.mxu0 0.0
      %2554 = vmatprep.subr.mxu0 0.0
      %2555 = vmatpush1.msra.mxu0 0.0
      %2556 = vmatprep.subr.mxu0 0.0
      %2557 = vmatpush1.msra.mxu0 0.0
      %2558 = vmatprep.mubr.f32.mxu0 0.0
      %2559 = vmatmul.mubr.f32.gmra.mrb[0].mxu0 %v417
      %v2560 = vpop.f32.mrb[0].mxu0
      %v2561 = vadd.f32 0.0, %v2560
      %v2562 = vpop.f32.mrb[0].mxu0
      %2563 = vmatprep.mubr.f32.mxu0 0.0
      %2564 = vmatmul.mubr.f32.gmra.mrb[0].mxu0 %v420
      %v2565 = vpop.f32.mrb[0].mxu0
      %v2566 = vadd.f32 0.0, %v2565
      %v2567 = vpop.f32.mrb[0].mxu0
      %2568 = vmatprep.mubr.f32.mxu0 0.0
      %2569 = vmatmul.mubr.f32.gmra.mrb[0].mxu0 %v423
      %v2570 = vpop.f32.mrb[0].mxu0
      %v2571 = vadd.f32 0.0, %v2570
      %v2572 = vpop.f32.mrb[0].mxu0
      %2573 = vmatprep.mubr.f32.mxu0 0.0
      %2574 = vmatmul.mubr.f32.gmra.mrb[0].mxu0 %v426
      %v2575 = vpop.f32.mrb[0].mxu0
      %v2576 = vadd.f32 0.0, %v2575
      %v2577 = vpop.f32.mrb[0].mxu0
      %2578 = vmatprep.mubr.f32.mxu0 0.0
      %2579 = vmatmul.mubr.f32.gmra.mrb[0].mxu0 %v429
      %v2580 = vpop.f32.mrb[0].mxu0
      %v2581 = vadd.f32 0.0, %v2580
      %v2582 = vpop.f32.mrb[0].mxu0
      %2583 = vmatprep.mubr.f32.mxu0 0.0
      %2584 = vmatmul.mubr.f32.gmra.mrb[0].mxu0 %v432
      %v2585 = vpop.f32.mrb[0].mxu0
      %v2586 = vadd.f32 0.0, %v2585
      %v2587 = vpop.f32.mrb[0].mxu0
      %2588 = vmatprep.mubr.f32.mxu0 0.0
      %2589 = vmatmul.mubr.f32.gmra.mrb[0].mxu0 %v435
      %v2590 = vpop.f32.mrb[0].mxu0
      %v2591 = vadd.f32 0.0, %v2590
      %v2592 = vpop.f32.mrb[0].mxu0
      %2593 = vmatprep.mubr.f32.mxu0 0.0
      %2594 = vmatmul.mubr.f32.gmra.mrb[0].mxu0 %v438
      %v2595 = vpop.f32.mrb[0].mxu0
      %v2596 = vadd.f32 0.0, %v2595
      %v2597 = vpop.f32.mrb[0].mxu0
      %2598 = vmatprep.mubr.f32.mxu0 0.0
      %2599 = vmatmul.mubr.f32.gmra.mrb[0].mxu0 %v441
      %v2600 = vpop.f32.mrb[0].mxu0
      %v2601 = vadd.f32 0.0, %v2600
      %v2602 = vpop.f32.mrb[0].mxu0
      %2603 = vmatprep.mubr.f32.mxu0 0.0
      %2604 = vmatmul.mubr.f32.gmra.mrb[0].mxu0 %v444
      %v2605 = vpop.f32.mrb[0].mxu0
      %v2606 = vadd.f32 0.0, %v2605
      %v2607 = vpop.f32.mrb[0].mxu0
      %2608 = vmatprep.mubr.f32.mxu0 0.0
      %2609 = vmatmul.mubr.f32.gmra.mrb[0].mxu0 %v447
      %v2610 = vpop.f32.mrb[0].mxu0
      %v2611 = vadd.f32 0.0, %v2610
      %v2612 = vpop.f32.mrb[0].mxu0
      %2613 = vmatprep.mubr.f32.mxu0 0.0
      %2614 = vmatmul.mubr.f32.gmra.mrb[0].mxu0 %v450
      %v2615 = vpop.f32.mrb[0].mxu0
      %v2616 = vadd.f32 0.0, %v2615
      %v2617 = vpop.f32.mrb[0].mxu0
      %2618 = vmatprep.mubr.f32.mxu0 0.0
      %2619 = vmatmul.mubr.f32.gmra.mrb[0].mxu0 %v453
      %v2620 = vpop.f32.mrb[0].mxu0
      %v2621 = vadd.f32 0.0, %v2620
      %v2622 = vpop.f32.mrb[0].mxu0
      %2623 = vmatprep.mubr.f32.mxu0 0.0
      %2624 = vmatmul.mubr.f32.gmra.mrb[0].mxu0 %v456
      %v2625 = vpop.f32.mrb[0].mxu0
      %v2626 = vadd.f32 0.0, %v2625
      %v2627 = vpop.f32.mrb[0].mxu0
      %2628 = vmatprep.mubr.f32.mxu0 0.0
      %2629 = vmatmul.mubr.f32.gmra.mrb[0].mxu0 %v459
      %v2630 = vpop.f32.mrb[0].mxu0
      %v2631 = vadd.f32 0.0, %v2630
      %v2632 = vpop.f32.mrb[0].mxu0
      %2633 = vmatprep.mubr.f32.mxu0 0.0
      %2634 = vmatmul.mubr.f32.gmra.mrb[0].mxu0 %v462
      %v2635 = vpop.f32.mrb[0].mxu0
      %v2636 = vadd.f32 0.0, %v2635
      %v2637 = vpop.f32.mrb[0].mxu0
      %2638 = vmatprep.mubr.f32.mxu0 0.0
      %2639 = vmatmul.mubr.f32.gmra.mrb[0].mxu0 %v465
      %v2640 = vpop.f32.mrb[0].mxu0
      %v2641 = vadd.f32 0.0, %v2640
      %v2642 = vpop.f32.mrb[0].mxu0
      %2643 = vmatprep.mubr.f32.mxu0 0.0
      %2644 = vmatmul.mubr.f32.gmra.mrb[0].mxu0 %v468
      %v2645 = vpop.f32.mrb[0].mxu0
      %v2646 = vadd.f32 0.0, %v2645
      %v2647 = vpop.f32.mrb[0].mxu0
      %2648 = vmatprep.mubr.f32.mxu0 0.0
      %2649 = vmatmul.mubr.f32.gmra.mrb[0].mxu0 %v471
      %v2650 = vpop.f32.mrb[0].mxu0
      %v2651 = vadd.f32 0.0, %v2650
      %v2652 = vpop.f32.mrb[0].mxu0
      %2653 = vmatprep.mubr.f32.mxu0 0.0
      %2654 = vmatmul.mubr.f32.gmra.mrb[0].mxu0 %v474
      %v2655 = vpop.f32.mrb[0].mxu0
      %v2656 = vadd.f32 0.0, %v2655
      %v2657 = vpop.f32.mrb[0].mxu0
      %2658 = vmatprep.mubr.f32.mxu0 0.0
      %2659 = vmatmul.mubr.f32.gmra.mrb[0].mxu0 %v477
      %v2660 = vpop.f32.mrb[0].mxu0
      %v2661 = vadd.f32 0.0, %v2660
      %v2662 = vpop.f32.mrb[0].mxu0
      %2663 = vmatprep.mubr.f32.mxu0 0.0
      %2664 = vmatmul.mubr.f32.gmra.mrb[0].mxu0 %v480
      %v2665 = vpop.f32.mrb[0].mxu0
      %v2666 = vadd.f32 0.0, %v2665
      %v2667 = vpop.f32.mrb[0].mxu0
      %2668 = vmatprep.mubr.f32.mxu0 0.0
      %2669 = vmatmul.mubr.f32.gmra.mrb[0].mxu0 %v483
      %v2670 = vpop.f32.mrb[0].mxu0
      %v2671 = vadd.f32 0.0, %v2670
      %v2672 = vpop.f32.mrb[0].mxu0
      %2673 = vmatprep.mubr.f32.mxu0 0.0
      %2674 = vmatmul.mubr.f32.gmra.mrb[0].mxu0 %v486
      %v2675 = vpop.f32.mrb[0].mxu0
      %v2676 = vadd.f32 0.0, %v2675
      %v2677 = vpop.f32.mrb[0].mxu0
      %2678 = vmatprep.mubr.f32.mxu0 0.0
      %2679 = vmatmul.mubr.f32.gmra.mrb[0].mxu0 %v489
      %v2680 = vpop.f32.mrb[0].mxu0
      %v2681 = vadd.f32 0.0, %v2680
      %v2682 = vpop.f32.mrb[0].mxu0
      %2683 = vmatprep.mubr.f32.mxu0 0.0
      %2684 = vmatmul.mubr.f32.gmra.mrb[0].mxu0 %v492
      %v2685 = vpop.f32.mrb[0].mxu0
      %v2686 = vadd.f32 0.0, %v2685
      %v2687 = vpop.f32.mrb[0].mxu0
      %2688 = vmatprep.mubr.f32.mxu0 0.0
      %2689 = vmatmul.mubr.f32.gmra.mrb[0].mxu0 %v495
      %v2690 = vpop.f32.mrb[0].mxu0
      %v2691 = vadd.f32 0.0, %v2690
      %v2692 = vpop.f32.mrb[0].mxu0
      %2693 = vmatprep.mubr.f32.mxu0 0.0
      %2694 = vmatmul.mubr.f32.gmra.mrb[0].mxu0 %v498
      %v2695 = vpop.f32.mrb[0].mxu0
      %v2696 = vadd.f32 0.0, %v2695
      %v2697 = vpop.f32.mrb[0].mxu0
      %2698 = vmatprep.mubr.f32.mxu0 0.0
      %2699 = vmatmul.mubr.f32.gmra.mrb[0].mxu0 %v1682
      %v2700 = vpop.f32.mrb[0].mxu0
      %v2701 = vadd.f32 0.0, %v2700
      %v2702 = vpop.f32.mrb[0].mxu0
      %2703 = vmatprep.mubr.f32.mxu0 0.0
      %2704 = vmatmul.mubr.f32.gmra.mrb[0].mxu0 %v1685
      %v2705 = vpop.f32.mrb[0].mxu0
      %v2706 = vadd.f32 0.0, %v2705
      %v2707 = vpop.f32.mrb[0].mxu0
      %2708 = vmatprep.mubr.f32.mxu0 0.0
      %2709 = vmatmul.mubr.f32.gmra.mrb[0].mxu0 %v2486
      %v2710 = vpop.f32.mrb[0].mxu0
      %v2711 = vadd.f32 0.0, %v2710
      %v2712 = vpop.f32.mrb[0].mxu0
      %2713 = vmatprep.mubr.f32.mxu0 0.0
      %2714 = vmatmul.mubr.f32.gmra.mrb[0].mxu0 %v2489
      %v2715 = vpop.f32.mrb[0].mxu0
      %v2716 = vadd.f32 0.0, %v2715
      %v2717 = vpop.f32.mrb[0].mxu0
      %2718 = vdwg.mxu0
      %v2719 = vadd.f32 %v2451, %v2561
      %v2720 = vadd.f32 %v2452, %v2566
      %v2721 = vadd.f32 %v2453, %v2571
      %v2722 = vadd.f32 %v2454, %v2576
      %v2723 = vadd.f32 %v2455, %v2581
      %v2724 = vadd.f32 %v2456, %v2586
      %v2725 = vadd.f32 %v2457, %v2591
      %v2726 = vadd.f32 %v2458, %v2596
      %v2727 = vadd.f32 %v2459, %v2601
      %v2728 = vadd.f32 %v2460, %v2606
      %v2729 = vadd.f32 %v2461, %v2611
      %v2730 = vadd.f32 %v2462, %v2616
      %v2731 = vadd.f32 %v2463, %v2621
      %v2732 = vadd.f32 %v2464, %v2626
      %v2733 = vadd.f32 %v2465, %v2631
      %v2734 = vadd.f32 %v2466, %v2636
      %v2735 = vadd.f32 %v2467, %v2641
      %v2736 = vadd.f32 %v2468, %v2646
      %v2737 = vadd.f32 %v2469, %v2651
      %v2738 = vadd.f32 %v2470, %v2656
      %v2739 = vadd.f32 %v2471, %v2661
      %v2740 = vadd.f32 %v2472, %v2666
      %v2741 = vadd.f32 %v2473, %v2671
      %v2742 = vadd.f32 %v2474, %v2676
      %v2743 = vadd.f32 %v2475, %v2681
      %v2744 = vadd.f32 %v2476, %v2686
      %v2745 = vadd.f32 %v2477, %v2691
      %v2746 = vadd.f32 %v2478, %v2696
      %v2747 = vadd.f32 %v2479, %v2701
      %v2748 = vadd.f32 %v2480, %v2706
      %v2749 = vadd.f32 %v2481, %v2711
      %v2750 = vadd.f32 %v2482, %v2716
      %s2751 = scalar_lea.vmem %s1, 32
      %v2752 = vld [vmem:[%s2751] sm:$0xf]
      %v2754 = vsel %vm214, %v399, 0
      %v2757 = vsel %vm214, %v400, 0
      %v2760 = vsel %vm500, %v2752, 0
      %2762 = vmatprep.subr.mxu0 0.0
      %2763 = vmatpush1.msra.mxu0 %v2760
      %2764 = vmatprep.subr.mxu0 0.0
      %2765 = vmatpush1.msra.mxu0 0.0
      %2766 = vmatprep.subr.mxu0 0.0
      %2767 = vmatpush1.msra.mxu0 0.0
      %2768 = vmatprep.subr.mxu0 0.0
      %2769 = vmatpush1.msra.mxu0 0.0
      %2770 = vmatprep.subr.mxu0 0.0
      %2771 = vmatpush1.msra.mxu0 0.0
      %2772 = vmatprep.subr.mxu0 0.0
      %2773 = vmatpush1.msra.mxu0 0.0
      %2774 = vmatprep.subr.mxu0 0.0
      %2775 = vmatpush1.msra.mxu0 0.0
      %2776 = vmatprep.subr.mxu0 0.0
      %2777 = vmatpush1.msra.mxu0 0.0
      %2778 = vmatprep.subr.mxu0 0.0
      %2779 = vmatpush1.msra.mxu0 0.0
      %2780 = vmatprep.subr.mxu0 0.0
      %2781 = vmatpush1.msra.mxu0 0.0
      %2782 = vmatprep.subr.mxu0 0.0
      %2783 = vmatpush1.msra.mxu0 0.0
      %2784 = vmatprep.subr.mxu0 0.0
      %2785 = vmatpush1.msra.mxu0 0.0
      %2786 = vmatprep.subr.mxu0 0.0
      %2787 = vmatpush1.msra.mxu0 0.0
      %2788 = vmatprep.subr.mxu0 0.0
      %2789 = vmatpush1.msra.mxu0 0.0
      %2790 = vmatprep.subr.mxu0 0.0
      %2791 = vmatpush1.msra.mxu0 0.0
      %2792 = vmatprep.subr.mxu0 0.0
      %2793 = vmatpush1.msra.mxu0 0.0
      %2794 = vmatprep.subr.mxu0 0.0
      %2795 = vmatpush1.msra.mxu0 0.0
      %2796 = vmatprep.subr.mxu0 0.0
      %2797 = vmatpush1.msra.mxu0 0.0
      %2798 = vmatprep.subr.mxu0 0.0
      %2799 = vmatpush1.msra.mxu0 0.0
      %2800 = vmatprep.subr.mxu0 0.0
      %2801 = vmatpush1.msra.mxu0 0.0
      %2802 = vmatprep.subr.mxu0 0.0
      %2803 = vmatpush1.msra.mxu0 0.0
      %2804 = vmatprep.subr.mxu0 0.0
      %2805 = vmatpush1.msra.mxu0 0.0
      %2806 = vmatprep.subr.mxu0 0.0
      %2807 = vmatpush1.msra.mxu0 0.0
      %2808 = vmatprep.subr.mxu0 0.0
      %2809 = vmatpush1.msra.mxu0 0.0
      %2810 = vmatprep.subr.mxu0 0.0
      %2811 = vmatpush1.msra.mxu0 0.0
      %2812 = vmatprep.subr.mxu0 0.0
      %2813 = vmatpush1.msra.mxu0 0.0
      %2814 = vmatprep.subr.mxu0 0.0
      %2815 = vmatpush1.msra.mxu0 0.0
      %2816 = vmatprep.subr.mxu0 0.0
      %2817 = vmatpush1.msra.mxu0 0.0
      %2818 = vmatprep.subr.mxu0 0.0
      %2819 = vmatpush1.msra.mxu0 0.0
      %2820 = vmatprep.subr.mxu0 0.0
      %2821 = vmatpush1.msra.mxu0 0.0
      %2822 = vmatprep.subr.mxu0 0.0
      %2823 = vmatpush1.msra.mxu0 0.0
      %2824 = vmatprep.subr.mxu0 0.0
      %2825 = vmatpush1.msra.mxu0 0.0
      %2826 = vmatprep.mubr.f32.mxu0 0.0
      %2827 = vmatmul.mubr.f32.gmra.mrb[0].mxu0 %v1068
      %v2828 = vpop.f32.mrb[0].mxu0
      %v2829 = vadd.f32 0.0, %v2828
      %v2830 = vpop.f32.mrb[0].mxu0
      %2831 = vmatprep.mubr.f32.mxu0 0.0
      %2832 = vmatmul.mubr.f32.gmra.mrb[0].mxu0 %v1071
      %v2833 = vpop.f32.mrb[0].mxu0
      %v2834 = vadd.f32 0.0, %v2833
      %v2835 = vpop.f32.mrb[0].mxu0
      %2836 = vmatprep.mubr.f32.mxu0 0.0
      %2837 = vmatmul.mubr.f32.gmra.mrb[0].mxu0 %v1074
      %v2838 = vpop.f32.mrb[0].mxu0
      %v2839 = vadd.f32 0.0, %v2838
      %v2840 = vpop.f32.mrb[0].mxu0
      %2841 = vmatprep.mubr.f32.mxu0 0.0
      %2842 = vmatmul.mubr.f32.gmra.mrb[0].mxu0 %v1077
      %v2843 = vpop.f32.mrb[0].mxu0
      %v2844 = vadd.f32 0.0, %v2843
      %v2845 = vpop.f32.mrb[0].mxu0
      %2846 = vmatprep.mubr.f32.mxu0 0.0
      %2847 = vmatmul.mubr.f32.gmra.mrb[0].mxu0 %v1080
      %v2848 = vpop.f32.mrb[0].mxu0
      %v2849 = vadd.f32 0.0, %v2848
      %v2850 = vpop.f32.mrb[0].mxu0
      %2851 = vmatprep.mubr.f32.mxu0 0.0
      %2852 = vmatmul.mubr.f32.gmra.mrb[0].mxu0 %v1083
      %v2853 = vpop.f32.mrb[0].mxu0
      %v2854 = vadd.f32 0.0, %v2853
      %v2855 = vpop.f32.mrb[0].mxu0
      %2856 = vmatprep.mubr.f32.mxu0 0.0
      %2857 = vmatmul.mubr.f32.gmra.mrb[0].mxu0 %v1086
      %v2858 = vpop.f32.mrb[0].mxu0
      %v2859 = vadd.f32 0.0, %v2858
      %v2860 = vpop.f32.mrb[0].mxu0
      %2861 = vmatprep.mubr.f32.mxu0 0.0
      %2862 = vmatmul.mubr.f32.gmra.mrb[0].mxu0 %v1089
      %v2863 = vpop.f32.mrb[0].mxu0
      %v2864 = vadd.f32 0.0, %v2863
      %v2865 = vpop.f32.mrb[0].mxu0
      %2866 = vmatprep.mubr.f32.mxu0 0.0
      %2867 = vmatmul.mubr.f32.gmra.mrb[0].mxu0 %v1092
      %v2868 = vpop.f32.mrb[0].mxu0
      %v2869 = vadd.f32 0.0, %v2868
      %v2870 = vpop.f32.mrb[0].mxu0
      %2871 = vmatprep.mubr.f32.mxu0 0.0
      %2872 = vmatmul.mubr.f32.gmra.mrb[0].mxu0 %v1095
      %v2873 = vpop.f32.mrb[0].mxu0
      %v2874 = vadd.f32 0.0, %v2873
      %v2875 = vpop.f32.mrb[0].mxu0
      %2876 = vmatprep.mubr.f32.mxu0 0.0
      %2877 = vmatmul.mubr.f32.gmra.mrb[0].mxu0 %v1098
      %v2878 = vpop.f32.mrb[0].mxu0
      %v2879 = vadd.f32 0.0, %v2878
      %v2880 = vpop.f32.mrb[0].mxu0
      %2881 = vmatprep.mubr.f32.mxu0 0.0
      %2882 = vmatmul.mubr.f32.gmra.mrb[0].mxu0 %v1101
      %v2883 = vpop.f32.mrb[0].mxu0
      %v2884 = vadd.f32 0.0, %v2883
      %v2885 = vpop.f32.mrb[0].mxu0
      %2886 = vmatprep.mubr.f32.mxu0 0.0
      %2887 = vmatmul.mubr.f32.gmra.mrb[0].mxu0 %v1104
      %v2888 = vpop.f32.mrb[0].mxu0
      %v2889 = vadd.f32 0.0, %v2888
      %v2890 = vpop.f32.mrb[0].mxu0
      %2891 = vmatprep.mubr.f32.mxu0 0.0
      %2892 = vmatmul.mubr.f32.gmra.mrb[0].mxu0 %v1107
      %v2893 = vpop.f32.mrb[0].mxu0
      %v2894 = vadd.f32 0.0, %v2893
      %v2895 = vpop.f32.mrb[0].mxu0
      %2896 = vmatprep.mubr.f32.mxu0 0.0
      %2897 = vmatmul.mubr.f32.gmra.mrb[0].mxu0 %v1110
      %v2898 = vpop.f32.mrb[0].mxu0
      %v2899 = vadd.f32 0.0, %v2898
      %v2900 = vpop.f32.mrb[0].mxu0
      %2901 = vmatprep.mubr.f32.mxu0 0.0
      %2902 = vmatmul.mubr.f32.gmra.mrb[0].mxu0 %v1113
      %v2903 = vpop.f32.mrb[0].mxu0
      %v2904 = vadd.f32 0.0, %v2903
      %v2905 = vpop.f32.mrb[0].mxu0
      %2906 = vmatprep.mubr.f32.mxu0 0.0
      %2907 = vmatmul.mubr.f32.gmra.mrb[0].mxu0 %v1116
      %v2908 = vpop.f32.mrb[0].mxu0
      %v2909 = vadd.f32 0.0, %v2908
      %v2910 = vpop.f32.mrb[0].mxu0
      %2911 = vmatprep.mubr.f32.mxu0 0.0
      %2912 = vmatmul.mubr.f32.gmra.mrb[0].mxu0 %v1119
      %v2913 = vpop.f32.mrb[0].mxu0
      %v2914 = vadd.f32 0.0, %v2913
      %v2915 = vpop.f32.mrb[0].mxu0
      %2916 = vmatprep.mubr.f32.mxu0 0.0
      %2917 = vmatmul.mubr.f32.gmra.mrb[0].mxu0 %v1122
      %v2918 = vpop.f32.mrb[0].mxu0
      %v2919 = vadd.f32 0.0, %v2918
      %v2920 = vpop.f32.mrb[0].mxu0
      %2921 = vmatprep.mubr.f32.mxu0 0.0
      %2922 = vmatmul.mubr.f32.gmra.mrb[0].mxu0 %v1125
      %v2923 = vpop.f32.mrb[0].mxu0
      %v2924 = vadd.f32 0.0, %v2923
      %v2925 = vpop.f32.mrb[0].mxu0
      %2926 = vmatprep.mubr.f32.mxu0 0.0
      %2927 = vmatmul.mubr.f32.gmra.mrb[0].mxu0 %v1128
      %v2928 = vpop.f32.mrb[0].mxu0
      %v2929 = vadd.f32 0.0, %v2928
      %v2930 = vpop.f32.mrb[0].mxu0
      %2931 = vmatprep.mubr.f32.mxu0 0.0
      %2932 = vmatmul.mubr.f32.gmra.mrb[0].mxu0 %v1131
      %v2933 = vpop.f32.mrb[0].mxu0
      %v2934 = vadd.f32 0.0, %v2933
      %v2935 = vpop.f32.mrb[0].mxu0
      %2936 = vmatprep.mubr.f32.mxu0 0.0
      %2937 = vmatmul.mubr.f32.gmra.mrb[0].mxu0 %v1134
      %v2938 = vpop.f32.mrb[0].mxu0
      %v2939 = vadd.f32 0.0, %v2938
      %v2940 = vpop.f32.mrb[0].mxu0
      %2941 = vmatprep.mubr.f32.mxu0 0.0
      %2942 = vmatmul.mubr.f32.gmra.mrb[0].mxu0 %v1137
      %v2943 = vpop.f32.mrb[0].mxu0
      %v2944 = vadd.f32 0.0, %v2943
      %v2945 = vpop.f32.mrb[0].mxu0
      %2946 = vmatprep.mubr.f32.mxu0 0.0
      %2947 = vmatmul.mubr.f32.gmra.mrb[0].mxu0 %v1140
      %v2948 = vpop.f32.mrb[0].mxu0
      %v2949 = vadd.f32 0.0, %v2948
      %v2950 = vpop.f32.mrb[0].mxu0
      %2951 = vmatprep.mubr.f32.mxu0 0.0
      %2952 = vmatmul.mubr.f32.gmra.mrb[0].mxu0 %v1143
      %v2953 = vpop.f32.mrb[0].mxu0
      %v2954 = vadd.f32 0.0, %v2953
      %v2955 = vpop.f32.mrb[0].mxu0
      %2956 = vmatprep.mubr.f32.mxu0 0.0
      %2957 = vmatmul.mubr.f32.gmra.mrb[0].mxu0 %v1146
      %v2958 = vpop.f32.mrb[0].mxu0
      %v2959 = vadd.f32 0.0, %v2958
      %v2960 = vpop.f32.mrb[0].mxu0
      %2961 = vmatprep.mubr.f32.mxu0 0.0
      %2962 = vmatmul.mubr.f32.gmra.mrb[0].mxu0 %v1149
      %v2963 = vpop.f32.mrb[0].mxu0
      %v2964 = vadd.f32 0.0, %v2963
      %v2965 = vpop.f32.mrb[0].mxu0
      %2966 = vmatprep.mubr.f32.mxu0 0.0
      %2967 = vmatmul.mubr.f32.gmra.mrb[0].mxu0 %v1950
      %v2968 = vpop.f32.mrb[0].mxu0
      %v2969 = vadd.f32 0.0, %v2968
      %v2970 = vpop.f32.mrb[0].mxu0
      %2971 = vmatprep.mubr.f32.mxu0 0.0
      %2972 = vmatmul.mubr.f32.gmra.mrb[0].mxu0 %v1953
      %v2973 = vpop.f32.mrb[0].mxu0
      %v2974 = vadd.f32 0.0, %v2973
      %v2975 = vpop.f32.mrb[0].mxu0
      %2976 = vmatprep.mubr.f32.mxu0 0.0
      %2977 = vmatmul.mubr.f32.gmra.mrb[0].mxu0 %v2754
      %v2978 = vpop.f32.mrb[0].mxu0
      %v2979 = vadd.f32 0.0, %v2978
      %v2980 = vpop.f32.mrb[0].mxu0
      %2981 = vmatprep.mubr.f32.mxu0 0.0
      %2982 = vmatmul.mubr.f32.gmra.mrb[0].mxu0 %v2757
      %v2983 = vpop.f32.mrb[0].mxu0
      %v2984 = vadd.f32 0.0, %v2983
      %v2985 = vpop.f32.mrb[0].mxu0
      %2986 = vdwg.mxu0
      %v2987 = vadd.f32 %v2719, %v2829
      %v2988 = vadd.f32 %v2720, %v2834
      %v2989 = vadd.f32 %v2721, %v2839
      %v2990 = vadd.f32 %v2722, %v2844
      %v2991 = vadd.f32 %v2723, %v2849
      %v2992 = vadd.f32 %v2724, %v2854
      %v2993 = vadd.f32 %v2725, %v2859
      %v2994 = vadd.f32 %v2726, %v2864
      %v2995 = vadd.f32 %v2727, %v2869
      %v2996 = vadd.f32 %v2728, %v2874
      %v2997 = vadd.f32 %v2729, %v2879
      %v2998 = vadd.f32 %v2730, %v2884
      %v2999 = vadd.f32 %v2731, %v2889
      %v3000 = vadd.f32 %v2732, %v2894
      %v3001 = vadd.f32 %v2733, %v2899
      %v3002 = vadd.f32 %v2734, %v2904
      %v3003 = vadd.f32 %v2735, %v2909
      %v3004 = vadd.f32 %v2736, %v2914
      %v3005 = vadd.f32 %v2737, %v2919
      %v3006 = vadd.f32 %v2738, %v2924
      %v3007 = vadd.f32 %v2739, %v2929
      %v3008 = vadd.f32 %v2740, %v2934
      %v3009 = vadd.f32 %v2741, %v2939
      %v3010 = vadd.f32 %v2742, %v2944
      %v3011 = vadd.f32 %v2743, %v2949
      %v3012 = vadd.f32 %v2744, %v2954
      %v3013 = vadd.f32 %v2745, %v2959
      %v3014 = vadd.f32 %v2746, %v2964
      %v3015 = vadd.f32 %v2747, %v2969
      %v3016 = vadd.f32 %v2748, %v2974
      %v3017 = vadd.f32 %v2749, %v2979
      %v3018 = vadd.f32 %v2750, %v2984
      %3019 = vst [vmem:[%s177] sm:$0xff] %v2987
      %3020 = vst [vmem:[%s177 + $0x8] sm:$0xff] %v2988
      %3021 = vst [vmem:[%s177 + $0x10] sm:$0xff] %v2989
      %3022 = vst [vmem:[%s177 + $0x18] sm:$0xff] %v2990
      %3023 = vst [vmem:[%s177 + $0x20] sm:$0xff] %v2991
      %3024 = vst [vmem:[%s177 + $0x28] sm:$0xff] %v2992
      %3025 = vst [vmem:[%s177 + $0x30] sm:$0xff] %v2993
      %3026 = vst [vmem:[%s177 + $0x38] sm:$0xff] %v2994
      %3027 = vst [vmem:[%s177 + $0x40] sm:$0xff] %v2995
      %3028 = vst [vmem:[%s177 + $0x48] sm:$0xff] %v2996
      %3029 = vst [vmem:[%s177 + $0x50] sm:$0xff] %v2997
      %3030 = vst [vmem:[%s177 + $0x58] sm:$0xff] %v2998
      %3031 = vst [vmem:[%s177 + $0x60] sm:$0xff] %v2999
      %3032 = vst [vmem:[%s177 + $0x68] sm:$0xff] %v3000
      %3033 = vst [vmem:[%s177 + $0x70] sm:$0xff] %v3001
      %3034 = vst [vmem:[%s177 + $0x78] sm:$0xff] %v3002
      %3035 = vst [vmem:[%s177 + $0x80] sm:$0xff] %v3003
      %3036 = vst [vmem:[%s177 + $0x88] sm:$0xff] %v3004
      %3037 = vst [vmem:[%s177 + $0x90] sm:$0xff] %v3005
      %3038 = vst [vmem:[%s177 + $0x98] sm:$0xff] %v3006
      %3039 = vst [vmem:[%s177 + $0xa0] sm:$0xff] %v3007
      %3040 = vst [vmem:[%s177 + $0xa8] sm:$0xff] %v3008
      %3041 = vst [vmem:[%s177 + $0xb0] sm:$0xff] %v3009
      %3042 = vst [vmem:[%s177 + $0xb8] sm:$0xff] %v3010
      %3043 = vst [vmem:[%s177 + $0xc0] sm:$0xff] %v3011
      %3044 = vst [vmem:[%s177 + $0xc8] sm:$0xff] %v3012
      %3045 = vst [vmem:[%s177 + $0xd0] sm:$0xff] %v3013
      %3046 = vst [vmem:[%s177 + $0xd8] sm:$0xff] %v3014
      %3047 = vst [vmem:[%s177 + $0xe0] sm:$0xff] %v3015
      %3048 = vst [vmem:[%s177 + $0xe8] sm:$0xff] %v3016
      %3049 = vst [vmem:[%s177 + $0xf0] sm:$0xff] %v3017
      %3050 = vst [vmem:[%s177 + $0xf8] sm:$0xff] %v3018
      %v3051 = vadd.f32 %v2987, %v2988
      %v3052 = vadd.f32 %v3051, %v2989
      %v3053 = vadd.f32 %v3052, %v2990
      %v3054 = vadd.f32 %v3053, %v2991
      %v3055 = vadd.f32 %v3054, %v2992
      %v3056 = vadd.f32 %v3055, %v2993
      %v3057 = vadd.f32 %v3056, %v2994
      %v3058 = vadd.f32 %v3057, %v2995
      %v3059 = vadd.f32 %v3058, %v2996
      %v3060 = vadd.f32 %v3059, %v2997
      %v3061 = vadd.f32 %v3060, %v2998
      %v3062 = vadd.f32 %v3061, %v2999
      %v3063 = vadd.f32 %v3062, %v3000
      %v3064 = vadd.f32 %v3063, %v3001
      %v3065 = vadd.f32 %v3064, %v3002
      %v3066 = vadd.f32 %v3065, %v3003
      %v3067 = vadd.f32 %v3066, %v3004
      %v3068 = vadd.f32 %v3067, %v3005
      %v3069 = vadd.f32 %v3068, %v3006
      %v3070 = vadd.f32 %v3069, %v3007
      %v3071 = vadd.f32 %v3070, %v3008
      %v3072 = vadd.f32 %v3071, %v3009
      %v3073 = vadd.f32 %v3072, %v3010
      %v3074 = vadd.f32 %v3073, %v3011
      %v3075 = vadd.f32 %v3074, %v3012
      %v3076 = vadd.f32 %v3075, %v3013
      %v3077 = vadd.f32 %v3076, %v3014
      %v3078 = vadd.f32 %v3077, %v3015
      %v3079 = vadd.f32 %v3078, %v3016
      %v3080 = vadd.f32 %v3079, %v3017
      %v3081 = vadd.f32 %v3080, %v3018
      %v3082 = vrot.slane %v3081, 4
      %v3083 = vadd.f32 %v3081, %v3082
      %v3084 = vrot.slane %v3083, 2
      %v3085 = vadd.f32 %v3083, %v3084
      %v3086 = vrot.slane %v3085, 1
      %v3087 = vadd.f32 %v3085, %v3086
      %v3088 = vadd.f32 %v3087, 0.0
      %v3089 = vmul.f32 %v2987, %v2987
      %v3090 = vmul.f32 %v2988, %v2988
      %v3091 = vmul.f32 %v2989, %v2989
      %v3092 = vmul.f32 %v2990, %v2990
      %v3093 = vmul.f32 %v2991, %v2991
      %v3094 = vmul.f32 %v2992, %v2992
      %v3095 = vmul.f32 %v2993, %v2993
      %v3096 = vmul.f32 %v2994, %v2994
      %v3097 = vmul.f32 %v2995, %v2995
      %v3098 = vmul.f32 %v2996, %v2996
      %v3099 = vmul.f32 %v2997, %v2997
      %v3100 = vmul.f32 %v2998, %v2998
      %v3101 = vmul.f32 %v2999, %v2999
      %v3102 = vmul.f32 %v3000, %v3000
      %v3103 = vmul.f32 %v3001, %v3001
      %v3104 = vmul.f32 %v3002, %v3002
      %v3105 = vmul.f32 %v3003, %v3003
      %v3106 = vmul.f32 %v3004, %v3004
      %v3107 = vmul.f32 %v3005, %v3005
      %v3108 = vmul.f32 %v3006, %v3006
      %v3109 = vmul.f32 %v3007, %v3007
      %v3110 = vmul.f32 %v3008, %v3008
      %v3111 = vmul.f32 %v3009, %v3009
      %v3112 = vmul.f32 %v3010, %v3010
      %v3113 = vmul.f32 %v3011, %v3011
      %v3114 = vmul.f32 %v3012, %v3012
      %v3115 = vmul.f32 %v3013, %v3013
      %v3116 = vmul.f32 %v3014, %v3014
      %v3117 = vmul.f32 %v3015, %v3015
      %v3118 = vmul.f32 %v3016, %v3016
      %v3119 = vmul.f32 %v3017, %v3017
      %v3120 = vmul.f32 %v3018, %v3018
      %v3121 = vadd.f32 %v3089, %v3090
      %v3122 = vadd.f32 %v3121, %v3091
      %v3123 = vadd.f32 %v3122, %v3092
      %v3124 = vadd.f32 %v3123, %v3093
      %v3125 = vadd.f32 %v3124, %v3094
      %v3126 = vadd.f32 %v3125, %v3095
      %v3127 = vadd.f32 %v3126, %v3096
      %v3128 = vadd.f32 %v3127, %v3097
      %v3129 = vadd.f32 %v3128, %v3098
      %v3130 = vadd.f32 %v3129, %v3099
      %v3131 = vadd.f32 %v3130, %v3100
      %v3132 = vadd.f32 %v3131, %v3101
      %v3133 = vadd.f32 %v3132, %v3102
      %v3134 = vadd.f32 %v3133, %v3103
      %v3135 = vadd.f32 %v3134, %v3104
      %v3136 = vadd.f32 %v3135, %v3105
      %v3137 = vadd.f32 %v3136, %v3106
      %v3138 = vadd.f32 %v3137, %v3107
      %v3139 = vadd.f32 %v3138, %v3108
      %v3140 = vadd.f32 %v3139, %v3109
      %v3141 = vadd.f32 %v3140, %v3110
      %v3142 = vadd.f32 %v3141, %v3111
      %v3143 = vadd.f32 %v3142, %v3112
      %v3144 = vadd.f32 %v3143, %v3113
      %v3145 = vadd.f32 %v3144, %v3114
      %v3146 = vadd.f32 %v3145, %v3115
      %v3147 = vadd.f32 %v3146, %v3116
      %v3148 = vadd.f32 %v3147, %v3117
      %v3149 = vadd.f32 %v3148, %v3118
      %v3150 = vadd.f32 %v3149, %v3119
      %v3151 = vadd.f32 %v3150, %v3120
      %v3152 = vrot.slane %v3151, 4
      %v3153 = vadd.f32 %v3151, %v3152
      %v3154 = vrot.slane %v3153, 2
      %v3155 = vadd.f32 %v3153, %v3154
      %v3156 = vrot.slane %v3155, 1
      %v3157 = vadd.f32 %v3155, %v3156
      %v3158 = vadd.f32 %v3157, 0.0
      %vm3159 = vcmask 1040384
      %v3160 = vsel %vm3159, %v3088, %v3158
      %vm3161 = vcmask 1041408
      %v3162 = vsel %vm3161, %v3160, 0.0
      %3163 = vst [vmem:[%s181] sm:$0xff] %v3162
      %p3164 = scmp.lt.s32.totalorder %s15, 1
      %s3165 = scalar_select %p3164, %s15, 1
      %s3166 = smul.addr %s3165, 32
      %s3167 = smul.addr %s3166, 8
      %s3168 = scalar_lea.vmem %s2, %s3167
      %p3169 = scmp.lt.s32.totalorder %s15, 1
      %s3170 = scalar_select %p3169, %s15, 1
      %s3171 = smul.addr %s3170, 8
      %s3172 = scalar_lea.vmem %s3, %s3171
      // Predicated region
      $region29: #{double_conv_forward.3} parent=27 // pred_check
        %p3173 = pneg %p80
      $region30: #{double_conv_forward.3} parent=27 // pred_check_branch
        %3175 = sbr.rel (%p3173) target = $region32
      $region31: #{double_conv_forward.3} parent=27 // pred_region
        _
      $region32: #{double_conv_forward.3} parent=27 // pred_fallthru
        _
      // Predicated region
      $region33: #{double_conv_forward.3} parent=27 // pred_check
        %p3176 = pneg %p106
      $region34: #{double_conv_forward.3} parent=27 // pred_check_branch
        %3178 = sbr.rel (%p3176) target = $region36
      $region35: #{double_conv_forward.3} parent=27 // pred_region
        _
      $region36: #{double_conv_forward.3} parent=27 // pred_fallthru
        _
    $region28: #{double_conv_forward.3} parent=5 // pred_fallthru
      _
    %p3179 = scmp.le.s32.totalorder 2, %s10
    // Predicated region
    $region37: #{double_conv_forward.3} parent=5 // pred_check
      %p3180 = pneg %p3179
    $region38: #{double_conv_forward.3} parent=5 // pred_check_branch
      %3182 = sbr.rel (%p3180) target = $region40
    $region39: #{double_conv_forward.3} parent=5 // pred_region
      %s3183 = ssub.s32 %s10, 2
      // Predicated region
      $region41: #{double_conv_forward.3} parent=39 // pred_check
        %p3184 = pneg %p86
      $region42: #{double_conv_forward.3} parent=39 // pred_check_branch
        %3186 = sbr.rel (%p3184) target = $region44
      $region43: #{double_conv_forward.3} parent=39 // pred_region
        %p3187 = scmp.lt.s32.totalorder %s16, 1
        %s3188 = scalar_select %p3187, %s16, 1
        %s3189 = smul.addr %s3188, 32
        %s3190 = smul.addr %s3189, 8
        %s3191 = scalar_lea.vmem %s2, %s3190
      $region44: #{double_conv_forward.3} parent=39 // pred_fallthru
        _
      // Predicated region
      $region45: #{double_conv_forward.3} parent=39 // pred_check
        %p3192 = pneg %p112
      $region46: #{double_conv_forward.3} parent=39 // pred_check_branch
        %3194 = sbr.rel (%p3192) target = $region48
      $region47: #{double_conv_forward.3} parent=39 // pred_region
        %p3195 = scmp.lt.s32.totalorder %s16, 1
        %s3196 = scalar_select %p3195, %s16, 1
        %s3197 = smul.addr %s3196, 8
        %s3198 = scalar_lea.vmem %s3, %s3197
      $region48: #{double_conv_forward.3} parent=39 // pred_fallthru
        _
    $region40: #{double_conv_forward.3} parent=5 // pred_fallthru
      _
  $region6: #{double_conv_forward.3} parent=0 // loop_footer
    %s14 = sadd.s32 1, %s10
  $region7: #{double_conv_forward.3} parent=0 // loop_footer_branch
    %9 = sbr.rel target = $region3
  $region8: #{double_conv_forward.3} parent=0 // loop_exit
    _

</llo_original>
